<compile_context>
chip_gen: v5e
topology: v5e:2x2
jax: 0.10.0
libtpu: 0.0.40
codegen_flags: <defaults>
</compile_context>

<pallas_src>
import functools

import jax
import jax.numpy as jnp
import numpy as np
from jax.experimental import pallas as pl
from jax.experimental.pallas import tpu as pltpu

PAD_TOKEN = -1.0


def scope_lm_kernel(
    emb_ref, side_ref, h0_ref, c0_ref,
    st_w1s_ref, st_w1e_ref, st_b1_ref, st_w2_ref, st_b2_ref,
    w_ih_ref, w_hh_ref, b_lstm_ref,
    su_sw_ref, su_rw_ref, su_b_ref,
    o_w1_ref, o_b1_ref, o_w2_ref, o_b2_ref,
    pred_ref,
    h_scr, c_scr, stack_scr, rnn_scr,
):
    ti = pl.program_id(1)                 # time-block index (inner, "arbitrary")
    L, BB, H = h_scr.shape
    Sp = stack_scr.shape[1]               # stack slots, padded to a multiple of 8
    TT = emb_ref.shape[0]
    md_ff = st_w1s_ref.dtype              # feed-forward matmul operand dtype (bf16 by default)
    md_rc = w_ih_ref.dtype                # recurrent-state matmul operand dtype (f32 by default)

    # First time block of each batch chunk: load learned initial state, zero the scope stack.
    @pl.when(ti == 0)
    def _():
        h_scr[...] = h0_ref[...]
        c_scr[...] = c0_ref[...]
        stack_scr[...] = jnp.zeros_like(stack_scr)

    st_w1s = st_w1s_ref[...]              # [H, H]  scope half of scope_transformer layer 1
    st_w1e = st_w1e_ref[...]              # [E, H]  embedding half (split => no per-step concat)
    st_b1 = st_b1_ref[...]
    st_w2 = st_w2_ref[...]
    st_b2 = st_b2_ref[...]
    su_sw = su_sw_ref[...]                # [H, H+1]  stack-side [value|gate] projection
    su_rw = su_rw_ref[...]                # [H, H+1]  rnn-side   [value|gate] projection
    su_b = su_b_ref[...]                  # [1, H+1]

    # TODO(synk): switch to lax.fori_loop(..., unroll=True) + pl.ds/pl.multiple_of on the rnn_scr
    # writes if TT grows beyond ~8 (static unrolling does not bound vreg live ranges).
    for tt in range(TT):
        emb = emb_ref[tt]                              # [BB, E]  (E == H)
        side = side_ref[tt]                            # [BB, 2*Sp+1] packed side inputs
        smask = side[:, 0:Sp]                          # one-hot scope-slot selector
        is_ident = side[:, Sp:Sp + 1]
        umask = side[:, Sp + 1:2 * Sp + 1]

        stack = stack_scr[...]                         # [BB, Sp, H]

        # ---- _scoped_input: two dots on split weights (no [BB,2H] concat copy) -------
        now_scope = jnp.sum(smask[:, :, None] * stack, axis=1)            # [BB, H]
        h1 = jnp.maximum(
            jnp.dot(now_scope.astype(md_ff), st_w1s, preferred_element_type=jnp.float32)
            + jnp.dot(emb.astype(md_ff), st_w1e, preferred_element_type=jnp.float32)
            + st_b1, 0.0)
        scoped = jnp.dot(h1.astype(md_ff), st_w2,
                         preferred_element_type=jnp.float32) + st_b2      # [BB, E]
        x = jnp.where(is_ident > 0.5, scoped, emb)

        # ---- stacked LSTM cells; columns pre-ordered [i|f|o|g]: one sigmoid on a
        # contiguous 3H slab, tanh on the trailing H slab; separate W_ih/W_hh dots ----
        for l in range(L):
            h_prev = h_scr[l]
            c_prev = c_scr[l]
            gates = (jnp.dot(x.astype(md_rc), w_ih_ref[l], preferred_element_type=jnp.float32)
                     + jnp.dot(h_prev.astype(md_rc), w_hh_ref[l],
                               preferred_element_type=jnp.float32)
                     + b_lstm_ref[l])                                     # [BB, 4H]
            sig = jax.nn.sigmoid(gates[:, 0:3 * H])
            g_g = jnp.tanh(gates[:, 3 * H:4 * H])
            i_g = sig[:, 0:H]
            f_g = sig[:, H:2 * H]
            o_g = sig[:, 2 * H:3 * H]
            c_new = f_g * c_prev + i_g * g_g
            h_new = o_g * jnp.tanh(c_new)
            h_scr[l] = h_new
            c_scr[l] = c_new
            x = h_new
        rnn_out = x                                                       # [BB, H] (f32)

        # ---- _update_scope_stack: fused [value|gate] projections, value lanes first
        # so the tanh slab is lane-aligned and the gate is the single trailing lane ----
        stack2 = stack.reshape(BB * Sp, H)             # free view: Sp % 8 == 0
        ps = jnp.dot(stack2.astype(md_rc), su_sw,
                     preferred_element_type=jnp.float32).reshape(BB, Sp, H + 1)
        pr = jnp.dot(rnn_out.astype(md_rc), su_rw,
                     preferred_element_type=jnp.float32)[:, None, :]      # [BB, 1, H+1]
        pre = ps + pr + su_b                                              # [BB, Sp, H+1]
        val = jnp.tanh(pre[:, :, 0:H])
        gate = jax.nn.sigmoid(pre[:, :, H:H + 1])
        new_stack = stack * (1.0 - gate) + gate * val
        new_stack = jnp.where(umask[:, :, None] > 0.5, 0.0, new_stack)    # masked_fill_(.., 0)
        stack_scr[...] = new_stack

        # Collect rnn_out for the block-batched output MLP (contiguous sublane store).
        rnn_scr[tt * BB:(tt + 1) * BB, :] = rnn_out

    # ---- output_mlp, batched over the whole time block (TT*BB rows on the MXU) --------
    ro = rnn_scr[...]                                                     # [TT*BB, H]
    oh = jnp.maximum(
        jnp.dot(ro.astype(md_ff), o_w1_ref[...], preferred_element_type=jnp.float32)
        + o_b1_ref[...], 0.0)
    logits = (jnp.dot(oh.astype(md_ff), o_w2_ref[...],
                      preferred_element_type=jnp.float32) + o_b2_ref[...])  # [TT*BB, Vp]
    pred_ref[0] = logits                  # lane-dense (Vp % 128 == 0) unmasked store


def _vmem_limit_bytes():
    """~85% of physical per-core VMEM (v5e/v6e 128MiB -> ~108MiB, v7x 64MiB -> ~54MiB),
    leaving headroom for compiler-internal scratch and semaphores."""
    cap = 128 * 1024 * 1024
    try:
        info = pltpu.get_tpu_info()
        cap = int(getattr(info, "vmem_capacity_bytes", cap) or cap)
    except Exception:
        pass
    return max(32 * 1024 * 1024, min(int(cap * 0.85), 112 * 1024 * 1024))


def make_params(key, vocab_size, E, H, L, S, B):
    assert E == H, "model's masked_select/view requires embedding_dim == hidden_state_size"
    ks = jax.random.split(key, 18)

    def rnd(k, shape, scale=0.1):
        return jax.random.normal(k, shape, dtype=jnp.float32) * scale

    return dict(
        emb_table=rnd(ks[0], (vocab_size, E), 1.0),
        h0=rnd(ks[1], (L, B, H), 1.0),             # nn.Parameter(randn) initial h
        c0=rnd(ks[2], (L, B, H), 1.0),             # nn.Parameter(randn) initial c
        st_w1=rnd(ks[3], (E + H, H)),
        st_b1=rnd(ks[4], (1, H)),
        st_w2=rnd(ks[5], (H, E)),
        st_b2=rnd(ks[6], (1, E)),
        w_ih=rnd(ks[7], (L, H, 4 * H)),            # torch gate order (i, f, g, o)
        w_hh=rnd(ks[8], (L, H, 4 * H)),
        b_lstm=rnd(ks[9], (L, 1, 4 * H)),          # b_ih + b_hh folded
        g_w=rnd(ks[10], (2 * H, 1)),
        g_b=rnd(ks[11], (1, 1)),
        v_w=rnd(ks[12], (2 * H, H)),
        v_b=rnd(ks[13], (1, H)),
        o_w1=rnd(ks[14], (H, H)),
        o_b1=rnd(ks[15], (1, H)),
        o_w2=rnd(ks[16], (H, vocab_size)),
        o_b2=rnd(ks[17], (1, vocab_size)),
    )


def scope_lm_forward(params, tokens, identifier_scope_mask, is_identifier, update_mask,
                     lengths, *, time_block=8, num_batch_chunks=1,
                     use_bf16_matmul=True, bf16_recurrent=False):
    """Sizing guidance (per perf review):
      v5e : 1 batch chunk; pick time_block so time_block*B >= 128 rows for the output MLP.
      v6e : 1 batch chunk; time_block*B >= 256 rows (2x256 MXU).
      v7x : num_batch_chunks=2 (one per TensorCore) only if B/2 >= ~128 rows; else 1 chunk.
    use_bf16_matmul: bf16 MXU operands for the feed-forward matmuls (f32 accumulation).
    bf16_recurrent : additionally bf16 for the LSTM / scope-update matmuls that feed the
                     recurrent state (off by default: error compounds over the sequence)."""
    B, T = tokens.shape
    E = params["emb_table"].shape[1]
    L, _, H = params["h0"].shape
    S = identifier_scope_mask.shape[2]
    V = params["o_w2"].shape[1]
    f32 = jnp.float32
    assert E == H

    nb = num_batch_chunks
    assert B % nb == 0
    BB = B // nb
    assert BB == B or BB % 8 == 0, "batch chunk must be the full batch or a multiple of 8"

    TT = time_block
    assert (TT * BB) % 8 == 0
    T_pad = pl.cdiv(T, TT) * TT
    nt = T_pad // TT
    Sp = pl.cdiv(S, 8) * 8                 # pad stack slots -> in-kernel reshapes are free views
    Vp = pl.cdiv(V, 128) * 128             # lane-dense (unmasked) logits stores

    # --- glue: embedding gather, time-major (fused XLA gather).
    emb_t = params["emb_table"][tokens.T]                                   # [T, B, E]

    # --- pack per-step side inputs into ONE array: [smask | is_ident | umask]
    smask_t = jnp.transpose(identifier_scope_mask.astype(f32), (1, 0, 2))   # [T, B, S]
    ident_t = is_identifier.astype(f32).T[:, :, None]                       # [T, B, 1]
    umask_t = jnp.transpose(update_mask.astype(f32), (1, 0, 2))             # [T, B, S]
    if Sp != S:
        zpad = ((0, 0), (0, 0), (0, Sp - S))
        smask_t = jnp.pad(smask_t, zpad)   # padded slots are never selected
        umask_t = jnp.pad(umask_t, zpad)   # and never force-cleared
    side_t = jnp.concatenate([smask_t, ident_t, umask_t], axis=2)           # [T, B, 2Sp+1]
    pad = T_pad - T
    if pad:
        emb_t = jnp.pad(emb_t, ((0, pad), (0, 0), (0, 0)))
        side_t = jnp.pad(side_t, ((0, pad), (0, 0), (0, 0)))

    # --- weight prep (constant-folded under jit): split / reorder / fuse / pad
    st_w1s = params["st_w1"][:H]            # scope half of scope_transformer layer 1
    st_w1e = params["st_w1"][H:]            # embedding half

    def ifog(w):                            # torch LSTM columns (i,f,g,o) -> (i,f,o,g)
        return jnp.concatenate(
            [w[..., :2 * H], w[..., 3 * H:4 * H], w[..., 2 * H:3 * H]], axis=-1)

    w_ih = ifog(params["w_ih"])
    w_hh = ifog(params["w_hh"])
    b_lstm = ifog(params["b_lstm"])
    su_sw = jnp.concatenate([params["v_w"][:H], params["g_w"][:H]], axis=1)  # [H, H+1] value|gate
    su_rw = jnp.concatenate([params["v_w"][H:], params["g_w"][H:]], axis=1)  # [H, H+1]
    su_b = jnp.concatenate([params["v_b"], params["g_b"]], axis=1)           # [1, H+1]
    o_w2 = jnp.pad(params["o_w2"], ((0, 0), (0, Vp - V)))
    o_b2 = jnp.pad(params["o_b2"], ((0, 0), (0, Vp - V)))

    md_ff = jnp.bfloat16 if use_bf16_matmul else jnp.float32
    md_rc = jnp.bfloat16 if (use_bf16_matmul and bf16_recurrent) else jnp.float32
    ff = lambda w: w.astype(md_ff)          # only MXU weight operands; biases / state stay f32
    rc = lambda w: w.astype(md_rc)
    weights = [
        ff(st_w1s), ff(st_w1e), params["st_b1"], ff(params["st_w2"]), params["st_b2"],
        rc(w_ih), rc(w_hh), b_lstm,
        rc(su_sw), rc(su_rw), su_b,
        ff(params["o_w1"]), params["o_b1"], ff(o_w2), o_b2,
    ]

    def step_spec(c):                       # time-major per-step blocks
        return pl.BlockSpec((TT, BB, c), lambda bi, ti: (ti, bi, 0))

    # TODO(synk): mark these grid-invariant weight specs pipeline_mode=pl.Buffered(1) (single
    # buffer) once verified on the target toolchain; default pipelining double-buffers them.
    def full_spec(arr):
        nd = arr.ndim
        return pl.BlockSpec(arr.shape, lambda bi, ti, _n=nd: (0,) * _n)

    state_spec = pl.BlockSpec((L, BB, H), lambda bi, ti: (0, bi, 0))

    in_specs = ([step_spec(E), step_spec(2 * Sp + 1), state_spec, state_spec]
                + [full_spec(w) for w in weights])

    out = pl.pallas_call(
        scope_lm_kernel,
        out_shape=jax.ShapeDtypeStruct((nb, T_pad * BB, Vp), jnp.float32),
        grid_spec=pltpu.PrefetchScalarGridSpec(
            num_scalar_prefetch=0,
            grid=(nb, nt),                  # batch chunks (parallel) x time blocks (arbitrary)
            in_specs=in_specs,
            out_specs=pl.BlockSpec((1, TT * BB, Vp), lambda bi, ti: (bi, ti, 0)),
            scratch_shapes=[
                pltpu.VMEM((L, BB, H), jnp.float32),     # h state (carried across time blocks)
                pltpu.VMEM((L, BB, H), jnp.float32),     # c state
                pltpu.VMEM((BB, Sp, H), jnp.float32),    # scope stack
                pltpu.VMEM((TT * BB, H), jnp.float32),   # rnn_out collected per time block
            ],
        ),
        compiler_params=pltpu.CompilerParams(
            dimension_semantics=("parallel", "arbitrary"),
            vmem_limit_bytes=_vmem_limit_bytes(),
        ),
    )(emb_t, side_t, params["h0"], params["c0"], *weights)

    # TODO(synk): logits leave the kernel time-major; at production vocab this reassembly is a
    # full extra HBM round trip and should move in-kernel (batch-major strided rnn_out collection
    # or pltpu.einshape) once those lowerings are verified. The length mask fuses into the same
    # XLA transpose/slice, so it costs no extra HBM traffic here.
    out = out.reshape(nb, T_pad, BB, Vp)
    out = jnp.transpose(out, (0, 2, 1, 3)).reshape(B, T_pad, Vp)[:, :T, :V]
    valid = (jnp.arange(T)[None, :] < lengths[:, None])[:, :, None]
    return jnp.where(valid, out, PAD_TOKEN)


def reference_forward(params, tokens, identifier_scope_mask, is_identifier, update_mask, lengths):
    """Pure-JAX reference mirroring the PyTorch forward (dense + validity mask)."""
    B, T = tokens.shape
    L, _, H = params["h0"].shape
    S = identifier_scope_mask.shape[2]
    emb = params["emb_table"][tokens]                      # [B, T, E]
    h, c = params["h0"], params["c0"]
    stack = jnp.zeros((B, S, H), jnp.float32)
    outs = []
    for t in range(T):
        e = emb[:, t]
        sm = identifier_scope_mask[:, t].astype(jnp.float32)
        now_scope = jnp.sum(sm[:, :, None] * stack, axis=1)
        st_in = jnp.concatenate([now_scope, e], axis=1)
        h1 = jax.nn.relu(st_in @ params["st_w1"] + params["st_b1"])
        scoped = h1 @ params["st_w2"] + params["st_b2"]
        x = jnp.where(is_identifier[:, t][:, None], scoped, e)
        new_h, new_c = [], []
        for l in range(L):
            gates = x @ params["w_ih"][l] + h[l] @ params["w_hh"][l] + params["b_lstm"][l]
            i_g = jax.nn.sigmoid(gates[:, :H]); f_g = jax.nn.sigmoid(gates[:, H:2 * H])
            g_g = jnp.tanh(gates[:, 2 * H:3 * H]); o_g = jax.nn.sigmoid(gates[:, 3 * H:])
            cn = f_g * c[l] + i_g * g_g
            hn = o_g * jnp.tanh(cn)
            new_h.append(hn); new_c.append(cn); x = hn
        h, c = jnp.stack(new_h), jnp.stack(new_c)
        rnn_out = x
        ui = jnp.concatenate([stack, jnp.broadcast_to(rnn_out[:, None, :], (B, S, H))], axis=2)
        gate = jax.nn.sigmoid(ui @ params["g_w"] + params["g_b"])
        val = jnp.tanh(ui @ params["v_w"] + params["v_b"])
        stack = stack * (1 - gate) + gate * val
        stack = jnp.where(update_mask[:, t][:, :, None], 0.0, stack)
        oh = jax.nn.relu(rnn_out @ params["o_w1"] + params["o_b1"])
        outs.append(oh @ params["o_w2"] + params["o_b2"])
    out = jnp.stack(outs, axis=1)
    valid = (jnp.arange(T)[None, :] < lengths[:, None])[:, :, None]
    return jnp.where(valid, out, PAD_TOKEN)


if __name__ == "__main__":
    # Small shapes consistent with the module (T=16 so the time-block grid has >1 step).
    VOCAB, E, H, L, S = 64, 32, 32, 2, 4
    B, T = 4, 16

    key = jax.random.PRNGKey(0)
    kp, k1, k2, k3, k4 = jax.random.split(key, 5)
    params = make_params(kp, VOCAB, E, H, L, S, B)

    tokens = jax.random.randint(k1, (B, T), 0, VOCAB, dtype=jnp.int32)
    slot_idx = jax.random.randint(k2, (B, T), 0, S, dtype=jnp.int32)
    identifier_scope_mask = (jnp.arange(S)[None, None, :] == slot_idx[:, :, None])  # one-hot bool
    is_identifier = jax.random.bernoulli(k3, 0.5, (B, T))
    update_mask = jax.random.bernoulli(k4, 0.3, (B, T, S))
    lengths = jnp.array([16, 13, 10, 7], dtype=jnp.int32)  # sorted desc (pack_padded_sequence)

    ref = jax.block_until_ready(
        reference_forward(params, tokens, identifier_scope_mask, is_identifier,
                          update_mask, lengths))

    # Pure f32 matmuls: tight semantic check of the kernel.
    fwd_f32 = jax.jit(functools.partial(scope_lm_forward, time_block=8, num_batch_chunks=1,
                                        use_bf16_matmul=False))
    out_f32 = jax.block_until_ready(
        fwd_f32(params, tokens, identifier_scope_mask, is_identifier, update_mask, lengths))
    assert out_f32.shape == (B, T, VOCAB), out_f32.shape
    d32 = float(jnp.max(jnp.abs(out_f32 - ref)))
    assert np.isfinite(d32) and d32 < 1e-2, f"f32 mismatch: max abs diff {d32}"

    # Default perf path: bf16 MXU operands on the feed-forward matmuls, f32 recurrent state.
    fwd = jax.jit(functools.partial(scope_lm_forward, time_block=8, num_batch_chunks=1))
    out = jax.block_until_ready(
        fwd(params, tokens, identifier_scope_mask, is_identifier, update_mask, lengths))
    dbf = float(jnp.max(jnp.abs(out - ref)))
    assert np.isfinite(dbf) and dbf < 5e-2, f"bf16 mismatch: max abs diff {dbf}"

    print("KERNEL_OK")
</pallas_src>

<mosaic_0001>
module attributes {stable_mosaic.version = 11 : i64} {
  func.func @scope_lm_kernel(%arg0: i32, %arg1: i32, %arg2: memref<8x4x32xf32, #tpu.memory_space<vmem>>, %arg3: memref<8x4x17xf32, #tpu.memory_space<vmem>>, %arg4: memref<2x4x32xf32, #tpu.memory_space<vmem>>, %arg5: memref<2x4x32xf32, #tpu.memory_space<vmem>>, %arg6: memref<32x32xf32, #tpu.memory_space<vmem>>, %arg7: memref<32x32xf32, #tpu.memory_space<vmem>>, %arg8: memref<1x32xf32, #tpu.memory_space<vmem>>, %arg9: memref<32x32xf32, #tpu.memory_space<vmem>>, %arg10: memref<1x32xf32, #tpu.memory_space<vmem>>, %arg11: memref<2x32x128xf32, #tpu.memory_space<vmem>>, %arg12: memref<2x32x128xf32, #tpu.memory_space<vmem>>, %arg13: memref<2x1x128xf32, #tpu.memory_space<vmem>>, %arg14: memref<32x33xf32, #tpu.memory_space<vmem>>, %arg15: memref<32x33xf32, #tpu.memory_space<vmem>>, %arg16: memref<1x33xf32, #tpu.memory_space<vmem>>, %arg17: memref<32x32xf32, #tpu.memory_space<vmem>>, %arg18: memref<1x32xf32, #tpu.memory_space<vmem>>, %arg19: memref<32x128xf32, #tpu.memory_space<vmem>>, %arg20: memref<1x128xf32, #tpu.memory_space<vmem>>, %arg21: memref<1x32x128xf32, #tpu.memory_space<vmem>>, %arg22: memref<2x4x32xf32, #tpu.memory_space<vmem>>, %arg23: memref<2x4x32xf32, #tpu.memory_space<vmem>>, %arg24: memref<4x8x32xf32, #tpu.memory_space<vmem>>, %arg25: memref<32x32xf32, #tpu.memory_space<vmem>>) attributes {dimension_semantics = [#tpu.dimension_semantics<parallel>, #tpu.dimension_semantics<arbitrary>], iteration_bounds = array<i64: 1, 2>, scalar_prefetch = 0 : i64, scratch_operands = 4 : i64, tpu.core_type = #tpu.core_type<tc>, window_params = [{transform_indices = @transform_0, window_bounds = array<i64: 8, 4, 32>}, {transform_indices = @transform_1, window_bounds = array<i64: 8, 4, 17>}, {transform_indices = @transform_2, window_bounds = array<i64: 2, 4, 32>}, {transform_indices = @transform_3, window_bounds = array<i64: 2, 4, 32>}, {pipeline_mode = #tpu.pipeline_mode<synchronous>, transform_indices = @transform_4, window_bounds = array<i64: 32, 32>}, {pipeline_mode = #tpu.pipeline_mode<synchronous>, transform_indices = @transform_5, window_bounds = array<i64: 32, 32>}, {pipeline_mode = #tpu.pipeline_mode<synchronous>, transform_indices = @transform_6, window_bounds = array<i64: 1, 32>}, {pipeline_mode = #tpu.pipeline_mode<synchronous>, transform_indices = @transform_7, window_bounds = array<i64: 32, 32>}, {pipeline_mode = #tpu.pipeline_mode<synchronous>, transform_indices = @transform_8, window_bounds = array<i64: 1, 32>}, {pipeline_mode = #tpu.pipeline_mode<synchronous>, transform_indices = @transform_9, window_bounds = array<i64: 2, 32, 128>}, {pipeline_mode = #tpu.pipeline_mode<synchronous>, transform_indices = @transform_10, window_bounds = array<i64: 2, 32, 128>}, {pipeline_mode = #tpu.pipeline_mode<synchronous>, transform_indices = @transform_11, window_bounds = array<i64: 2, 1, 128>}, {pipeline_mode = #tpu.pipeline_mode<synchronous>, transform_indices = @transform_12, window_bounds = array<i64: 32, 33>}, {pipeline_mode = #tpu.pipeline_mode<synchronous>, transform_indices = @transform_13, window_bounds = array<i64: 32, 33>}, {pipeline_mode = #tpu.pipeline_mode<synchronous>, transform_indices = @transform_14, window_bounds = array<i64: 1, 33>}, {pipeline_mode = #tpu.pipeline_mode<synchronous>, transform_indices = @transform_15, window_bounds = array<i64: 32, 32>}, {pipeline_mode = #tpu.pipeline_mode<synchronous>, transform_indices = @transform_16, window_bounds = array<i64: 1, 32>}, {pipeline_mode = #tpu.pipeline_mode<synchronous>, transform_indices = @transform_17, window_bounds = array<i64: 32, 128>}, {pipeline_mode = #tpu.pipeline_mode<synchronous>, transform_indices = @transform_18, window_bounds = array<i64: 1, 128>}, {transform_indices = @transform_19, window_bounds = array<i64: 1, 32, 128>}]} {
    %c0_i32 = arith.constant 0 : i32
    %0 = arith.cmpi eq, %arg1, %c0_i32 : i32
    %1 = arith.extui %0 : i1 to i32
    %c0_i32_0 = arith.constant 0 : i32
    %2 = arith.cmpi ne, %1, %c0_i32_0 : i32
    scf.if %2 {
      %c0_610 = arith.constant 0 : index
      %c0_611 = arith.constant 0 : index
      %c0_612 = arith.constant 0 : index
      %1107 = vector.load %arg4[%c0_610, %c0_611, %c0_612] : memref<2x4x32xf32, #tpu.memory_space<vmem>>, vector<2x4x32xf32>
      %c0_613 = arith.constant 0 : index
      %c0_614 = arith.constant 0 : index
      %c0_615 = arith.constant 0 : index
      %1108 = vector.load %arg22[%c0_613, %c0_614, %c0_615] : memref<2x4x32xf32, #tpu.memory_space<vmem>>, vector<2x4x32xf32>
      tpu.vector_store %arg22[%c0_613, %c0_614, %c0_615], %1107 {strides = array<i32>} : memref<2x4x32xf32, #tpu.memory_space<vmem>>, vector<2x4x32xf32>,
      %c0_616 = arith.constant 0 : index
      %c0_617 = arith.constant 0 : index
      %c0_618 = arith.constant 0 : index
      %1109 = vector.load %arg5[%c0_616, %c0_617, %c0_618] : memref<2x4x32xf32, #tpu.memory_space<vmem>>, vector<2x4x32xf32>
      %c0_619 = arith.constant 0 : index
      %c0_620 = arith.constant 0 : index
      %c0_621 = arith.constant 0 : index
      %1110 = vector.load %arg23[%c0_619, %c0_620, %c0_621] : memref<2x4x32xf32, #tpu.memory_space<vmem>>, vector<2x4x32xf32>
      tpu.vector_store %arg23[%c0_619, %c0_620, %c0_621], %1109 {strides = array<i32>} : memref<2x4x32xf32, #tpu.memory_space<vmem>>, vector<2x4x32xf32>,
      %cst_622 = arith.constant 0.000000e+00 : f32
      %1111 = vector.broadcast %cst_622 : f32 to vector<4x8x32xf32>
      %c0_623 = arith.constant 0 : index
      %c0_624 = arith.constant 0 : index
      %c0_625 = arith.constant 0 : index
      %1112 = vector.load %arg24[%c0_623, %c0_624, %c0_625] : memref<4x8x32xf32, #tpu.memory_space<vmem>>, vector<4x8x32xf32>
      tpu.vector_store %arg24[%c0_623, %c0_624, %c0_625], %1111 {strides = array<i32>} : memref<4x8x32xf32, #tpu.memory_space<vmem>>, vector<4x8x32xf32>,
    } else {
    }
    %c0 = arith.constant 0 : index
    %c0_1 = arith.constant 0 : index
    %3 = vector.load %arg6[%c0, %c0_1] : memref<32x32xf32, #tpu.memory_space<vmem>>, vector<32x32xf32>
    %c0_2 = arith.constant 0 : index
    %c0_3 = arith.constant 0 : index
    %4 = vector.load %arg7[%c0_2, %c0_3] : memref<32x32xf32, #tpu.memory_space<vmem>>, vector<32x32xf32>
    %c0_4 = arith.constant 0 : index
    %c0_5 = arith.constant 0 : index
    %5 = vector.load %arg8[%c0_4, %c0_5] : memref<1x32xf32, #tpu.memory_space<vmem>>, vector<1x32xf32>
    %c0_6 = arith.constant 0 : index
    %c0_7 = arith.constant 0 : index
    %6 = vector.load %arg9[%c0_6, %c0_7] : memref<32x32xf32, #tpu.memory_space<vmem>>, vector<32x32xf32>
    %c0_8 = arith.constant 0 : index
    %c0_9 = arith.constant 0 : index
    %7 = vector.load %arg10[%c0_8, %c0_9] : memref<1x32xf32, #tpu.memory_space<vmem>>, vector<1x32xf32>
    %c0_10 = arith.constant 0 : index
    %c0_11 = arith.constant 0 : index
    %8 = vector.load %arg14[%c0_10, %c0_11] : memref<32x33xf32, #tpu.memory_space<vmem>>, vector<32x33xf32>
    %c0_12 = arith.constant 0 : index
    %c0_13 = arith.constant 0 : index
    %9 = vector.load %arg15[%c0_12, %c0_13] : memref<32x33xf32, #tpu.memory_space<vmem>>, vector<32x33xf32>
    %c0_14 = arith.constant 0 : index
    %c0_15 = arith.constant 0 : index
    %10 = vector.load %arg16[%c0_14, %c0_15] : memref<1x33xf32, #tpu.memory_space<vmem>>, vector<1x33xf32>
    %c0_16 = arith.constant 0 : index
    %c0_17 = arith.constant 0 : index
    %c0_18 = arith.constant 0 : index
    %11 = vector.load %arg2[%c0_16, %c0_17, %c0_18] : memref<8x4x32xf32, #tpu.memory_space<vmem>>, vector<1x4x32xf32>
    %12 = vector.shape_cast %11 : vector<1x4x32xf32> to vector<4x32xf32>
    %c0_19 = arith.constant 0 : index
    %c0_20 = arith.constant 0 : index
    %c0_21 = arith.constant 0 : index
    %13 = vector.load %arg3[%c0_19, %c0_20, %c0_21] : memref<8x4x17xf32, #tpu.memory_space<vmem>>, vector<1x4x17xf32>
    %14 = vector.shape_cast %13 : vector<1x4x17xf32> to vector<4x17xf32>
    %15 = vector.extract_strided_slice %14 {offsets = [0, 0], sizes = [4, 8], strides = [1, 1]} : vector<4x17xf32> to vector<4x8xf32>
    %16 = vector.extract_strided_slice %14 {offsets = [0, 8], sizes = [4, 1], strides = [1, 1]} : vector<4x17xf32> to vector<4x1xf32>
    %17 = vector.extract_strided_slice %14 {offsets = [0, 9], sizes = [4, 8], strides = [1, 1]} : vector<4x17xf32> to vector<4x8xf32>
    %c0_22 = arith.constant 0 : index
    %c0_23 = arith.constant 0 : index
    %c0_24 = arith.constant 0 : index
    %18 = vector.load %arg24[%c0_22, %c0_23, %c0_24] : memref<4x8x32xf32, #tpu.memory_space<vmem>>, vector<4x8x32xf32>
    %19 = vector.shape_cast %15 : vector<4x8xf32> to vector<4x8x1xf32>
    %20 = vector.broadcast %19 : vector<4x8x1xf32> to vector<4x8x32xf32>
    %21 = arith.mulf %20, %18 : vector<4x8x32xf32>
    %cst = arith.constant dense<0.000000e+00> : vector<4x32xf32>
    %22 = vector.multi_reduction <add>, %21, %cst [1] : vector<4x8x32xf32> to vector<4x32xf32>
    %cst_25 = arith.constant dense<0.000000e+00> : vector<4x32xf32>
    %23 = tpu.matmul %22, %3, %cst_25 {dimension_numbers = #tpu.dot_dimension_numbers<[1], [0], [0], [1], [0, 0, 1, 1], [], []>} : vector<4x32xf32>, vector<32x32xf32>, vector<4x32xf32> -> vector<4x32xf32>
    %cst_26 = arith.constant dense<0.000000e+00> : vector<4x32xf32>
    %24 = tpu.matmul %12, %4, %cst_26 {dimension_numbers = #tpu.dot_dimension_numbers<[1], [0], [0], [1], [0, 0, 1, 1], [], []>} : vector<4x32xf32>, vector<32x32xf32>, vector<4x32xf32> -> vector<4x32xf32>
    %25 = arith.addf %23, %24 : vector<4x32xf32>
    %26 = vector.broadcast %5 : vector<1x32xf32> to vector<4x32xf32>
    %27 = arith.addf %25, %26 : vector<4x32xf32>
    %cst_27 = arith.constant 0.000000e+00 : f32
    %28 = vector.broadcast %cst_27 : f32 to vector<4x32xf32>
    %29 = arith.maximumf %27, %28 : vector<4x32xf32>
    %cst_28 = arith.constant dense<0.000000e+00> : vector<4x32xf32>
    %30 = tpu.matmul %29, %6, %cst_28 {dimension_numbers = #tpu.dot_dimension_numbers<[1], [0], [0], [1], [0, 0, 1, 1], [], []>} : vector<4x32xf32>, vector<32x32xf32>, vector<4x32xf32> -> vector<4x32xf32>
    %31 = vector.broadcast %7 : vector<1x32xf32> to vector<4x32xf32>
    %32 = arith.addf %30, %31 : vector<4x32xf32>
    %cst_29 = arith.constant 5.000000e-01 : f32
    %33 = vector.broadcast %cst_29 : f32 to vector<4x1xf32>
    %34 = arith.cmpf ogt, %16, %33 : vector<4x1xf32>
    %35 = vector.shape_cast %34 : vector<4x1xi1> to vector<4x1xi1>
    %36 = vector.broadcast %35 : vector<4x1xi1> to vector<4x32xi1>
    %37 = arith.select %36, %32, %12 : vector<4x32xi1>, vector<4x32xf32>
    %c0_30 = arith.constant 0 : index
    %c0_31 = arith.constant 0 : index
    %c0_32 = arith.constant 0 : index
    %38 = vector.load %arg22[%c0_30, %c0_31, %c0_32] : memref<2x4x32xf32, #tpu.memory_space<vmem>>, vector<1x4x32xf32>
    %39 = vector.shape_cast %38 : vector<1x4x32xf32> to vector<4x32xf32>
    %c0_33 = arith.constant 0 : index
    %c0_34 = arith.constant 0 : index
    %c0_35 = arith.constant 0 : index
    %40 = vector.load %arg23[%c0_33, %c0_34, %c0_35] : memref<2x4x32xf32, #tpu.memory_space<vmem>>, vector<1x4x32xf32>
    %41 = vector.shape_cast %40 : vector<1x4x32xf32> to vector<4x32xf32>
    %c0_36 = arith.constant 0 : index
    %c0_37 = arith.constant 0 : index
    %c0_38 = arith.constant 0 : index
    %42 = vector.load %arg11[%c0_36, %c0_37, %c0_38] : memref<2x32x128xf32, #tpu.memory_space<vmem>>, vector<1x32x128xf32>
    %43 = vector.shape_cast %42 : vector<1x32x128xf32> to vector<32x128xf32>
    %cst_39 = arith.constant dense<0.000000e+00> : vector<4x128xf32>
    %44 = tpu.matmul %37, %43, %cst_39 {dimension_numbers = #tpu.dot_dimension_numbers<[1], [0], [0], [1], [0, 0, 1, 1], [], []>} : vector<4x32xf32>, vector<32x128xf32>, vector<4x128xf32> -> vector<4x128xf32>
    %c0_40 = arith.constant 0 : index
    %c0_41 = arith.constant 0 : index
    %c0_42 = arith.constant 0 : index
    %45 = vector.load %arg12[%c0_40, %c0_41, %c0_42] : memref<2x32x128xf32, #tpu.memory_space<vmem>>, vector<1x32x128xf32>
    %46 = vector.shape_cast %45 : vector<1x32x128xf32> to vector<32x128xf32>
    %cst_43 = arith.constant dense<0.000000e+00> : vector<4x128xf32>
    %47 = tpu.matmul %39, %46, %cst_43 {dimension_numbers = #tpu.dot_dimension_numbers<[1], [0], [0], [1], [0, 0, 1, 1], [], []>} : vector<4x32xf32>, vector<32x128xf32>, vector<4x128xf32> -> vector<4x128xf32>
    %48 = arith.addf %44, %47 : vector<4x128xf32>
    %c0_44 = arith.constant 0 : index
    %c0_45 = arith.constant 0 : index
    %c0_46 = arith.constant 0 : index
    %49 = vector.load %arg13[%c0_44, %c0_45, %c0_46] : memref<2x1x128xf32, #tpu.memory_space<vmem>>, vector<1x1x128xf32>
    %50 = vector.shape_cast %49 : vector<1x1x128xf32> to vector<1x128xf32>
    %51 = vector.broadcast %50 : vector<1x128xf32> to vector<4x128xf32>
    %52 = arith.addf %48, %51 : vector<4x128xf32>
    %53 = vector.extract_strided_slice %52 {offsets = [0, 0], sizes = [4, 96], strides = [1, 1]} : vector<4x128xf32> to vector<4x96xf32>
    %54 = arith.negf %53 : vector<4x96xf32>
    %55 = math.exp %54 : vector<4x96xf32>
    %cst_47 = arith.constant 1.000000e+00 : f32
    %56 = vector.broadcast %cst_47 : f32 to vector<4x96xf32>
    %57 = arith.addf %56, %55 : vector<4x96xf32>
    %58 = arith.divf %56, %57 : vector<4x96xf32>
    %59 = vector.extract_strided_slice %52 {offsets = [0, 96], sizes = [4, 32], strides = [1, 1]} : vector<4x128xf32> to vector<4x32xf32>
    %60 = math.tanh %59 : vector<4x32xf32>
    %61 = vector.extract_strided_slice %58 {offsets = [0, 0], sizes = [4, 32], strides = [1, 1]} : vector<4x96xf32> to vector<4x32xf32>
    %62 = vector.extract_strided_slice %58 {offsets = [0, 32], sizes = [4, 32], strides = [1, 1]} : vector<4x96xf32> to vector<4x32xf32>
    %63 = vector.extract_strided_slice %58 {offsets = [0, 64], sizes = [4, 32], strides = [1, 1]} : vector<4x96xf32> to vector<4x32xf32>
    %64 = arith.mulf %62, %41 : vector<4x32xf32>
    %65 = arith.mulf %61, %60 : vector<4x32xf32>
    %66 = arith.addf %64, %65 : vector<4x32xf32>
    %67 = math.tanh %66 : vector<4x32xf32>
    %68 = arith.mulf %63, %67 : vector<4x32xf32>
    %c0_48 = arith.constant 0 : index
    %c0_49 = arith.constant 0 : index
    %c0_50 = arith.constant 0 : index
    %69 = vector.load %arg22[%c0_48, %c0_49, %c0_50] : memref<2x4x32xf32, #tpu.memory_space<vmem>>, vector<1x4x32xf32>
    %70 = vector.shape_cast %69 : vector<1x4x32xf32> to vector<4x32xf32>
    %71 = vector.shape_cast %68 : vector<4x32xf32> to vector<1x4x32xf32>
    tpu.vector_store %arg22[%c0_48, %c0_49, %c0_50], %71 {strides = array<i32>} : memref<2x4x32xf32, #tpu.memory_space<vmem>>, vector<1x4x32xf32>,
    %c0_51 = arith.constant 0 : index
    %c0_52 = arith.constant 0 : index
    %c0_53 = arith.constant 0 : index
    %72 = vector.load %arg23[%c0_51, %c0_52, %c0_53] : memref<2x4x32xf32, #tpu.memory_space<vmem>>, vector<1x4x32xf32>
    %73 = vector.shape_cast %72 : vector<1x4x32xf32> to vector<4x32xf32>
    %74 = vector.shape_cast %66 : vector<4x32xf32> to vector<1x4x32xf32>
    tpu.vector_store %arg23[%c0_51, %c0_52, %c0_53], %74 {strides = array<i32>} : memref<2x4x32xf32, #tpu.memory_space<vmem>>, vector<1x4x32xf32>,
    %c1 = arith.constant 1 : index
    %c0_54 = arith.constant 0 : index
    %c0_55 = arith.constant 0 : index
    %75 = vector.load %arg22[%c1, %c0_54, %c0_55] : memref<2x4x32xf32, #tpu.memory_space<vmem>>, vector<1x4x32xf32>
    %76 = vector.shape_cast %75 : vector<1x4x32xf32> to vector<4x32xf32>
    %c1_56 = arith.constant 1 : index
    %c0_57 = arith.constant 0 : index
    %c0_58 = arith.constant 0 : index
    %77 = vector.load %arg23[%c1_56, %c0_57, %c0_58] : memref<2x4x32xf32, #tpu.memory_space<vmem>>, vector<1x4x32xf32>
    %78 = vector.shape_cast %77 : vector<1x4x32xf32> to vector<4x32xf32>
    %c1_59 = arith.constant 1 : index
    %c0_60 = arith.constant 0 : index
    %c0_61 = arith.constant 0 : index
    %79 = vector.load %arg11[%c1_59, %c0_60, %c0_61] : memref<2x32x128xf32, #tpu.memory_space<vmem>>, vector<1x32x128xf32>
    %80 = vector.shape_cast %79 : vector<1x32x128xf32> to vector<32x128xf32>
    %cst_62 = arith.constant dense<0.000000e+00> : vector<4x128xf32>
    %81 = tpu.matmul %68, %80, %cst_62 {dimension_numbers = #tpu.dot_dimension_numbers<[1], [0], [0], [1], [0, 0, 1, 1], [], []>} : vector<4x32xf32>, vector<32x128xf32>, vector<4x128xf32> -> vector<4x128xf32>
    %c1_63 = arith.constant 1 : index
    %c0_64 = arith.constant 0 : index
    %c0_65 = arith.constant 0 : index
    %82 = vector.load %arg12[%c1_63, %c0_64, %c0_65] : memref<2x32x128xf32, #tpu.memory_space<vmem>>, vector<1x32x128xf32>
    %83 = vector.shape_cast %82 : vector<1x32x128xf32> to vector<32x128xf32>
    %cst_66 = arith.constant dense<0.000000e+00> : vector<4x128xf32>
    %84 = tpu.matmul %76, %83, %cst_66 {dimension_numbers = #tpu.dot_dimension_numbers<[1], [0], [0], [1], [0, 0, 1, 1], [], []>} : vector<4x32xf32>, vector<32x128xf32>, vector<4x128xf32> -> vector<4x128xf32>
    %85 = arith.addf %81, %84 : vector<4x128xf32>
    %c1_67 = arith.constant 1 : index
    %c0_68 = arith.constant 0 : index
    %c0_69 = arith.constant 0 : index
    %86 = vector.load %arg13[%c1_67, %c0_68, %c0_69] : memref<2x1x128xf32, #tpu.memory_space<vmem>>, vector<1x1x128xf32>
    %87 = vector.shape_cast %86 : vector<1x1x128xf32> to vector<1x128xf32>
    %88 = vector.broadcast %87 : vector<1x128xf32> to vector<4x128xf32>
    %89 = arith.addf %85, %88 : vector<4x128xf32>
    %90 = vector.extract_strided_slice %89 {offsets = [0, 0], sizes = [4, 96], strides = [1, 1]} : vector<4x128xf32> to vector<4x96xf32>
    %91 = arith.negf %90 : vector<4x96xf32>
    %92 = math.exp %91 : vector<4x96xf32>
    %cst_70 = arith.constant 1.000000e+00 : f32
    %93 = vector.broadcast %cst_70 : f32 to vector<4x96xf32>
    %94 = arith.addf %93, %92 : vector<4x96xf32>
    %95 = arith.divf %93, %94 : vector<4x96xf32>
    %96 = vector.extract_strided_slice %89 {offsets = [0, 96], sizes = [4, 32], strides = [1, 1]} : vector<4x128xf32> to vector<4x32xf32>
    %97 = math.tanh %96 : vector<4x32xf32>
    %98 = vector.extract_strided_slice %95 {offsets = [0, 0], sizes = [4, 32], strides = [1, 1]} : vector<4x96xf32> to vector<4x32xf32>
    %99 = vector.extract_strided_slice %95 {offsets = [0, 32], sizes = [4, 32], strides = [1, 1]} : vector<4x96xf32> to vector<4x32xf32>
    %100 = vector.extract_strided_slice %95 {offsets = [0, 64], sizes = [4, 32], strides = [1, 1]} : vector<4x96xf32> to vector<4x32xf32>
    %101 = arith.mulf %99, %78 : vector<4x32xf32>
    %102 = arith.mulf %98, %97 : vector<4x32xf32>
    %103 = arith.addf %101, %102 : vector<4x32xf32>
    %104 = math.tanh %103 : vector<4x32xf32>
    %105 = arith.mulf %100, %104 : vector<4x32xf32>
    %c1_71 = arith.constant 1 : index
    %c0_72 = arith.constant 0 : index
    %c0_73 = arith.constant 0 : index
    %106 = vector.load %arg22[%c1_71, %c0_72, %c0_73] : memref<2x4x32xf32, #tpu.memory_space<vmem>>, vector<1x4x32xf32>
    %107 = vector.shape_cast %106 : vector<1x4x32xf32> to vector<4x32xf32>
    %108 = vector.shape_cast %105 : vector<4x32xf32> to vector<1x4x32xf32>
    tpu.vector_store %arg22[%c1_71, %c0_72, %c0_73], %108 {strides = array<i32>} : memref<2x4x32xf32, #tpu.memory_space<vmem>>, vector<1x4x32xf32>,
    %c1_74 = arith.constant 1 : index
    %c0_75 = arith.constant 0 : index
    %c0_76 = arith.constant 0 : index
    %109 = vector.load %arg23[%c1_74, %c0_75, %c0_76] : memref<2x4x32xf32, #tpu.memory_space<vmem>>, vector<1x4x32xf32>
    %110 = vector.shape_cast %109 : vector<1x4x32xf32> to vector<4x32xf32>
    %111 = vector.shape_cast %103 : vector<4x32xf32> to vector<1x4x32xf32>
    tpu.vector_store %arg23[%c1_74, %c0_75, %c0_76], %111 {strides = array<i32>} : memref<2x4x32xf32, #tpu.memory_space<vmem>>, vector<1x4x32xf32>,
    %112 = vector.shape_cast %18 : vector<4x8x32xf32> to vector<32x32xf32>
    %cst_77 = arith.constant dense<0.000000e+00> : vector<32x33xf32>
    %113 = tpu.matmul %112, %8, %cst_77 {dimension_numbers = #tpu.dot_dimension_numbers<[1], [0], [0], [1], [0, 0, 1, 1], [], []>} : vector<32x32xf32>, vector<32x33xf32>, vector<32x33xf32> -> vector<32x33xf32>
    %114 = vector.shape_cast %113 : vector<32x33xf32> to vector<4x8x33xf32>
    %cst_78 = arith.constant dense<0.000000e+00> : vector<4x33xf32>
    %115 = tpu.matmul %105, %9, %cst_78 {dimension_numbers = #tpu.dot_dimension_numbers<[1], [0], [0], [1], [0, 0, 1, 1], [], []>} : vector<4x32xf32>, vector<32x33xf32>, vector<4x33xf32> -> vector<4x33xf32>
    %116 = vector.shape_cast %115 : vector<4x33xf32> to vector<4x1x33xf32>
    %117 = vector.broadcast %116 : vector<4x1x33xf32> to vector<4x8x33xf32>
    %118 = arith.addf %114, %117 : vector<4x8x33xf32>
    %119 = vector.shape_cast %10 : vector<1x33xf32> to vector<1x1x33xf32>
    %120 = vector.broadcast %119 : vector<1x1x33xf32> to vector<4x8x33xf32>
    %121 = arith.addf %118, %120 : vector<4x8x33xf32>
    %122 = vector.extract_strided_slice %121 {offsets = [0, 0, 0], sizes = [4, 8, 32], strides = [1, 1, 1]} : vector<4x8x33xf32> to vector<4x8x32xf32>
    %123 = math.tanh %122 : vector<4x8x32xf32>
    %124 = vector.extract_strided_slice %121 {offsets = [0, 0, 32], sizes = [4, 8, 1], strides = [1, 1, 1]} : vector<4x8x33xf32> to vector<4x8x1xf32>
    %125 = arith.negf %124 : vector<4x8x1xf32>
    %126 = math.exp %125 : vector<4x8x1xf32>
    %cst_79 = arith.constant 1.000000e+00 : f32
    %127 = vector.broadcast %cst_79 : f32 to vector<4x8x1xf32>
    %128 = arith.addf %127, %126 : vector<4x8x1xf32>
    %129 = arith.divf %127, %128 : vector<4x8x1xf32>
    %cst_80 = arith.constant 1.000000e+00 : f32
    %130 = vector.broadcast %cst_80 : f32 to vector<4x8x1xf32>
    %131 = arith.subf %130, %129 : vector<4x8x1xf32>
    %132 = vector.broadcast %131 : vector<4x8x1xf32> to vector<4x8x32xf32>
    %133 = arith.mulf %18, %132 : vector<4x8x32xf32>
    %134 = vector.broadcast %129 : vector<4x8x1xf32> to vector<4x8x32xf32>
    %135 = arith.mulf %134, %123 : vector<4x8x32xf32>
    %136 = arith.addf %133, %135 : vector<4x8x32xf32>
    %137 = vector.shape_cast %17 : vector<4x8xf32> to vector<4x8x1xf32>
    %cst_81 = arith.constant 5.000000e-01 : f32
    %138 = vector.broadcast %cst_81 : f32 to vector<4x8x1xf32>
    %139 = arith.cmpf ogt, %137, %138 : vector<4x8x1xf32>
    %cst_82 = arith.constant 0.000000e+00 : f32
    %140 = vector.shape_cast %139 : vector<4x8x1xi1> to vector<4x8x1xi1>
    %141 = vector.broadcast %140 : vector<4x8x1xi1> to vector<4x8x32xi1>
    %142 = vector.broadcast %cst_82 : f32 to vector<4x8x32xf32>
    %143 = arith.select %141, %142, %136 : vector<4x8x32xi1>, vector<4x8x32xf32>
    %c0_83 = arith.constant 0 : index
    %c0_84 = arith.constant 0 : index
    %c0_85 = arith.constant 0 : index
    %144 = vector.load %arg24[%c0_83, %c0_84, %c0_85] : memref<4x8x32xf32, #tpu.memory_space<vmem>>, vector<4x8x32xf32>
    tpu.vector_store %arg24[%c0_83, %c0_84, %c0_85], %143 {strides = array<i32>} : memref<4x8x32xf32, #tpu.memory_space<vmem>>, vector<4x8x32xf32>,
    %c0_86 = arith.constant 0 : index
    %c0_87 = arith.constant 0 : index
    %145 = vector.load %arg25[%c0_86, %c0_87] : memref<32x32xf32, #tpu.memory_space<vmem>>, vector<4x32xf32>
    tpu.vector_store %arg25[%c0_86, %c0_87], %105 {strides = array<i32>} : memref<32x32xf32, #tpu.memory_space<vmem>>, vector<4x32xf32>,
    %c1_88 = arith.constant 1 : index
    %c0_89 = arith.constant 0 : index
    %c0_90 = arith.constant 0 : index
    %146 = vector.load %arg2[%c1_88, %c0_89, %c0_90] : memref<8x4x32xf32, #tpu.memory_space<vmem>>, vector<1x4x32xf32>
    %147 = vector.shape_cast %146 : vector<1x4x32xf32> to vector<4x32xf32>
    %c1_91 = arith.constant 1 : index
    %c0_92 = arith.constant 0 : index
    %c0_93 = arith.constant 0 : index
    %148 = vector.load %arg3[%c1_91, %c0_92, %c0_93] : memref<8x4x17xf32, #tpu.memory_space<vmem>>, vector<1x4x17xf32>
    %149 = vector.shape_cast %148 : vector<1x4x17xf32> to vector<4x17xf32>
    %150 = vector.extract_strided_slice %149 {offsets = [0, 0], sizes = [4, 8], strides = [1, 1]} : vector<4x17xf32> to vector<4x8xf32>
    %151 = vector.extract_strided_slice %149 {offsets = [0, 8], sizes = [4, 1], strides = [1, 1]} : vector<4x17xf32> to vector<4x1xf32>
    %152 = vector.extract_strided_slice %149 {offsets = [0, 9], sizes = [4, 8], strides = [1, 1]} : vector<4x17xf32> to vector<4x8xf32>
    %c0_94 = arith.constant 0 : index
    %c0_95 = arith.constant 0 : index
    %c0_96 = arith.constant 0 : index
    %153 = vector.load %arg24[%c0_94, %c0_95, %c0_96] : memref<4x8x32xf32, #tpu.memory_space<vmem>>, vector<4x8x32xf32>
    %154 = vector.shape_cast %150 : vector<4x8xf32> to vector<4x8x1xf32>
    %155 = vector.broadcast %154 : vector<4x8x1xf32> to vector<4x8x32xf32>
    %156 = arith.mulf %155, %153 : vector<4x8x32xf32>
    %cst_97 = arith.constant dense<0.000000e+00> : vector<4x32xf32>
    %157 = vector.multi_reduction <add>, %156, %cst_97 [1] : vector<4x8x32xf32> to vector<4x32xf32>
    %cst_98 = arith.constant dense<0.000000e+00> : vector<4x32xf32>
    %158 = tpu.matmul %157, %3, %cst_98 {dimension_numbers = #tpu.dot_dimension_numbers<[1], [0], [0], [1], [0, 0, 1, 1], [], []>} : vector<4x32xf32>, vector<32x32xf32>, vector<4x32xf32> -> vector<4x32xf32>
    %cst_99 = arith.constant dense<0.000000e+00> : vector<4x32xf32>
    %159 = tpu.matmul %147, %4, %cst_99 {dimension_numbers = #tpu.dot_dimension_numbers<[1], [0], [0], [1], [0, 0, 1, 1], [], []>} : vector<4x32xf32>, vector<32x32xf32>, vector<4x32xf32> -> vector<4x32xf32>
    %160 = arith.addf %158, %159 : vector<4x32xf32>
    %161 = vector.broadcast %5 : vector<1x32xf32> to vector<4x32xf32>
    %162 = arith.addf %160, %161 : vector<4x32xf32>
    %cst_100 = arith.constant 0.000000e+00 : f32
    %163 = vector.broadcast %cst_100 : f32 to vector<4x32xf32>
    %164 = arith.maximumf %162, %163 : vector<4x32xf32>
    %cst_101 = arith.constant dense<0.000000e+00> : vector<4x32xf32>
    %165 = tpu.matmul %164, %6, %cst_101 {dimension_numbers = #tpu.dot_dimension_numbers<[1], [0], [0], [1], [0, 0, 1, 1], [], []>} : vector<4x32xf32>, vector<32x32xf32>, vector<4x32xf32> -> vector<4x32xf32>
    %166 = vector.broadcast %7 : vector<1x32xf32> to vector<4x32xf32>
    %167 = arith.addf %165, %166 : vector<4x32xf32>
    %cst_102 = arith.constant 5.000000e-01 : f32
    %168 = vector.broadcast %cst_102 : f32 to vector<4x1xf32>
    %169 = arith.cmpf ogt, %151, %168 : vector<4x1xf32>
    %170 = vector.shape_cast %169 : vector<4x1xi1> to vector<4x1xi1>
    %171 = vector.broadcast %170 : vector<4x1xi1> to vector<4x32xi1>
    %172 = arith.select %171, %167, %147 : vector<4x32xi1>, vector<4x32xf32>
    %c0_103 = arith.constant 0 : index
    %c0_104 = arith.constant 0 : index
    %c0_105 = arith.constant 0 : index
    %173 = vector.load %arg22[%c0_103, %c0_104, %c0_105] : memref<2x4x32xf32, #tpu.memory_space<vmem>>, vector<1x4x32xf32>
    %174 = vector.shape_cast %173 : vector<1x4x32xf32> to vector<4x32xf32>
    %c0_106 = arith.constant 0 : index
    %c0_107 = arith.constant 0 : index
    %c0_108 = arith.constant 0 : index
    %175 = vector.load %arg23[%c0_106, %c0_107, %c0_108] : memref<2x4x32xf32, #tpu.memory_space<vmem>>, vector<1x4x32xf32>
    %176 = vector.shape_cast %175 : vector<1x4x32xf32> to vector<4x32xf32>
    %c0_109 = arith.constant 0 : index
    %c0_110 = arith.constant 0 : index
    %c0_111 = arith.constant 0 : index
    %177 = vector.load %arg11[%c0_109, %c0_110, %c0_111] : memref<2x32x128xf32, #tpu.memory_space<vmem>>, vector<1x32x128xf32>
    %178 = vector.shape_cast %177 : vector<1x32x128xf32> to vector<32x128xf32>
    %cst_112 = arith.constant dense<0.000000e+00> : vector<4x128xf32>
    %179 = tpu.matmul %172, %178, %cst_112 {dimension_numbers = #tpu.dot_dimension_numbers<[1], [0], [0], [1], [0, 0, 1, 1], [], []>} : vector<4x32xf32>, vector<32x128xf32>, vector<4x128xf32> -> vector<4x128xf32>
    %c0_113 = arith.constant 0 : index
    %c0_114 = arith.constant 0 : index
    %c0_115 = arith.constant 0 : index
    %180 = vector.load %arg12[%c0_113, %c0_114, %c0_115] : memref<2x32x128xf32, #tpu.memory_space<vmem>>, vector<1x32x128xf32>
    %181 = vector.shape_cast %180 : vector<1x32x128xf32> to vector<32x128xf32>
    %cst_116 = arith.constant dense<0.000000e+00> : vector<4x128xf32>
    %182 = tpu.matmul %174, %181, %cst_116 {dimension_numbers = #tpu.dot_dimension_numbers<[1], [0], [0], [1], [0, 0, 1, 1], [], []>} : vector<4x32xf32>, vector<32x128xf32>, vector<4x128xf32> -> vector<4x128xf32>
    %183 = arith.addf %179, %182 : vector<4x128xf32>
    %c0_117 = arith.constant 0 : index
    %c0_118 = arith.constant 0 : index
    %c0_119 = arith.constant 0 : index
    %184 = vector.load %arg13[%c0_117, %c0_118, %c0_119] : memref<2x1x128xf32, #tpu.memory_space<vmem>>, vector<1x1x128xf32>
    %185 = vector.shape_cast %184 : vector<1x1x128xf32> to vector<1x128xf32>
    %186 = vector.broadcast %185 : vector<1x128xf32> to vector<4x128xf32>
    %187 = arith.addf %183, %186 : vector<4x128xf32>
    %188 = vector.extract_strided_slice %187 {offsets = [0, 0], sizes = [4, 96], strides = [1, 1]} : vector<4x128xf32> to vector<4x96xf32>
    %189 = arith.negf %188 : vector<4x96xf32>
    %190 = math.exp %189 : vector<4x96xf32>
    %cst_120 = arith.constant 1.000000e+00 : f32
    %191 = vector.broadcast %cst_120 : f32 to vector<4x96xf32>
    %192 = arith.addf %191, %190 : vector<4x96xf32>
    %193 = arith.divf %191, %192 : vector<4x96xf32>
    %194 = vector.extract_strided_slice %187 {offsets = [0, 96], sizes = [4, 32], strides = [1, 1]} : vector<4x128xf32> to vector<4x32xf32>
    %195 = math.tanh %194 : vector<4x32xf32>
    %196 = vector.extract_strided_slice %193 {offsets = [0, 0], sizes = [4, 32], strides = [1, 1]} : vector<4x96xf32> to vector<4x32xf32>
    %197 = vector.extract_strided_slice %193 {offsets = [0, 32], sizes = [4, 32], strides = [1, 1]} : vector<4x96xf32> to vector<4x32xf32>
    %198 = vector.extract_strided_slice %193 {offsets = [0, 64], sizes = [4, 32], strides = [1, 1]} : vector<4x96xf32> to vector<4x32xf32>
    %199 = arith.mulf %197, %176 : vector<4x32xf32>
    %200 = arith.mulf %196, %195 : vector<4x32xf32>
    %201 = arith.addf %199, %200 : vector<4x32xf32>
    %202 = math.tanh %201 : vector<4x32xf32>
    %203 = arith.mulf %198, %202 : vector<4x32xf32>
    %c0_121 = arith.constant 0 : index
    %c0_122 = arith.constant 0 : index
    %c0_123 = arith.constant 0 : index
    %204 = vector.load %arg22[%c0_121, %c0_122, %c0_123] : memref<2x4x32xf32, #tpu.memory_space<vmem>>, vector<1x4x32xf32>
    %205 = vector.shape_cast %204 : vector<1x4x32xf32> to vector<4x32xf32>
    %206 = vector.shape_cast %203 : vector<4x32xf32> to vector<1x4x32xf32>
    tpu.vector_store %arg22[%c0_121, %c0_122, %c0_123], %206 {strides = array<i32>} : memref<2x4x32xf32, #tpu.memory_space<vmem>>, vector<1x4x32xf32>,
    %c0_124 = arith.constant 0 : index
    %c0_125 = arith.constant 0 : index
    %c0_126 = arith.constant 0 : index
    %207 = vector.load %arg23[%c0_124, %c0_125, %c0_126] : memref<2x4x32xf32, #tpu.memory_space<vmem>>, vector<1x4x32xf32>
    %208 = vector.shape_cast %207 : vector<1x4x32xf32> to vector<4x32xf32>
    %209 = vector.shape_cast %201 : vector<4x32xf32> to vector<1x4x32xf32>
    tpu.vector_store %arg23[%c0_124, %c0_125, %c0_126], %209 {strides = array<i32>} : memref<2x4x32xf32, #tpu.memory_space<vmem>>, vector<1x4x32xf32>,
    %c1_127 = arith.constant 1 : index
    %c0_128 = arith.constant 0 : index
    %c0_129 = arith.constant 0 : index
    %210 = vector.load %arg22[%c1_127, %c0_128, %c0_129] : memref<2x4x32xf32, #tpu.memory_space<vmem>>, vector<1x4x32xf32>
    %211 = vector.shape_cast %210 : vector<1x4x32xf32> to vector<4x32xf32>
    %c1_130 = arith.constant 1 : index
    %c0_131 = arith.constant 0 : index
    %c0_132 = arith.constant 0 : index
    %212 = vector.load %arg23[%c1_130, %c0_131, %c0_132] : memref<2x4x32xf32, #tpu.memory_space<vmem>>, vector<1x4x32xf32>
    %213 = vector.shape_cast %212 : vector<1x4x32xf32> to vector<4x32xf32>
    %c1_133 = arith.constant 1 : index
    %c0_134 = arith.constant 0 : index
    %c0_135 = arith.constant 0 : index
    %214 = vector.load %arg11[%c1_133, %c0_134, %c0_135] : memref<2x32x128xf32, #tpu.memory_space<vmem>>, vector<1x32x128xf32>
    %215 = vector.shape_cast %214 : vector<1x32x128xf32> to vector<32x128xf32>
    %cst_136 = arith.constant dense<0.000000e+00> : vector<4x128xf32>
    %216 = tpu.matmul %203, %215, %cst_136 {dimension_numbers = #tpu.dot_dimension_numbers<[1], [0], [0], [1], [0, 0, 1, 1], [], []>} : vector<4x32xf32>, vector<32x128xf32>, vector<4x128xf32> -> vector<4x128xf32>
    %c1_137 = arith.constant 1 : index
    %c0_138 = arith.constant 0 : index
    %c0_139 = arith.constant 0 : index
    %217 = vector.load %arg12[%c1_137, %c0_138, %c0_139] : memref<2x32x128xf32, #tpu.memory_space<vmem>>, vector<1x32x128xf32>
    %218 = vector.shape_cast %217 : vector<1x32x128xf32> to vector<32x128xf32>
    %cst_140 = arith.constant dense<0.000000e+00> : vector<4x128xf32>
    %219 = tpu.matmul %211, %218, %cst_140 {dimension_numbers = #tpu.dot_dimension_numbers<[1], [0], [0], [1], [0, 0, 1, 1], [], []>} : vector<4x32xf32>, vector<32x128xf32>, vector<4x128xf32> -> vector<4x128xf32>
    %220 = arith.addf %216, %219 : vector<4x128xf32>
    %c1_141 = arith.constant 1 : index
    %c0_142 = arith.constant 0 : index
    %c0_143 = arith.constant 0 : index
    %221 = vector.load %arg13[%c1_141, %c0_142, %c0_143] : memref<2x1x128xf32, #tpu.memory_space<vmem>>, vector<1x1x128xf32>
    %222 = vector.shape_cast %221 : vector<1x1x128xf32> to vector<1x128xf32>
    %223 = vector.broadcast %222 : vector<1x128xf32> to vector<4x128xf32>
    %224 = arith.addf %220, %223 : vector<4x128xf32>
    %225 = vector.extract_strided_slice %224 {offsets = [0, 0], sizes = [4, 96], strides = [1, 1]} : vector<4x128xf32> to vector<4x96xf32>
    %226 = arith.negf %225 : vector<4x96xf32>
    %227 = math.exp %226 : vector<4x96xf32>
    %cst_144 = arith.constant 1.000000e+00 : f32
    %228 = vector.broadcast %cst_144 : f32 to vector<4x96xf32>
    %229 = arith.addf %228, %227 : vector<4x96xf32>
    %230 = arith.divf %228, %229 : vector<4x96xf32>
    %231 = vector.extract_strided_slice %224 {offsets = [0, 96], sizes = [4, 32], strides = [1, 1]} : vector<4x128xf32> to vector<4x32xf32>
    %232 = math.tanh %231 : vector<4x32xf32>
    %233 = vector.extract_strided_slice %230 {offsets = [0, 0], sizes = [4, 32], strides = [1, 1]} : vector<4x96xf32> to vector<4x32xf32>
    %234 = vector.extract_strided_slice %230 {offsets = [0, 32], sizes = [4, 32], strides = [1, 1]} : vector<4x96xf32> to vector<4x32xf32>
    %235 = vector.extract_strided_slice %230 {offsets = [0, 64], sizes = [4, 32], strides = [1, 1]} : vector<4x96xf32> to vector<4x32xf32>
    %236 = arith.mulf %234, %213 : vector<4x32xf32>
    %237 = arith.mulf %233, %232 : vector<4x32xf32>
    %238 = arith.addf %236, %237 : vector<4x32xf32>
    %239 = math.tanh %238 : vector<4x32xf32>
    %240 = arith.mulf %235, %239 : vector<4x32xf32>
    %c1_145 = arith.constant 1 : index
    %c0_146 = arith.constant 0 : index
    %c0_147 = arith.constant 0 : index
    %241 = vector.load %arg22[%c1_145, %c0_146, %c0_147] : memref<2x4x32xf32, #tpu.memory_space<vmem>>, vector<1x4x32xf32>
    %242 = vector.shape_cast %241 : vector<1x4x32xf32> to vector<4x32xf32>
    %243 = vector.shape_cast %240 : vector<4x32xf32> to vector<1x4x32xf32>
    tpu.vector_store %arg22[%c1_145, %c0_146, %c0_147], %243 {strides = array<i32>} : memref<2x4x32xf32, #tpu.memory_space<vmem>>, vector<1x4x32xf32>,
    %c1_148 = arith.constant 1 : index
    %c0_149 = arith.constant 0 : index
    %c0_150 = arith.constant 0 : index
    %244 = vector.load %arg23[%c1_148, %c0_149, %c0_150] : memref<2x4x32xf32, #tpu.memory_space<vmem>>, vector<1x4x32xf32>
    %245 = vector.shape_cast %244 : vector<1x4x32xf32> to vector<4x32xf32>
    %246 = vector.shape_cast %238 : vector<4x32xf32> to vector<1x4x32xf32>
    tpu.vector_store %arg23[%c1_148, %c0_149, %c0_150], %246 {strides = array<i32>} : memref<2x4x32xf32, #tpu.memory_space<vmem>>, vector<1x4x32xf32>,
    %247 = vector.shape_cast %153 : vector<4x8x32xf32> to vector<32x32xf32>
    %cst_151 = arith.constant dense<0.000000e+00> : vector<32x33xf32>
    %248 = tpu.matmul %247, %8, %cst_151 {dimension_numbers = #tpu.dot_dimension_numbers<[1], [0], [0], [1], [0, 0, 1, 1], [], []>} : vector<32x32xf32>, vector<32x33xf32>, vector<32x33xf32> -> vector<32x33xf32>
    %249 = vector.shape_cast %248 : vector<32x33xf32> to vector<4x8x33xf32>
    %cst_152 = arith.constant dense<0.000000e+00> : vector<4x33xf32>
    %250 = tpu.matmul %240, %9, %cst_152 {dimension_numbers = #tpu.dot_dimension_numbers<[1], [0], [0], [1], [0, 0, 1, 1], [], []>} : vector<4x32xf32>, vector<32x33xf32>, vector<4x33xf32> -> vector<4x33xf32>
    %251 = vector.shape_cast %250 : vector<4x33xf32> to vector<4x1x33xf32>
    %252 = vector.broadcast %251 : vector<4x1x33xf32> to vector<4x8x33xf32>
    %253 = arith.addf %249, %252 : vector<4x8x33xf32>
    %254 = vector.shape_cast %10 : vector<1x33xf32> to vector<1x1x33xf32>
    %255 = vector.broadcast %254 : vector<1x1x33xf32> to vector<4x8x33xf32>
    %256 = arith.addf %253, %255 : vector<4x8x33xf32>
    %257 = vector.extract_strided_slice %256 {offsets = [0, 0, 0], sizes = [4, 8, 32], strides = [1, 1, 1]} : vector<4x8x33xf32> to vector<4x8x32xf32>
    %258 = math.tanh %257 : vector<4x8x32xf32>
    %259 = vector.extract_strided_slice %256 {offsets = [0, 0, 32], sizes = [4, 8, 1], strides = [1, 1, 1]} : vector<4x8x33xf32> to vector<4x8x1xf32>
    %260 = arith.negf %259 : vector<4x8x1xf32>
    %261 = math.exp %260 : vector<4x8x1xf32>
    %cst_153 = arith.constant 1.000000e+00 : f32
    %262 = vector.broadcast %cst_153 : f32 to vector<4x8x1xf32>
    %263 = arith.addf %262, %261 : vector<4x8x1xf32>
    %264 = arith.divf %262, %263 : vector<4x8x1xf32>
    %cst_154 = arith.constant 1.000000e+00 : f32
    %265 = vector.broadcast %cst_154 : f32 to vector<4x8x1xf32>
    %266 = arith.subf %265, %264 : vector<4x8x1xf32>
    %267 = vector.broadcast %266 : vector<4x8x1xf32> to vector<4x8x32xf32>
    %268 = arith.mulf %153, %267 : vector<4x8x32xf32>
    %269 = vector.broadcast %264 : vector<4x8x1xf32> to vector<4x8x32xf32>
    %270 = arith.mulf %269, %258 : vector<4x8x32xf32>
    %271 = arith.addf %268, %270 : vector<4x8x32xf32>
    %272 = vector.shape_cast %152 : vector<4x8xf32> to vector<4x8x1xf32>
    %cst_155 = arith.constant 5.000000e-01 : f32
    %273 = vector.broadcast %cst_155 : f32 to vector<4x8x1xf32>
    %274 = arith.cmpf ogt, %272, %273 : vector<4x8x1xf32>
    %cst_156 = arith.constant 0.000000e+00 : f32
    %275 = vector.shape_cast %274 : vector<4x8x1xi1> to vector<4x8x1xi1>
    %276 = vector.broadcast %275 : vector<4x8x1xi1> to vector<4x8x32xi1>
    %277 = vector.broadcast %cst_156 : f32 to vector<4x8x32xf32>
    %278 = arith.select %276, %277, %271 : vector<4x8x32xi1>, vector<4x8x32xf32>
    %c0_157 = arith.constant 0 : index
    %c0_158 = arith.constant 0 : index
    %c0_159 = arith.constant 0 : index
    %279 = vector.load %arg24[%c0_157, %c0_158, %c0_159] : memref<4x8x32xf32, #tpu.memory_space<vmem>>, vector<4x8x32xf32>
    tpu.vector_store %arg24[%c0_157, %c0_158, %c0_159], %278 {strides = array<i32>} : memref<4x8x32xf32, #tpu.memory_space<vmem>>, vector<4x8x32xf32>,
    %c4 = arith.constant 4 : index
    %c0_160 = arith.constant 0 : index
    %280 = vector.load %arg25[%c4, %c0_160] : memref<32x32xf32, #tpu.memory_space<vmem>>, vector<4x32xf32>
    tpu.vector_store %arg25[%c4, %c0_160], %240 {strides = array<i32>} : memref<32x32xf32, #tpu.memory_space<vmem>>, vector<4x32xf32>,
    %c2 = arith.constant 2 : index
    %c0_161 = arith.constant 0 : index
    %c0_162 = arith.constant 0 : index
    %281 = vector.load %arg2[%c2, %c0_161, %c0_162] : memref<8x4x32xf32, #tpu.memory_space<vmem>>, vector<1x4x32xf32>
    %282 = vector.shape_cast %281 : vector<1x4x32xf32> to vector<4x32xf32>
    %c2_163 = arith.constant 2 : index
    %c0_164 = arith.constant 0 : index
    %c0_165 = arith.constant 0 : index
    %283 = vector.load %arg3[%c2_163, %c0_164, %c0_165] : memref<8x4x17xf32, #tpu.memory_space<vmem>>, vector<1x4x17xf32>
    %284 = vector.shape_cast %283 : vector<1x4x17xf32> to vector<4x17xf32>
    %285 = vector.extract_strided_slice %284 {offsets = [0, 0], sizes = [4, 8], strides = [1, 1]} : vector<4x17xf32> to vector<4x8xf32>
    %286 = vector.extract_strided_slice %284 {offsets = [0, 8], sizes = [4, 1], strides = [1, 1]} : vector<4x17xf32> to vector<4x1xf32>
    %287 = vector.extract_strided_slice %284 {offsets = [0, 9], sizes = [4, 8], strides = [1, 1]} : vector<4x17xf32> to vector<4x8xf32>
    %c0_166 = arith.constant 0 : index
    %c0_167 = arith.constant 0 : index
    %c0_168 = arith.constant 0 : index
    %288 = vector.load %arg24[%c0_166, %c0_167, %c0_168] : memref<4x8x32xf32, #tpu.memory_space<vmem>>, vector<4x8x32xf32>
    %289 = vector.shape_cast %285 : vector<4x8xf32> to vector<4x8x1xf32>
    %290 = vector.broadcast %289 : vector<4x8x1xf32> to vector<4x8x32xf32>
    %291 = arith.mulf %290, %288 : vector<4x8x32xf32>
    %cst_169 = arith.constant dense<0.000000e+00> : vector<4x32xf32>
    %292 = vector.multi_reduction <add>, %291, %cst_169 [1] : vector<4x8x32xf32> to vector<4x32xf32>
    %cst_170 = arith.constant dense<0.000000e+00> : vector<4x32xf32>
    %293 = tpu.matmul %292, %3, %cst_170 {dimension_numbers = #tpu.dot_dimension_numbers<[1], [0], [0], [1], [0, 0, 1, 1], [], []>} : vector<4x32xf32>, vector<32x32xf32>, vector<4x32xf32> -> vector<4x32xf32>
    %cst_171 = arith.constant dense<0.000000e+00> : vector<4x32xf32>
    %294 = tpu.matmul %282, %4, %cst_171 {dimension_numbers = #tpu.dot_dimension_numbers<[1], [0], [0], [1], [0, 0, 1, 1], [], []>} : vector<4x32xf32>, vector<32x32xf32>, vector<4x32xf32> -> vector<4x32xf32>
    %295 = arith.addf %293, %294 : vector<4x32xf32>
    %296 = vector.broadcast %5 : vector<1x32xf32> to vector<4x32xf32>
    %297 = arith.addf %295, %296 : vector<4x32xf32>
    %cst_172 = arith.constant 0.000000e+00 : f32
    %298 = vector.broadcast %cst_172 : f32 to vector<4x32xf32>
    %299 = arith.maximumf %297, %298 : vector<4x32xf32>
    %cst_173 = arith.constant dense<0.000000e+00> : vector<4x32xf32>
    %300 = tpu.matmul %299, %6, %cst_173 {dimension_numbers = #tpu.dot_dimension_numbers<[1], [0], [0], [1], [0, 0, 1, 1], [], []>} : vector<4x32xf32>, vector<32x32xf32>, vector<4x32xf32> -> vector<4x32xf32>
    %301 = vector.broadcast %7 : vector<1x32xf32> to vector<4x32xf32>
    %302 = arith.addf %300, %301 : vector<4x32xf32>
    %cst_174 = arith.constant 5.000000e-01 : f32
    %303 = vector.broadcast %cst_174 : f32 to vector<4x1xf32>
    %304 = arith.cmpf ogt, %286, %303 : vector<4x1xf32>
    %305 = vector.shape_cast %304 : vector<4x1xi1> to vector<4x1xi1>
    %306 = vector.broadcast %305 : vector<4x1xi1> to vector<4x32xi1>
    %307 = arith.select %306, %302, %282 : vector<4x32xi1>, vector<4x32xf32>
    %c0_175 = arith.constant 0 : index
    %c0_176 = arith.constant 0 : index
    %c0_177 = arith.constant 0 : index
    %308 = vector.load %arg22[%c0_175, %c0_176, %c0_177] : memref<2x4x32xf32, #tpu.memory_space<vmem>>, vector<1x4x32xf32>
    %309 = vector.shape_cast %308 : vector<1x4x32xf32> to vector<4x32xf32>
    %c0_178 = arith.constant 0 : index
    %c0_179 = arith.constant 0 : index
    %c0_180 = arith.constant 0 : index
    %310 = vector.load %arg23[%c0_178, %c0_179, %c0_180] : memref<2x4x32xf32, #tpu.memory_space<vmem>>, vector<1x4x32xf32>
    %311 = vector.shape_cast %310 : vector<1x4x32xf32> to vector<4x32xf32>
    %c0_181 = arith.constant 0 : index
    %c0_182 = arith.constant 0 : index
    %c0_183 = arith.constant 0 : index
    %312 = vector.load %arg11[%c0_181, %c0_182, %c0_183] : memref<2x32x128xf32, #tpu.memory_space<vmem>>, vector<1x32x128xf32>
    %313 = vector.shape_cast %312 : vector<1x32x128xf32> to vector<32x128xf32>
    %cst_184 = arith.constant dense<0.000000e+00> : vector<4x128xf32>
    %314 = tpu.matmul %307, %313, %cst_184 {dimension_numbers = #tpu.dot_dimension_numbers<[1], [0], [0], [1], [0, 0, 1, 1], [], []>} : vector<4x32xf32>, vector<32x128xf32>, vector<4x128xf32> -> vector<4x128xf32>
    %c0_185 = arith.constant 0 : index
    %c0_186 = arith.constant 0 : index
    %c0_187 = arith.constant 0 : index
    %315 = vector.load %arg12[%c0_185, %c0_186, %c0_187] : memref<2x32x128xf32, #tpu.memory_space<vmem>>, vector<1x32x128xf32>
    %316 = vector.shape_cast %315 : vector<1x32x128xf32> to vector<32x128xf32>
    %cst_188 = arith.constant dense<0.000000e+00> : vector<4x128xf32>
    %317 = tpu.matmul %309, %316, %cst_188 {dimension_numbers = #tpu.dot_dimension_numbers<[1], [0], [0], [1], [0, 0, 1, 1], [], []>} : vector<4x32xf32>, vector<32x128xf32>, vector<4x128xf32> -> vector<4x128xf32>
    %318 = arith.addf %314, %317 : vector<4x128xf32>
    %c0_189 = arith.constant 0 : index
    %c0_190 = arith.constant 0 : index
    %c0_191 = arith.constant 0 : index
    %319 = vector.load %arg13[%c0_189, %c0_190, %c0_191] : memref<2x1x128xf32, #tpu.memory_space<vmem>>, vector<1x1x128xf32>
    %320 = vector.shape_cast %319 : vector<1x1x128xf32> to vector<1x128xf32>
    %321 = vector.broadcast %320 : vector<1x128xf32> to vector<4x128xf32>
    %322 = arith.addf %318, %321 : vector<4x128xf32>
    %323 = vector.extract_strided_slice %322 {offsets = [0, 0], sizes = [4, 96], strides = [1, 1]} : vector<4x128xf32> to vector<4x96xf32>
    %324 = arith.negf %323 : vector<4x96xf32>
    %325 = math.exp %324 : vector<4x96xf32>
    %cst_192 = arith.constant 1.000000e+00 : f32
    %326 = vector.broadcast %cst_192 : f32 to vector<4x96xf32>
    %327 = arith.addf %326, %325 : vector<4x96xf32>
    %328 = arith.divf %326, %327 : vector<4x96xf32>
    %329 = vector.extract_strided_slice %322 {offsets = [0, 96], sizes = [4, 32], strides = [1, 1]} : vector<4x128xf32> to vector<4x32xf32>
    %330 = math.tanh %329 : vector<4x32xf32>
    %331 = vector.extract_strided_slice %328 {offsets = [0, 0], sizes = [4, 32], strides = [1, 1]} : vector<4x96xf32> to vector<4x32xf32>
    %332 = vector.extract_strided_slice %328 {offsets = [0, 32], sizes = [4, 32], strides = [1, 1]} : vector<4x96xf32> to vector<4x32xf32>
    %333 = vector.extract_strided_slice %328 {offsets = [0, 64], sizes = [4, 32], strides = [1, 1]} : vector<4x96xf32> to vector<4x32xf32>
    %334 = arith.mulf %332, %311 : vector<4x32xf32>
    %335 = arith.mulf %331, %330 : vector<4x32xf32>
    %336 = arith.addf %334, %335 : vector<4x32xf32>
    %337 = math.tanh %336 : vector<4x32xf32>
    %338 = arith.mulf %333, %337 : vector<4x32xf32>
    %c0_193 = arith.constant 0 : index
    %c0_194 = arith.constant 0 : index
    %c0_195 = arith.constant 0 : index
    %339 = vector.load %arg22[%c0_193, %c0_194, %c0_195] : memref<2x4x32xf32, #tpu.memory_space<vmem>>, vector<1x4x32xf32>
    %340 = vector.shape_cast %339 : vector<1x4x32xf32> to vector<4x32xf32>
    %341 = vector.shape_cast %338 : vector<4x32xf32> to vector<1x4x32xf32>
    tpu.vector_store %arg22[%c0_193, %c0_194, %c0_195], %341 {strides = array<i32>} : memref<2x4x32xf32, #tpu.memory_space<vmem>>, vector<1x4x32xf32>,
    %c0_196 = arith.constant 0 : index
    %c0_197 = arith.constant 0 : index
    %c0_198 = arith.constant 0 : index
    %342 = vector.load %arg23[%c0_196, %c0_197, %c0_198] : memref<2x4x32xf32, #tpu.memory_space<vmem>>, vector<1x4x32xf32>
    %343 = vector.shape_cast %342 : vector<1x4x32xf32> to vector<4x32xf32>
    %344 = vector.shape_cast %336 : vector<4x32xf32> to vector<1x4x32xf32>
    tpu.vector_store %arg23[%c0_196, %c0_197, %c0_198], %344 {strides = array<i32>} : memref<2x4x32xf32, #tpu.memory_space<vmem>>, vector<1x4x32xf32>,
    %c1_199 = arith.constant 1 : index
    %c0_200 = arith.constant 0 : index
    %c0_201 = arith.constant 0 : index
    %345 = vector.load %arg22[%c1_199, %c0_200, %c0_201] : memref<2x4x32xf32, #tpu.memory_space<vmem>>, vector<1x4x32xf32>
    %346 = vector.shape_cast %345 : vector<1x4x32xf32> to vector<4x32xf32>
    %c1_202 = arith.constant 1 : index
    %c0_203 = arith.constant 0 : index
    %c0_204 = arith.constant 0 : index
    %347 = vector.load %arg23[%c1_202, %c0_203, %c0_204] : memref<2x4x32xf32, #tpu.memory_space<vmem>>, vector<1x4x32xf32>
    %348 = vector.shape_cast %347 : vector<1x4x32xf32> to vector<4x32xf32>
    %c1_205 = arith.constant 1 : index
    %c0_206 = arith.constant 0 : index
    %c0_207 = arith.constant 0 : index
    %349 = vector.load %arg11[%c1_205, %c0_206, %c0_207] : memref<2x32x128xf32, #tpu.memory_space<vmem>>, vector<1x32x128xf32>
    %350 = vector.shape_cast %349 : vector<1x32x128xf32> to vector<32x128xf32>
    %cst_208 = arith.constant dense<0.000000e+00> : vector<4x128xf32>
    %351 = tpu.matmul %338, %350, %cst_208 {dimension_numbers = #tpu.dot_dimension_numbers<[1], [0], [0], [1], [0, 0, 1, 1], [], []>} : vector<4x32xf32>, vector<32x128xf32>, vector<4x128xf32> -> vector<4x128xf32>
    %c1_209 = arith.constant 1 : index
    %c0_210 = arith.constant 0 : index
    %c0_211 = arith.constant 0 : index
    %352 = vector.load %arg12[%c1_209, %c0_210, %c0_211] : memref<2x32x128xf32, #tpu.memory_space<vmem>>, vector<1x32x128xf32>
    %353 = vector.shape_cast %352 : vector<1x32x128xf32> to vector<32x128xf32>
    %cst_212 = arith.constant dense<0.000000e+00> : vector<4x128xf32>
    %354 = tpu.matmul %346, %353, %cst_212 {dimension_numbers = #tpu.dot_dimension_numbers<[1], [0], [0], [1], [0, 0, 1, 1], [], []>} : vector<4x32xf32>, vector<32x128xf32>, vector<4x128xf32> -> vector<4x128xf32>
    %355 = arith.addf %351, %354 : vector<4x128xf32>
    %c1_213 = arith.constant 1 : index
    %c0_214 = arith.constant 0 : index
    %c0_215 = arith.constant 0 : index
    %356 = vector.load %arg13[%c1_213, %c0_214, %c0_215] : memref<2x1x128xf32, #tpu.memory_space<vmem>>, vector<1x1x128xf32>
    %357 = vector.shape_cast %356 : vector<1x1x128xf32> to vector<1x128xf32>
    %358 = vector.broadcast %357 : vector<1x128xf32> to vector<4x128xf32>
    %359 = arith.addf %355, %358 : vector<4x128xf32>
    %360 = vector.extract_strided_slice %359 {offsets = [0, 0], sizes = [4, 96], strides = [1, 1]} : vector<4x128xf32> to vector<4x96xf32>
    %361 = arith.negf %360 : vector<4x96xf32>
    %362 = math.exp %361 : vector<4x96xf32>
    %cst_216 = arith.constant 1.000000e+00 : f32
    %363 = vector.broadcast %cst_216 : f32 to vector<4x96xf32>
    %364 = arith.addf %363, %362 : vector<4x96xf32>
    %365 = arith.divf %363, %364 : vector<4x96xf32>
    %366 = vector.extract_strided_slice %359 {offsets = [0, 96], sizes = [4, 32], strides = [1, 1]} : vector<4x128xf32> to vector<4x32xf32>
    %367 = math.tanh %366 : vector<4x32xf32>
    %368 = vector.extract_strided_slice %365 {offsets = [0, 0], sizes = [4, 32], strides = [1, 1]} : vector<4x96xf32> to vector<4x32xf32>
    %369 = vector.extract_strided_slice %365 {offsets = [0, 32], sizes = [4, 32], strides = [1, 1]} : vector<4x96xf32> to vector<4x32xf32>
    %370 = vector.extract_strided_slice %365 {offsets = [0, 64], sizes = [4, 32], strides = [1, 1]} : vector<4x96xf32> to vector<4x32xf32>
    %371 = arith.mulf %369, %348 : vector<4x32xf32>
    %372 = arith.mulf %368, %367 : vector<4x32xf32>
    %373 = arith.addf %371, %372 : vector<4x32xf32>
    %374 = math.tanh %373 : vector<4x32xf32>
    %375 = arith.mulf %370, %374 : vector<4x32xf32>
    %c1_217 = arith.constant 1 : index
    %c0_218 = arith.constant 0 : index
    %c0_219 = arith.constant 0 : index
    %376 = vector.load %arg22[%c1_217, %c0_218, %c0_219] : memref<2x4x32xf32, #tpu.memory_space<vmem>>, vector<1x4x32xf32>
    %377 = vector.shape_cast %376 : vector<1x4x32xf32> to vector<4x32xf32>
    %378 = vector.shape_cast %375 : vector<4x32xf32> to vector<1x4x32xf32>
    tpu.vector_store %arg22[%c1_217, %c0_218, %c0_219], %378 {strides = array<i32>} : memref<2x4x32xf32, #tpu.memory_space<vmem>>, vector<1x4x32xf32>,
    %c1_220 = arith.constant 1 : index
    %c0_221 = arith.constant 0 : index
    %c0_222 = arith.constant 0 : index
    %379 = vector.load %arg23[%c1_220, %c0_221, %c0_222] : memref<2x4x32xf32, #tpu.memory_space<vmem>>, vector<1x4x32xf32>
    %380 = vector.shape_cast %379 : vector<1x4x32xf32> to vector<4x32xf32>
    %381 = vector.shape_cast %373 : vector<4x32xf32> to vector<1x4x32xf32>
    tpu.vector_store %arg23[%c1_220, %c0_221, %c0_222], %381 {strides = array<i32>} : memref<2x4x32xf32, #tpu.memory_space<vmem>>, vector<1x4x32xf32>,
    %382 = vector.shape_cast %288 : vector<4x8x32xf32> to vector<32x32xf32>
    %cst_223 = arith.constant dense<0.000000e+00> : vector<32x33xf32>
    %383 = tpu.matmul %382, %8, %cst_223 {dimension_numbers = #tpu.dot_dimension_numbers<[1], [0], [0], [1], [0, 0, 1, 1], [], []>} : vector<32x32xf32>, vector<32x33xf32>, vector<32x33xf32> -> vector<32x33xf32>
    %384 = vector.shape_cast %383 : vector<32x33xf32> to vector<4x8x33xf32>
    %cst_224 = arith.constant dense<0.000000e+00> : vector<4x33xf32>
    %385 = tpu.matmul %375, %9, %cst_224 {dimension_numbers = #tpu.dot_dimension_numbers<[1], [0], [0], [1], [0, 0, 1, 1], [], []>} : vector<4x32xf32>, vector<32x33xf32>, vector<4x33xf32> -> vector<4x33xf32>
    %386 = vector.shape_cast %385 : vector<4x33xf32> to vector<4x1x33xf32>
    %387 = vector.broadcast %386 : vector<4x1x33xf32> to vector<4x8x33xf32>
    %388 = arith.addf %384, %387 : vector<4x8x33xf32>
    %389 = vector.shape_cast %10 : vector<1x33xf32> to vector<1x1x33xf32>
    %390 = vector.broadcast %389 : vector<1x1x33xf32> to vector<4x8x33xf32>
    %391 = arith.addf %388, %390 : vector<4x8x33xf32>
    %392 = vector.extract_strided_slice %391 {offsets = [0, 0, 0], sizes = [4, 8, 32], strides = [1, 1, 1]} : vector<4x8x33xf32> to vector<4x8x32xf32>
    %393 = math.tanh %392 : vector<4x8x32xf32>
    %394 = vector.extract_strided_slice %391 {offsets = [0, 0, 32], sizes = [4, 8, 1], strides = [1, 1, 1]} : vector<4x8x33xf32> to vector<4x8x1xf32>
    %395 = arith.negf %394 : vector<4x8x1xf32>
    %396 = math.exp %395 : vector<4x8x1xf32>
    %cst_225 = arith.constant 1.000000e+00 : f32
    %397 = vector.broadcast %cst_225 : f32 to vector<4x8x1xf32>
    %398 = arith.addf %397, %396 : vector<4x8x1xf32>
    %399 = arith.divf %397, %398 : vector<4x8x1xf32>
    %cst_226 = arith.constant 1.000000e+00 : f32
    %400 = vector.broadcast %cst_226 : f32 to vector<4x8x1xf32>
    %401 = arith.subf %400, %399 : vector<4x8x1xf32>
    %402 = vector.broadcast %401 : vector<4x8x1xf32> to vector<4x8x32xf32>
    %403 = arith.mulf %288, %402 : vector<4x8x32xf32>
    %404 = vector.broadcast %399 : vector<4x8x1xf32> to vector<4x8x32xf32>
    %405 = arith.mulf %404, %393 : vector<4x8x32xf32>
    %406 = arith.addf %403, %405 : vector<4x8x32xf32>
    %407 = vector.shape_cast %287 : vector<4x8xf32> to vector<4x8x1xf32>
    %cst_227 = arith.constant 5.000000e-01 : f32
    %408 = vector.broadcast %cst_227 : f32 to vector<4x8x1xf32>
    %409 = arith.cmpf ogt, %407, %408 : vector<4x8x1xf32>
    %cst_228 = arith.constant 0.000000e+00 : f32
    %410 = vector.shape_cast %409 : vector<4x8x1xi1> to vector<4x8x1xi1>
    %411 = vector.broadcast %410 : vector<4x8x1xi1> to vector<4x8x32xi1>
    %412 = vector.broadcast %cst_228 : f32 to vector<4x8x32xf32>
    %413 = arith.select %411, %412, %406 : vector<4x8x32xi1>, vector<4x8x32xf32>
    %c0_229 = arith.constant 0 : index
    %c0_230 = arith.constant 0 : index
    %c0_231 = arith.constant 0 : index
    %414 = vector.load %arg24[%c0_229, %c0_230, %c0_231] : memref<4x8x32xf32, #tpu.memory_space<vmem>>, vector<4x8x32xf32>
    tpu.vector_store %arg24[%c0_229, %c0_230, %c0_231], %413 {strides = array<i32>} : memref<4x8x32xf32, #tpu.memory_space<vmem>>, vector<4x8x32xf32>,
    %c8 = arith.constant 8 : index
    %c0_232 = arith.constant 0 : index
    %415 = vector.load %arg25[%c8, %c0_232] : memref<32x32xf32, #tpu.memory_space<vmem>>, vector<4x32xf32>
    tpu.vector_store %arg25[%c8, %c0_232], %375 {strides = array<i32>} : memref<32x32xf32, #tpu.memory_space<vmem>>, vector<4x32xf32>,
    %c3 = arith.constant 3 : index
    %c0_233 = arith.constant 0 : index
    %c0_234 = arith.constant 0 : index
    %416 = vector.load %arg2[%c3, %c0_233, %c0_234] : memref<8x4x32xf32, #tpu.memory_space<vmem>>, vector<1x4x32xf32>
    %417 = vector.shape_cast %416 : vector<1x4x32xf32> to vector<4x32xf32>
    %c3_235 = arith.constant 3 : index
    %c0_236 = arith.constant 0 : index
    %c0_237 = arith.constant 0 : index
    %418 = vector.load %arg3[%c3_235, %c0_236, %c0_237] : memref<8x4x17xf32, #tpu.memory_space<vmem>>, vector<1x4x17xf32>
    %419 = vector.shape_cast %418 : vector<1x4x17xf32> to vector<4x17xf32>
    %420 = vector.extract_strided_slice %419 {offsets = [0, 0], sizes = [4, 8], strides = [1, 1]} : vector<4x17xf32> to vector<4x8xf32>
    %421 = vector.extract_strided_slice %419 {offsets = [0, 8], sizes = [4, 1], strides = [1, 1]} : vector<4x17xf32> to vector<4x1xf32>
    %422 = vector.extract_strided_slice %419 {offsets = [0, 9], sizes = [4, 8], strides = [1, 1]} : vector<4x17xf32> to vector<4x8xf32>
    %c0_238 = arith.constant 0 : index
    %c0_239 = arith.constant 0 : index
    %c0_240 = arith.constant 0 : index
    %423 = vector.load %arg24[%c0_238, %c0_239, %c0_240] : memref<4x8x32xf32, #tpu.memory_space<vmem>>, vector<4x8x32xf32>
    %424 = vector.shape_cast %420 : vector<4x8xf32> to vector<4x8x1xf32>
    %425 = vector.broadcast %424 : vector<4x8x1xf32> to vector<4x8x32xf32>
    %426 = arith.mulf %425, %423 : vector<4x8x32xf32>
    %cst_241 = arith.constant dense<0.000000e+00> : vector<4x32xf32>
    %427 = vector.multi_reduction <add>, %426, %cst_241 [1] : vector<4x8x32xf32> to vector<4x32xf32>
    %cst_242 = arith.constant dense<0.000000e+00> : vector<4x32xf32>
    %428 = tpu.matmul %427, %3, %cst_242 {dimension_numbers = #tpu.dot_dimension_numbers<[1], [0], [0], [1], [0, 0, 1, 1], [], []>} : vector<4x32xf32>, vector<32x32xf32>, vector<4x32xf32> -> vector<4x32xf32>
    %cst_243 = arith.constant dense<0.000000e+00> : vector<4x32xf32>
    %429 = tpu.matmul %417, %4, %cst_243 {dimension_numbers = #tpu.dot_dimension_numbers<[1], [0], [0], [1], [0, 0, 1, 1], [], []>} : vector<4x32xf32>, vector<32x32xf32>, vector<4x32xf32> -> vector<4x32xf32>
    %430 = arith.addf %428, %429 : vector<4x32xf32>
    %431 = vector.broadcast %5 : vector<1x32xf32> to vector<4x32xf32>
    %432 = arith.addf %430, %431 : vector<4x32xf32>
    %cst_244 = arith.constant 0.000000e+00 : f32
    %433 = vector.broadcast %cst_244 : f32 to vector<4x32xf32>
    %434 = arith.maximumf %432, %433 : vector<4x32xf32>
    %cst_245 = arith.constant dense<0.000000e+00> : vector<4x32xf32>
    %435 = tpu.matmul %434, %6, %cst_245 {dimension_numbers = #tpu.dot_dimension_numbers<[1], [0], [0], [1], [0, 0, 1, 1], [], []>} : vector<4x32xf32>, vector<32x32xf32>, vector<4x32xf32> -> vector<4x32xf32>
    %436 = vector.broadcast %7 : vector<1x32xf32> to vector<4x32xf32>
    %437 = arith.addf %435, %436 : vector<4x32xf32>
    %cst_246 = arith.constant 5.000000e-01 : f32
    %438 = vector.broadcast %cst_246 : f32 to vector<4x1xf32>
    %439 = arith.cmpf ogt, %421, %438 : vector<4x1xf32>
    %440 = vector.shape_cast %439 : vector<4x1xi1> to vector<4x1xi1>
    %441 = vector.broadcast %440 : vector<4x1xi1> to vector<4x32xi1>
    %442 = arith.select %441, %437, %417 : vector<4x32xi1>, vector<4x32xf32>
    %c0_247 = arith.constant 0 : index
    %c0_248 = arith.constant 0 : index
    %c0_249 = arith.constant 0 : index
    %443 = vector.load %arg22[%c0_247, %c0_248, %c0_249] : memref<2x4x32xf32, #tpu.memory_space<vmem>>, vector<1x4x32xf32>
    %444 = vector.shape_cast %443 : vector<1x4x32xf32> to vector<4x32xf32>
    %c0_250 = arith.constant 0 : index
    %c0_251 = arith.constant 0 : index
    %c0_252 = arith.constant 0 : index
    %445 = vector.load %arg23[%c0_250, %c0_251, %c0_252] : memref<2x4x32xf32, #tpu.memory_space<vmem>>, vector<1x4x32xf32>
    %446 = vector.shape_cast %445 : vector<1x4x32xf32> to vector<4x32xf32>
    %c0_253 = arith.constant 0 : index
    %c0_254 = arith.constant 0 : index
    %c0_255 = arith.constant 0 : index
    %447 = vector.load %arg11[%c0_253, %c0_254, %c0_255] : memref<2x32x128xf32, #tpu.memory_space<vmem>>, vector<1x32x128xf32>
    %448 = vector.shape_cast %447 : vector<1x32x128xf32> to vector<32x128xf32>
    %cst_256 = arith.constant dense<0.000000e+00> : vector<4x128xf32>
    %449 = tpu.matmul %442, %448, %cst_256 {dimension_numbers = #tpu.dot_dimension_numbers<[1], [0], [0], [1], [0, 0, 1, 1], [], []>} : vector<4x32xf32>, vector<32x128xf32>, vector<4x128xf32> -> vector<4x128xf32>
    %c0_257 = arith.constant 0 : index
    %c0_258 = arith.constant 0 : index
    %c0_259 = arith.constant 0 : index
    %450 = vector.load %arg12[%c0_257, %c0_258, %c0_259] : memref<2x32x128xf32, #tpu.memory_space<vmem>>, vector<1x32x128xf32>
    %451 = vector.shape_cast %450 : vector<1x32x128xf32> to vector<32x128xf32>
    %cst_260 = arith.constant dense<0.000000e+00> : vector<4x128xf32>
    %452 = tpu.matmul %444, %451, %cst_260 {dimension_numbers = #tpu.dot_dimension_numbers<[1], [0], [0], [1], [0, 0, 1, 1], [], []>} : vector<4x32xf32>, vector<32x128xf32>, vector<4x128xf32> -> vector<4x128xf32>
    %453 = arith.addf %449, %452 : vector<4x128xf32>
    %c0_261 = arith.constant 0 : index
    %c0_262 = arith.constant 0 : index
    %c0_263 = arith.constant 0 : index
    %454 = vector.load %arg13[%c0_261, %c0_262, %c0_263] : memref<2x1x128xf32, #tpu.memory_space<vmem>>, vector<1x1x128xf32>
    %455 = vector.shape_cast %454 : vector<1x1x128xf32> to vector<1x128xf32>
    %456 = vector.broadcast %455 : vector<1x128xf32> to vector<4x128xf32>
    %457 = arith.addf %453, %456 : vector<4x128xf32>
    %458 = vector.extract_strided_slice %457 {offsets = [0, 0], sizes = [4, 96], strides = [1, 1]} : vector<4x128xf32> to vector<4x96xf32>
    %459 = arith.negf %458 : vector<4x96xf32>
    %460 = math.exp %459 : vector<4x96xf32>
    %cst_264 = arith.constant 1.000000e+00 : f32
    %461 = vector.broadcast %cst_264 : f32 to vector<4x96xf32>
    %462 = arith.addf %461, %460 : vector<4x96xf32>
    %463 = arith.divf %461, %462 : vector<4x96xf32>
    %464 = vector.extract_strided_slice %457 {offsets = [0, 96], sizes = [4, 32], strides = [1, 1]} : vector<4x128xf32> to vector<4x32xf32>
    %465 = math.tanh %464 : vector<4x32xf32>
    %466 = vector.extract_strided_slice %463 {offsets = [0, 0], sizes = [4, 32], strides = [1, 1]} : vector<4x96xf32> to vector<4x32xf32>
    %467 = vector.extract_strided_slice %463 {offsets = [0, 32], sizes = [4, 32], strides = [1, 1]} : vector<4x96xf32> to vector<4x32xf32>
    %468 = vector.extract_strided_slice %463 {offsets = [0, 64], sizes = [4, 32], strides = [1, 1]} : vector<4x96xf32> to vector<4x32xf32>
    %469 = arith.mulf %467, %446 : vector<4x32xf32>
    %470 = arith.mulf %466, %465 : vector<4x32xf32>
    %471 = arith.addf %469, %470 : vector<4x32xf32>
    %472 = math.tanh %471 : vector<4x32xf32>
    %473 = arith.mulf %468, %472 : vector<4x32xf32>
    %c0_265 = arith.constant 0 : index
    %c0_266 = arith.constant 0 : index
    %c0_267 = arith.constant 0 : index
    %474 = vector.load %arg22[%c0_265, %c0_266, %c0_267] : memref<2x4x32xf32, #tpu.memory_space<vmem>>, vector<1x4x32xf32>
    %475 = vector.shape_cast %474 : vector<1x4x32xf32> to vector<4x32xf32>
    %476 = vector.shape_cast %473 : vector<4x32xf32> to vector<1x4x32xf32>
    tpu.vector_store %arg22[%c0_265, %c0_266, %c0_267], %476 {strides = array<i32>} : memref<2x4x32xf32, #tpu.memory_space<vmem>>, vector<1x4x32xf32>,
    %c0_268 = arith.constant 0 : index
    %c0_269 = arith.constant 0 : index
    %c0_270 = arith.constant 0 : index
    %477 = vector.load %arg23[%c0_268, %c0_269, %c0_270] : memref<2x4x32xf32, #tpu.memory_space<vmem>>, vector<1x4x32xf32>
    %478 = vector.shape_cast %477 : vector<1x4x32xf32> to vector<4x32xf32>
    %479 = vector.shape_cast %471 : vector<4x32xf32> to vector<1x4x32xf32>
    tpu.vector_store %arg23[%c0_268, %c0_269, %c0_270], %479 {strides = array<i32>} : memref<2x4x32xf32, #tpu.memory_space<vmem>>, vector<1x4x32xf32>,
    %c1_271 = arith.constant 1 : index
    %c0_272 = arith.constant 0 : index
    %c0_273 = arith.constant 0 : index
    %480 = vector.load %arg22[%c1_271, %c0_272, %c0_273] : memref<2x4x32xf32, #tpu.memory_space<vmem>>, vector<1x4x32xf32>
    %481 = vector.shape_cast %480 : vector<1x4x32xf32> to vector<4x32xf32>
    %c1_274 = arith.constant 1 : index
    %c0_275 = arith.constant 0 : index
    %c0_276 = arith.constant 0 : index
    %482 = vector.load %arg23[%c1_274, %c0_275, %c0_276] : memref<2x4x32xf32, #tpu.memory_space<vmem>>, vector<1x4x32xf32>
    %483 = vector.shape_cast %482 : vector<1x4x32xf32> to vector<4x32xf32>
    %c1_277 = arith.constant 1 : index
    %c0_278 = arith.constant 0 : index
    %c0_279 = arith.constant 0 : index
    %484 = vector.load %arg11[%c1_277, %c0_278, %c0_279] : memref<2x32x128xf32, #tpu.memory_space<vmem>>, vector<1x32x128xf32>
    %485 = vector.shape_cast %484 : vector<1x32x128xf32> to vector<32x128xf32>
    %cst_280 = arith.constant dense<0.000000e+00> : vector<4x128xf32>
    %486 = tpu.matmul %473, %485, %cst_280 {dimension_numbers = #tpu.dot_dimension_numbers<[1], [0], [0], [1], [0, 0, 1, 1], [], []>} : vector<4x32xf32>, vector<32x128xf32>, vector<4x128xf32> -> vector<4x128xf32>
    %c1_281 = arith.constant 1 : index
    %c0_282 = arith.constant 0 : index
    %c0_283 = arith.constant 0 : index
    %487 = vector.load %arg12[%c1_281, %c0_282, %c0_283] : memref<2x32x128xf32, #tpu.memory_space<vmem>>, vector<1x32x128xf32>
    %488 = vector.shape_cast %487 : vector<1x32x128xf32> to vector<32x128xf32>
    %cst_284 = arith.constant dense<0.000000e+00> : vector<4x128xf32>
    %489 = tpu.matmul %481, %488, %cst_284 {dimension_numbers = #tpu.dot_dimension_numbers<[1], [0], [0], [1], [0, 0, 1, 1], [], []>} : vector<4x32xf32>, vector<32x128xf32>, vector<4x128xf32> -> vector<4x128xf32>
    %490 = arith.addf %486, %489 : vector<4x128xf32>
    %c1_285 = arith.constant 1 : index
    %c0_286 = arith.constant 0 : index
    %c0_287 = arith.constant 0 : index
    %491 = vector.load %arg13[%c1_285, %c0_286, %c0_287] : memref<2x1x128xf32, #tpu.memory_space<vmem>>, vector<1x1x128xf32>
    %492 = vector.shape_cast %491 : vector<1x1x128xf32> to vector<1x128xf32>
    %493 = vector.broadcast %492 : vector<1x128xf32> to vector<4x128xf32>
    %494 = arith.addf %490, %493 : vector<4x128xf32>
    %495 = vector.extract_strided_slice %494 {offsets = [0, 0], sizes = [4, 96], strides = [1, 1]} : vector<4x128xf32> to vector<4x96xf32>
    %496 = arith.negf %495 : vector<4x96xf32>
    %497 = math.exp %496 : vector<4x96xf32>
    %cst_288 = arith.constant 1.000000e+00 : f32
    %498 = vector.broadcast %cst_288 : f32 to vector<4x96xf32>
    %499 = arith.addf %498, %497 : vector<4x96xf32>
    %500 = arith.divf %498, %499 : vector<4x96xf32>
    %501 = vector.extract_strided_slice %494 {offsets = [0, 96], sizes = [4, 32], strides = [1, 1]} : vector<4x128xf32> to vector<4x32xf32>
    %502 = math.tanh %501 : vector<4x32xf32>
    %503 = vector.extract_strided_slice %500 {offsets = [0, 0], sizes = [4, 32], strides = [1, 1]} : vector<4x96xf32> to vector<4x32xf32>
    %504 = vector.extract_strided_slice %500 {offsets = [0, 32], sizes = [4, 32], strides = [1, 1]} : vector<4x96xf32> to vector<4x32xf32>
    %505 = vector.extract_strided_slice %500 {offsets = [0, 64], sizes = [4, 32], strides = [1, 1]} : vector<4x96xf32> to vector<4x32xf32>
    %506 = arith.mulf %504, %483 : vector<4x32xf32>
    %507 = arith.mulf %503, %502 : vector<4x32xf32>
    %508 = arith.addf %506, %507 : vector<4x32xf32>
    %509 = math.tanh %508 : vector<4x32xf32>
    %510 = arith.mulf %505, %509 : vector<4x32xf32>
    %c1_289 = arith.constant 1 : index
    %c0_290 = arith.constant 0 : index
    %c0_291 = arith.constant 0 : index
    %511 = vector.load %arg22[%c1_289, %c0_290, %c0_291] : memref<2x4x32xf32, #tpu.memory_space<vmem>>, vector<1x4x32xf32>
    %512 = vector.shape_cast %511 : vector<1x4x32xf32> to vector<4x32xf32>
    %513 = vector.shape_cast %510 : vector<4x32xf32> to vector<1x4x32xf32>
    tpu.vector_store %arg22[%c1_289, %c0_290, %c0_291], %513 {strides = array<i32>} : memref<2x4x32xf32, #tpu.memory_space<vmem>>, vector<1x4x32xf32>,
    %c1_292 = arith.constant 1 : index
    %c0_293 = arith.constant 0 : index
    %c0_294 = arith.constant 0 : index
    %514 = vector.load %arg23[%c1_292, %c0_293, %c0_294] : memref<2x4x32xf32, #tpu.memory_space<vmem>>, vector<1x4x32xf32>
    %515 = vector.shape_cast %514 : vector<1x4x32xf32> to vector<4x32xf32>
    %516 = vector.shape_cast %508 : vector<4x32xf32> to vector<1x4x32xf32>
    tpu.vector_store %arg23[%c1_292, %c0_293, %c0_294], %516 {strides = array<i32>} : memref<2x4x32xf32, #tpu.memory_space<vmem>>, vector<1x4x32xf32>,
    %517 = vector.shape_cast %423 : vector<4x8x32xf32> to vector<32x32xf32>
    %cst_295 = arith.constant dense<0.000000e+00> : vector<32x33xf32>
    %518 = tpu.matmul %517, %8, %cst_295 {dimension_numbers = #tpu.dot_dimension_numbers<[1], [0], [0], [1], [0, 0, 1, 1], [], []>} : vector<32x32xf32>, vector<32x33xf32>, vector<32x33xf32> -> vector<32x33xf32>
    %519 = vector.shape_cast %518 : vector<32x33xf32> to vector<4x8x33xf32>
    %cst_296 = arith.constant dense<0.000000e+00> : vector<4x33xf32>
    %520 = tpu.matmul %510, %9, %cst_296 {dimension_numbers = #tpu.dot_dimension_numbers<[1], [0], [0], [1], [0, 0, 1, 1], [], []>} : vector<4x32xf32>, vector<32x33xf32>, vector<4x33xf32> -> vector<4x33xf32>
    %521 = vector.shape_cast %520 : vector<4x33xf32> to vector<4x1x33xf32>
    %522 = vector.broadcast %521 : vector<4x1x33xf32> to vector<4x8x33xf32>
    %523 = arith.addf %519, %522 : vector<4x8x33xf32>
    %524 = vector.shape_cast %10 : vector<1x33xf32> to vector<1x1x33xf32>
    %525 = vector.broadcast %524 : vector<1x1x33xf32> to vector<4x8x33xf32>
    %526 = arith.addf %523, %525 : vector<4x8x33xf32>
    %527 = vector.extract_strided_slice %526 {offsets = [0, 0, 0], sizes = [4, 8, 32], strides = [1, 1, 1]} : vector<4x8x33xf32> to vector<4x8x32xf32>
    %528 = math.tanh %527 : vector<4x8x32xf32>
    %529 = vector.extract_strided_slice %526 {offsets = [0, 0, 32], sizes = [4, 8, 1], strides = [1, 1, 1]} : vector<4x8x33xf32> to vector<4x8x1xf32>
    %530 = arith.negf %529 : vector<4x8x1xf32>
    %531 = math.exp %530 : vector<4x8x1xf32>
    %cst_297 = arith.constant 1.000000e+00 : f32
    %532 = vector.broadcast %cst_297 : f32 to vector<4x8x1xf32>
    %533 = arith.addf %532, %531 : vector<4x8x1xf32>
    %534 = arith.divf %532, %533 : vector<4x8x1xf32>
    %cst_298 = arith.constant 1.000000e+00 : f32
    %535 = vector.broadcast %cst_298 : f32 to vector<4x8x1xf32>
    %536 = arith.subf %535, %534 : vector<4x8x1xf32>
    %537 = vector.broadcast %536 : vector<4x8x1xf32> to vector<4x8x32xf32>
    %538 = arith.mulf %423, %537 : vector<4x8x32xf32>
    %539 = vector.broadcast %534 : vector<4x8x1xf32> to vector<4x8x32xf32>
    %540 = arith.mulf %539, %528 : vector<4x8x32xf32>
    %541 = arith.addf %538, %540 : vector<4x8x32xf32>
    %542 = vector.shape_cast %422 : vector<4x8xf32> to vector<4x8x1xf32>
    %cst_299 = arith.constant 5.000000e-01 : f32
    %543 = vector.broadcast %cst_299 : f32 to vector<4x8x1xf32>
    %544 = arith.cmpf ogt, %542, %543 : vector<4x8x1xf32>
    %cst_300 = arith.constant 0.000000e+00 : f32
    %545 = vector.shape_cast %544 : vector<4x8x1xi1> to vector<4x8x1xi1>
    %546 = vector.broadcast %545 : vector<4x8x1xi1> to vector<4x8x32xi1>
    %547 = vector.broadcast %cst_300 : f32 to vector<4x8x32xf32>
    %548 = arith.select %546, %547, %541 : vector<4x8x32xi1>, vector<4x8x32xf32>
    %c0_301 = arith.constant 0 : index
    %c0_302 = arith.constant 0 : index
    %c0_303 = arith.constant 0 : index
    %549 = vector.load %arg24[%c0_301, %c0_302, %c0_303] : memref<4x8x32xf32, #tpu.memory_space<vmem>>, vector<4x8x32xf32>
    tpu.vector_store %arg24[%c0_301, %c0_302, %c0_303], %548 {strides = array<i32>} : memref<4x8x32xf32, #tpu.memory_space<vmem>>, vector<4x8x32xf32>,
    %c12 = arith.constant 12 : index
    %c0_304 = arith.constant 0 : index
    %550 = vector.load %arg25[%c12, %c0_304] : memref<32x32xf32, #tpu.memory_space<vmem>>, vector<4x32xf32>
    tpu.vector_store %arg25[%c12, %c0_304], %510 {strides = array<i32>} : memref<32x32xf32, #tpu.memory_space<vmem>>, vector<4x32xf32>,
    %c4_305 = arith.constant 4 : index
    %c0_306 = arith.constant 0 : index
    %c0_307 = arith.constant 0 : index
    %551 = vector.load %arg2[%c4_305, %c0_306, %c0_307] : memref<8x4x32xf32, #tpu.memory_space<vmem>>, vector<1x4x32xf32>
    %552 = vector.shape_cast %551 : vector<1x4x32xf32> to vector<4x32xf32>
    %c4_308 = arith.constant 4 : index
    %c0_309 = arith.constant 0 : index
    %c0_310 = arith.constant 0 : index
    %553 = vector.load %arg3[%c4_308, %c0_309, %c0_310] : memref<8x4x17xf32, #tpu.memory_space<vmem>>, vector<1x4x17xf32>
    %554 = vector.shape_cast %553 : vector<1x4x17xf32> to vector<4x17xf32>
    %555 = vector.extract_strided_slice %554 {offsets = [0, 0], sizes = [4, 8], strides = [1, 1]} : vector<4x17xf32> to vector<4x8xf32>
    %556 = vector.extract_strided_slice %554 {offsets = [0, 8], sizes = [4, 1], strides = [1, 1]} : vector<4x17xf32> to vector<4x1xf32>
    %557 = vector.extract_strided_slice %554 {offsets = [0, 9], sizes = [4, 8], strides = [1, 1]} : vector<4x17xf32> to vector<4x8xf32>
    %c0_311 = arith.constant 0 : index
    %c0_312 = arith.constant 0 : index
    %c0_313 = arith.constant 0 : index
    %558 = vector.load %arg24[%c0_311, %c0_312, %c0_313] : memref<4x8x32xf32, #tpu.memory_space<vmem>>, vector<4x8x32xf32>
    %559 = vector.shape_cast %555 : vector<4x8xf32> to vector<4x8x1xf32>
    %560 = vector.broadcast %559 : vector<4x8x1xf32> to vector<4x8x32xf32>
    %561 = arith.mulf %560, %558 : vector<4x8x32xf32>
    %cst_314 = arith.constant dense<0.000000e+00> : vector<4x32xf32>
    %562 = vector.multi_reduction <add>, %561, %cst_314 [1] : vector<4x8x32xf32> to vector<4x32xf32>
    %cst_315 = arith.constant dense<0.000000e+00> : vector<4x32xf32>
    %563 = tpu.matmul %562, %3, %cst_315 {dimension_numbers = #tpu.dot_dimension_numbers<[1], [0], [0], [1], [0, 0, 1, 1], [], []>} : vector<4x32xf32>, vector<32x32xf32>, vector<4x32xf32> -> vector<4x32xf32>
    %cst_316 = arith.constant dense<0.000000e+00> : vector<4x32xf32>
    %564 = tpu.matmul %552, %4, %cst_316 {dimension_numbers = #tpu.dot_dimension_numbers<[1], [0], [0], [1], [0, 0, 1, 1], [], []>} : vector<4x32xf32>, vector<32x32xf32>, vector<4x32xf32> -> vector<4x32xf32>
    %565 = arith.addf %563, %564 : vector<4x32xf32>
    %566 = vector.broadcast %5 : vector<1x32xf32> to vector<4x32xf32>
    %567 = arith.addf %565, %566 : vector<4x32xf32>
    %cst_317 = arith.constant 0.000000e+00 : f32
    %568 = vector.broadcast %cst_317 : f32 to vector<4x32xf32>
    %569 = arith.maximumf %567, %568 : vector<4x32xf32>
    %cst_318 = arith.constant dense<0.000000e+00> : vector<4x32xf32>
    %570 = tpu.matmul %569, %6, %cst_318 {dimension_numbers = #tpu.dot_dimension_numbers<[1], [0], [0], [1], [0, 0, 1, 1], [], []>} : vector<4x32xf32>, vector<32x32xf32>, vector<4x32xf32> -> vector<4x32xf32>
    %571 = vector.broadcast %7 : vector<1x32xf32> to vector<4x32xf32>
    %572 = arith.addf %570, %571 : vector<4x32xf32>
    %cst_319 = arith.constant 5.000000e-01 : f32
    %573 = vector.broadcast %cst_319 : f32 to vector<4x1xf32>
    %574 = arith.cmpf ogt, %556, %573 : vector<4x1xf32>
    %575 = vector.shape_cast %574 : vector<4x1xi1> to vector<4x1xi1>
    %576 = vector.broadcast %575 : vector<4x1xi1> to vector<4x32xi1>
    %577 = arith.select %576, %572, %552 : vector<4x32xi1>, vector<4x32xf32>
    %c0_320 = arith.constant 0 : index
    %c0_321 = arith.constant 0 : index
    %c0_322 = arith.constant 0 : index
    %578 = vector.load %arg22[%c0_320, %c0_321, %c0_322] : memref<2x4x32xf32, #tpu.memory_space<vmem>>, vector<1x4x32xf32>
    %579 = vector.shape_cast %578 : vector<1x4x32xf32> to vector<4x32xf32>
    %c0_323 = arith.constant 0 : index
    %c0_324 = arith.constant 0 : index
    %c0_325 = arith.constant 0 : index
    %580 = vector.load %arg23[%c0_323, %c0_324, %c0_325] : memref<2x4x32xf32, #tpu.memory_space<vmem>>, vector<1x4x32xf32>
    %581 = vector.shape_cast %580 : vector<1x4x32xf32> to vector<4x32xf32>
    %c0_326 = arith.constant 0 : index
    %c0_327 = arith.constant 0 : index
    %c0_328 = arith.constant 0 : index
    %582 = vector.load %arg11[%c0_326, %c0_327, %c0_328] : memref<2x32x128xf32, #tpu.memory_space<vmem>>, vector<1x32x128xf32>
    %583 = vector.shape_cast %582 : vector<1x32x128xf32> to vector<32x128xf32>
    %cst_329 = arith.constant dense<0.000000e+00> : vector<4x128xf32>
    %584 = tpu.matmul %577, %583, %cst_329 {dimension_numbers = #tpu.dot_dimension_numbers<[1], [0], [0], [1], [0, 0, 1, 1], [], []>} : vector<4x32xf32>, vector<32x128xf32>, vector<4x128xf32> -> vector<4x128xf32>
    %c0_330 = arith.constant 0 : index
    %c0_331 = arith.constant 0 : index
    %c0_332 = arith.constant 0 : index
    %585 = vector.load %arg12[%c0_330, %c0_331, %c0_332] : memref<2x32x128xf32, #tpu.memory_space<vmem>>, vector<1x32x128xf32>
    %586 = vector.shape_cast %585 : vector<1x32x128xf32> to vector<32x128xf32>
    %cst_333 = arith.constant dense<0.000000e+00> : vector<4x128xf32>
    %587 = tpu.matmul %579, %586, %cst_333 {dimension_numbers = #tpu.dot_dimension_numbers<[1], [0], [0], [1], [0, 0, 1, 1], [], []>} : vector<4x32xf32>, vector<32x128xf32>, vector<4x128xf32> -> vector<4x128xf32>
    %588 = arith.addf %584, %587 : vector<4x128xf32>
    %c0_334 = arith.constant 0 : index
    %c0_335 = arith.constant 0 : index
    %c0_336 = arith.constant 0 : index
    %589 = vector.load %arg13[%c0_334, %c0_335, %c0_336] : memref<2x1x128xf32, #tpu.memory_space<vmem>>, vector<1x1x128xf32>
    %590 = vector.shape_cast %589 : vector<1x1x128xf32> to vector<1x128xf32>
    %591 = vector.broadcast %590 : vector<1x128xf32> to vector<4x128xf32>
    %592 = arith.addf %588, %591 : vector<4x128xf32>
    %593 = vector.extract_strided_slice %592 {offsets = [0, 0], sizes = [4, 96], strides = [1, 1]} : vector<4x128xf32> to vector<4x96xf32>
    %594 = arith.negf %593 : vector<4x96xf32>
    %595 = math.exp %594 : vector<4x96xf32>
    %cst_337 = arith.constant 1.000000e+00 : f32
    %596 = vector.broadcast %cst_337 : f32 to vector<4x96xf32>
    %597 = arith.addf %596, %595 : vector<4x96xf32>
    %598 = arith.divf %596, %597 : vector<4x96xf32>
    %599 = vector.extract_strided_slice %592 {offsets = [0, 96], sizes = [4, 32], strides = [1, 1]} : vector<4x128xf32> to vector<4x32xf32>
    %600 = math.tanh %599 : vector<4x32xf32>
    %601 = vector.extract_strided_slice %598 {offsets = [0, 0], sizes = [4, 32], strides = [1, 1]} : vector<4x96xf32> to vector<4x32xf32>
    %602 = vector.extract_strided_slice %598 {offsets = [0, 32], sizes = [4, 32], strides = [1, 1]} : vector<4x96xf32> to vector<4x32xf32>
    %603 = vector.extract_strided_slice %598 {offsets = [0, 64], sizes = [4, 32], strides = [1, 1]} : vector<4x96xf32> to vector<4x32xf32>
    %604 = arith.mulf %602, %581 : vector<4x32xf32>
    %605 = arith.mulf %601, %600 : vector<4x32xf32>
    %606 = arith.addf %604, %605 : vector<4x32xf32>
    %607 = math.tanh %606 : vector<4x32xf32>
    %608 = arith.mulf %603, %607 : vector<4x32xf32>
    %c0_338 = arith.constant 0 : index
    %c0_339 = arith.constant 0 : index
    %c0_340 = arith.constant 0 : index
    %609 = vector.load %arg22[%c0_338, %c0_339, %c0_340] : memref<2x4x32xf32, #tpu.memory_space<vmem>>, vector<1x4x32xf32>
    %610 = vector.shape_cast %609 : vector<1x4x32xf32> to vector<4x32xf32>
    %611 = vector.shape_cast %608 : vector<4x32xf32> to vector<1x4x32xf32>
    tpu.vector_store %arg22[%c0_338, %c0_339, %c0_340], %611 {strides = array<i32>} : memref<2x4x32xf32, #tpu.memory_space<vmem>>, vector<1x4x32xf32>,
    %c0_341 = arith.constant 0 : index
    %c0_342 = arith.constant 0 : index
    %c0_343 = arith.constant 0 : index
    %612 = vector.load %arg23[%c0_341, %c0_342, %c0_343] : memref<2x4x32xf32, #tpu.memory_space<vmem>>, vector<1x4x32xf32>
    %613 = vector.shape_cast %612 : vector<1x4x32xf32> to vector<4x32xf32>
    %614 = vector.shape_cast %606 : vector<4x32xf32> to vector<1x4x32xf32>
    tpu.vector_store %arg23[%c0_341, %c0_342, %c0_343], %614 {strides = array<i32>} : memref<2x4x32xf32, #tpu.memory_space<vmem>>, vector<1x4x32xf32>,
    %c1_344 = arith.constant 1 : index
    %c0_345 = arith.constant 0 : index
    %c0_346 = arith.constant 0 : index
    %615 = vector.load %arg22[%c1_344, %c0_345, %c0_346] : memref<2x4x32xf32, #tpu.memory_space<vmem>>, vector<1x4x32xf32>
    %616 = vector.shape_cast %615 : vector<1x4x32xf32> to vector<4x32xf32>
    %c1_347 = arith.constant 1 : index
    %c0_348 = arith.constant 0 : index
    %c0_349 = arith.constant 0 : index
    %617 = vector.load %arg23[%c1_347, %c0_348, %c0_349] : memref<2x4x32xf32, #tpu.memory_space<vmem>>, vector<1x4x32xf32>
    %618 = vector.shape_cast %617 : vector<1x4x32xf32> to vector<4x32xf32>
    %c1_350 = arith.constant 1 : index
    %c0_351 = arith.constant 0 : index
    %c0_352 = arith.constant 0 : index
    %619 = vector.load %arg11[%c1_350, %c0_351, %c0_352] : memref<2x32x128xf32, #tpu.memory_space<vmem>>, vector<1x32x128xf32>
    %620 = vector.shape_cast %619 : vector<1x32x128xf32> to vector<32x128xf32>
    %cst_353 = arith.constant dense<0.000000e+00> : vector<4x128xf32>
    %621 = tpu.matmul %608, %620, %cst_353 {dimension_numbers = #tpu.dot_dimension_numbers<[1], [0], [0], [1], [0, 0, 1, 1], [], []>} : vector<4x32xf32>, vector<32x128xf32>, vector<4x128xf32> -> vector<4x128xf32>
    %c1_354 = arith.constant 1 : index
    %c0_355 = arith.constant 0 : index
    %c0_356 = arith.constant 0 : index
    %622 = vector.load %arg12[%c1_354, %c0_355, %c0_356] : memref<2x32x128xf32, #tpu.memory_space<vmem>>, vector<1x32x128xf32>
    %623 = vector.shape_cast %622 : vector<1x32x128xf32> to vector<32x128xf32>
    %cst_357 = arith.constant dense<0.000000e+00> : vector<4x128xf32>
    %624 = tpu.matmul %616, %623, %cst_357 {dimension_numbers = #tpu.dot_dimension_numbers<[1], [0], [0], [1], [0, 0, 1, 1], [], []>} : vector<4x32xf32>, vector<32x128xf32>, vector<4x128xf32> -> vector<4x128xf32>
    %625 = arith.addf %621, %624 : vector<4x128xf32>
    %c1_358 = arith.constant 1 : index
    %c0_359 = arith.constant 0 : index
    %c0_360 = arith.constant 0 : index
    %626 = vector.load %arg13[%c1_358, %c0_359, %c0_360] : memref<2x1x128xf32, #tpu.memory_space<vmem>>, vector<1x1x128xf32>
    %627 = vector.shape_cast %626 : vector<1x1x128xf32> to vector<1x128xf32>
    %628 = vector.broadcast %627 : vector<1x128xf32> to vector<4x128xf32>
    %629 = arith.addf %625, %628 : vector<4x128xf32>
    %630 = vector.extract_strided_slice %629 {offsets = [0, 0], sizes = [4, 96], strides = [1, 1]} : vector<4x128xf32> to vector<4x96xf32>
    %631 = arith.negf %630 : vector<4x96xf32>
    %632 = math.exp %631 : vector<4x96xf32>
    %cst_361 = arith.constant 1.000000e+00 : f32
    %633 = vector.broadcast %cst_361 : f32 to vector<4x96xf32>
    %634 = arith.addf %633, %632 : vector<4x96xf32>
    %635 = arith.divf %633, %634 : vector<4x96xf32>
    %636 = vector.extract_strided_slice %629 {offsets = [0, 96], sizes = [4, 32], strides = [1, 1]} : vector<4x128xf32> to vector<4x32xf32>
    %637 = math.tanh %636 : vector<4x32xf32>
    %638 = vector.extract_strided_slice %635 {offsets = [0, 0], sizes = [4, 32], strides = [1, 1]} : vector<4x96xf32> to vector<4x32xf32>
    %639 = vector.extract_strided_slice %635 {offsets = [0, 32], sizes = [4, 32], strides = [1, 1]} : vector<4x96xf32> to vector<4x32xf32>
    %640 = vector.extract_strided_slice %635 {offsets = [0, 64], sizes = [4, 32], strides = [1, 1]} : vector<4x96xf32> to vector<4x32xf32>
    %641 = arith.mulf %639, %618 : vector<4x32xf32>
    %642 = arith.mulf %638, %637 : vector<4x32xf32>
    %643 = arith.addf %641, %642 : vector<4x32xf32>
    %644 = math.tanh %643 : vector<4x32xf32>
    %645 = arith.mulf %640, %644 : vector<4x32xf32>
    %c1_362 = arith.constant 1 : index
    %c0_363 = arith.constant 0 : index
    %c0_364 = arith.constant 0 : index
    %646 = vector.load %arg22[%c1_362, %c0_363, %c0_364] : memref<2x4x32xf32, #tpu.memory_space<vmem>>, vector<1x4x32xf32>
    %647 = vector.shape_cast %646 : vector<1x4x32xf32> to vector<4x32xf32>
    %648 = vector.shape_cast %645 : vector<4x32xf32> to vector<1x4x32xf32>
    tpu.vector_store %arg22[%c1_362, %c0_363, %c0_364], %648 {strides = array<i32>} : memref<2x4x32xf32, #tpu.memory_space<vmem>>, vector<1x4x32xf32>,
    %c1_365 = arith.constant 1 : index
    %c0_366 = arith.constant 0 : index
    %c0_367 = arith.constant 0 : index
    %649 = vector.load %arg23[%c1_365, %c0_366, %c0_367] : memref<2x4x32xf32, #tpu.memory_space<vmem>>, vector<1x4x32xf32>
    %650 = vector.shape_cast %649 : vector<1x4x32xf32> to vector<4x32xf32>
    %651 = vector.shape_cast %643 : vector<4x32xf32> to vector<1x4x32xf32>
    tpu.vector_store %arg23[%c1_365, %c0_366, %c0_367], %651 {strides = array<i32>} : memref<2x4x32xf32, #tpu.memory_space<vmem>>, vector<1x4x32xf32>,
    %652 = vector.shape_cast %558 : vector<4x8x32xf32> to vector<32x32xf32>
    %cst_368 = arith.constant dense<0.000000e+00> : vector<32x33xf32>
    %653 = tpu.matmul %652, %8, %cst_368 {dimension_numbers = #tpu.dot_dimension_numbers<[1], [0], [0], [1], [0, 0, 1, 1], [], []>} : vector<32x32xf32>, vector<32x33xf32>, vector<32x33xf32> -> vector<32x33xf32>
    %654 = vector.shape_cast %653 : vector<32x33xf32> to vector<4x8x33xf32>
    %cst_369 = arith.constant dense<0.000000e+00> : vector<4x33xf32>
    %655 = tpu.matmul %645, %9, %cst_369 {dimension_numbers = #tpu.dot_dimension_numbers<[1], [0], [0], [1], [0, 0, 1, 1], [], []>} : vector<4x32xf32>, vector<32x33xf32>, vector<4x33xf32> -> vector<4x33xf32>
    %656 = vector.shape_cast %655 : vector<4x33xf32> to vector<4x1x33xf32>
    %657 = vector.broadcast %656 : vector<4x1x33xf32> to vector<4x8x33xf32>
    %658 = arith.addf %654, %657 : vector<4x8x33xf32>
    %659 = vector.shape_cast %10 : vector<1x33xf32> to vector<1x1x33xf32>
    %660 = vector.broadcast %659 : vector<1x1x33xf32> to vector<4x8x33xf32>
    %661 = arith.addf %658, %660 : vector<4x8x33xf32>
    %662 = vector.extract_strided_slice %661 {offsets = [0, 0, 0], sizes = [4, 8, 32], strides = [1, 1, 1]} : vector<4x8x33xf32> to vector<4x8x32xf32>
    %663 = math.tanh %662 : vector<4x8x32xf32>
    %664 = vector.extract_strided_slice %661 {offsets = [0, 0, 32], sizes = [4, 8, 1], strides = [1, 1, 1]} : vector<4x8x33xf32> to vector<4x8x1xf32>
    %665 = arith.negf %664 : vector<4x8x1xf32>
    %666 = math.exp %665 : vector<4x8x1xf32>
    %cst_370 = arith.constant 1.000000e+00 : f32
    %667 = vector.broadcast %cst_370 : f32 to vector<4x8x1xf32>
    %668 = arith.addf %667, %666 : vector<4x8x1xf32>
    %669 = arith.divf %667, %668 : vector<4x8x1xf32>
    %cst_371 = arith.constant 1.000000e+00 : f32
    %670 = vector.broadcast %cst_371 : f32 to vector<4x8x1xf32>
    %671 = arith.subf %670, %669 : vector<4x8x1xf32>
    %672 = vector.broadcast %671 : vector<4x8x1xf32> to vector<4x8x32xf32>
    %673 = arith.mulf %558, %672 : vector<4x8x32xf32>
    %674 = vector.broadcast %669 : vector<4x8x1xf32> to vector<4x8x32xf32>
    %675 = arith.mulf %674, %663 : vector<4x8x32xf32>
    %676 = arith.addf %673, %675 : vector<4x8x32xf32>
    %677 = vector.shape_cast %557 : vector<4x8xf32> to vector<4x8x1xf32>
    %cst_372 = arith.constant 5.000000e-01 : f32
    %678 = vector.broadcast %cst_372 : f32 to vector<4x8x1xf32>
    %679 = arith.cmpf ogt, %677, %678 : vector<4x8x1xf32>
    %cst_373 = arith.constant 0.000000e+00 : f32
    %680 = vector.shape_cast %679 : vector<4x8x1xi1> to vector<4x8x1xi1>
    %681 = vector.broadcast %680 : vector<4x8x1xi1> to vector<4x8x32xi1>
    %682 = vector.broadcast %cst_373 : f32 to vector<4x8x32xf32>
    %683 = arith.select %681, %682, %676 : vector<4x8x32xi1>, vector<4x8x32xf32>
    %c0_374 = arith.constant 0 : index
    %c0_375 = arith.constant 0 : index
    %c0_376 = arith.constant 0 : index
    %684 = vector.load %arg24[%c0_374, %c0_375, %c0_376] : memref<4x8x32xf32, #tpu.memory_space<vmem>>, vector<4x8x32xf32>
    tpu.vector_store %arg24[%c0_374, %c0_375, %c0_376], %683 {strides = array<i32>} : memref<4x8x32xf32, #tpu.memory_space<vmem>>, vector<4x8x32xf32>,
    %c16 = arith.constant 16 : index
    %c0_377 = arith.constant 0 : index
    %685 = vector.load %arg25[%c16, %c0_377] : memref<32x32xf32, #tpu.memory_space<vmem>>, vector<4x32xf32>
    tpu.vector_store %arg25[%c16, %c0_377], %645 {strides = array<i32>} : memref<32x32xf32, #tpu.memory_space<vmem>>, vector<4x32xf32>,
    %c5 = arith.constant 5 : index
    %c0_378 = arith.constant 0 : index
    %c0_379 = arith.constant 0 : index
    %686 = vector.load %arg2[%c5, %c0_378, %c0_379] : memref<8x4x32xf32, #tpu.memory_space<vmem>>, vector<1x4x32xf32>
    %687 = vector.shape_cast %686 : vector<1x4x32xf32> to vector<4x32xf32>
    %c5_380 = arith.constant 5 : index
    %c0_381 = arith.constant 0 : index
    %c0_382 = arith.constant 0 : index
    %688 = vector.load %arg3[%c5_380, %c0_381, %c0_382] : memref<8x4x17xf32, #tpu.memory_space<vmem>>, vector<1x4x17xf32>
    %689 = vector.shape_cast %688 : vector<1x4x17xf32> to vector<4x17xf32>
    %690 = vector.extract_strided_slice %689 {offsets = [0, 0], sizes = [4, 8], strides = [1, 1]} : vector<4x17xf32> to vector<4x8xf32>
    %691 = vector.extract_strided_slice %689 {offsets = [0, 8], sizes = [4, 1], strides = [1, 1]} : vector<4x17xf32> to vector<4x1xf32>
    %692 = vector.extract_strided_slice %689 {offsets = [0, 9], sizes = [4, 8], strides = [1, 1]} : vector<4x17xf32> to vector<4x8xf32>
    %c0_383 = arith.constant 0 : index
    %c0_384 = arith.constant 0 : index
    %c0_385 = arith.constant 0 : index
    %693 = vector.load %arg24[%c0_383, %c0_384, %c0_385] : memref<4x8x32xf32, #tpu.memory_space<vmem>>, vector<4x8x32xf32>
    %694 = vector.shape_cast %690 : vector<4x8xf32> to vector<4x8x1xf32>
    %695 = vector.broadcast %694 : vector<4x8x1xf32> to vector<4x8x32xf32>
    %696 = arith.mulf %695, %693 : vector<4x8x32xf32>
    %cst_386 = arith.constant dense<0.000000e+00> : vector<4x32xf32>
    %697 = vector.multi_reduction <add>, %696, %cst_386 [1] : vector<4x8x32xf32> to vector<4x32xf32>
    %cst_387 = arith.constant dense<0.000000e+00> : vector<4x32xf32>
    %698 = tpu.matmul %697, %3, %cst_387 {dimension_numbers = #tpu.dot_dimension_numbers<[1], [0], [0], [1], [0, 0, 1, 1], [], []>} : vector<4x32xf32>, vector<32x32xf32>, vector<4x32xf32> -> vector<4x32xf32>
    %cst_388 = arith.constant dense<0.000000e+00> : vector<4x32xf32>
    %699 = tpu.matmul %687, %4, %cst_388 {dimension_numbers = #tpu.dot_dimension_numbers<[1], [0], [0], [1], [0, 0, 1, 1], [], []>} : vector<4x32xf32>, vector<32x32xf32>, vector<4x32xf32> -> vector<4x32xf32>
    %700 = arith.addf %698, %699 : vector<4x32xf32>
    %701 = vector.broadcast %5 : vector<1x32xf32> to vector<4x32xf32>
    %702 = arith.addf %700, %701 : vector<4x32xf32>
    %cst_389 = arith.constant 0.000000e+00 : f32
    %703 = vector.broadcast %cst_389 : f32 to vector<4x32xf32>
    %704 = arith.maximumf %702, %703 : vector<4x32xf32>
    %cst_390 = arith.constant dense<0.000000e+00> : vector<4x32xf32>
    %705 = tpu.matmul %704, %6, %cst_390 {dimension_numbers = #tpu.dot_dimension_numbers<[1], [0], [0], [1], [0, 0, 1, 1], [], []>} : vector<4x32xf32>, vector<32x32xf32>, vector<4x32xf32> -> vector<4x32xf32>
    %706 = vector.broadcast %7 : vector<1x32xf32> to vector<4x32xf32>
    %707 = arith.addf %705, %706 : vector<4x32xf32>
    %cst_391 = arith.constant 5.000000e-01 : f32
    %708 = vector.broadcast %cst_391 : f32 to vector<4x1xf32>
    %709 = arith.cmpf ogt, %691, %708 : vector<4x1xf32>
    %710 = vector.shape_cast %709 : vector<4x1xi1> to vector<4x1xi1>
    %711 = vector.broadcast %710 : vector<4x1xi1> to vector<4x32xi1>
    %712 = arith.select %711, %707, %687 : vector<4x32xi1>, vector<4x32xf32>
    %c0_392 = arith.constant 0 : index
    %c0_393 = arith.constant 0 : index
    %c0_394 = arith.constant 0 : index
    %713 = vector.load %arg22[%c0_392, %c0_393, %c0_394] : memref<2x4x32xf32, #tpu.memory_space<vmem>>, vector<1x4x32xf32>
    %714 = vector.shape_cast %713 : vector<1x4x32xf32> to vector<4x32xf32>
    %c0_395 = arith.constant 0 : index
    %c0_396 = arith.constant 0 : index
    %c0_397 = arith.constant 0 : index
    %715 = vector.load %arg23[%c0_395, %c0_396, %c0_397] : memref<2x4x32xf32, #tpu.memory_space<vmem>>, vector<1x4x32xf32>
    %716 = vector.shape_cast %715 : vector<1x4x32xf32> to vector<4x32xf32>
    %c0_398 = arith.constant 0 : index
    %c0_399 = arith.constant 0 : index
    %c0_400 = arith.constant 0 : index
    %717 = vector.load %arg11[%c0_398, %c0_399, %c0_400] : memref<2x32x128xf32, #tpu.memory_space<vmem>>, vector<1x32x128xf32>
    %718 = vector.shape_cast %717 : vector<1x32x128xf32> to vector<32x128xf32>
    %cst_401 = arith.constant dense<0.000000e+00> : vector<4x128xf32>
    %719 = tpu.matmul %712, %718, %cst_401 {dimension_numbers = #tpu.dot_dimension_numbers<[1], [0], [0], [1], [0, 0, 1, 1], [], []>} : vector<4x32xf32>, vector<32x128xf32>, vector<4x128xf32> -> vector<4x128xf32>
    %c0_402 = arith.constant 0 : index
    %c0_403 = arith.constant 0 : index
    %c0_404 = arith.constant 0 : index
    %720 = vector.load %arg12[%c0_402, %c0_403, %c0_404] : memref<2x32x128xf32, #tpu.memory_space<vmem>>, vector<1x32x128xf32>
    %721 = vector.shape_cast %720 : vector<1x32x128xf32> to vector<32x128xf32>
    %cst_405 = arith.constant dense<0.000000e+00> : vector<4x128xf32>
    %722 = tpu.matmul %714, %721, %cst_405 {dimension_numbers = #tpu.dot_dimension_numbers<[1], [0], [0], [1], [0, 0, 1, 1], [], []>} : vector<4x32xf32>, vector<32x128xf32>, vector<4x128xf32> -> vector<4x128xf32>
    %723 = arith.addf %719, %722 : vector<4x128xf32>
    %c0_406 = arith.constant 0 : index
    %c0_407 = arith.constant 0 : index
    %c0_408 = arith.constant 0 : index
    %724 = vector.load %arg13[%c0_406, %c0_407, %c0_408] : memref<2x1x128xf32, #tpu.memory_space<vmem>>, vector<1x1x128xf32>
    %725 = vector.shape_cast %724 : vector<1x1x128xf32> to vector<1x128xf32>
    %726 = vector.broadcast %725 : vector<1x128xf32> to vector<4x128xf32>
    %727 = arith.addf %723, %726 : vector<4x128xf32>
    %728 = vector.extract_strided_slice %727 {offsets = [0, 0], sizes = [4, 96], strides = [1, 1]} : vector<4x128xf32> to vector<4x96xf32>
    %729 = arith.negf %728 : vector<4x96xf32>
    %730 = math.exp %729 : vector<4x96xf32>
    %cst_409 = arith.constant 1.000000e+00 : f32
    %731 = vector.broadcast %cst_409 : f32 to vector<4x96xf32>
    %732 = arith.addf %731, %730 : vector<4x96xf32>
    %733 = arith.divf %731, %732 : vector<4x96xf32>
    %734 = vector.extract_strided_slice %727 {offsets = [0, 96], sizes = [4, 32], strides = [1, 1]} : vector<4x128xf32> to vector<4x32xf32>
    %735 = math.tanh %734 : vector<4x32xf32>
    %736 = vector.extract_strided_slice %733 {offsets = [0, 0], sizes = [4, 32], strides = [1, 1]} : vector<4x96xf32> to vector<4x32xf32>
    %737 = vector.extract_strided_slice %733 {offsets = [0, 32], sizes = [4, 32], strides = [1, 1]} : vector<4x96xf32> to vector<4x32xf32>
    %738 = vector.extract_strided_slice %733 {offsets = [0, 64], sizes = [4, 32], strides = [1, 1]} : vector<4x96xf32> to vector<4x32xf32>
    %739 = arith.mulf %737, %716 : vector<4x32xf32>
    %740 = arith.mulf %736, %735 : vector<4x32xf32>
    %741 = arith.addf %739, %740 : vector<4x32xf32>
    %742 = math.tanh %741 : vector<4x32xf32>
    %743 = arith.mulf %738, %742 : vector<4x32xf32>
    %c0_410 = arith.constant 0 : index
    %c0_411 = arith.constant 0 : index
    %c0_412 = arith.constant 0 : index
    %744 = vector.load %arg22[%c0_410, %c0_411, %c0_412] : memref<2x4x32xf32, #tpu.memory_space<vmem>>, vector<1x4x32xf32>
    %745 = vector.shape_cast %744 : vector<1x4x32xf32> to vector<4x32xf32>
    %746 = vector.shape_cast %743 : vector<4x32xf32> to vector<1x4x32xf32>
    tpu.vector_store %arg22[%c0_410, %c0_411, %c0_412], %746 {strides = array<i32>} : memref<2x4x32xf32, #tpu.memory_space<vmem>>, vector<1x4x32xf32>,
    %c0_413 = arith.constant 0 : index
    %c0_414 = arith.constant 0 : index
    %c0_415 = arith.constant 0 : index
    %747 = vector.load %arg23[%c0_413, %c0_414, %c0_415] : memref<2x4x32xf32, #tpu.memory_space<vmem>>, vector<1x4x32xf32>
    %748 = vector.shape_cast %747 : vector<1x4x32xf32> to vector<4x32xf32>
    %749 = vector.shape_cast %741 : vector<4x32xf32> to vector<1x4x32xf32>
    tpu.vector_store %arg23[%c0_413, %c0_414, %c0_415], %749 {strides = array<i32>} : memref<2x4x32xf32, #tpu.memory_space<vmem>>, vector<1x4x32xf32>,
    %c1_416 = arith.constant 1 : index
    %c0_417 = arith.constant 0 : index
    %c0_418 = arith.constant 0 : index
    %750 = vector.load %arg22[%c1_416, %c0_417, %c0_418] : memref<2x4x32xf32, #tpu.memory_space<vmem>>, vector<1x4x32xf32>
    %751 = vector.shape_cast %750 : vector<1x4x32xf32> to vector<4x32xf32>
    %c1_419 = arith.constant 1 : index
    %c0_420 = arith.constant 0 : index
    %c0_421 = arith.constant 0 : index
    %752 = vector.load %arg23[%c1_419, %c0_420, %c0_421] : memref<2x4x32xf32, #tpu.memory_space<vmem>>, vector<1x4x32xf32>
    %753 = vector.shape_cast %752 : vector<1x4x32xf32> to vector<4x32xf32>
    %c1_422 = arith.constant 1 : index
    %c0_423 = arith.constant 0 : index
    %c0_424 = arith.constant 0 : index
    %754 = vector.load %arg11[%c1_422, %c0_423, %c0_424] : memref<2x32x128xf32, #tpu.memory_space<vmem>>, vector<1x32x128xf32>
    %755 = vector.shape_cast %754 : vector<1x32x128xf32> to vector<32x128xf32>
    %cst_425 = arith.constant dense<0.000000e+00> : vector<4x128xf32>
    %756 = tpu.matmul %743, %755, %cst_425 {dimension_numbers = #tpu.dot_dimension_numbers<[1], [0], [0], [1], [0, 0, 1, 1], [], []>} : vector<4x32xf32>, vector<32x128xf32>, vector<4x128xf32> -> vector<4x128xf32>
    %c1_426 = arith.constant 1 : index
    %c0_427 = arith.constant 0 : index
    %c0_428 = arith.constant 0 : index
    %757 = vector.load %arg12[%c1_426, %c0_427, %c0_428] : memref<2x32x128xf32, #tpu.memory_space<vmem>>, vector<1x32x128xf32>
    %758 = vector.shape_cast %757 : vector<1x32x128xf32> to vector<32x128xf32>
    %cst_429 = arith.constant dense<0.000000e+00> : vector<4x128xf32>
    %759 = tpu.matmul %751, %758, %cst_429 {dimension_numbers = #tpu.dot_dimension_numbers<[1], [0], [0], [1], [0, 0, 1, 1], [], []>} : vector<4x32xf32>, vector<32x128xf32>, vector<4x128xf32> -> vector<4x128xf32>
    %760 = arith.addf %756, %759 : vector<4x128xf32>
    %c1_430 = arith.constant 1 : index
    %c0_431 = arith.constant 0 : index
    %c0_432 = arith.constant 0 : index
    %761 = vector.load %arg13[%c1_430, %c0_431, %c0_432] : memref<2x1x128xf32, #tpu.memory_space<vmem>>, vector<1x1x128xf32>
    %762 = vector.shape_cast %761 : vector<1x1x128xf32> to vector<1x128xf32>
    %763 = vector.broadcast %762 : vector<1x128xf32> to vector<4x128xf32>
    %764 = arith.addf %760, %763 : vector<4x128xf32>
    %765 = vector.extract_strided_slice %764 {offsets = [0, 0], sizes = [4, 96], strides = [1, 1]} : vector<4x128xf32> to vector<4x96xf32>
    %766 = arith.negf %765 : vector<4x96xf32>
    %767 = math.exp %766 : vector<4x96xf32>
    %cst_433 = arith.constant 1.000000e+00 : f32
    %768 = vector.broadcast %cst_433 : f32 to vector<4x96xf32>
    %769 = arith.addf %768, %767 : vector<4x96xf32>
    %770 = arith.divf %768, %769 : vector<4x96xf32>
    %771 = vector.extract_strided_slice %764 {offsets = [0, 96], sizes = [4, 32], strides = [1, 1]} : vector<4x128xf32> to vector<4x32xf32>
    %772 = math.tanh %771 : vector<4x32xf32>
    %773 = vector.extract_strided_slice %770 {offsets = [0, 0], sizes = [4, 32], strides = [1, 1]} : vector<4x96xf32> to vector<4x32xf32>
    %774 = vector.extract_strided_slice %770 {offsets = [0, 32], sizes = [4, 32], strides = [1, 1]} : vector<4x96xf32> to vector<4x32xf32>
    %775 = vector.extract_strided_slice %770 {offsets = [0, 64], sizes = [4, 32], strides = [1, 1]} : vector<4x96xf32> to vector<4x32xf32>
    %776 = arith.mulf %774, %753 : vector<4x32xf32>
    %777 = arith.mulf %773, %772 : vector<4x32xf32>
    %778 = arith.addf %776, %777 : vector<4x32xf32>
    %779 = math.tanh %778 : vector<4x32xf32>
    %780 = arith.mulf %775, %779 : vector<4x32xf32>
    %c1_434 = arith.constant 1 : index
    %c0_435 = arith.constant 0 : index
    %c0_436 = arith.constant 0 : index
    %781 = vector.load %arg22[%c1_434, %c0_435, %c0_436] : memref<2x4x32xf32, #tpu.memory_space<vmem>>, vector<1x4x32xf32>
    %782 = vector.shape_cast %781 : vector<1x4x32xf32> to vector<4x32xf32>
    %783 = vector.shape_cast %780 : vector<4x32xf32> to vector<1x4x32xf32>
    tpu.vector_store %arg22[%c1_434, %c0_435, %c0_436], %783 {strides = array<i32>} : memref<2x4x32xf32, #tpu.memory_space<vmem>>, vector<1x4x32xf32>,
    %c1_437 = arith.constant 1 : index
    %c0_438 = arith.constant 0 : index
    %c0_439 = arith.constant 0 : index
    %784 = vector.load %arg23[%c1_437, %c0_438, %c0_439] : memref<2x4x32xf32, #tpu.memory_space<vmem>>, vector<1x4x32xf32>
    %785 = vector.shape_cast %784 : vector<1x4x32xf32> to vector<4x32xf32>
    %786 = vector.shape_cast %778 : vector<4x32xf32> to vector<1x4x32xf32>
    tpu.vector_store %arg23[%c1_437, %c0_438, %c0_439], %786 {strides = array<i32>} : memref<2x4x32xf32, #tpu.memory_space<vmem>>, vector<1x4x32xf32>,
    %787 = vector.shape_cast %693 : vector<4x8x32xf32> to vector<32x32xf32>
    %cst_440 = arith.constant dense<0.000000e+00> : vector<32x33xf32>
    %788 = tpu.matmul %787, %8, %cst_440 {dimension_numbers = #tpu.dot_dimension_numbers<[1], [0], [0], [1], [0, 0, 1, 1], [], []>} : vector<32x32xf32>, vector<32x33xf32>, vector<32x33xf32> -> vector<32x33xf32>
    %789 = vector.shape_cast %788 : vector<32x33xf32> to vector<4x8x33xf32>
    %cst_441 = arith.constant dense<0.000000e+00> : vector<4x33xf32>
    %790 = tpu.matmul %780, %9, %cst_441 {dimension_numbers = #tpu.dot_dimension_numbers<[1], [0], [0], [1], [0, 0, 1, 1], [], []>} : vector<4x32xf32>, vector<32x33xf32>, vector<4x33xf32> -> vector<4x33xf32>
    %791 = vector.shape_cast %790 : vector<4x33xf32> to vector<4x1x33xf32>
    %792 = vector.broadcast %791 : vector<4x1x33xf32> to vector<4x8x33xf32>
    %793 = arith.addf %789, %792 : vector<4x8x33xf32>
    %794 = vector.shape_cast %10 : vector<1x33xf32> to vector<1x1x33xf32>
    %795 = vector.broadcast %794 : vector<1x1x33xf32> to vector<4x8x33xf32>
    %796 = arith.addf %793, %795 : vector<4x8x33xf32>
    %797 = vector.extract_strided_slice %796 {offsets = [0, 0, 0], sizes = [4, 8, 32], strides = [1, 1, 1]} : vector<4x8x33xf32> to vector<4x8x32xf32>
    %798 = math.tanh %797 : vector<4x8x32xf32>
    %799 = vector.extract_strided_slice %796 {offsets = [0, 0, 32], sizes = [4, 8, 1], strides = [1, 1, 1]} : vector<4x8x33xf32> to vector<4x8x1xf32>
    %800 = arith.negf %799 : vector<4x8x1xf32>
    %801 = math.exp %800 : vector<4x8x1xf32>
    %cst_442 = arith.constant 1.000000e+00 : f32
    %802 = vector.broadcast %cst_442 : f32 to vector<4x8x1xf32>
    %803 = arith.addf %802, %801 : vector<4x8x1xf32>
    %804 = arith.divf %802, %803 : vector<4x8x1xf32>
    %cst_443 = arith.constant 1.000000e+00 : f32
    %805 = vector.broadcast %cst_443 : f32 to vector<4x8x1xf32>
    %806 = arith.subf %805, %804 : vector<4x8x1xf32>
    %807 = vector.broadcast %806 : vector<4x8x1xf32> to vector<4x8x32xf32>
    %808 = arith.mulf %693, %807 : vector<4x8x32xf32>
    %809 = vector.broadcast %804 : vector<4x8x1xf32> to vector<4x8x32xf32>
    %810 = arith.mulf %809, %798 : vector<4x8x32xf32>
    %811 = arith.addf %808, %810 : vector<4x8x32xf32>
    %812 = vector.shape_cast %692 : vector<4x8xf32> to vector<4x8x1xf32>
    %cst_444 = arith.constant 5.000000e-01 : f32
    %813 = vector.broadcast %cst_444 : f32 to vector<4x8x1xf32>
    %814 = arith.cmpf ogt, %812, %813 : vector<4x8x1xf32>
    %cst_445 = arith.constant 0.000000e+00 : f32
    %815 = vector.shape_cast %814 : vector<4x8x1xi1> to vector<4x8x1xi1>
    %816 = vector.broadcast %815 : vector<4x8x1xi1> to vector<4x8x32xi1>
    %817 = vector.broadcast %cst_445 : f32 to vector<4x8x32xf32>
    %818 = arith.select %816, %817, %811 : vector<4x8x32xi1>, vector<4x8x32xf32>
    %c0_446 = arith.constant 0 : index
    %c0_447 = arith.constant 0 : index
    %c0_448 = arith.constant 0 : index
    %819 = vector.load %arg24[%c0_446, %c0_447, %c0_448] : memref<4x8x32xf32, #tpu.memory_space<vmem>>, vector<4x8x32xf32>
    tpu.vector_store %arg24[%c0_446, %c0_447, %c0_448], %818 {strides = array<i32>} : memref<4x8x32xf32, #tpu.memory_space<vmem>>, vector<4x8x32xf32>,
    %c20 = arith.constant 20 : index
    %c0_449 = arith.constant 0 : index
    %820 = vector.load %arg25[%c20, %c0_449] : memref<32x32xf32, #tpu.memory_space<vmem>>, vector<4x32xf32>
    tpu.vector_store %arg25[%c20, %c0_449], %780 {strides = array<i32>} : memref<32x32xf32, #tpu.memory_space<vmem>>, vector<4x32xf32>,
    %c6 = arith.constant 6 : index
    %c0_450 = arith.constant 0 : index
    %c0_451 = arith.constant 0 : index
    %821 = vector.load %arg2[%c6, %c0_450, %c0_451] : memref<8x4x32xf32, #tpu.memory_space<vmem>>, vector<1x4x32xf32>
    %822 = vector.shape_cast %821 : vector<1x4x32xf32> to vector<4x32xf32>
    %c6_452 = arith.constant 6 : index
    %c0_453 = arith.constant 0 : index
    %c0_454 = arith.constant 0 : index
    %823 = vector.load %arg3[%c6_452, %c0_453, %c0_454] : memref<8x4x17xf32, #tpu.memory_space<vmem>>, vector<1x4x17xf32>
    %824 = vector.shape_cast %823 : vector<1x4x17xf32> to vector<4x17xf32>
    %825 = vector.extract_strided_slice %824 {offsets = [0, 0], sizes = [4, 8], strides = [1, 1]} : vector<4x17xf32> to vector<4x8xf32>
    %826 = vector.extract_strided_slice %824 {offsets = [0, 8], sizes = [4, 1], strides = [1, 1]} : vector<4x17xf32> to vector<4x1xf32>
    %827 = vector.extract_strided_slice %824 {offsets = [0, 9], sizes = [4, 8], strides = [1, 1]} : vector<4x17xf32> to vector<4x8xf32>
    %c0_455 = arith.constant 0 : index
    %c0_456 = arith.constant 0 : index
    %c0_457 = arith.constant 0 : index
    %828 = vector.load %arg24[%c0_455, %c0_456, %c0_457] : memref<4x8x32xf32, #tpu.memory_space<vmem>>, vector<4x8x32xf32>
    %829 = vector.shape_cast %825 : vector<4x8xf32> to vector<4x8x1xf32>
    %830 = vector.broadcast %829 : vector<4x8x1xf32> to vector<4x8x32xf32>
    %831 = arith.mulf %830, %828 : vector<4x8x32xf32>
    %cst_458 = arith.constant dense<0.000000e+00> : vector<4x32xf32>
    %832 = vector.multi_reduction <add>, %831, %cst_458 [1] : vector<4x8x32xf32> to vector<4x32xf32>
    %cst_459 = arith.constant dense<0.000000e+00> : vector<4x32xf32>
    %833 = tpu.matmul %832, %3, %cst_459 {dimension_numbers = #tpu.dot_dimension_numbers<[1], [0], [0], [1], [0, 0, 1, 1], [], []>} : vector<4x32xf32>, vector<32x32xf32>, vector<4x32xf32> -> vector<4x32xf32>
    %cst_460 = arith.constant dense<0.000000e+00> : vector<4x32xf32>
    %834 = tpu.matmul %822, %4, %cst_460 {dimension_numbers = #tpu.dot_dimension_numbers<[1], [0], [0], [1], [0, 0, 1, 1], [], []>} : vector<4x32xf32>, vector<32x32xf32>, vector<4x32xf32> -> vector<4x32xf32>
    %835 = arith.addf %833, %834 : vector<4x32xf32>
    %836 = vector.broadcast %5 : vector<1x32xf32> to vector<4x32xf32>
    %837 = arith.addf %835, %836 : vector<4x32xf32>
    %cst_461 = arith.constant 0.000000e+00 : f32
    %838 = vector.broadcast %cst_461 : f32 to vector<4x32xf32>
    %839 = arith.maximumf %837, %838 : vector<4x32xf32>
    %cst_462 = arith.constant dense<0.000000e+00> : vector<4x32xf32>
    %840 = tpu.matmul %839, %6, %cst_462 {dimension_numbers = #tpu.dot_dimension_numbers<[1], [0], [0], [1], [0, 0, 1, 1], [], []>} : vector<4x32xf32>, vector<32x32xf32>, vector<4x32xf32> -> vector<4x32xf32>
    %841 = vector.broadcast %7 : vector<1x32xf32> to vector<4x32xf32>
    %842 = arith.addf %840, %841 : vector<4x32xf32>
    %cst_463 = arith.constant 5.000000e-01 : f32
    %843 = vector.broadcast %cst_463 : f32 to vector<4x1xf32>
    %844 = arith.cmpf ogt, %826, %843 : vector<4x1xf32>
    %845 = vector.shape_cast %844 : vector<4x1xi1> to vector<4x1xi1>
    %846 = vector.broadcast %845 : vector<4x1xi1> to vector<4x32xi1>
    %847 = arith.select %846, %842, %822 : vector<4x32xi1>, vector<4x32xf32>
    %c0_464 = arith.constant 0 : index
    %c0_465 = arith.constant 0 : index
    %c0_466 = arith.constant 0 : index
    %848 = vector.load %arg22[%c0_464, %c0_465, %c0_466] : memref<2x4x32xf32, #tpu.memory_space<vmem>>, vector<1x4x32xf32>
    %849 = vector.shape_cast %848 : vector<1x4x32xf32> to vector<4x32xf32>
    %c0_467 = arith.constant 0 : index
    %c0_468 = arith.constant 0 : index
    %c0_469 = arith.constant 0 : index
    %850 = vector.load %arg23[%c0_467, %c0_468, %c0_469] : memref<2x4x32xf32, #tpu.memory_space<vmem>>, vector<1x4x32xf32>
    %851 = vector.shape_cast %850 : vector<1x4x32xf32> to vector<4x32xf32>
    %c0_470 = arith.constant 0 : index
    %c0_471 = arith.constant 0 : index
    %c0_472 = arith.constant 0 : index
    %852 = vector.load %arg11[%c0_470, %c0_471, %c0_472] : memref<2x32x128xf32, #tpu.memory_space<vmem>>, vector<1x32x128xf32>
    %853 = vector.shape_cast %852 : vector<1x32x128xf32> to vector<32x128xf32>
    %cst_473 = arith.constant dense<0.000000e+00> : vector<4x128xf32>
    %854 = tpu.matmul %847, %853, %cst_473 {dimension_numbers = #tpu.dot_dimension_numbers<[1], [0], [0], [1], [0, 0, 1, 1], [], []>} : vector<4x32xf32>, vector<32x128xf32>, vector<4x128xf32> -> vector<4x128xf32>
    %c0_474 = arith.constant 0 : index
    %c0_475 = arith.constant 0 : index
    %c0_476 = arith.constant 0 : index
    %855 = vector.load %arg12[%c0_474, %c0_475, %c0_476] : memref<2x32x128xf32, #tpu.memory_space<vmem>>, vector<1x32x128xf32>
    %856 = vector.shape_cast %855 : vector<1x32x128xf32> to vector<32x128xf32>
    %cst_477 = arith.constant dense<0.000000e+00> : vector<4x128xf32>
    %857 = tpu.matmul %849, %856, %cst_477 {dimension_numbers = #tpu.dot_dimension_numbers<[1], [0], [0], [1], [0, 0, 1, 1], [], []>} : vector<4x32xf32>, vector<32x128xf32>, vector<4x128xf32> -> vector<4x128xf32>
    %858 = arith.addf %854, %857 : vector<4x128xf32>
    %c0_478 = arith.constant 0 : index
    %c0_479 = arith.constant 0 : index
    %c0_480 = arith.constant 0 : index
    %859 = vector.load %arg13[%c0_478, %c0_479, %c0_480] : memref<2x1x128xf32, #tpu.memory_space<vmem>>, vector<1x1x128xf32>
    %860 = vector.shape_cast %859 : vector<1x1x128xf32> to vector<1x128xf32>
    %861 = vector.broadcast %860 : vector<1x128xf32> to vector<4x128xf32>
    %862 = arith.addf %858, %861 : vector<4x128xf32>
    %863 = vector.extract_strided_slice %862 {offsets = [0, 0], sizes = [4, 96], strides = [1, 1]} : vector<4x128xf32> to vector<4x96xf32>
    %864 = arith.negf %863 : vector<4x96xf32>
    %865 = math.exp %864 : vector<4x96xf32>
    %cst_481 = arith.constant 1.000000e+00 : f32
    %866 = vector.broadcast %cst_481 : f32 to vector<4x96xf32>
    %867 = arith.addf %866, %865 : vector<4x96xf32>
    %868 = arith.divf %866, %867 : vector<4x96xf32>
    %869 = vector.extract_strided_slice %862 {offsets = [0, 96], sizes = [4, 32], strides = [1, 1]} : vector<4x128xf32> to vector<4x32xf32>
    %870 = math.tanh %869 : vector<4x32xf32>
    %871 = vector.extract_strided_slice %868 {offsets = [0, 0], sizes = [4, 32], strides = [1, 1]} : vector<4x96xf32> to vector<4x32xf32>
    %872 = vector.extract_strided_slice %868 {offsets = [0, 32], sizes = [4, 32], strides = [1, 1]} : vector<4x96xf32> to vector<4x32xf32>
    %873 = vector.extract_strided_slice %868 {offsets = [0, 64], sizes = [4, 32], strides = [1, 1]} : vector<4x96xf32> to vector<4x32xf32>
    %874 = arith.mulf %872, %851 : vector<4x32xf32>
    %875 = arith.mulf %871, %870 : vector<4x32xf32>
    %876 = arith.addf %874, %875 : vector<4x32xf32>
    %877 = math.tanh %876 : vector<4x32xf32>
    %878 = arith.mulf %873, %877 : vector<4x32xf32>
    %c0_482 = arith.constant 0 : index
    %c0_483 = arith.constant 0 : index
    %c0_484 = arith.constant 0 : index
    %879 = vector.load %arg22[%c0_482, %c0_483, %c0_484] : memref<2x4x32xf32, #tpu.memory_space<vmem>>, vector<1x4x32xf32>
    %880 = vector.shape_cast %879 : vector<1x4x32xf32> to vector<4x32xf32>
    %881 = vector.shape_cast %878 : vector<4x32xf32> to vector<1x4x32xf32>
    tpu.vector_store %arg22[%c0_482, %c0_483, %c0_484], %881 {strides = array<i32>} : memref<2x4x32xf32, #tpu.memory_space<vmem>>, vector<1x4x32xf32>,
    %c0_485 = arith.constant 0 : index
    %c0_486 = arith.constant 0 : index
    %c0_487 = arith.constant 0 : index
    %882 = vector.load %arg23[%c0_485, %c0_486, %c0_487] : memref<2x4x32xf32, #tpu.memory_space<vmem>>, vector<1x4x32xf32>
    %883 = vector.shape_cast %882 : vector<1x4x32xf32> to vector<4x32xf32>
    %884 = vector.shape_cast %876 : vector<4x32xf32> to vector<1x4x32xf32>
    tpu.vector_store %arg23[%c0_485, %c0_486, %c0_487], %884 {strides = array<i32>} : memref<2x4x32xf32, #tpu.memory_space<vmem>>, vector<1x4x32xf32>,
    %c1_488 = arith.constant 1 : index
    %c0_489 = arith.constant 0 : index
    %c0_490 = arith.constant 0 : index
    %885 = vector.load %arg22[%c1_488, %c0_489, %c0_490] : memref<2x4x32xf32, #tpu.memory_space<vmem>>, vector<1x4x32xf32>
    %886 = vector.shape_cast %885 : vector<1x4x32xf32> to vector<4x32xf32>
    %c1_491 = arith.constant 1 : index
    %c0_492 = arith.constant 0 : index
    %c0_493 = arith.constant 0 : index
    %887 = vector.load %arg23[%c1_491, %c0_492, %c0_493] : memref<2x4x32xf32, #tpu.memory_space<vmem>>, vector<1x4x32xf32>
    %888 = vector.shape_cast %887 : vector<1x4x32xf32> to vector<4x32xf32>
    %c1_494 = arith.constant 1 : index
    %c0_495 = arith.constant 0 : index
    %c0_496 = arith.constant 0 : index
    %889 = vector.load %arg11[%c1_494, %c0_495, %c0_496] : memref<2x32x128xf32, #tpu.memory_space<vmem>>, vector<1x32x128xf32>
    %890 = vector.shape_cast %889 : vector<1x32x128xf32> to vector<32x128xf32>
    %cst_497 = arith.constant dense<0.000000e+00> : vector<4x128xf32>
    %891 = tpu.matmul %878, %890, %cst_497 {dimension_numbers = #tpu.dot_dimension_numbers<[1], [0], [0], [1], [0, 0, 1, 1], [], []>} : vector<4x32xf32>, vector<32x128xf32>, vector<4x128xf32> -> vector<4x128xf32>
    %c1_498 = arith.constant 1 : index
    %c0_499 = arith.constant 0 : index
    %c0_500 = arith.constant 0 : index
    %892 = vector.load %arg12[%c1_498, %c0_499, %c0_500] : memref<2x32x128xf32, #tpu.memory_space<vmem>>, vector<1x32x128xf32>
    %893 = vector.shape_cast %892 : vector<1x32x128xf32> to vector<32x128xf32>
    %cst_501 = arith.constant dense<0.000000e+00> : vector<4x128xf32>
    %894 = tpu.matmul %886, %893, %cst_501 {dimension_numbers = #tpu.dot_dimension_numbers<[1], [0], [0], [1], [0, 0, 1, 1], [], []>} : vector<4x32xf32>, vector<32x128xf32>, vector<4x128xf32> -> vector<4x128xf32>
    %895 = arith.addf %891, %894 : vector<4x128xf32>
    %c1_502 = arith.constant 1 : index
    %c0_503 = arith.constant 0 : index
    %c0_504 = arith.constant 0 : index
    %896 = vector.load %arg13[%c1_502, %c0_503, %c0_504] : memref<2x1x128xf32, #tpu.memory_space<vmem>>, vector<1x1x128xf32>
    %897 = vector.shape_cast %896 : vector<1x1x128xf32> to vector<1x128xf32>
    %898 = vector.broadcast %897 : vector<1x128xf32> to vector<4x128xf32>
    %899 = arith.addf %895, %898 : vector<4x128xf32>
    %900 = vector.extract_strided_slice %899 {offsets = [0, 0], sizes = [4, 96], strides = [1, 1]} : vector<4x128xf32> to vector<4x96xf32>
    %901 = arith.negf %900 : vector<4x96xf32>
    %902 = math.exp %901 : vector<4x96xf32>
    %cst_505 = arith.constant 1.000000e+00 : f32
    %903 = vector.broadcast %cst_505 : f32 to vector<4x96xf32>
    %904 = arith.addf %903, %902 : vector<4x96xf32>
    %905 = arith.divf %903, %904 : vector<4x96xf32>
    %906 = vector.extract_strided_slice %899 {offsets = [0, 96], sizes = [4, 32], strides = [1, 1]} : vector<4x128xf32> to vector<4x32xf32>
    %907 = math.tanh %906 : vector<4x32xf32>
    %908 = vector.extract_strided_slice %905 {offsets = [0, 0], sizes = [4, 32], strides = [1, 1]} : vector<4x96xf32> to vector<4x32xf32>
    %909 = vector.extract_strided_slice %905 {offsets = [0, 32], sizes = [4, 32], strides = [1, 1]} : vector<4x96xf32> to vector<4x32xf32>
    %910 = vector.extract_strided_slice %905 {offsets = [0, 64], sizes = [4, 32], strides = [1, 1]} : vector<4x96xf32> to vector<4x32xf32>
    %911 = arith.mulf %909, %888 : vector<4x32xf32>
    %912 = arith.mulf %908, %907 : vector<4x32xf32>
    %913 = arith.addf %911, %912 : vector<4x32xf32>
    %914 = math.tanh %913 : vector<4x32xf32>
    %915 = arith.mulf %910, %914 : vector<4x32xf32>
    %c1_506 = arith.constant 1 : index
    %c0_507 = arith.constant 0 : index
    %c0_508 = arith.constant 0 : index
    %916 = vector.load %arg22[%c1_506, %c0_507, %c0_508] : memref<2x4x32xf32, #tpu.memory_space<vmem>>, vector<1x4x32xf32>
    %917 = vector.shape_cast %916 : vector<1x4x32xf32> to vector<4x32xf32>
    %918 = vector.shape_cast %915 : vector<4x32xf32> to vector<1x4x32xf32>
    tpu.vector_store %arg22[%c1_506, %c0_507, %c0_508], %918 {strides = array<i32>} : memref<2x4x32xf32, #tpu.memory_space<vmem>>, vector<1x4x32xf32>,
    %c1_509 = arith.constant 1 : index
    %c0_510 = arith.constant 0 : index
    %c0_511 = arith.constant 0 : index
    %919 = vector.load %arg23[%c1_509, %c0_510, %c0_511] : memref<2x4x32xf32, #tpu.memory_space<vmem>>, vector<1x4x32xf32>
    %920 = vector.shape_cast %919 : vector<1x4x32xf32> to vector<4x32xf32>
    %921 = vector.shape_cast %913 : vector<4x32xf32> to vector<1x4x32xf32>
    tpu.vector_store %arg23[%c1_509, %c0_510, %c0_511], %921 {strides = array<i32>} : memref<2x4x32xf32, #tpu.memory_space<vmem>>, vector<1x4x32xf32>,
    %922 = vector.shape_cast %828 : vector<4x8x32xf32> to vector<32x32xf32>
    %cst_512 = arith.constant dense<0.000000e+00> : vector<32x33xf32>
    %923 = tpu.matmul %922, %8, %cst_512 {dimension_numbers = #tpu.dot_dimension_numbers<[1], [0], [0], [1], [0, 0, 1, 1], [], []>} : vector<32x32xf32>, vector<32x33xf32>, vector<32x33xf32> -> vector<32x33xf32>
    %924 = vector.shape_cast %923 : vector<32x33xf32> to vector<4x8x33xf32>
    %cst_513 = arith.constant dense<0.000000e+00> : vector<4x33xf32>
    %925 = tpu.matmul %915, %9, %cst_513 {dimension_numbers = #tpu.dot_dimension_numbers<[1], [0], [0], [1], [0, 0, 1, 1], [], []>} : vector<4x32xf32>, vector<32x33xf32>, vector<4x33xf32> -> vector<4x33xf32>
    %926 = vector.shape_cast %925 : vector<4x33xf32> to vector<4x1x33xf32>
    %927 = vector.broadcast %926 : vector<4x1x33xf32> to vector<4x8x33xf32>
    %928 = arith.addf %924, %927 : vector<4x8x33xf32>
    %929 = vector.shape_cast %10 : vector<1x33xf32> to vector<1x1x33xf32>
    %930 = vector.broadcast %929 : vector<1x1x33xf32> to vector<4x8x33xf32>
    %931 = arith.addf %928, %930 : vector<4x8x33xf32>
    %932 = vector.extract_strided_slice %931 {offsets = [0, 0, 0], sizes = [4, 8, 32], strides = [1, 1, 1]} : vector<4x8x33xf32> to vector<4x8x32xf32>
    %933 = math.tanh %932 : vector<4x8x32xf32>
    %934 = vector.extract_strided_slice %931 {offsets = [0, 0, 32], sizes = [4, 8, 1], strides = [1, 1, 1]} : vector<4x8x33xf32> to vector<4x8x1xf32>
    %935 = arith.negf %934 : vector<4x8x1xf32>
    %936 = math.exp %935 : vector<4x8x1xf32>
    %cst_514 = arith.constant 1.000000e+00 : f32
    %937 = vector.broadcast %cst_514 : f32 to vector<4x8x1xf32>
    %938 = arith.addf %937, %936 : vector<4x8x1xf32>
    %939 = arith.divf %937, %938 : vector<4x8x1xf32>
    %cst_515 = arith.constant 1.000000e+00 : f32
    %940 = vector.broadcast %cst_515 : f32 to vector<4x8x1xf32>
    %941 = arith.subf %940, %939 : vector<4x8x1xf32>
    %942 = vector.broadcast %941 : vector<4x8x1xf32> to vector<4x8x32xf32>
    %943 = arith.mulf %828, %942 : vector<4x8x32xf32>
    %944 = vector.broadcast %939 : vector<4x8x1xf32> to vector<4x8x32xf32>
    %945 = arith.mulf %944, %933 : vector<4x8x32xf32>
    %946 = arith.addf %943, %945 : vector<4x8x32xf32>
    %947 = vector.shape_cast %827 : vector<4x8xf32> to vector<4x8x1xf32>
    %cst_516 = arith.constant 5.000000e-01 : f32
    %948 = vector.broadcast %cst_516 : f32 to vector<4x8x1xf32>
    %949 = arith.cmpf ogt, %947, %948 : vector<4x8x1xf32>
    %cst_517 = arith.constant 0.000000e+00 : f32
    %950 = vector.shape_cast %949 : vector<4x8x1xi1> to vector<4x8x1xi1>
    %951 = vector.broadcast %950 : vector<4x8x1xi1> to vector<4x8x32xi1>
    %952 = vector.broadcast %cst_517 : f32 to vector<4x8x32xf32>
    %953 = arith.select %951, %952, %946 : vector<4x8x32xi1>, vector<4x8x32xf32>
    %c0_518 = arith.constant 0 : index
    %c0_519 = arith.constant 0 : index
    %c0_520 = arith.constant 0 : index
    %954 = vector.load %arg24[%c0_518, %c0_519, %c0_520] : memref<4x8x32xf32, #tpu.memory_space<vmem>>, vector<4x8x32xf32>
    tpu.vector_store %arg24[%c0_518, %c0_519, %c0_520], %953 {strides = array<i32>} : memref<4x8x32xf32, #tpu.memory_space<vmem>>, vector<4x8x32xf32>,
    %c24 = arith.constant 24 : index
    %c0_521 = arith.constant 0 : index
    %955 = vector.load %arg25[%c24, %c0_521] : memref<32x32xf32, #tpu.memory_space<vmem>>, vector<4x32xf32>
    tpu.vector_store %arg25[%c24, %c0_521], %915 {strides = array<i32>} : memref<32x32xf32, #tpu.memory_space<vmem>>, vector<4x32xf32>,
    %c7 = arith.constant 7 : index
    %c0_522 = arith.constant 0 : index
    %c0_523 = arith.constant 0 : index
    %956 = vector.load %arg2[%c7, %c0_522, %c0_523] : memref<8x4x32xf32, #tpu.memory_space<vmem>>, vector<1x4x32xf32>
    %957 = vector.shape_cast %956 : vector<1x4x32xf32> to vector<4x32xf32>
    %c7_524 = arith.constant 7 : index
    %c0_525 = arith.constant 0 : index
    %c0_526 = arith.constant 0 : index
    %958 = vector.load %arg3[%c7_524, %c0_525, %c0_526] : memref<8x4x17xf32, #tpu.memory_space<vmem>>, vector<1x4x17xf32>
    %959 = vector.shape_cast %958 : vector<1x4x17xf32> to vector<4x17xf32>
    %960 = vector.extract_strided_slice %959 {offsets = [0, 0], sizes = [4, 8], strides = [1, 1]} : vector<4x17xf32> to vector<4x8xf32>
    %961 = vector.extract_strided_slice %959 {offsets = [0, 8], sizes = [4, 1], strides = [1, 1]} : vector<4x17xf32> to vector<4x1xf32>
    %962 = vector.extract_strided_slice %959 {offsets = [0, 9], sizes = [4, 8], strides = [1, 1]} : vector<4x17xf32> to vector<4x8xf32>
    %c0_527 = arith.constant 0 : index
    %c0_528 = arith.constant 0 : index
    %c0_529 = arith.constant 0 : index
    %963 = vector.load %arg24[%c0_527, %c0_528, %c0_529] : memref<4x8x32xf32, #tpu.memory_space<vmem>>, vector<4x8x32xf32>
    %964 = vector.shape_cast %960 : vector<4x8xf32> to vector<4x8x1xf32>
    %965 = vector.broadcast %964 : vector<4x8x1xf32> to vector<4x8x32xf32>
    %966 = arith.mulf %965, %963 : vector<4x8x32xf32>
    %cst_530 = arith.constant dense<0.000000e+00> : vector<4x32xf32>
    %967 = vector.multi_reduction <add>, %966, %cst_530 [1] : vector<4x8x32xf32> to vector<4x32xf32>
    %cst_531 = arith.constant dense<0.000000e+00> : vector<4x32xf32>
    %968 = tpu.matmul %967, %3, %cst_531 {dimension_numbers = #tpu.dot_dimension_numbers<[1], [0], [0], [1], [0, 0, 1, 1], [], []>} : vector<4x32xf32>, vector<32x32xf32>, vector<4x32xf32> -> vector<4x32xf32>
    %cst_532 = arith.constant dense<0.000000e+00> : vector<4x32xf32>
    %969 = tpu.matmul %957, %4, %cst_532 {dimension_numbers = #tpu.dot_dimension_numbers<[1], [0], [0], [1], [0, 0, 1, 1], [], []>} : vector<4x32xf32>, vector<32x32xf32>, vector<4x32xf32> -> vector<4x32xf32>
    %970 = arith.addf %968, %969 : vector<4x32xf32>
    %971 = vector.broadcast %5 : vector<1x32xf32> to vector<4x32xf32>
    %972 = arith.addf %970, %971 : vector<4x32xf32>
    %cst_533 = arith.constant 0.000000e+00 : f32
    %973 = vector.broadcast %cst_533 : f32 to vector<4x32xf32>
    %974 = arith.maximumf %972, %973 : vector<4x32xf32>
    %cst_534 = arith.constant dense<0.000000e+00> : vector<4x32xf32>
    %975 = tpu.matmul %974, %6, %cst_534 {dimension_numbers = #tpu.dot_dimension_numbers<[1], [0], [0], [1], [0, 0, 1, 1], [], []>} : vector<4x32xf32>, vector<32x32xf32>, vector<4x32xf32> -> vector<4x32xf32>
    %976 = vector.broadcast %7 : vector<1x32xf32> to vector<4x32xf32>
    %977 = arith.addf %975, %976 : vector<4x32xf32>
    %cst_535 = arith.constant 5.000000e-01 : f32
    %978 = vector.broadcast %cst_535 : f32 to vector<4x1xf32>
    %979 = arith.cmpf ogt, %961, %978 : vector<4x1xf32>
    %980 = vector.shape_cast %979 : vector<4x1xi1> to vector<4x1xi1>
    %981 = vector.broadcast %980 : vector<4x1xi1> to vector<4x32xi1>
    %982 = arith.select %981, %977, %957 : vector<4x32xi1>, vector<4x32xf32>
    %c0_536 = arith.constant 0 : index
    %c0_537 = arith.constant 0 : index
    %c0_538 = arith.constant 0 : index
    %983 = vector.load %arg22[%c0_536, %c0_537, %c0_538] : memref<2x4x32xf32, #tpu.memory_space<vmem>>, vector<1x4x32xf32>
    %984 = vector.shape_cast %983 : vector<1x4x32xf32> to vector<4x32xf32>
    %c0_539 = arith.constant 0 : index
    %c0_540 = arith.constant 0 : index
    %c0_541 = arith.constant 0 : index
    %985 = vector.load %arg23[%c0_539, %c0_540, %c0_541] : memref<2x4x32xf32, #tpu.memory_space<vmem>>, vector<1x4x32xf32>
    %986 = vector.shape_cast %985 : vector<1x4x32xf32> to vector<4x32xf32>
    %c0_542 = arith.constant 0 : index
    %c0_543 = arith.constant 0 : index
    %c0_544 = arith.constant 0 : index
    %987 = vector.load %arg11[%c0_542, %c0_543, %c0_544] : memref<2x32x128xf32, #tpu.memory_space<vmem>>, vector<1x32x128xf32>
    %988 = vector.shape_cast %987 : vector<1x32x128xf32> to vector<32x128xf32>
    %cst_545 = arith.constant dense<0.000000e+00> : vector<4x128xf32>
    %989 = tpu.matmul %982, %988, %cst_545 {dimension_numbers = #tpu.dot_dimension_numbers<[1], [0], [0], [1], [0, 0, 1, 1], [], []>} : vector<4x32xf32>, vector<32x128xf32>, vector<4x128xf32> -> vector<4x128xf32>
    %c0_546 = arith.constant 0 : index
    %c0_547 = arith.constant 0 : index
    %c0_548 = arith.constant 0 : index
    %990 = vector.load %arg12[%c0_546, %c0_547, %c0_548] : memref<2x32x128xf32, #tpu.memory_space<vmem>>, vector<1x32x128xf32>
    %991 = vector.shape_cast %990 : vector<1x32x128xf32> to vector<32x128xf32>
    %cst_549 = arith.constant dense<0.000000e+00> : vector<4x128xf32>
    %992 = tpu.matmul %984, %991, %cst_549 {dimension_numbers = #tpu.dot_dimension_numbers<[1], [0], [0], [1], [0, 0, 1, 1], [], []>} : vector<4x32xf32>, vector<32x128xf32>, vector<4x128xf32> -> vector<4x128xf32>
    %993 = arith.addf %989, %992 : vector<4x128xf32>
    %c0_550 = arith.constant 0 : index
    %c0_551 = arith.constant 0 : index
    %c0_552 = arith.constant 0 : index
    %994 = vector.load %arg13[%c0_550, %c0_551, %c0_552] : memref<2x1x128xf32, #tpu.memory_space<vmem>>, vector<1x1x128xf32>
    %995 = vector.shape_cast %994 : vector<1x1x128xf32> to vector<1x128xf32>
    %996 = vector.broadcast %995 : vector<1x128xf32> to vector<4x128xf32>
    %997 = arith.addf %993, %996 : vector<4x128xf32>
    %998 = vector.extract_strided_slice %997 {offsets = [0, 0], sizes = [4, 96], strides = [1, 1]} : vector<4x128xf32> to vector<4x96xf32>
    %999 = arith.negf %998 : vector<4x96xf32>
    %1000 = math.exp %999 : vector<4x96xf32>
    %cst_553 = arith.constant 1.000000e+00 : f32
    %1001 = vector.broadcast %cst_553 : f32 to vector<4x96xf32>
    %1002 = arith.addf %1001, %1000 : vector<4x96xf32>
    %1003 = arith.divf %1001, %1002 : vector<4x96xf32>
    %1004 = vector.extract_strided_slice %997 {offsets = [0, 96], sizes = [4, 32], strides = [1, 1]} : vector<4x128xf32> to vector<4x32xf32>
    %1005 = math.tanh %1004 : vector<4x32xf32>
    %1006 = vector.extract_strided_slice %1003 {offsets = [0, 0], sizes = [4, 32], strides = [1, 1]} : vector<4x96xf32> to vector<4x32xf32>
    %1007 = vector.extract_strided_slice %1003 {offsets = [0, 32], sizes = [4, 32], strides = [1, 1]} : vector<4x96xf32> to vector<4x32xf32>
    %1008 = vector.extract_strided_slice %1003 {offsets = [0, 64], sizes = [4, 32], strides = [1, 1]} : vector<4x96xf32> to vector<4x32xf32>
    %1009 = arith.mulf %1007, %986 : vector<4x32xf32>
    %1010 = arith.mulf %1006, %1005 : vector<4x32xf32>
    %1011 = arith.addf %1009, %1010 : vector<4x32xf32>
    %1012 = math.tanh %1011 : vector<4x32xf32>
    %1013 = arith.mulf %1008, %1012 : vector<4x32xf32>
    %c0_554 = arith.constant 0 : index
    %c0_555 = arith.constant 0 : index
    %c0_556 = arith.constant 0 : index
    %1014 = vector.load %arg22[%c0_554, %c0_555, %c0_556] : memref<2x4x32xf32, #tpu.memory_space<vmem>>, vector<1x4x32xf32>
    %1015 = vector.shape_cast %1014 : vector<1x4x32xf32> to vector<4x32xf32>
    %1016 = vector.shape_cast %1013 : vector<4x32xf32> to vector<1x4x32xf32>
    tpu.vector_store %arg22[%c0_554, %c0_555, %c0_556], %1016 {strides = array<i32>} : memref<2x4x32xf32, #tpu.memory_space<vmem>>, vector<1x4x32xf32>,
    %c0_557 = arith.constant 0 : index
    %c0_558 = arith.constant 0 : index
    %c0_559 = arith.constant 0 : index
    %1017 = vector.load %arg23[%c0_557, %c0_558, %c0_559] : memref<2x4x32xf32, #tpu.memory_space<vmem>>, vector<1x4x32xf32>
    %1018 = vector.shape_cast %1017 : vector<1x4x32xf32> to vector<4x32xf32>
    %1019 = vector.shape_cast %1011 : vector<4x32xf32> to vector<1x4x32xf32>
    tpu.vector_store %arg23[%c0_557, %c0_558, %c0_559], %1019 {strides = array<i32>} : memref<2x4x32xf32, #tpu.memory_space<vmem>>, vector<1x4x32xf32>,
    %c1_560 = arith.constant 1 : index
    %c0_561 = arith.constant 0 : index
    %c0_562 = arith.constant 0 : index
    %1020 = vector.load %arg22[%c1_560, %c0_561, %c0_562] : memref<2x4x32xf32, #tpu.memory_space<vmem>>, vector<1x4x32xf32>
    %1021 = vector.shape_cast %1020 : vector<1x4x32xf32> to vector<4x32xf32>
    %c1_563 = arith.constant 1 : index
    %c0_564 = arith.constant 0 : index
    %c0_565 = arith.constant 0 : index
    %1022 = vector.load %arg23[%c1_563, %c0_564, %c0_565] : memref<2x4x32xf32, #tpu.memory_space<vmem>>, vector<1x4x32xf32>
    %1023 = vector.shape_cast %1022 : vector<1x4x32xf32> to vector<4x32xf32>
    %c1_566 = arith.constant 1 : index
    %c0_567 = arith.constant 0 : index
    %c0_568 = arith.constant 0 : index
    %1024 = vector.load %arg11[%c1_566, %c0_567, %c0_568] : memref<2x32x128xf32, #tpu.memory_space<vmem>>, vector<1x32x128xf32>
    %1025 = vector.shape_cast %1024 : vector<1x32x128xf32> to vector<32x128xf32>
    %cst_569 = arith.constant dense<0.000000e+00> : vector<4x128xf32>
    %1026 = tpu.matmul %1013, %1025, %cst_569 {dimension_numbers = #tpu.dot_dimension_numbers<[1], [0], [0], [1], [0, 0, 1, 1], [], []>} : vector<4x32xf32>, vector<32x128xf32>, vector<4x128xf32> -> vector<4x128xf32>
    %c1_570 = arith.constant 1 : index
    %c0_571 = arith.constant 0 : index
    %c0_572 = arith.constant 0 : index
    %1027 = vector.load %arg12[%c1_570, %c0_571, %c0_572] : memref<2x32x128xf32, #tpu.memory_space<vmem>>, vector<1x32x128xf32>
    %1028 = vector.shape_cast %1027 : vector<1x32x128xf32> to vector<32x128xf32>
    %cst_573 = arith.constant dense<0.000000e+00> : vector<4x128xf32>
    %1029 = tpu.matmul %1021, %1028, %cst_573 {dimension_numbers = #tpu.dot_dimension_numbers<[1], [0], [0], [1], [0, 0, 1, 1], [], []>} : vector<4x32xf32>, vector<32x128xf32>, vector<4x128xf32> -> vector<4x128xf32>
    %1030 = arith.addf %1026, %1029 : vector<4x128xf32>
    %c1_574 = arith.constant 1 : index
    %c0_575 = arith.constant 0 : index
    %c0_576 = arith.constant 0 : index
    %1031 = vector.load %arg13[%c1_574, %c0_575, %c0_576] : memref<2x1x128xf32, #tpu.memory_space<vmem>>, vector<1x1x128xf32>
    %1032 = vector.shape_cast %1031 : vector<1x1x128xf32> to vector<1x128xf32>
    %1033 = vector.broadcast %1032 : vector<1x128xf32> to vector<4x128xf32>
    %1034 = arith.addf %1030, %1033 : vector<4x128xf32>
    %1035 = vector.extract_strided_slice %1034 {offsets = [0, 0], sizes = [4, 96], strides = [1, 1]} : vector<4x128xf32> to vector<4x96xf32>
    %1036 = arith.negf %1035 : vector<4x96xf32>
    %1037 = math.exp %1036 : vector<4x96xf32>
    %cst_577 = arith.constant 1.000000e+00 : f32
    %1038 = vector.broadcast %cst_577 : f32 to vector<4x96xf32>
    %1039 = arith.addf %1038, %1037 : vector<4x96xf32>
    %1040 = arith.divf %1038, %1039 : vector<4x96xf32>
    %1041 = vector.extract_strided_slice %1034 {offsets = [0, 96], sizes = [4, 32], strides = [1, 1]} : vector<4x128xf32> to vector<4x32xf32>
    %1042 = math.tanh %1041 : vector<4x32xf32>
    %1043 = vector.extract_strided_slice %1040 {offsets = [0, 0], sizes = [4, 32], strides = [1, 1]} : vector<4x96xf32> to vector<4x32xf32>
    %1044 = vector.extract_strided_slice %1040 {offsets = [0, 32], sizes = [4, 32], strides = [1, 1]} : vector<4x96xf32> to vector<4x32xf32>
    %1045 = vector.extract_strided_slice %1040 {offsets = [0, 64], sizes = [4, 32], strides = [1, 1]} : vector<4x96xf32> to vector<4x32xf32>
    %1046 = arith.mulf %1044, %1023 : vector<4x32xf32>
    %1047 = arith.mulf %1043, %1042 : vector<4x32xf32>
    %1048 = arith.addf %1046, %1047 : vector<4x32xf32>
    %1049 = math.tanh %1048 : vector<4x32xf32>
    %1050 = arith.mulf %1045, %1049 : vector<4x32xf32>
    %c1_578 = arith.constant 1 : index
    %c0_579 = arith.constant 0 : index
    %c0_580 = arith.constant 0 : index
    %1051 = vector.load %arg22[%c1_578, %c0_579, %c0_580] : memref<2x4x32xf32, #tpu.memory_space<vmem>>, vector<1x4x32xf32>
    %1052 = vector.shape_cast %1051 : vector<1x4x32xf32> to vector<4x32xf32>
    %1053 = vector.shape_cast %1050 : vector<4x32xf32> to vector<1x4x32xf32>
    tpu.vector_store %arg22[%c1_578, %c0_579, %c0_580], %1053 {strides = array<i32>} : memref<2x4x32xf32, #tpu.memory_space<vmem>>, vector<1x4x32xf32>,
    %c1_581 = arith.constant 1 : index
    %c0_582 = arith.constant 0 : index
    %c0_583 = arith.constant 0 : index
    %1054 = vector.load %arg23[%c1_581, %c0_582, %c0_583] : memref<2x4x32xf32, #tpu.memory_space<vmem>>, vector<1x4x32xf32>
    %1055 = vector.shape_cast %1054 : vector<1x4x32xf32> to vector<4x32xf32>
    %1056 = vector.shape_cast %1048 : vector<4x32xf32> to vector<1x4x32xf32>
    tpu.vector_store %arg23[%c1_581, %c0_582, %c0_583], %1056 {strides = array<i32>} : memref<2x4x32xf32, #tpu.memory_space<vmem>>, vector<1x4x32xf32>,
    %1057 = vector.shape_cast %963 : vector<4x8x32xf32> to vector<32x32xf32>
    %cst_584 = arith.constant dense<0.000000e+00> : vector<32x33xf32>
    %1058 = tpu.matmul %1057, %8, %cst_584 {dimension_numbers = #tpu.dot_dimension_numbers<[1], [0], [0], [1], [0, 0, 1, 1], [], []>} : vector<32x32xf32>, vector<32x33xf32>, vector<32x33xf32> -> vector<32x33xf32>
    %1059 = vector.shape_cast %1058 : vector<32x33xf32> to vector<4x8x33xf32>
    %cst_585 = arith.constant dense<0.000000e+00> : vector<4x33xf32>
    %1060 = tpu.matmul %1050, %9, %cst_585 {dimension_numbers = #tpu.dot_dimension_numbers<[1], [0], [0], [1], [0, 0, 1, 1], [], []>} : vector<4x32xf32>, vector<32x33xf32>, vector<4x33xf32> -> vector<4x33xf32>
    %1061 = vector.shape_cast %1060 : vector<4x33xf32> to vector<4x1x33xf32>
    %1062 = vector.broadcast %1061 : vector<4x1x33xf32> to vector<4x8x33xf32>
    %1063 = arith.addf %1059, %1062 : vector<4x8x33xf32>
    %1064 = vector.shape_cast %10 : vector<1x33xf32> to vector<1x1x33xf32>
    %1065 = vector.broadcast %1064 : vector<1x1x33xf32> to vector<4x8x33xf32>
    %1066 = arith.addf %1063, %1065 : vector<4x8x33xf32>
    %1067 = vector.extract_strided_slice %1066 {offsets = [0, 0, 0], sizes = [4, 8, 32], strides = [1, 1, 1]} : vector<4x8x33xf32> to vector<4x8x32xf32>
    %1068 = math.tanh %1067 : vector<4x8x32xf32>
    %1069 = vector.extract_strided_slice %1066 {offsets = [0, 0, 32], sizes = [4, 8, 1], strides = [1, 1, 1]} : vector<4x8x33xf32> to vector<4x8x1xf32>
    %1070 = arith.negf %1069 : vector<4x8x1xf32>
    %1071 = math.exp %1070 : vector<4x8x1xf32>
    %cst_586 = arith.constant 1.000000e+00 : f32
    %1072 = vector.broadcast %cst_586 : f32 to vector<4x8x1xf32>
    %1073 = arith.addf %1072, %1071 : vector<4x8x1xf32>
    %1074 = arith.divf %1072, %1073 : vector<4x8x1xf32>
    %cst_587 = arith.constant 1.000000e+00 : f32
    %1075 = vector.broadcast %cst_587 : f32 to vector<4x8x1xf32>
    %1076 = arith.subf %1075, %1074 : vector<4x8x1xf32>
    %1077 = vector.broadcast %1076 : vector<4x8x1xf32> to vector<4x8x32xf32>
    %1078 = arith.mulf %963, %1077 : vector<4x8x32xf32>
    %1079 = vector.broadcast %1074 : vector<4x8x1xf32> to vector<4x8x32xf32>
    %1080 = arith.mulf %1079, %1068 : vector<4x8x32xf32>
    %1081 = arith.addf %1078, %1080 : vector<4x8x32xf32>
    %1082 = vector.shape_cast %962 : vector<4x8xf32> to vector<4x8x1xf32>
    %cst_588 = arith.constant 5.000000e-01 : f32
    %1083 = vector.broadcast %cst_588 : f32 to vector<4x8x1xf32>
    %1084 = arith.cmpf ogt, %1082, %1083 : vector<4x8x1xf32>
    %cst_589 = arith.constant 0.000000e+00 : f32
    %1085 = vector.shape_cast %1084 : vector<4x8x1xi1> to vector<4x8x1xi1>
    %1086 = vector.broadcast %1085 : vector<4x8x1xi1> to vector<4x8x32xi1>
    %1087 = vector.broadcast %cst_589 : f32 to vector<4x8x32xf32>
    %1088 = arith.select %1086, %1087, %1081 : vector<4x8x32xi1>, vector<4x8x32xf32>
    %c0_590 = arith.constant 0 : index
    %c0_591 = arith.constant 0 : index
    %c0_592 = arith.constant 0 : index
    %1089 = vector.load %arg24[%c0_590, %c0_591, %c0_592] : memref<4x8x32xf32, #tpu.memory_space<vmem>>, vector<4x8x32xf32>
    tpu.vector_store %arg24[%c0_590, %c0_591, %c0_592], %1088 {strides = array<i32>} : memref<4x8x32xf32, #tpu.memory_space<vmem>>, vector<4x8x32xf32>,
    %c28 = arith.constant 28 : index
    %c0_593 = arith.constant 0 : index
    %1090 = vector.load %arg25[%c28, %c0_593] : memref<32x32xf32, #tpu.memory_space<vmem>>, vector<4x32xf32>
    tpu.vector_store %arg25[%c28, %c0_593], %1050 {strides = array<i32>} : memref<32x32xf32, #tpu.memory_space<vmem>>, vector<4x32xf32>,
    %c0_594 = arith.constant 0 : index
    %c0_595 = arith.constant 0 : index
    %1091 = vector.load %arg25[%c0_594, %c0_595] : memref<32x32xf32, #tpu.memory_space<vmem>>, vector<32x32xf32>
    %c0_596 = arith.constant 0 : index
    %c0_597 = arith.constant 0 : index
    %1092 = vector.load %arg17[%c0_596, %c0_597] : memref<32x32xf32, #tpu.memory_space<vmem>>, vector<32x32xf32>
    %cst_598 = arith.constant dense<0.000000e+00> : vector<32x32xf32>
    %1093 = tpu.matmul %1091, %1092, %cst_598 {dimension_numbers = #tpu.dot_dimension_numbers<[1], [0], [0], [1], [0, 0, 1, 1], [], []>} : vector<32x32xf32>, vector<32x32xf32>, vector<32x32xf32> -> vector<32x32xf32>
    %c0_599 = arith.constant 0 : index
    %c0_600 = arith.constant 0 : index
    %1094 = vector.load %arg18[%c0_599, %c0_600] : memref<1x32xf32, #tpu.memory_space<vmem>>, vector<1x32xf32>
    %1095 = vector.broadcast %1094 : vector<1x32xf32> to vector<32x32xf32>
    %1096 = arith.addf %1093, %1095 : vector<32x32xf32>
    %cst_601 = arith.constant 0.000000e+00 : f32
    %1097 = vector.broadcast %cst_601 : f32 to vector<32x32xf32>
    %1098 = arith.maximumf %1096, %1097 : vector<32x32xf32>
    %c0_602 = arith.constant 0 : index
    %c0_603 = arith.constant 0 : index
    %1099 = vector.load %arg19[%c0_602, %c0_603] : memref<32x128xf32, #tpu.memory_space<vmem>>, vector<32x128xf32>
    %cst_604 = arith.constant dense<0.000000e+00> : vector<32x128xf32>
    %1100 = tpu.matmul %1098, %1099, %cst_604 {dimension_numbers = #tpu.dot_dimension_numbers<[1], [0], [0], [1], [0, 0, 1, 1], [], []>} : vector<32x32xf32>, vector<32x128xf32>, vector<32x128xf32> -> vector<32x128xf32>
    %c0_605 = arith.constant 0 : index
    %c0_606 = arith.constant 0 : index
    %1101 = vector.load %arg20[%c0_605, %c0_606] : memref<1x128xf32, #tpu.memory_space<vmem>>, vector<1x128xf32>
    %1102 = vector.broadcast %1101 : vector<1x128xf32> to vector<32x128xf32>
    %1103 = arith.addf %1100, %1102 : vector<32x128xf32>
    %c0_607 = arith.constant 0 : index
    %c0_608 = arith.constant 0 : index
    %c0_609 = arith.constant 0 : index
    %1104 = vector.load %arg21[%c0_607, %c0_608, %c0_609] : memref<1x32x128xf32, #tpu.memory_space<vmem>>, vector<1x32x128xf32>
    %1105 = vector.shape_cast %1104 : vector<1x32x128xf32> to vector<32x128xf32>
    %1106 = vector.shape_cast %1103 : vector<32x128xf32> to vector<1x32x128xf32>
    tpu.vector_store %arg21[%c0_607, %c0_608, %c0_609], %1106 {strides = array<i32>} : memref<1x32x128xf32, #tpu.memory_space<vmem>>, vector<1x32x128xf32>,
    return
  }
  func.func @transform_0(%arg0: i32, %arg1: i32) -> (i32, i32, i32) {
    %c0_i32 = arith.constant 0 : i32
    %c0_i32_0 = arith.constant 0 : i32
    return %arg1, %arg0, %c0_i32 : i32, i32, i32
  }
  func.func @transform_1(%arg0: i32, %arg1: i32) -> (i32, i32, i32) {
    %c0_i32 = arith.constant 0 : i32
    %c0_i32_0 = arith.constant 0 : i32
    return %arg1, %arg0, %c0_i32 : i32, i32, i32
  }
  func.func @transform_2(%arg0: i32, %arg1: i32) -> (i32, i32, i32) {
    %c0_i32 = arith.constant 0 : i32
    %c0_i32_0 = arith.constant 0 : i32
    %c0_i32_1 = arith.constant 0 : i32
    return %c0_i32, %arg0, %c0_i32_0 : i32, i32, i32
  }
  func.func @transform_3(%arg0: i32, %arg1: i32) -> (i32, i32, i32) {
    %c0_i32 = arith.constant 0 : i32
    %c0_i32_0 = arith.constant 0 : i32
    %c0_i32_1 = arith.constant 0 : i32
    return %c0_i32, %arg0, %c0_i32_0 : i32, i32, i32
  }
  func.func @transform_4(%arg0: i32, %arg1: i32) -> (i32, i32) {
    %c0_i32 = arith.constant 0 : i32
    %c0_i32_0 = arith.constant 0 : i32
    %c0_i32_1 = arith.constant 0 : i32
    return %c0_i32, %c0_i32_0 : i32, i32
  }
  func.func @transform_5(%arg0: i32, %arg1: i32) -> (i32, i32) {
    %c0_i32 = arith.constant 0 : i32
    %c0_i32_0 = arith.constant 0 : i32
    %c0_i32_1 = arith.constant 0 : i32
    return %c0_i32, %c0_i32_0 : i32, i32
  }
  func.func @transform_6(%arg0: i32, %arg1: i32) -> (i32, i32) {
    %c0_i32 = arith.constant 0 : i32
    %c0_i32_0 = arith.constant 0 : i32
    %c0_i32_1 = arith.constant 0 : i32
    return %c0_i32, %c0_i32_0 : i32, i32
  }
  func.func @transform_7(%arg0: i32, %arg1: i32) -> (i32, i32) {
    %c0_i32 = arith.constant 0 : i32
    %c0_i32_0 = arith.constant 0 : i32
    %c0_i32_1 = arith.constant 0 : i32
    return %c0_i32, %c0_i32_0 : i32, i32
  }
  func.func @transform_8(%arg0: i32, %arg1: i32) -> (i32, i32) {
    %c0_i32 = arith.constant 0 : i32
    %c0_i32_0 = arith.constant 0 : i32
    %c0_i32_1 = arith.constant 0 : i32
    return %c0_i32, %c0_i32_0 : i32, i32
  }
  func.func @transform_9(%arg0: i32, %arg1: i32) -> (i32, i32, i32) {
    %c0_i32 = arith.constant 0 : i32
    %c0_i32_0 = arith.constant 0 : i32
    %c0_i32_1 = arith.constant 0 : i32
    %c0_i32_2 = arith.constant 0 : i32
    return %c0_i32, %c0_i32_0, %c0_i32_1 : i32, i32, i32
  }
  func.func @transform_10(%arg0: i32, %arg1: i32) -> (i32, i32, i32) {
    %c0_i32 = arith.constant 0 : i32
    %c0_i32_0 = arith.constant 0 : i32
    %c0_i32_1 = arith.constant 0 : i32
    %c0_i32_2 = arith.constant 0 : i32
    return %c0_i32, %c0_i32_0, %c0_i32_1 : i32, i32, i32
  }
  func.func @transform_11(%arg0: i32, %arg1: i32) -> (i32, i32, i32) {
    %c0_i32 = arith.constant 0 : i32
    %c0_i32_0 = arith.constant 0 : i32
    %c0_i32_1 = arith.constant 0 : i32
    %c0_i32_2 = arith.constant 0 : i32
    return %c0_i32, %c0_i32_0, %c0_i32_1 : i32, i32, i32
  }
  func.func @transform_12(%arg0: i32, %arg1: i32) -> (i32, i32) {
    %c0_i32 = arith.constant 0 : i32
    %c0_i32_0 = arith.constant 0 : i32
    %c0_i32_1 = arith.constant 0 : i32
    return %c0_i32, %c0_i32_0 : i32, i32
  }
  func.func @transform_13(%arg0: i32, %arg1: i32) -> (i32, i32) {
    %c0_i32 = arith.constant 0 : i32
    %c0_i32_0 = arith.constant 0 : i32
    %c0_i32_1 = arith.constant 0 : i32
    return %c0_i32, %c0_i32_0 : i32, i32
  }
  func.func @transform_14(%arg0: i32, %arg1: i32) -> (i32, i32) {
    %c0_i32 = arith.constant 0 : i32
    %c0_i32_0 = arith.constant 0 : i32
    %c0_i32_1 = arith.constant 0 : i32
    return %c0_i32, %c0_i32_0 : i32, i32
  }
  func.func @transform_15(%arg0: i32, %arg1: i32) -> (i32, i32) {
    %c0_i32 = arith.constant 0 : i32
    %c0_i32_0 = arith.constant 0 : i32
    %c0_i32_1 = arith.constant 0 : i32
    return %c0_i32, %c0_i32_0 : i32, i32
  }
  func.func @transform_16(%arg0: i32, %arg1: i32) -> (i32, i32) {
    %c0_i32 = arith.constant 0 : i32
    %c0_i32_0 = arith.constant 0 : i32
    %c0_i32_1 = arith.constant 0 : i32
    return %c0_i32, %c0_i32_0 : i32, i32
  }
  func.func @transform_17(%arg0: i32, %arg1: i32) -> (i32, i32) {
    %c0_i32 = arith.constant 0 : i32
    %c0_i32_0 = arith.constant 0 : i32
    %c0_i32_1 = arith.constant 0 : i32
    return %c0_i32, %c0_i32_0 : i32, i32
  }
  func.func @transform_18(%arg0: i32, %arg1: i32) -> (i32, i32) {
    %c0_i32 = arith.constant 0 : i32
    %c0_i32_0 = arith.constant 0 : i32
    %c0_i32_1 = arith.constant 0 : i32
    return %c0_i32, %c0_i32_0 : i32, i32
  }
  func.func @transform_19(%arg0: i32, %arg1: i32) -> (i32, i32, i32) {
    %c0_i32 = arith.constant 0 : i32
    %c0_i32_0 = arith.constant 0 : i32
    return %arg0, %arg1, %c0_i32 : i32, i32, i32
  }
}

</mosaic_0001>

<llo_original>
// kernel: scope_lm_forward.1
$region0: #{scope_lm_forward.1}
  #allocation0 [shape = 'u32[]', space=smem, size = 0x4, offset = 0x4, fixed_abs, tag = 'smem constant byte address 0x4 - core index']
  #allocation1 [shape = 'u32[72,128]{1,0:T(1,128)}', space=vmem, size = 0x9000, scoped, tag = 'internal scratch']
  #allocation2 [shape = 'f32[2,4,32]{2,1,0:T(4,128)}', space=vmem, size = 0x1000, scoped, tag = 'scratch operand']
  #allocation3 [shape = 'f32[2,4,32]{2,1,0:T(4,128)}', space=vmem, size = 0x1000, scoped, tag = 'scratch operand']
  #allocation4 [shape = 'f32[4,8,32]{2,1,0:T(8,128)}', space=vmem, size = 0x4000, scoped, tag = 'scratch operand']
  #allocation5 [shape = 'f32[32,32]{1,0:T(8,128)}', space=vmem, size = 0x4000, scoped, tag = 'scratch operand']
  %s0 = inlined_call_operand.vmem [shape: f32[16,4,32], index: 0, kind: input, shape index: {}]
  %s1 = inlined_call_operand.vmem [shape: f32[16,4,17], index: 1, kind: input, shape index: {}]
  %s2 = inlined_call_operand.vmem [shape: f32[2,4,32], index: 2, kind: input, shape index: {}]
  %s3 = inlined_call_operand.vmem [shape: f32[2,4,32], index: 3, kind: input, shape index: {}]
  %s4 = inlined_call_operand.vmem [shape: f32[32,32], index: 4, kind: input, shape index: {}]
  %s5 = inlined_call_operand.vmem [shape: f32[32,32], index: 5, kind: input, shape index: {}]
  %s6 = inlined_call_operand.vmem [shape: f32[1,32], index: 6, kind: input, shape index: {}]
  %s7 = inlined_call_operand.vmem [shape: f32[32,32], index: 7, kind: input, shape index: {}]
  %s8 = inlined_call_operand.vmem [shape: f32[1,32], index: 8, kind: input, shape index: {}]
  %s9 = inlined_call_operand.vmem [shape: f32[2,32,128], index: 9, kind: input, shape index: {}]
  %s10 = inlined_call_operand.vmem [shape: f32[2,32,128], index: 10, kind: input, shape index: {}]
  %s11 = inlined_call_operand.vmem [shape: f32[2,1,128], index: 11, kind: input, shape index: {}]
  %s12 = inlined_call_operand.vmem [shape: f32[32,33], index: 12, kind: input, shape index: {}]
  %s13 = inlined_call_operand.vmem [shape: f32[32,33], index: 13, kind: input, shape index: {}]
  %s14 = inlined_call_operand.vmem [shape: f32[1,33], index: 14, kind: input, shape index: {}]
  %s15 = inlined_call_operand.vmem [shape: f32[32,32], index: 15, kind: input, shape index: {}]
  %s16 = inlined_call_operand.vmem [shape: f32[1,32], index: 16, kind: input, shape index: {}]
  %s17 = inlined_call_operand.vmem [shape: f32[32,128], index: 17, kind: input, shape index: {}]
  %s18 = inlined_call_operand.vmem [shape: f32[1,128], index: 18, kind: input, shape index: {}]
  %s19 = inlined_call_operand.vmem [shape: f32[1,64,128], index: 19, kind: output, shape index: {}]
  %s20 = sld [smem:[#allocation0]]
  $region113: #{scope_lm_forward.1} parent=0
    _
  %s22 = ssub.s32 1, %s20
  %s23 = scalar_select 0, %s22, %s20
  loop: start=0, step=1, limit=4
  $region2: #{scope_lm_forward.1} parent=0 // loop_pre_header
    _
  $region3: #{scope_lm_forward.1} parent=0 // loop_header
    %s25 = sphi 0, %s29
    %p26 = scmp.ge.s32.totalorder %s25, 4
    %s32 = sphi 0, %s44
    %s33 = sphi 0, %s40
    %s34 = sphi 0, %s32
    %s35 = sphi 0, %s33
    %s36 = sphi 0, %s34
    %s37 = sphi 0, %s35
    %s49 = sphi 0, %s51
    %s52 = sphi 0, %s49
    %s53 = sphi 0, %s52
    %s69 = sphi 0, %s53
    %s77 = sphi 0, %s79
    %s80 = sphi 0, %s77
    %s81 = sphi 0, %s80
    %s97 = sphi 0, %s81
    %s103 = sphi 0, %s105
    %s106 = sphi 0, %s103
    %s107 = sphi 0, %s106
    %s123 = sphi 0, %s107
    %s129 = sphi 0, %s131
    %s132 = sphi 0, %s129
    %s133 = sphi 0, %s132
    %s149 = sphi 0, %s133
    %s153 = sphi 0, %s153
    %s155 = sphi 0, %s153
    %s156 = sphi 0, %s155
    %s170 = sphi 0, %s156
    %s174 = sphi 0, %s174
    %s176 = sphi 0, %s174
    %s177 = sphi 0, %s176
    %s191 = sphi 0, %s177
    %s195 = sphi 0, %s195
    %s197 = sphi 0, %s195
    %s198 = sphi 0, %s197
    %s212 = sphi 0, %s198
    %s216 = sphi 0, %s216
    %s218 = sphi 0, %s216
    %s219 = sphi 0, %s218
    %s233 = sphi 0, %s219
    %s237 = sphi 0, %s237
    %s239 = sphi 0, %s237
    %s240 = sphi 0, %s239
    %s254 = sphi 0, %s240
    %s258 = sphi 0, %s258
    %s260 = sphi 0, %s258
    %s261 = sphi 0, %s260
    %s275 = sphi 0, %s261
    %s279 = sphi 0, %s279
    %s281 = sphi 0, %s279
    %s282 = sphi 0, %s281
    %s296 = sphi 0, %s282
    %s300 = sphi 0, %s300
    %s302 = sphi 0, %s300
    %s303 = sphi 0, %s302
    %s317 = sphi 0, %s303
    %s321 = sphi 0, %s321
    %s323 = sphi 0, %s321
    %s324 = sphi 0, %s323
    %s338 = sphi 0, %s324
    %s342 = sphi 0, %s342
    %s344 = sphi 0, %s342
    %s345 = sphi 0, %s344
    %s359 = sphi 0, %s345
    %s363 = sphi 0, %s363
    %s365 = sphi 0, %s363
    %s366 = sphi 0, %s365
    %s380 = sphi 0, %s366
    %s384 = sphi 0, %s384
    %s386 = sphi 0, %s384
    %s387 = sphi 0, %s386
    %s401 = sphi 0, %s387
    %s405 = sphi 0, %s405
    %s407 = sphi 0, %s405
    %s408 = sphi 0, %s407
    %s422 = sphi 0, %s408
    %s426 = sphi 0, %s426
    %s428 = sphi 0, %s426
    %s429 = sphi 0, %s428
    %s443 = sphi 0, %s429
    %s447 = sphi 0, %s447
    %s449 = sphi 0, %s447
    %s450 = sphi 0, %s449
    %s464 = sphi 0, %s450
    %s472 = sphi 0, %s474
    %s475 = sphi 0, %s472
    %s476 = sphi 0, %s475
    %s492 = sphi 0, %s476
  $region4: #{scope_lm_forward.1} parent=0 // loop_header_branch
    %28 = sbr.rel (%p26) target = $region8
  $region5: #{scope_lm_forward.1} parent=0 // loop_body
    %s30 = ssub.s32 %s25, 1
    %s31 = ssub.s32 %s25, 2
    %s38 = sadd.s32 1, %s33
    %p39 = scmp.ge.s32.totalorder %s38, 2
    %s40 = scalar_select %p39, 0, %s38
    %s41 = sadd.s32 1, %s32
    %s42 = scalar_select %p39, %s41, %s32
    %p43 = scmp.ge.s32.totalorder %s42, 1
    %s44 = scalar_select %p43, 0, %s42
    %s45 = ssub.s32 %s33, %s40
    %s46 = ssub.s32 %s32, %s44
    %s47 = sor.u32 %s45, %s46
    %p48 = scmp.eq.s32.totalorder %s47, 0
    %s50 = sadd.s32 %s49, 1
    %s51 = scalar_select %p48, %s49, %s50
    %p54 = pneg %p48
    %p55 = scmp.eq.s32.totalorder %s25, 1
    %p56 = por %p54, %p55
    %p57 = scmp.ne.s32.totalorder %s49, %s52
    %p58 = scmp.eq.s32.totalorder %s25, 0
    %p59 = por %p57, %p58
    %p60 = scmp.ne.s32.totalorder %s49, %s52
    %p61 = scmp.eq.s32.totalorder %s30, 1
    %p62 = por %p60, %p61
    %p63 = scmp.ne.s32.totalorder %s52, %s53
    %p64 = scmp.eq.s32.totalorder %s30, 0
    %p65 = por %p63, %p64
    %p66 = scmp.ne.s32.totalorder %s52, %s53
    %p67 = scmp.eq.s32.totalorder %s31, 1
    %p68 = por %p66, %p67
    %p70 = scmp.ne.s32.totalorder %s53, %s69
    %p71 = scmp.eq.s32.totalorder %s31, 0
    %p72 = por %p70, %p71
    %s73 = ssub.s32 %s33, %s40
    %s74 = ssub.s32 %s32, %s44
    %s75 = sor.u32 %s73, %s74
    %p76 = scmp.eq.s32.totalorder %s75, 0
    %s78 = sadd.s32 %s77, 1
    %s79 = scalar_select %p76, %s77, %s78
    %p82 = pneg %p76
    %p83 = scmp.eq.s32.totalorder %s25, 1
    %p84 = por %p82, %p83
    %p85 = scmp.ne.s32.totalorder %s77, %s80
    %p86 = scmp.eq.s32.totalorder %s25, 0
    %p87 = por %p85, %p86
    %p88 = scmp.ne.s32.totalorder %s77, %s80
    %p89 = scmp.eq.s32.totalorder %s30, 1
    %p90 = por %p88, %p89
    %p91 = scmp.ne.s32.totalorder %s80, %s81
    %p92 = scmp.eq.s32.totalorder %s30, 0
    %p93 = por %p91, %p92
    %p94 = scmp.ne.s32.totalorder %s80, %s81
    %p95 = scmp.eq.s32.totalorder %s31, 1
    %p96 = por %p94, %p95
    %p98 = scmp.ne.s32.totalorder %s81, %s97
    %p99 = scmp.eq.s32.totalorder %s31, 0
    %p100 = por %p98, %p99
    %s101 = ssub.s32 %s32, %s44
    %p102 = scmp.eq.s32.totalorder %s101, 0
    %s104 = sadd.s32 %s103, 1
    %s105 = scalar_select %p102, %s103, %s104
    %p108 = pneg %p102
    %p109 = scmp.eq.s32.totalorder %s25, 1
    %p110 = por %p108, %p109
    %p111 = scmp.ne.s32.totalorder %s103, %s106
    %p112 = scmp.eq.s32.totalorder %s25, 0
    %p113 = por %p111, %p112
    %p114 = scmp.ne.s32.totalorder %s103, %s106
    %p115 = scmp.eq.s32.totalorder %s30, 1
    %p116 = por %p114, %p115
    %p117 = scmp.ne.s32.totalorder %s106, %s107
    %p118 = scmp.eq.s32.totalorder %s30, 0
    %p119 = por %p117, %p118
    %p120 = scmp.ne.s32.totalorder %s106, %s107
    %p121 = scmp.eq.s32.totalorder %s31, 1
    %p122 = por %p120, %p121
    %p124 = scmp.ne.s32.totalorder %s107, %s123
    %p125 = scmp.eq.s32.totalorder %s31, 0
    %p126 = por %p124, %p125
    %s127 = ssub.s32 %s32, %s44
    %p128 = scmp.eq.s32.totalorder %s127, 0
    %s130 = sadd.s32 %s129, 1
    %s131 = scalar_select %p128, %s129, %s130
    %p134 = pneg %p128
    %p135 = scmp.eq.s32.totalorder %s25, 1
    %p136 = por %p134, %p135
    %p137 = scmp.ne.s32.totalorder %s129, %s132
    %p138 = scmp.eq.s32.totalorder %s25, 0
    %p139 = por %p137, %p138
    %p140 = scmp.ne.s32.totalorder %s129, %s132
    %p141 = scmp.eq.s32.totalorder %s30, 1
    %p142 = por %p140, %p141
    %p143 = scmp.ne.s32.totalorder %s132, %s133
    %p144 = scmp.eq.s32.totalorder %s30, 0
    %p145 = por %p143, %p144
    %p146 = scmp.ne.s32.totalorder %s132, %s133
    %p147 = scmp.eq.s32.totalorder %s31, 1
    %p148 = por %p146, %p147
    %p150 = scmp.ne.s32.totalorder %s133, %s149
    %p151 = scmp.eq.s32.totalorder %s31, 0
    %p152 = por %p150, %p151
    %s154 = sadd.s32 %s153, 1
    %p157 = scmp.eq.s32.totalorder %s25, 1
    %p158 = scmp.ne.s32.totalorder %s153, %s155
    %p159 = scmp.eq.s32.totalorder %s25, 0
    %p160 = por %p158, %p159
    %p161 = scmp.ne.s32.totalorder %s153, %s155
    %p162 = scmp.eq.s32.totalorder %s30, 1
    %p163 = por %p161, %p162
    %p164 = scmp.ne.s32.totalorder %s155, %s156
    %p165 = scmp.eq.s32.totalorder %s30, 0
    %p166 = por %p164, %p165
    %p167 = scmp.ne.s32.totalorder %s155, %s156
    %p168 = scmp.eq.s32.totalorder %s31, 1
    %p169 = por %p167, %p168
    %p171 = scmp.ne.s32.totalorder %s156, %s170
    %p172 = scmp.eq.s32.totalorder %s31, 0
    %p173 = por %p171, %p172
    %s175 = sadd.s32 %s174, 1
    %p178 = scmp.eq.s32.totalorder %s25, 1
    %p179 = scmp.ne.s32.totalorder %s174, %s176
    %p180 = scmp.eq.s32.totalorder %s25, 0
    %p181 = por %p179, %p180
    %p182 = scmp.ne.s32.totalorder %s174, %s176
    %p183 = scmp.eq.s32.totalorder %s30, 1
    %p184 = por %p182, %p183
    %p185 = scmp.ne.s32.totalorder %s176, %s177
    %p186 = scmp.eq.s32.totalorder %s30, 0
    %p187 = por %p185, %p186
    %p188 = scmp.ne.s32.totalorder %s176, %s177
    %p189 = scmp.eq.s32.totalorder %s31, 1
    %p190 = por %p188, %p189
    %p192 = scmp.ne.s32.totalorder %s177, %s191
    %p193 = scmp.eq.s32.totalorder %s31, 0
    %p194 = por %p192, %p193
    %s196 = sadd.s32 %s195, 1
    %p199 = scmp.eq.s32.totalorder %s25, 1
    %p200 = scmp.ne.s32.totalorder %s195, %s197
    %p201 = scmp.eq.s32.totalorder %s25, 0
    %p202 = por %p200, %p201
    %p203 = scmp.ne.s32.totalorder %s195, %s197
    %p204 = scmp.eq.s32.totalorder %s30, 1
    %p205 = por %p203, %p204
    %p206 = scmp.ne.s32.totalorder %s197, %s198
    %p207 = scmp.eq.s32.totalorder %s30, 0
    %p208 = por %p206, %p207
    %p209 = scmp.ne.s32.totalorder %s197, %s198
    %p210 = scmp.eq.s32.totalorder %s31, 1
    %p211 = por %p209, %p210
    %p213 = scmp.ne.s32.totalorder %s198, %s212
    %p214 = scmp.eq.s32.totalorder %s31, 0
    %p215 = por %p213, %p214
    %s217 = sadd.s32 %s216, 1
    %p220 = scmp.eq.s32.totalorder %s25, 1
    %p221 = scmp.ne.s32.totalorder %s216, %s218
    %p222 = scmp.eq.s32.totalorder %s25, 0
    %p223 = por %p221, %p222
    %p224 = scmp.ne.s32.totalorder %s216, %s218
    %p225 = scmp.eq.s32.totalorder %s30, 1
    %p226 = por %p224, %p225
    %p227 = scmp.ne.s32.totalorder %s218, %s219
    %p228 = scmp.eq.s32.totalorder %s30, 0
    %p229 = por %p227, %p228
    %p230 = scmp.ne.s32.totalorder %s218, %s219
    %p231 = scmp.eq.s32.totalorder %s31, 1
    %p232 = por %p230, %p231
    %p234 = scmp.ne.s32.totalorder %s219, %s233
    %p235 = scmp.eq.s32.totalorder %s31, 0
    %p236 = por %p234, %p235
    %s238 = sadd.s32 %s237, 1
    %p241 = scmp.eq.s32.totalorder %s25, 1
    %p242 = scmp.ne.s32.totalorder %s237, %s239
    %p243 = scmp.eq.s32.totalorder %s25, 0
    %p244 = por %p242, %p243
    %p245 = scmp.ne.s32.totalorder %s237, %s239
    %p246 = scmp.eq.s32.totalorder %s30, 1
    %p247 = por %p245, %p246
    %p248 = scmp.ne.s32.totalorder %s239, %s240
    %p249 = scmp.eq.s32.totalorder %s30, 0
    %p250 = por %p248, %p249
    %p251 = scmp.ne.s32.totalorder %s239, %s240
    %p252 = scmp.eq.s32.totalorder %s31, 1
    %p253 = por %p251, %p252
    %p255 = scmp.ne.s32.totalorder %s240, %s254
    %p256 = scmp.eq.s32.totalorder %s31, 0
    %p257 = por %p255, %p256
    %s259 = sadd.s32 %s258, 1
    %p262 = scmp.eq.s32.totalorder %s25, 1
    %p263 = scmp.ne.s32.totalorder %s258, %s260
    %p264 = scmp.eq.s32.totalorder %s25, 0
    %p265 = por %p263, %p264
    %p266 = scmp.ne.s32.totalorder %s258, %s260
    %p267 = scmp.eq.s32.totalorder %s30, 1
    %p268 = por %p266, %p267
    %p269 = scmp.ne.s32.totalorder %s260, %s261
    %p270 = scmp.eq.s32.totalorder %s30, 0
    %p271 = por %p269, %p270
    %p272 = scmp.ne.s32.totalorder %s260, %s261
    %p273 = scmp.eq.s32.totalorder %s31, 1
    %p274 = por %p272, %p273
    %p276 = scmp.ne.s32.totalorder %s261, %s275
    %p277 = scmp.eq.s32.totalorder %s31, 0
    %p278 = por %p276, %p277
    %s280 = sadd.s32 %s279, 1
    %p283 = scmp.eq.s32.totalorder %s25, 1
    %p284 = scmp.ne.s32.totalorder %s279, %s281
    %p285 = scmp.eq.s32.totalorder %s25, 0
    %p286 = por %p284, %p285
    %p287 = scmp.ne.s32.totalorder %s279, %s281
    %p288 = scmp.eq.s32.totalorder %s30, 1
    %p289 = por %p287, %p288
    %p290 = scmp.ne.s32.totalorder %s281, %s282
    %p291 = scmp.eq.s32.totalorder %s30, 0
    %p292 = por %p290, %p291
    %p293 = scmp.ne.s32.totalorder %s281, %s282
    %p294 = scmp.eq.s32.totalorder %s31, 1
    %p295 = por %p293, %p294
    %p297 = scmp.ne.s32.totalorder %s282, %s296
    %p298 = scmp.eq.s32.totalorder %s31, 0
    %p299 = por %p297, %p298
    %s301 = sadd.s32 %s300, 1
    %p304 = scmp.eq.s32.totalorder %s25, 1
    %p305 = scmp.ne.s32.totalorder %s300, %s302
    %p306 = scmp.eq.s32.totalorder %s25, 0
    %p307 = por %p305, %p306
    %p308 = scmp.ne.s32.totalorder %s300, %s302
    %p309 = scmp.eq.s32.totalorder %s30, 1
    %p310 = por %p308, %p309
    %p311 = scmp.ne.s32.totalorder %s302, %s303
    %p312 = scmp.eq.s32.totalorder %s30, 0
    %p313 = por %p311, %p312
    %p314 = scmp.ne.s32.totalorder %s302, %s303
    %p315 = scmp.eq.s32.totalorder %s31, 1
    %p316 = por %p314, %p315
    %p318 = scmp.ne.s32.totalorder %s303, %s317
    %p319 = scmp.eq.s32.totalorder %s31, 0
    %p320 = por %p318, %p319
    %s322 = sadd.s32 %s321, 1
    %p325 = scmp.eq.s32.totalorder %s25, 1
    %p326 = scmp.ne.s32.totalorder %s321, %s323
    %p327 = scmp.eq.s32.totalorder %s25, 0
    %p328 = por %p326, %p327
    %p329 = scmp.ne.s32.totalorder %s321, %s323
    %p330 = scmp.eq.s32.totalorder %s30, 1
    %p331 = por %p329, %p330
    %p332 = scmp.ne.s32.totalorder %s323, %s324
    %p333 = scmp.eq.s32.totalorder %s30, 0
    %p334 = por %p332, %p333
    %p335 = scmp.ne.s32.totalorder %s323, %s324
    %p336 = scmp.eq.s32.totalorder %s31, 1
    %p337 = por %p335, %p336
    %p339 = scmp.ne.s32.totalorder %s324, %s338
    %p340 = scmp.eq.s32.totalorder %s31, 0
    %p341 = por %p339, %p340
    %s343 = sadd.s32 %s342, 1
    %p346 = scmp.eq.s32.totalorder %s25, 1
    %p347 = scmp.ne.s32.totalorder %s342, %s344
    %p348 = scmp.eq.s32.totalorder %s25, 0
    %p349 = por %p347, %p348
    %p350 = scmp.ne.s32.totalorder %s342, %s344
    %p351 = scmp.eq.s32.totalorder %s30, 1
    %p352 = por %p350, %p351
    %p353 = scmp.ne.s32.totalorder %s344, %s345
    %p354 = scmp.eq.s32.totalorder %s30, 0
    %p355 = por %p353, %p354
    %p356 = scmp.ne.s32.totalorder %s344, %s345
    %p357 = scmp.eq.s32.totalorder %s31, 1
    %p358 = por %p356, %p357
    %p360 = scmp.ne.s32.totalorder %s345, %s359
    %p361 = scmp.eq.s32.totalorder %s31, 0
    %p362 = por %p360, %p361
    %s364 = sadd.s32 %s363, 1
    %p367 = scmp.eq.s32.totalorder %s25, 1
    %p368 = scmp.ne.s32.totalorder %s363, %s365
    %p369 = scmp.eq.s32.totalorder %s25, 0
    %p370 = por %p368, %p369
    %p371 = scmp.ne.s32.totalorder %s363, %s365
    %p372 = scmp.eq.s32.totalorder %s30, 1
    %p373 = por %p371, %p372
    %p374 = scmp.ne.s32.totalorder %s365, %s366
    %p375 = scmp.eq.s32.totalorder %s30, 0
    %p376 = por %p374, %p375
    %p377 = scmp.ne.s32.totalorder %s365, %s366
    %p378 = scmp.eq.s32.totalorder %s31, 1
    %p379 = por %p377, %p378
    %p381 = scmp.ne.s32.totalorder %s366, %s380
    %p382 = scmp.eq.s32.totalorder %s31, 0
    %p383 = por %p381, %p382
    %s385 = sadd.s32 %s384, 1
    %p388 = scmp.eq.s32.totalorder %s25, 1
    %p389 = scmp.ne.s32.totalorder %s384, %s386
    %p390 = scmp.eq.s32.totalorder %s25, 0
    %p391 = por %p389, %p390
    %p392 = scmp.ne.s32.totalorder %s384, %s386
    %p393 = scmp.eq.s32.totalorder %s30, 1
    %p394 = por %p392, %p393
    %p395 = scmp.ne.s32.totalorder %s386, %s387
    %p396 = scmp.eq.s32.totalorder %s30, 0
    %p397 = por %p395, %p396
    %p398 = scmp.ne.s32.totalorder %s386, %s387
    %p399 = scmp.eq.s32.totalorder %s31, 1
    %p400 = por %p398, %p399
    %p402 = scmp.ne.s32.totalorder %s387, %s401
    %p403 = scmp.eq.s32.totalorder %s31, 0
    %p404 = por %p402, %p403
    %s406 = sadd.s32 %s405, 1
    %p409 = scmp.eq.s32.totalorder %s25, 1
    %p410 = scmp.ne.s32.totalorder %s405, %s407
    %p411 = scmp.eq.s32.totalorder %s25, 0
    %p412 = por %p410, %p411
    %p413 = scmp.ne.s32.totalorder %s405, %s407
    %p414 = scmp.eq.s32.totalorder %s30, 1
    %p415 = por %p413, %p414
    %p416 = scmp.ne.s32.totalorder %s407, %s408
    %p417 = scmp.eq.s32.totalorder %s30, 0
    %p418 = por %p416, %p417
    %p419 = scmp.ne.s32.totalorder %s407, %s408
    %p420 = scmp.eq.s32.totalorder %s31, 1
    %p421 = por %p419, %p420
    %p423 = scmp.ne.s32.totalorder %s408, %s422
    %p424 = scmp.eq.s32.totalorder %s31, 0
    %p425 = por %p423, %p424
    %s427 = sadd.s32 %s426, 1
    %p430 = scmp.eq.s32.totalorder %s25, 1
    %p431 = scmp.ne.s32.totalorder %s426, %s428
    %p432 = scmp.eq.s32.totalorder %s25, 0
    %p433 = por %p431, %p432
    %p434 = scmp.ne.s32.totalorder %s426, %s428
    %p435 = scmp.eq.s32.totalorder %s30, 1
    %p436 = por %p434, %p435
    %p437 = scmp.ne.s32.totalorder %s428, %s429
    %p438 = scmp.eq.s32.totalorder %s30, 0
    %p439 = por %p437, %p438
    %p440 = scmp.ne.s32.totalorder %s428, %s429
    %p441 = scmp.eq.s32.totalorder %s31, 1
    %p442 = por %p440, %p441
    %p444 = scmp.ne.s32.totalorder %s429, %s443
    %p445 = scmp.eq.s32.totalorder %s31, 0
    %p446 = por %p444, %p445
    %s448 = sadd.s32 %s447, 1
    %p451 = scmp.eq.s32.totalorder %s25, 1
    %p452 = scmp.ne.s32.totalorder %s447, %s449
    %p453 = scmp.eq.s32.totalorder %s25, 0
    %p454 = por %p452, %p453
    %p455 = scmp.ne.s32.totalorder %s447, %s449
    %p456 = scmp.eq.s32.totalorder %s30, 1
    %p457 = por %p455, %p456
    %p458 = scmp.ne.s32.totalorder %s449, %s450
    %p459 = scmp.eq.s32.totalorder %s30, 0
    %p460 = por %p458, %p459
    %p461 = scmp.ne.s32.totalorder %s449, %s450
    %p462 = scmp.eq.s32.totalorder %s31, 1
    %p463 = por %p461, %p462
    %p465 = scmp.ne.s32.totalorder %s450, %s464
    %p466 = scmp.eq.s32.totalorder %s31, 0
    %p467 = por %p465, %p466
    %s468 = ssub.s32 %s32, %s44
    %s469 = ssub.s32 %s33, %s40
    %s470 = sor.u32 %s468, %s469
    %p471 = scmp.eq.s32.totalorder %s470, 0
    %s473 = sadd.s32 %s472, 1
    %s474 = scalar_select %p471, %s472, %s473
    %p477 = pneg %p471
    %p478 = scmp.eq.s32.totalorder %s25, 1
    %p479 = por %p477, %p478
    %p480 = scmp.ne.s32.totalorder %s472, %s475
    %p481 = scmp.eq.s32.totalorder %s25, 0
    %p482 = por %p480, %p481
    %p483 = scmp.ne.s32.totalorder %s472, %s475
    %p484 = scmp.eq.s32.totalorder %s30, 1
    %p485 = por %p483, %p484
    %p486 = scmp.ne.s32.totalorder %s475, %s476
    %p487 = scmp.eq.s32.totalorder %s30, 0
    %p488 = por %p486, %p487
    %p489 = scmp.ne.s32.totalorder %s475, %s476
    %p490 = scmp.eq.s32.totalorder %s31, 1
    %p491 = por %p489, %p490
    %p493 = scmp.ne.s32.totalorder %s476, %s492
    %p494 = scmp.eq.s32.totalorder %s31, 0
    %p495 = por %p493, %p494
    %p496 = scmp.le.s32.totalorder 1, %s25
    %p497 = scmp.lt.s32.totalorder %s25, 3
    %p498 = pnand %p496, %p497
    %p499 = pneg %p498
    // Predicated region
    $region9: #{scope_lm_forward.1} parent=5 // pred_check
      _
    $region10: #{scope_lm_forward.1} parent=5 // pred_check_branch
      %501 = sbr.rel (%p498) target = $region12
    $region11: #{scope_lm_forward.1} parent=5 // pred_region
      %s502 = ssub.s32 %s25, 1
      // Predicated region
      $region13: #{scope_lm_forward.1} parent=11 // pred_check
        %p503 = pneg %p119
      $region14: #{scope_lm_forward.1} parent=11 // pred_check_branch
        %505 = sbr.rel (%p503) target = $region16
      $region15: #{scope_lm_forward.1} parent=11 // pred_region
        %p506 = scmp.lt.s32.totalorder %s34, 0
        %s507 = scalar_select %p506, %s34, 0
        %s508 = smul.addr %s507, 4
        %s509 = scalar_lea.vmem %s2, %s508
      $region16: #{scope_lm_forward.1} parent=11 // pred_fallthru
        _
      // Predicated region
      $region17: #{scope_lm_forward.1} parent=11 // pred_check
        %p510 = pneg %p145
      $region18: #{scope_lm_forward.1} parent=11 // pred_check_branch
        %512 = sbr.rel (%p510) target = $region20
      $region19: #{scope_lm_forward.1} parent=11 // pred_region
        %p513 = scmp.lt.s32.totalorder %s34, 0
        %s514 = scalar_select %p513, %s34, 0
        %s515 = smul.addr %s514, 4
        %s516 = scalar_lea.vmem %s3, %s515
      $region20: #{scope_lm_forward.1} parent=11 // pred_fallthru
        _
      // Predicated region
      $region21: #{scope_lm_forward.1} parent=11 // pred_check
        %p517 = pneg %p166
      $region22: #{scope_lm_forward.1} parent=11 // pred_check_branch
        %519 = sbr.rel (%p517) target = $region24
      $region23: #{scope_lm_forward.1} parent=11 // pred_region
        _
      $region24: #{scope_lm_forward.1} parent=11 // pred_fallthru
        _
      // Predicated region
      $region25: #{scope_lm_forward.1} parent=11 // pred_check
        %p520 = pneg %p187
      $region26: #{scope_lm_forward.1} parent=11 // pred_check_branch
        %522 = sbr.rel (%p520) target = $region28
      $region27: #{scope_lm_forward.1} parent=11 // pred_region
        _
      $region28: #{scope_lm_forward.1} parent=11 // pred_fallthru
        _
      // Predicated region
      $region29: #{scope_lm_forward.1} parent=11 // pred_check
        %p523 = pneg %p208
      $region30: #{scope_lm_forward.1} parent=11 // pred_check_branch
        %525 = sbr.rel (%p523) target = $region32
      $region31: #{scope_lm_forward.1} parent=11 // pred_region
        _
      $region32: #{scope_lm_forward.1} parent=11 // pred_fallthru
        _
      // Predicated region
      $region33: #{scope_lm_forward.1} parent=11 // pred_check
        %p526 = pneg %p229
      $region34: #{scope_lm_forward.1} parent=11 // pred_check_branch
        %528 = sbr.rel (%p526) target = $region36
      $region35: #{scope_lm_forward.1} parent=11 // pred_region
        _
      $region36: #{scope_lm_forward.1} parent=11 // pred_fallthru
        _
      // Predicated region
      $region37: #{scope_lm_forward.1} parent=11 // pred_check
        %p529 = pneg %p250
      $region38: #{scope_lm_forward.1} parent=11 // pred_check_branch
        %531 = sbr.rel (%p529) target = $region40
      $region39: #{scope_lm_forward.1} parent=11 // pred_region
        _
      $region40: #{scope_lm_forward.1} parent=11 // pred_fallthru
        _
      // Predicated region
      $region41: #{scope_lm_forward.1} parent=11 // pred_check
        %p532 = pneg %p271
      $region42: #{scope_lm_forward.1} parent=11 // pred_check_branch
        %534 = sbr.rel (%p532) target = $region44
      $region43: #{scope_lm_forward.1} parent=11 // pred_region
        _
      $region44: #{scope_lm_forward.1} parent=11 // pred_fallthru
        _
      // Predicated region
      $region45: #{scope_lm_forward.1} parent=11 // pred_check
        %p535 = pneg %p292
      $region46: #{scope_lm_forward.1} parent=11 // pred_check_branch
        %537 = sbr.rel (%p535) target = $region48
      $region47: #{scope_lm_forward.1} parent=11 // pred_region
        _
      $region48: #{scope_lm_forward.1} parent=11 // pred_fallthru
        _
      // Predicated region
      $region49: #{scope_lm_forward.1} parent=11 // pred_check
        %p538 = pneg %p313
      $region50: #{scope_lm_forward.1} parent=11 // pred_check_branch
        %540 = sbr.rel (%p538) target = $region52
      $region51: #{scope_lm_forward.1} parent=11 // pred_region
        _
      $region52: #{scope_lm_forward.1} parent=11 // pred_fallthru
        _
      // Predicated region
      $region53: #{scope_lm_forward.1} parent=11 // pred_check
        %p541 = pneg %p334
      $region54: #{scope_lm_forward.1} parent=11 // pred_check_branch
        %543 = sbr.rel (%p541) target = $region56
      $region55: #{scope_lm_forward.1} parent=11 // pred_region
        _
      $region56: #{scope_lm_forward.1} parent=11 // pred_fallthru
        _
      // Predicated region
      $region57: #{scope_lm_forward.1} parent=11 // pred_check
        %p544 = pneg %p355
      $region58: #{scope_lm_forward.1} parent=11 // pred_check_branch
        %546 = sbr.rel (%p544) target = $region60
      $region59: #{scope_lm_forward.1} parent=11 // pred_region
        _
      $region60: #{scope_lm_forward.1} parent=11 // pred_fallthru
        _
      // Predicated region
      $region61: #{scope_lm_forward.1} parent=11 // pred_check
        %p547 = pneg %p376
      $region62: #{scope_lm_forward.1} parent=11 // pred_check_branch
        %549 = sbr.rel (%p547) target = $region64
      $region63: #{scope_lm_forward.1} parent=11 // pred_region
        _
      $region64: #{scope_lm_forward.1} parent=11 // pred_fallthru
        _
      // Predicated region
      $region65: #{scope_lm_forward.1} parent=11 // pred_check
        %p550 = pneg %p397
      $region66: #{scope_lm_forward.1} parent=11 // pred_check_branch
        %552 = sbr.rel (%p550) target = $region68
      $region67: #{scope_lm_forward.1} parent=11 // pred_region
        _
      $region68: #{scope_lm_forward.1} parent=11 // pred_fallthru
        _
      // Predicated region
      $region69: #{scope_lm_forward.1} parent=11 // pred_check
        %p553 = pneg %p418
      $region70: #{scope_lm_forward.1} parent=11 // pred_check_branch
        %555 = sbr.rel (%p553) target = $region72
      $region71: #{scope_lm_forward.1} parent=11 // pred_region
        _
      $region72: #{scope_lm_forward.1} parent=11 // pred_fallthru
        _
      // Predicated region
      $region73: #{scope_lm_forward.1} parent=11 // pred_check
        %p556 = pneg %p439
      $region74: #{scope_lm_forward.1} parent=11 // pred_check_branch
        %558 = sbr.rel (%p556) target = $region76
      $region75: #{scope_lm_forward.1} parent=11 // pred_region
        _
      $region76: #{scope_lm_forward.1} parent=11 // pred_fallthru
        _
      // Predicated region
      $region77: #{scope_lm_forward.1} parent=11 // pred_check
        %p559 = pneg %p460
      $region78: #{scope_lm_forward.1} parent=11 // pred_check_branch
        %561 = sbr.rel (%p559) target = $region80
      $region79: #{scope_lm_forward.1} parent=11 // pred_region
        _
      $region80: #{scope_lm_forward.1} parent=11 // pred_fallthru
        _
    $region12: #{scope_lm_forward.1} parent=5 // pred_fallthru
      _
    %p562 = scmp.lt.s32.totalorder %s25, 2
    // Predicated region
    $region81: #{scope_lm_forward.1} parent=5 // pred_check
      %p563 = pneg %p562
    $region82: #{scope_lm_forward.1} parent=5 // pred_check_branch
      %565 = sbr.rel (%p563) target = $region84
    $region83: #{scope_lm_forward.1} parent=5 // pred_region
      // Predicated region
      $region85: #{scope_lm_forward.1} parent=83 // pred_check
        %p566 = pneg %p59
      $region86: #{scope_lm_forward.1} parent=83 // pred_check_branch
        %568 = sbr.rel (%p566) target = $region88
      $region87: #{scope_lm_forward.1} parent=83 // pred_region
        %s569 = smul.u32 8, %s33
        %p570 = scmp.lt.s32.totalorder %s569, 15
        %s571 = scalar_select %p570, %s569, 15
        %p572 = scmp.lt.s32.totalorder %s32, 0
        %s573 = scalar_select %p572, %s32, 0
        %s574 = sadd.s32 %s573, %s571
        %s575 = smul.addr %s574, 4
        %s576 = scalar_lea.vmem %s0, %s575
        %s577 = smul.u32 8, %s33
      $region88: #{scope_lm_forward.1} parent=83 // pred_fallthru
        _
      // Predicated region
      $region89: #{scope_lm_forward.1} parent=83 // pred_check
        %p578 = pneg %p87
      $region90: #{scope_lm_forward.1} parent=83 // pred_check_branch
        %580 = sbr.rel (%p578) target = $region92
      $region91: #{scope_lm_forward.1} parent=83 // pred_region
        %s581 = smul.u32 8, %s33
        %p582 = scmp.lt.s32.totalorder %s581, 15
        %s583 = scalar_select %p582, %s581, 15
        %p584 = scmp.lt.s32.totalorder %s32, 0
        %s585 = scalar_select %p584, %s32, 0
        %s586 = sadd.s32 %s585, %s583
        %s587 = smul.addr %s586, 4
        %s588 = scalar_lea.vmem %s1, %s587
        %s589 = smul.u32 8, %s33
      $region92: #{scope_lm_forward.1} parent=83 // pred_fallthru
        _
    $region84: #{scope_lm_forward.1} parent=5 // pred_fallthru
      _
    %p590 = scmp.le.s32.totalorder 1, %s25
    %p591 = scmp.lt.s32.totalorder %s25, 3
    %p592 = pnand %p590, %p591
    %p593 = pneg %p592
    // Predicated region
    $region93: #{scope_lm_forward.1} parent=5 // pred_check
      _
    $region94: #{scope_lm_forward.1} parent=5 // pred_check_branch
      %595 = sbr.rel (%p592) target = $region96
    $region95: #{scope_lm_forward.1} parent=5 // pred_region
      %s596 = ssub.s32 %s25, 1
      %s597 = smul.u32 8, %s35
      %p598 = scmp.lt.s32.totalorder %s597, 15
      %s599 = scalar_select %p598, %s597, 15
      %p600 = scmp.lt.s32.totalorder %s34, 0
      %s601 = scalar_select %p600, %s34, 0
      %s602 = sadd.s32 %s601, %s599
      %s603 = smul.addr %s602, 4
      %s604 = scalar_lea.vmem %s0, %s603
      %p605 = pneg %p65
      %p606 = pneg %p62
      %s607 = smul.u32 8, %s35
      %p608 = scmp.lt.s32.totalorder %s607, 15
      %s609 = scalar_select %p608, %s607, 15
      %p610 = scmp.lt.s32.totalorder %s34, 0
      %s611 = scalar_select %p610, %s34, 0
      %s612 = sadd.s32 %s611, %s609
      %s613 = smul.addr %s612, 4
      %s614 = scalar_lea.vmem %s1, %s613
      %p615 = pneg %p93
      %p616 = pneg %p90
      %p617 = scmp.lt.s32.totalorder %s34, 0
      %s618 = scalar_select %p617, %s34, 0
      %s619 = smul.addr %s618, 4
      %s620 = scalar_lea.vmem %s2, %s619
      %p621 = pneg %p119
      %p622 = pneg %p116
      %p623 = scmp.lt.s32.totalorder %s34, 0
      %s624 = scalar_select %p623, %s34, 0
      %s625 = smul.addr %s624, 4
      %s626 = scalar_lea.vmem %s3, %s625
      %p627 = pneg %p145
      %p628 = pneg %p142
      %p629 = pneg %p166
      %p630 = pneg %p163
      %p631 = pneg %p187
      %p632 = pneg %p184
      %p633 = pneg %p208
      %p634 = pneg %p205
      %p635 = pneg %p229
      %p636 = pneg %p226
      %p637 = pneg %p250
      %p638 = pneg %p247
      %p639 = pneg %p271
      %p640 = pneg %p268
      %p641 = pneg %p292
      %p642 = pneg %p289
      %p643 = pneg %p313
      %p644 = pneg %p310
      %p645 = pneg %p334
      %p646 = pneg %p331
      %p647 = pneg %p355
      %p648 = pneg %p352
      %p649 = pneg %p376
      %p650 = pneg %p373
      %p651 = pneg %p397
      %p652 = pneg %p394
      %p653 = pneg %p418
      %p654 = pneg %p415
      %p655 = pneg %p439
      %p656 = pneg %p436
      %p657 = pneg %p460
      %p658 = pneg %p457
      %p659 = pneg %p488
      %p660 = pneg %p485
      %s661 = smul.u32 4, %s35
      %p662 = scmp.lt.s32.totalorder %s34, 0
      %s663 = scalar_select %p662, %s34, 0
      %p664 = scmp.lt.s32.totalorder %s661, 7
      %s665 = scalar_select %p664, %s661, 7
      %s666 = smul.addr %s663, 8
      %s667 = sadd.s32 %s665, %s666
      %s668 = smul.addr %s667, 8
      %s669 = scalar_lea.vmem %s19, %s668
      %s670 = smul.u32 8, %s35
      %p671 = scmp.lt.s32.totalorder %s670, 15
      %s672 = scalar_select %p671, %s670, 15
      %p673 = scmp.lt.s32.totalorder %s34, 0
      %s674 = scalar_select %p673, %s34, 0
      %s675 = sadd.s32 %s674, %s672
      %s676 = smul.addr %s675, 4
      %s677 = scalar_lea.vmem %s0, %s676
      %s678 = smul.u32 8, %s35
      %s679 = smul.u32 8, %s35
      %p680 = scmp.lt.s32.totalorder %s679, 15
      %s681 = scalar_select %p680, %s679, 15
      %p682 = scmp.lt.s32.totalorder %s34, 0
      %s683 = scalar_select %p682, %s34, 0
      %s684 = sadd.s32 %s683, %s681
      %s685 = smul.addr %s684, 4
      %s686 = scalar_lea.vmem %s1, %s685
      %s687 = smul.u32 8, %s35
      %p688 = scmp.lt.s32.totalorder %s34, 0
      %s689 = scalar_select %p688, %s34, 0
      %s690 = smul.addr %s689, 4
      %s691 = scalar_lea.vmem %s2, %s690
      %p692 = scmp.lt.s32.totalorder %s34, 0
      %s693 = scalar_select %p692, %s34, 0
      %s694 = smul.addr %s693, 4
      %s695 = scalar_lea.vmem %s3, %s694
      %s696 = smul.u32 4, %s35
      %p697 = scmp.lt.s32.totalorder %s34, 0
      %s698 = scalar_select %p697, %s34, 0
      %p699 = scmp.lt.s32.totalorder %s696, 7
      %s700 = scalar_select %p699, %s696, 7
      %s701 = smul.addr %s698, 8
      %s702 = sadd.s32 %s700, %s701
      %s703 = smul.addr %s702, 8
      %s704 = scalar_lea.vmem %s19, %s703
      %s705 = smul.u32 4, %s35
      %p706 = scmp.eq.s32.totalorder %s35, 0
      // Predicated region
      $region97: #{scope_lm_forward.1} parent=95 // pred_check
        %p707 = pneg %p706
      $region98: #{scope_lm_forward.1} parent=95 // pred_check_branch
        %709 = sbr.rel (%p707) target = $region100
      $region99: #{scope_lm_forward.1} parent=95 // pred_region
        %v710 = vld [vmem:[%s691] sm:$0xf]
        %v711 = vld [vmem:[%s691 + $0x4] sm:$0xf]
        %vm712 = vcmask 257024
        %713 = vst.msk [vmem:[#allocation2] sm:$0xf] %vm712, %v710
        %714 = vst.msk [vmem:[#allocation2 + $0x4] sm:$0xf] %vm712, %v711
        %v715 = vld [vmem:[%s695] sm:$0xf]
        %v716 = vld [vmem:[%s695 + $0x4] sm:$0xf]
        %717 = vst.msk [vmem:[#allocation3] sm:$0xf] %vm712, %v715
        %718 = vst.msk [vmem:[#allocation3 + $0x4] sm:$0xf] %vm712, %v716
        %vm719 = vcmask 261120
        %720 = vst.msk [vmem:[#allocation4] sm:$0xff] %vm719, 0.0
        %721 = vst.msk [vmem:[#allocation4 + $0x8] sm:$0xff] %vm719, 0.0
        %722 = vst.msk [vmem:[#allocation4 + $0x10] sm:$0xff] %vm719, 0.0
        %723 = vst.msk [vmem:[#allocation4 + $0x18] sm:$0xff] %vm719, 0.0
      $region100: #{scope_lm_forward.1} parent=95 // pred_fallthru
        _
      %v724 = vld [vmem:[%s4] sm:$0xff]
      %v725 = vld [vmem:[%s4 + $0x8] sm:$0xff]
      %v726 = vld [vmem:[%s4 + $0x10] sm:$0xff]
      %v727 = vld [vmem:[%s4 + $0x18] sm:$0xff]
      %v728 = vld [vmem:[%s5] sm:$0xff]
      %v729 = vld [vmem:[%s5 + $0x8] sm:$0xff]
      %v730 = vld [vmem:[%s5 + $0x10] sm:$0xff]
      %v731 = vld [vmem:[%s5 + $0x18] sm:$0xff]
      %v732 = vld [vmem:[%s6] sm:$0x1]
      %v733 = vld [vmem:[%s7] sm:$0xff]
      %v734 = vld [vmem:[%s7 + $0x8] sm:$0xff]
      %v735 = vld [vmem:[%s7 + $0x10] sm:$0xff]
      %v736 = vld [vmem:[%s7 + $0x18] sm:$0xff]
      %v737 = vld [vmem:[%s8] sm:$0x1]
      %v738 = vld [vmem:[%s12] sm:$0xff]
      %v739 = vld [vmem:[%s12 + $0x8] sm:$0xff]
      %v740 = vld [vmem:[%s12 + $0x10] sm:$0xff]
      %v741 = vld [vmem:[%s12 + $0x18] sm:$0xff]
      %v742 = vld [vmem:[%s13] sm:$0xff]
      %v743 = vld [vmem:[%s13 + $0x8] sm:$0xff]
      %v744 = vld [vmem:[%s13 + $0x10] sm:$0xff]
      %v745 = vld [vmem:[%s13 + $0x18] sm:$0xff]
      %v746 = vld [vmem:[%s14] sm:$0x1]
      %v747 = vld [vmem:[%s677] sm:$0xf]
      %v748 = vld [vmem:[%s686] sm:$0xf]
      %v749 = vld [vmem:[#allocation4] sm:$0xff]
      %v750 = vld [vmem:[#allocation4 + $0x8] sm:$0xff]
      %v751 = vld [vmem:[#allocation4 + $0x10] sm:$0xff]
      %v752 = vld [vmem:[#allocation4 + $0x18] sm:$0xff]
      %v753 = vperm.slane %v748, 0
      %v754 = vlaneseq
      %v755 = vshrl.u32 %v754, 7
      %757 = vset.pattern.permute.xlu0 %v755
      %758 = vperm.xlu0 %757, %v753
      %v759 = vpop.permute.xlu0 %758
      %v760 = vperm.slane %v748, 1
      %v761 = vlaneseq
      %v762 = vshrl.u32 %v761, 7
      %764 = vset.pattern.permute.xlu0 %v762
      %765 = vperm.xlu0 %764, %v760
      %v766 = vpop.permute.xlu0 %765
      %v767 = vperm.slane %v748, 2
      %v768 = vlaneseq
      %v769 = vshrl.u32 %v768, 7
      %771 = vset.pattern.permute.xlu0 %v769
      %772 = vperm.xlu0 %771, %v767
      %v773 = vpop.permute.xlu0 %772
      %v774 = vperm.slane %v748, 3
      %v775 = vlaneseq
      %v776 = vshrl.u32 %v775, 7
      %778 = vset.pattern.permute.xlu0 %v776
      %779 = vperm.xlu0 %778, %v774
      %v780 = vpop.permute.xlu0 %779
      %v781 = vmul.f32 %v759, %v749
      %v782 = vmul.f32 %v766, %v750
      %v783 = vmul.f32 %v773, %v751
      %v784 = vmul.f32 %v780, %v752
      %vm785 = vcmask 261120
      %v786 = vsel %vm785, %v781, 0.0
      %v787 = vrot.slane %v786, 4
      %v788 = vadd.f32 %v786, %v787
      %v789 = vrot.slane %v788, 2
      %v790 = vadd.f32 %v788, %v789
      %v791 = vrot.slane %v790, 1
      %v792 = vadd.f32 %v790, %v791
      %v793 = vsel %vm785, %v782, 0.0
      %v794 = vrot.slane %v793, 4
      %v795 = vadd.f32 %v793, %v794
      %v796 = vrot.slane %v795, 2
      %v797 = vadd.f32 %v795, %v796
      %v798 = vrot.slane %v797, 1
      %v799 = vadd.f32 %v797, %v798
      %v800 = vsel %vm785, %v783, 0.0
      %v801 = vrot.slane %v800, 4
      %v802 = vadd.f32 %v800, %v801
      %v803 = vrot.slane %v802, 2
      %v804 = vadd.f32 %v802, %v803
      %v805 = vrot.slane %v804, 1
      %v806 = vadd.f32 %v804, %v805
      %v807 = vsel %vm785, %v784, 0.0
      %v808 = vrot.slane %v807, 4
      %v809 = vadd.f32 %v807, %v808
      %v810 = vrot.slane %v809, 2
      %v811 = vadd.f32 %v809, %v810
      %v812 = vrot.slane %v811, 1
      %v813 = vadd.f32 %v811, %v812
      %v815 = vsel %vm785, %v747, 0
      %817 = vmatpush.msra.mxu0 0.0
      %818 = vmatpush.msra.mxu0 0.0
      %819 = vmatpush.msra.mxu0 0.0
      %820 = vmatpush.msra.mxu0 0.0
      %821 = vmatpush.msra.mxu0 0.0
      %822 = vmatpush.msra.mxu0 0.0
      %823 = vmatpush.msra.mxu0 0.0
      %824 = vmatpush.msra.mxu0 0.0
      %825 = vmatpush.msra.mxu0 0.0
      %826 = vmatpush.msra.mxu0 0.0
      %827 = vmatpush.msra.mxu0 0.0
      %828 = vmatpush.msra.mxu0 0.0
      %829 = vmatpush.msra.mxu0 %v731
      %830 = vmatpush.msra.mxu0 %v730
      %831 = vmatpush.msra.mxu0 %v729
      %832 = vmatpush.msra.mxu0 %v728
      %833 = vmatmul.f32.gmra.mxu0 %v815
      %v834 = vpop.f32.mrf.mxu0
      %v835 = vadd.f32 0.0, %v834
      %836 = vdwg.mxu0
      %vm841 = vcmask 1041409
      %v842 = vsel %vm841, %v799, %v792
      %vm843 = vcmask 1042434
      %v844 = vsel %vm843, %v806, %v842
      %vm845 = vcmask 1043459
      %v846 = vsel %vm845, %v813, %v844
      %v847 = vsel %vm785, %v846, 0
      %849 = vmatpush.msra.mxu0 0.0
      %850 = vmatpush.msra.mxu0 0.0
      %851 = vmatpush.msra.mxu0 0.0
      %852 = vmatpush.msra.mxu0 0.0
      %853 = vmatpush.msra.mxu0 0.0
      %854 = vmatpush.msra.mxu0 0.0
      %855 = vmatpush.msra.mxu0 0.0
      %856 = vmatpush.msra.mxu0 0.0
      %857 = vmatpush.msra.mxu0 0.0
      %858 = vmatpush.msra.mxu0 0.0
      %859 = vmatpush.msra.mxu0 0.0
      %860 = vmatpush.msra.mxu0 0.0
      %861 = vmatpush.msra.mxu0 %v727
      %862 = vmatpush.msra.mxu0 %v726
      %863 = vmatpush.msra.mxu0 %v725
      %864 = vmatpush.msra.mxu0 %v724
      %865 = vmatmul.f32.gmra.mxu0 %v847
      %v866 = vpop.f32.mrf.mxu0
      %v867 = vadd.f32 %v835, %v866
      %868 = vdwg.mxu0
      %v870 = vperm.slane %v732, 0
      %v872 = vadd.f32 %v867, %v870
      %v873 = vmax.f32 %v872, 0.0
      %v875 = vperm.slane %v737, 0
      %v878 = vsel %vm785, %v873, 0
      %880 = vmatpush.msra.mxu0 0.0
      %881 = vmatpush.msra.mxu0 0.0
      %882 = vmatpush.msra.mxu0 0.0
      %883 = vmatpush.msra.mxu0 0.0
      %884 = vmatpush.msra.mxu0 0.0
      %885 = vmatpush.msra.mxu0 0.0
      %886 = vmatpush.msra.mxu0 0.0
      %887 = vmatpush.msra.mxu0 0.0
      %888 = vmatpush.msra.mxu0 0.0
      %889 = vmatpush.msra.mxu0 0.0
      %890 = vmatpush.msra.mxu0 0.0
      %891 = vmatpush.msra.mxu0 0.0
      %892 = vmatpush.msra.mxu0 %v736
      %893 = vmatpush.msra.mxu0 %v735
      %894 = vmatpush.msra.mxu0 %v734
      %895 = vmatpush.msra.mxu0 %v733
      %896 = vmatmul.f32.gmra.mxu0 %v878
      %v897 = vpop.f32.mrf.mxu0
      %v898 = vadd.f32 %v875, %v897
      %899 = vdwg.mxu0
      %vm900 = vcmp.gt.f32.partialorder %v748, 0.5
      %v901 = vsel %vm900, 1, 0
      %902 = vset.pattern.permute.xlu0 8
      %903 = vperm.xlu0 %902, %v901
      %v904 = vpop.permute.xlu0 %903
      %vm905 = vcmp.eq.s32.totalorder %v904, 1
      %v906 = vsel %vm905, %v898, %v747
      %v907 = vld [vmem:[#allocation2] sm:$0xf]
      %v908 = vld [vmem:[#allocation3] sm:$0xf]
      %v909 = vld [vmem:[%s9] sm:$0xff]
      %v910 = vld [vmem:[%s9 + $0x8] sm:$0xff]
      %v911 = vld [vmem:[%s9 + $0x10] sm:$0xff]
      %v912 = vld [vmem:[%s9 + $0x18] sm:$0xff]
      %v913 = vld [vmem:[%s10] sm:$0xff]
      %v914 = vld [vmem:[%s10 + $0x8] sm:$0xff]
      %v915 = vld [vmem:[%s10 + $0x10] sm:$0xff]
      %v916 = vld [vmem:[%s10 + $0x18] sm:$0xff]
      %v918 = vsel %vm785, %v907, 0
      %920 = vmatpush.msra.mxu0 0.0
      %921 = vmatpush.msra.mxu0 0.0
      %922 = vmatpush.msra.mxu0 0.0
      %923 = vmatpush.msra.mxu0 0.0
      %924 = vmatpush.msra.mxu0 0.0
      %925 = vmatpush.msra.mxu0 0.0
      %926 = vmatpush.msra.mxu0 0.0
      %927 = vmatpush.msra.mxu0 0.0
      %928 = vmatpush.msra.mxu0 0.0
      %929 = vmatpush.msra.mxu0 0.0
      %930 = vmatpush.msra.mxu0 0.0
      %931 = vmatpush.msra.mxu0 0.0
      %932 = vmatpush.msra.mxu0 %v916
      %933 = vmatpush.msra.mxu0 %v915
      %934 = vmatpush.msra.mxu0 %v914
      %935 = vmatpush.msra.mxu0 %v913
      %936 = vmatmul.f32.gmra.mxu0 %v918
      %v937 = vpop.f32.mrf.mxu0
      %v938 = vadd.f32 0.0, %v937
      %939 = vdwg.mxu0
      %v941 = vsel %vm785, %v906, 0
      %943 = vmatpush.msra.mxu0 0.0
      %944 = vmatpush.msra.mxu0 0.0
      %945 = vmatpush.msra.mxu0 0.0
      %946 = vmatpush.msra.mxu0 0.0
      %947 = vmatpush.msra.mxu0 0.0
      %948 = vmatpush.msra.mxu0 0.0
      %949 = vmatpush.msra.mxu0 0.0
      %950 = vmatpush.msra.mxu0 0.0
      %951 = vmatpush.msra.mxu0 0.0
      %952 = vmatpush.msra.mxu0 0.0
      %953 = vmatpush.msra.mxu0 0.0
      %954 = vmatpush.msra.mxu0 0.0
      %955 = vmatpush.msra.mxu0 %v912
      %956 = vmatpush.msra.mxu0 %v911
      %957 = vmatpush.msra.mxu0 %v910
      %958 = vmatpush.msra.mxu0 %v909
      %959 = vmatmul.f32.gmra.mxu0 %v941
      %v960 = vpop.f32.mrf.mxu0
      %v961 = vadd.f32 %v938, %v960
      %962 = vdwg.mxu0
      %v963 = vld [vmem:[%s11] sm:$0x1]
      %v965 = vperm.slane %v963, 0
      %v967 = vadd.f32 %v961, %v965
      %v968 = vxor.u32 %v967, 2147483648
      %v969 = vmul.f32 %v968, 1.442695
      %v970 = vpow.pop %v969
      %v971 = vadd.f32 %v970, 1.0
      %v972 = vrcp.pop %v971
      %v973 = vmul.f32 %v971, %v972
      %v974 = vsub.f32 1.0, %v973
      %v975 = vmul.f32 %v972, %v974
      %v976 = vadd.f32 %v972, %v975
      %vm977 = vweird.f32 %v971
      %vm978 = vweird.f32 %v972
      %vm979 = vmor %vm977, %vm978
      %v980 = vsel %vm979, %v972, %v976
      %v981 = vand.u32 2147483647, %v971
      %vm982 = vcmp.eq.f32.partialorder %v981, 8.507059e+37
      %v983 = vand.u32 %v971, 2147483648
      %v984 = vor.u32 1.1754944e-38, %v983
      %v985 = vsel %vm982, %v984, %v980
      %v986 = vmul.f32 1.0, %v985
      %v987 = vtanh.pop %v967
      %989 = vrot.lane.b32.xlu0 %v908, 32
      %v990 = vpop.permute.xlu0 %989
      %v992 = vmul.f32 %v986, %v990
      %994 = vrot.lane.b32.xlu0 %v987, 32
      %v995 = vpop.permute.xlu0 %994
      %v997 = vmul.f32 %v986, %v995
      %999 = vrot.lane.b32.xlu0 %v997, 32
      %v1000 = vpop.permute.xlu0 %999
      %v1002 = vadd.f32 %v992, %v1000
      %v1003 = vtanh.pop %v1002
      %1005 = vrot.lane.b32.xlu0 %v1003, 32
      %v1006 = vpop.permute.xlu0 %1005
      %v1008 = vmul.f32 %v986, %v1006
      %1010 = vrot.lane.b32.xlu0 %v1008, 64
      %v1011 = vpop.permute.xlu0 %1010
      %vm1013 = vcmask 257024
      %1014 = vst.msk [vmem:[#allocation2] sm:$0xf] %vm1013, %v1011
      %1016 = vrot.lane.b32.xlu0 %v1002, 96
      %v1017 = vpop.permute.xlu0 %1016
      %1019 = vst.msk [vmem:[#allocation3] sm:$0xf] %vm1013, %v1017
      %s1020 = scalar_lea.vmem [#allocation2], 4
      %v1021 = vld [vmem:[%s1020] sm:$0xf]
      %s1022 = scalar_lea.vmem [#allocation3], 4
      %v1023 = vld [vmem:[%s1022] sm:$0xf]
      %s1024 = scalar_lea.vmem %s9, 32
      %v1025 = vld [vmem:[%s1024] sm:$0xff]
      %v1026 = vld [vmem:[%s1024 + $0x8] sm:$0xff]
      %v1027 = vld [vmem:[%s1024 + $0x10] sm:$0xff]
      %v1028 = vld [vmem:[%s1024 + $0x18] sm:$0xff]
      %s1029 = scalar_lea.vmem %s10, 32
      %v1030 = vld [vmem:[%s1029] sm:$0xff]
      %v1031 = vld [vmem:[%s1029 + $0x8] sm:$0xff]
      %v1032 = vld [vmem:[%s1029 + $0x10] sm:$0xff]
      %v1033 = vld [vmem:[%s1029 + $0x18] sm:$0xff]
      %v1035 = vsel %vm785, %v1021, 0
      %1037 = vmatpush.msra.mxu0 0.0
      %1038 = vmatpush.msra.mxu0 0.0
      %1039 = vmatpush.msra.mxu0 0.0
      %1040 = vmatpush.msra.mxu0 0.0
      %1041 = vmatpush.msra.mxu0 0.0
      %1042 = vmatpush.msra.mxu0 0.0
      %1043 = vmatpush.msra.mxu0 0.0
      %1044 = vmatpush.msra.mxu0 0.0
      %1045 = vmatpush.msra.mxu0 0.0
      %1046 = vmatpush.msra.mxu0 0.0
      %1047 = vmatpush.msra.mxu0 0.0
      %1048 = vmatpush.msra.mxu0 0.0
      %1049 = vmatpush.msra.mxu0 %v1033
      %1050 = vmatpush.msra.mxu0 %v1032
      %1051 = vmatpush.msra.mxu0 %v1031
      %1052 = vmatpush.msra.mxu0 %v1030
      %1053 = vmatmul.f32.gmra.mxu0 %v1035
      %v1054 = vpop.f32.mrf.mxu0
      %v1055 = vadd.f32 0.0, %v1054
      %1056 = vdwg.mxu0
      %v1057 = vsel %vm785, %v1011, 0
      %1059 = vmatpush.msra.mxu0 0.0
      %1060 = vmatpush.msra.mxu0 0.0
      %1061 = vmatpush.msra.mxu0 0.0
      %1062 = vmatpush.msra.mxu0 0.0
      %1063 = vmatpush.msra.mxu0 0.0
      %1064 = vmatpush.msra.mxu0 0.0
      %1065 = vmatpush.msra.mxu0 0.0
      %1066 = vmatpush.msra.mxu0 0.0
      %1067 = vmatpush.msra.mxu0 0.0
      %1068 = vmatpush.msra.mxu0 0.0
      %1069 = vmatpush.msra.mxu0 0.0
      %1070 = vmatpush.msra.mxu0 0.0
      %1071 = vmatpush.msra.mxu0 %v1028
      %1072 = vmatpush.msra.mxu0 %v1027
      %1073 = vmatpush.msra.mxu0 %v1026
      %1074 = vmatpush.msra.mxu0 %v1025
      %1075 = vmatmul.f32.gmra.mxu0 %v1057
      %v1076 = vpop.f32.mrf.mxu0
      %v1077 = vadd.f32 %v1055, %v1076
      %1078 = vdwg.mxu0
      %s1079 = scalar_lea.vmem %s11, 1
      %v1080 = vld [vmem:[%s1079] sm:$0x1]
      %v1082 = vperm.slane %v1080, 0
      %v1084 = vadd.f32 %v1077, %v1082
      %v1085 = vxor.u32 %v1084, 2147483648
      %v1086 = vmul.f32 %v1085, 1.442695
      %v1087 = vpow.pop %v1086
      %v1088 = vadd.f32 %v1087, 1.0
      %v1089 = vrcp.pop %v1088
      %v1090 = vmul.f32 %v1088, %v1089
      %v1091 = vsub.f32 1.0, %v1090
      %v1092 = vmul.f32 %v1089, %v1091
      %v1093 = vadd.f32 %v1089, %v1092
      %vm1094 = vweird.f32 %v1088
      %vm1095 = vweird.f32 %v1089
      %vm1096 = vmor %vm1094, %vm1095
      %v1097 = vsel %vm1096, %v1089, %v1093
      %v1098 = vand.u32 2147483647, %v1088
      %vm1099 = vcmp.eq.f32.partialorder %v1098, 8.507059e+37
      %v1100 = vand.u32 %v1088, 2147483648
      %v1101 = vor.u32 1.1754944e-38, %v1100
      %v1102 = vsel %vm1099, %v1101, %v1097
      %v1103 = vmul.f32 1.0, %v1102
      %v1104 = vtanh.pop %v1084
      %1106 = vrot.lane.b32.xlu0 %v1023, 32
      %v1107 = vpop.permute.xlu0 %1106
      %v1109 = vmul.f32 %v1103, %v1107
      %1111 = vrot.lane.b32.xlu0 %v1104, 32
      %v1112 = vpop.permute.xlu0 %1111
      %v1114 = vmul.f32 %v1103, %v1112
      %1116 = vrot.lane.b32.xlu0 %v1114, 32
      %v1117 = vpop.permute.xlu0 %1116
      %v1119 = vadd.f32 %v1109, %v1117
      %v1120 = vtanh.pop %v1119
      %1122 = vrot.lane.b32.xlu0 %v1120, 32
      %v1123 = vpop.permute.xlu0 %1122
      %v1125 = vmul.f32 %v1103, %v1123
      %1127 = vrot.lane.b32.xlu0 %v1125, 64
      %v1128 = vpop.permute.xlu0 %1127
      %1130 = vst.msk [vmem:[%s1020] sm:$0xf] %vm1013, %v1128
      %1132 = vrot.lane.b32.xlu0 %v1119, 96
      %v1133 = vpop.permute.xlu0 %1132
      %1135 = vst.msk [vmem:[%s1022] sm:$0xf] %vm1013, %v1133
      %v1137 = vsel %vm785, %v749, 0
      %v1140 = vsel %vm785, %v750, 0
      %v1143 = vsel %vm785, %v751, 0
      %v1146 = vsel %vm785, %v752, 0
      %1148 = vmatpush.msra.mxu0 0.0
      %1149 = vmatpush.msra.mxu0 0.0
      %1150 = vmatpush.msra.mxu0 0.0
      %1151 = vmatpush.msra.mxu0 0.0
      %1152 = vmatpush.msra.mxu0 0.0
      %1153 = vmatpush.msra.mxu0 0.0
      %1154 = vmatpush.msra.mxu0 0.0
      %1155 = vmatpush.msra.mxu0 0.0
      %1156 = vmatpush.msra.mxu0 0.0
      %1157 = vmatpush.msra.mxu0 0.0
      %1158 = vmatpush.msra.mxu0 0.0
      %1159 = vmatpush.msra.mxu0 0.0
      %1160 = vmatpush.msra.mxu0 %v741
      %1161 = vmatpush.msra.mxu0 %v740
      %1162 = vmatpush.msra.mxu0 %v739
      %1163 = vmatpush.msra.mxu0 %v738
      %1164 = vmatmul.f32.gmra.mxu0 %v1137
      %v1165 = vpop.f32.mrf.mxu0
      %v1166 = vadd.f32 0.0, %v1165
      %1167 = vmatmul.f32.gmra.mxu0 %v1140
      %v1168 = vpop.f32.mrf.mxu0
      %v1169 = vadd.f32 0.0, %v1168
      %1170 = vmatmul.f32.gmra.mxu0 %v1143
      %v1171 = vpop.f32.mrf.mxu0
      %v1172 = vadd.f32 0.0, %v1171
      %1173 = vmatmul.f32.gmra.mxu0 %v1146
      %v1174 = vpop.f32.mrf.mxu0
      %v1175 = vadd.f32 0.0, %v1174
      %1176 = vdwg.mxu0
      %v1177 = vsel %vm785, %v1128, 0
      %1179 = vmatpush.msra.mxu0 0.0
      %1180 = vmatpush.msra.mxu0 0.0
      %1181 = vmatpush.msra.mxu0 0.0
      %1182 = vmatpush.msra.mxu0 0.0
      %1183 = vmatpush.msra.mxu0 0.0
      %1184 = vmatpush.msra.mxu0 0.0
      %1185 = vmatpush.msra.mxu0 0.0
      %1186 = vmatpush.msra.mxu0 0.0
      %1187 = vmatpush.msra.mxu0 0.0
      %1188 = vmatpush.msra.mxu0 0.0
      %1189 = vmatpush.msra.mxu0 0.0
      %1190 = vmatpush.msra.mxu0 0.0
      %1191 = vmatpush.msra.mxu0 %v745
      %1192 = vmatpush.msra.mxu0 %v744
      %1193 = vmatpush.msra.mxu0 %v743
      %1194 = vmatpush.msra.mxu0 %v742
      %1195 = vmatmul.f32.gmra.mxu0 %v1177
      %v1196 = vpop.f32.mrf.mxu0
      %v1197 = vadd.f32 0.0, %v1196
      %1198 = vdwg.mxu0
      %v1200 = vrot.slane %v1197, 1
      %v1201 = vrot.slane %v1197, 2
      %v1202 = vrot.slane %v1197, 3
      %v1203 = vperm.slane %v1197, 0
      %v1204 = vperm.slane %v1200, 0
      %v1205 = vperm.slane %v1201, 0
      %v1206 = vperm.slane %v1202, 0
      %v1211 = vadd.f32 %v1166, %v1203
      %v1212 = vadd.f32 %v1169, %v1204
      %v1213 = vadd.f32 %v1172, %v1205
      %v1214 = vadd.f32 %v1175, %v1206
      %v1216 = vperm.slane %v746, 0
      %v1218 = vadd.f32 %v1211, %v1216
      %v1219 = vadd.f32 %v1212, %v1216
      %v1220 = vadd.f32 %v1213, %v1216
      %v1221 = vadd.f32 %v1214, %v1216
      %v1222 = vtanh.pop %v1218
      %v1223 = vtanh.pop %v1219
      %v1224 = vtanh.pop %v1220
      %v1225 = vtanh.pop %v1221
      %v1226 = vxor.u32 %v1218, 2147483648
      %v1227 = vxor.u32 %v1219, 2147483648
      %v1228 = vxor.u32 %v1220, 2147483648
      %v1229 = vxor.u32 %v1221, 2147483648
      %v1230 = vmul.f32 %v1226, 1.442695
      %v1231 = vpow.pop %v1230
      %v1232 = vmul.f32 %v1227, 1.442695
      %v1233 = vpow.pop %v1232
      %v1234 = vmul.f32 %v1228, 1.442695
      %v1235 = vpow.pop %v1234
      %v1236 = vmul.f32 %v1229, 1.442695
      %v1237 = vpow.pop %v1236
      %v1238 = vadd.f32 %v1231, 1.0
      %v1239 = vadd.f32 %v1233, 1.0
      %v1240 = vadd.f32 %v1235, 1.0
      %v1241 = vadd.f32 %v1237, 1.0
      %v1242 = vrcp.pop %v1238
      %v1243 = vmul.f32 %v1238, %v1242
      %v1244 = vsub.f32 1.0, %v1243
      %v1245 = vmul.f32 %v1242, %v1244
      %v1246 = vadd.f32 %v1242, %v1245
      %vm1247 = vweird.f32 %v1238
      %vm1248 = vweird.f32 %v1242
      %vm1249 = vmor %vm1247, %vm1248
      %v1250 = vsel %vm1249, %v1242, %v1246
      %v1251 = vand.u32 2147483647, %v1238
      %vm1252 = vcmp.eq.f32.partialorder %v1251, 8.507059e+37
      %v1253 = vand.u32 %v1238, 2147483648
      %v1254 = vor.u32 1.1754944e-38, %v1253
      %v1255 = vsel %vm1252, %v1254, %v1250
      %v1256 = vmul.f32 1.0, %v1255
      %v1257 = vrcp.pop %v1239
      %v1258 = vmul.f32 %v1239, %v1257
      %v1259 = vsub.f32 1.0, %v1258
      %v1260 = vmul.f32 %v1257, %v1259
      %v1261 = vadd.f32 %v1257, %v1260
      %vm1262 = vweird.f32 %v1239
      %vm1263 = vweird.f32 %v1257
      %vm1264 = vmor %vm1262, %vm1263
      %v1265 = vsel %vm1264, %v1257, %v1261
      %v1266 = vand.u32 2147483647, %v1239
      %vm1267 = vcmp.eq.f32.partialorder %v1266, 8.507059e+37
      %v1268 = vand.u32 %v1239, 2147483648
      %v1269 = vor.u32 1.1754944e-38, %v1268
      %v1270 = vsel %vm1267, %v1269, %v1265
      %v1271 = vmul.f32 1.0, %v1270
      %v1272 = vrcp.pop %v1240
      %v1273 = vmul.f32 %v1240, %v1272
      %v1274 = vsub.f32 1.0, %v1273
      %v1275 = vmul.f32 %v1272, %v1274
      %v1276 = vadd.f32 %v1272, %v1275
      %vm1277 = vweird.f32 %v1240
      %vm1278 = vweird.f32 %v1272
      %vm1279 = vmor %vm1277, %vm1278
      %v1280 = vsel %vm1279, %v1272, %v1276
      %v1281 = vand.u32 2147483647, %v1240
      %vm1282 = vcmp.eq.f32.partialorder %v1281, 8.507059e+37
      %v1283 = vand.u32 %v1240, 2147483648
      %v1284 = vor.u32 1.1754944e-38, %v1283
      %v1285 = vsel %vm1282, %v1284, %v1280
      %v1286 = vmul.f32 1.0, %v1285
      %v1287 = vrcp.pop %v1241
      %v1288 = vmul.f32 %v1241, %v1287
      %v1289 = vsub.f32 1.0, %v1288
      %v1290 = vmul.f32 %v1287, %v1289
      %v1291 = vadd.f32 %v1287, %v1290
      %vm1292 = vweird.f32 %v1241
      %vm1293 = vweird.f32 %v1287
      %vm1294 = vmor %vm1292, %vm1293
      %v1295 = vsel %vm1294, %v1287, %v1291
      %v1296 = vand.u32 2147483647, %v1241
      %vm1297 = vcmp.eq.f32.partialorder %v1296, 8.507059e+37
      %v1298 = vand.u32 %v1241, 2147483648
      %v1299 = vor.u32 1.1754944e-38, %v1298
      %v1300 = vsel %vm1297, %v1299, %v1295
      %v1301 = vmul.f32 1.0, %v1300
      %v1302 = vsub.f32 1.0, %v1256
      %v1303 = vsub.f32 1.0, %v1271
      %v1304 = vsub.f32 1.0, %v1286
      %v1305 = vsub.f32 1.0, %v1301
      %1307 = vset.pattern.permute.xlu0 32
      %1308 = vperm.xlu0 %1307, %v1302
      %v1309 = vpop.permute.xlu0 %1308
      %1312 = vset.pattern.permute.xlu0 32
      %1313 = vperm.xlu0 %1312, %v1303
      %v1314 = vpop.permute.xlu0 %1313
      %1317 = vset.pattern.permute.xlu0 32
      %1318 = vperm.xlu0 %1317, %v1304
      %v1319 = vpop.permute.xlu0 %1318
      %1322 = vset.pattern.permute.xlu0 32
      %1323 = vperm.xlu0 %1322, %v1305
      %v1324 = vpop.permute.xlu0 %1323
      %v1326 = vmul.f32 %v749, %v1309
      %v1327 = vmul.f32 %v750, %v1314
      %v1328 = vmul.f32 %v751, %v1319
      %v1329 = vmul.f32 %v752, %v1324
      %1331 = vset.pattern.permute.xlu0 32
      %1332 = vperm.xlu0 %1331, %v1256
      %v1333 = vpop.permute.xlu0 %1332
      %1336 = vset.pattern.permute.xlu0 32
      %1337 = vperm.xlu0 %1336, %v1271
      %v1338 = vpop.permute.xlu0 %1337
      %1341 = vset.pattern.permute.xlu0 32
      %1342 = vperm.xlu0 %1341, %v1286
      %v1343 = vpop.permute.xlu0 %1342
      %1346 = vset.pattern.permute.xlu0 32
      %1347 = vperm.xlu0 %1346, %v1301
      %v1348 = vpop.permute.xlu0 %1347
      %v1350 = vmul.f32 %v1333, %v1222
      %v1351 = vmul.f32 %v1338, %v1223
      %v1352 = vmul.f32 %v1343, %v1224
      %v1353 = vmul.f32 %v1348, %v1225
      %v1354 = vadd.f32 %v1326, %v1350
      %v1355 = vadd.f32 %v1327, %v1351
      %v1356 = vadd.f32 %v1328, %v1352
      %v1357 = vadd.f32 %v1329, %v1353
      %v1358 = vlaneseq
      %v1359 = vshrl.u32 %v1358, 7
      %v1360 = vadd.s32 %v1359, 9
      %1361 = vset.pattern.permute.xlu0 %v1360
      %1362 = vperm.xlu0 %1361, %v753
      %v1363 = vpop.permute.xlu0 %1362
      %v1364 = vlaneseq
      %v1365 = vshrl.u32 %v1364, 7
      %v1366 = vadd.s32 %v1365, 9
      %1367 = vset.pattern.permute.xlu0 %v1366
      %1368 = vperm.xlu0 %1367, %v760
      %v1369 = vpop.permute.xlu0 %1368
      %v1370 = vlaneseq
      %v1371 = vshrl.u32 %v1370, 7
      %v1372 = vadd.s32 %v1371, 9
      %1373 = vset.pattern.permute.xlu0 %v1372
      %1374 = vperm.xlu0 %1373, %v767
      %v1375 = vpop.permute.xlu0 %1374
      %v1376 = vlaneseq
      %v1377 = vshrl.u32 %v1376, 7
      %v1378 = vadd.s32 %v1377, 9
      %1379 = vset.pattern.permute.xlu0 %v1378
      %1380 = vperm.xlu0 %1379, %v774
      %v1381 = vpop.permute.xlu0 %1380
      %vm1382 = vcmp.gt.f32.partialorder %v1363, 0.5
      %vm1383 = vcmp.gt.f32.partialorder %v1369, 0.5
      %vm1384 = vcmp.gt.f32.partialorder %v1375, 0.5
      %vm1385 = vcmp.gt.f32.partialorder %v1381, 0.5
      %v1386 = vsel %vm1382, 1, 0
      %v1387 = vsel %vm1383, 1, 0
      %v1388 = vsel %vm1384, 1, 0
      %v1389 = vsel %vm1385, 1, 0
      %vm1390 = vcmp.eq.s32.totalorder %v1386, 1
      %vm1391 = vcmp.eq.s32.totalorder %v1387, 1
      %vm1392 = vcmp.eq.s32.totalorder %v1388, 1
      %vm1393 = vcmp.eq.s32.totalorder %v1389, 1
      %v1394 = vsel %vm1390, 0.0, %v1354
      %v1395 = vsel %vm1391, 0.0, %v1355
      %v1396 = vsel %vm1392, 0.0, %v1356
      %v1397 = vsel %vm1393, 0.0, %v1357
      %1398 = vst.msk [vmem:[#allocation4] sm:$0xff] %vm785, %v1394
      %1399 = vst.msk [vmem:[#allocation4 + $0x8] sm:$0xff] %vm785, %v1395
      %1400 = vst.msk [vmem:[#allocation4 + $0x10] sm:$0xff] %vm785, %v1396
      %1401 = vst.msk [vmem:[#allocation4 + $0x18] sm:$0xff] %vm785, %v1397
      %1402 = vst.msk [vmem:[#allocation5] sm:$0xf] %vm1013, %v1128
      %s1403 = scalar_lea.vmem %s677, 4
      %v1404 = vld [vmem:[%s1403] sm:$0xf]
      %s1405 = scalar_lea.vmem %s686, 4
      %v1406 = vld [vmem:[%s1405] sm:$0xf]
      %v1407 = vld [vmem:[#allocation4] sm:$0xff]
      %v1408 = vld [vmem:[#allocation4 + $0x8] sm:$0xff]
      %v1409 = vld [vmem:[#allocation4 + $0x10] sm:$0xff]
      %v1410 = vld [vmem:[#allocation4 + $0x18] sm:$0xff]
      %v1411 = vperm.slane %v1406, 0
      %v1412 = vlaneseq
      %v1413 = vshrl.u32 %v1412, 7
      %1415 = vset.pattern.permute.xlu0 %v1413
      %1416 = vperm.xlu0 %1415, %v1411
      %v1417 = vpop.permute.xlu0 %1416
      %v1418 = vperm.slane %v1406, 1
      %v1419 = vlaneseq
      %v1420 = vshrl.u32 %v1419, 7
      %1422 = vset.pattern.permute.xlu0 %v1420
      %1423 = vperm.xlu0 %1422, %v1418
      %v1424 = vpop.permute.xlu0 %1423
      %v1425 = vperm.slane %v1406, 2
      %v1426 = vlaneseq
      %v1427 = vshrl.u32 %v1426, 7
      %1429 = vset.pattern.permute.xlu0 %v1427
      %1430 = vperm.xlu0 %1429, %v1425
      %v1431 = vpop.permute.xlu0 %1430
      %v1432 = vperm.slane %v1406, 3
      %v1433 = vlaneseq
      %v1434 = vshrl.u32 %v1433, 7
      %1436 = vset.pattern.permute.xlu0 %v1434
      %1437 = vperm.xlu0 %1436, %v1432
      %v1438 = vpop.permute.xlu0 %1437
      %v1439 = vmul.f32 %v1417, %v1407
      %v1440 = vmul.f32 %v1424, %v1408
      %v1441 = vmul.f32 %v1431, %v1409
      %v1442 = vmul.f32 %v1438, %v1410
      %v1443 = vsel %vm785, %v1439, 0.0
      %v1444 = vrot.slane %v1443, 4
      %v1445 = vadd.f32 %v1443, %v1444
      %v1446 = vrot.slane %v1445, 2
      %v1447 = vadd.f32 %v1445, %v1446
      %v1448 = vrot.slane %v1447, 1
      %v1449 = vadd.f32 %v1447, %v1448
      %v1450 = vsel %vm785, %v1440, 0.0
      %v1451 = vrot.slane %v1450, 4
      %v1452 = vadd.f32 %v1450, %v1451
      %v1453 = vrot.slane %v1452, 2
      %v1454 = vadd.f32 %v1452, %v1453
      %v1455 = vrot.slane %v1454, 1
      %v1456 = vadd.f32 %v1454, %v1455
      %v1457 = vsel %vm785, %v1441, 0.0
      %v1458 = vrot.slane %v1457, 4
      %v1459 = vadd.f32 %v1457, %v1458
      %v1460 = vrot.slane %v1459, 2
      %v1461 = vadd.f32 %v1459, %v1460
      %v1462 = vrot.slane %v1461, 1
      %v1463 = vadd.f32 %v1461, %v1462
      %v1464 = vsel %vm785, %v1442, 0.0
      %v1465 = vrot.slane %v1464, 4
      %v1466 = vadd.f32 %v1464, %v1465
      %v1467 = vrot.slane %v1466, 2
      %v1468 = vadd.f32 %v1466, %v1467
      %v1469 = vrot.slane %v1468, 1
      %v1470 = vadd.f32 %v1468, %v1469
      %v1472 = vsel %vm785, %v1404, 0
      %1474 = vmatpush.msra.mxu0 0.0
      %1475 = vmatpush.msra.mxu0 0.0
      %1476 = vmatpush.msra.mxu0 0.0
      %1477 = vmatpush.msra.mxu0 0.0
      %1478 = vmatpush.msra.mxu0 0.0
      %1479 = vmatpush.msra.mxu0 0.0
      %1480 = vmatpush.msra.mxu0 0.0
      %1481 = vmatpush.msra.mxu0 0.0
      %1482 = vmatpush.msra.mxu0 0.0
      %1483 = vmatpush.msra.mxu0 0.0
      %1484 = vmatpush.msra.mxu0 0.0
      %1485 = vmatpush.msra.mxu0 0.0
      %1486 = vmatpush.msra.mxu0 %v731
      %1487 = vmatpush.msra.mxu0 %v730
      %1488 = vmatpush.msra.mxu0 %v729
      %1489 = vmatpush.msra.mxu0 %v728
      %1490 = vmatmul.f32.gmra.mxu0 %v1472
      %v1491 = vpop.f32.mrf.mxu0
      %v1492 = vadd.f32 0.0, %v1491
      %1493 = vdwg.mxu0
      %v1498 = vsel %vm841, %v1456, %v1449
      %v1499 = vsel %vm843, %v1463, %v1498
      %v1500 = vsel %vm845, %v1470, %v1499
      %v1501 = vsel %vm785, %v1500, 0
      %1503 = vmatpush.msra.mxu0 0.0
      %1504 = vmatpush.msra.mxu0 0.0
      %1505 = vmatpush.msra.mxu0 0.0
      %1506 = vmatpush.msra.mxu0 0.0
      %1507 = vmatpush.msra.mxu0 0.0
      %1508 = vmatpush.msra.mxu0 0.0
      %1509 = vmatpush.msra.mxu0 0.0
      %1510 = vmatpush.msra.mxu0 0.0
      %1511 = vmatpush.msra.mxu0 0.0
      %1512 = vmatpush.msra.mxu0 0.0
      %1513 = vmatpush.msra.mxu0 0.0
      %1514 = vmatpush.msra.mxu0 0.0
      %1515 = vmatpush.msra.mxu0 %v727
      %1516 = vmatpush.msra.mxu0 %v726
      %1517 = vmatpush.msra.mxu0 %v725
      %1518 = vmatpush.msra.mxu0 %v724
      %1519 = vmatmul.f32.gmra.mxu0 %v1501
      %v1520 = vpop.f32.mrf.mxu0
      %v1521 = vadd.f32 %v1492, %v1520
      %1522 = vdwg.mxu0
      %v1523 = vadd.f32 %v1521, %v870
      %v1524 = vmax.f32 %v1523, 0.0
      %v1526 = vsel %vm785, %v1524, 0
      %1528 = vmatpush.msra.mxu0 0.0
      %1529 = vmatpush.msra.mxu0 0.0
      %1530 = vmatpush.msra.mxu0 0.0
      %1531 = vmatpush.msra.mxu0 0.0
      %1532 = vmatpush.msra.mxu0 0.0
      %1533 = vmatpush.msra.mxu0 0.0
      %1534 = vmatpush.msra.mxu0 0.0
      %1535 = vmatpush.msra.mxu0 0.0
      %1536 = vmatpush.msra.mxu0 0.0
      %1537 = vmatpush.msra.mxu0 0.0
      %1538 = vmatpush.msra.mxu0 0.0
      %1539 = vmatpush.msra.mxu0 0.0
      %1540 = vmatpush.msra.mxu0 %v736
      %1541 = vmatpush.msra.mxu0 %v735
      %1542 = vmatpush.msra.mxu0 %v734
      %1543 = vmatpush.msra.mxu0 %v733
      %1544 = vmatmul.f32.gmra.mxu0 %v1526
      %v1545 = vpop.f32.mrf.mxu0
      %v1546 = vadd.f32 %v875, %v1545
      %1547 = vdwg.mxu0
      %vm1548 = vcmp.gt.f32.partialorder %v1406, 0.5
      %v1549 = vsel %vm1548, 1, 0
      %1550 = vset.pattern.permute.xlu0 8
      %1551 = vperm.xlu0 %1550, %v1549
      %v1552 = vpop.permute.xlu0 %1551
      %vm1553 = vcmp.eq.s32.totalorder %v1552, 1
      %v1554 = vsel %vm1553, %v1546, %v1404
      %v1555 = vld [vmem:[#allocation2] sm:$0xf]
      %v1556 = vld [vmem:[#allocation3] sm:$0xf]
      %v1557 = vld [vmem:[%s9] sm:$0xff]
      %v1558 = vld [vmem:[%s9 + $0x8] sm:$0xff]
      %v1559 = vld [vmem:[%s9 + $0x10] sm:$0xff]
      %v1560 = vld [vmem:[%s9 + $0x18] sm:$0xff]
      %v1561 = vld [vmem:[%s10] sm:$0xff]
      %v1562 = vld [vmem:[%s10 + $0x8] sm:$0xff]
      %v1563 = vld [vmem:[%s10 + $0x10] sm:$0xff]
      %v1564 = vld [vmem:[%s10 + $0x18] sm:$0xff]
      %v1566 = vsel %vm785, %v1555, 0
      %1568 = vmatpush.msra.mxu0 0.0
      %1569 = vmatpush.msra.mxu0 0.0
      %1570 = vmatpush.msra.mxu0 0.0
      %1571 = vmatpush.msra.mxu0 0.0
      %1572 = vmatpush.msra.mxu0 0.0
      %1573 = vmatpush.msra.mxu0 0.0
      %1574 = vmatpush.msra.mxu0 0.0
      %1575 = vmatpush.msra.mxu0 0.0
      %1576 = vmatpush.msra.mxu0 0.0
      %1577 = vmatpush.msra.mxu0 0.0
      %1578 = vmatpush.msra.mxu0 0.0
      %1579 = vmatpush.msra.mxu0 0.0
      %1580 = vmatpush.msra.mxu0 %v1564
      %1581 = vmatpush.msra.mxu0 %v1563
      %1582 = vmatpush.msra.mxu0 %v1562
      %1583 = vmatpush.msra.mxu0 %v1561
      %1584 = vmatmul.f32.gmra.mxu0 %v1566
      %v1585 = vpop.f32.mrf.mxu0
      %v1586 = vadd.f32 0.0, %v1585
      %1587 = vdwg.mxu0
      %v1589 = vsel %vm785, %v1554, 0
      %1591 = vmatpush.msra.mxu0 0.0
      %1592 = vmatpush.msra.mxu0 0.0
      %1593 = vmatpush.msra.mxu0 0.0
      %1594 = vmatpush.msra.mxu0 0.0
      %1595 = vmatpush.msra.mxu0 0.0
      %1596 = vmatpush.msra.mxu0 0.0
      %1597 = vmatpush.msra.mxu0 0.0
      %1598 = vmatpush.msra.mxu0 0.0
      %1599 = vmatpush.msra.mxu0 0.0
      %1600 = vmatpush.msra.mxu0 0.0
      %1601 = vmatpush.msra.mxu0 0.0
      %1602 = vmatpush.msra.mxu0 0.0
      %1603 = vmatpush.msra.mxu0 %v1560
      %1604 = vmatpush.msra.mxu0 %v1559
      %1605 = vmatpush.msra.mxu0 %v1558
      %1606 = vmatpush.msra.mxu0 %v1557
      %1607 = vmatmul.f32.gmra.mxu0 %v1589
      %v1608 = vpop.f32.mrf.mxu0
      %v1609 = vadd.f32 %v1586, %v1608
      %1610 = vdwg.mxu0
      %v1611 = vld [vmem:[%s11] sm:$0x1]
      %v1613 = vperm.slane %v1611, 0
      %v1615 = vadd.f32 %v1609, %v1613
      %v1616 = vxor.u32 %v1615, 2147483648
      %v1617 = vmul.f32 %v1616, 1.442695
      %v1618 = vpow.pop %v1617
      %v1619 = vadd.f32 %v1618, 1.0
      %v1620 = vrcp.pop %v1619
      %v1621 = vmul.f32 %v1619, %v1620
      %v1622 = vsub.f32 1.0, %v1621
      %v1623 = vmul.f32 %v1620, %v1622
      %v1624 = vadd.f32 %v1620, %v1623
      %vm1625 = vweird.f32 %v1619
      %vm1626 = vweird.f32 %v1620
      %vm1627 = vmor %vm1625, %vm1626
      %v1628 = vsel %vm1627, %v1620, %v1624
      %v1629 = vand.u32 2147483647, %v1619
      %vm1630 = vcmp.eq.f32.partialorder %v1629, 8.507059e+37
      %v1631 = vand.u32 %v1619, 2147483648
      %v1632 = vor.u32 1.1754944e-38, %v1631
      %v1633 = vsel %vm1630, %v1632, %v1628
      %v1634 = vmul.f32 1.0, %v1633
      %v1635 = vtanh.pop %v1615
      %1637 = vrot.lane.b32.xlu0 %v1556, 32
      %v1638 = vpop.permute.xlu0 %1637
      %v1640 = vmul.f32 %v1634, %v1638
      %1642 = vrot.lane.b32.xlu0 %v1635, 32
      %v1643 = vpop.permute.xlu0 %1642
      %v1645 = vmul.f32 %v1634, %v1643
      %1647 = vrot.lane.b32.xlu0 %v1645, 32
      %v1648 = vpop.permute.xlu0 %1647
      %v1650 = vadd.f32 %v1640, %v1648
      %v1651 = vtanh.pop %v1650
      %1653 = vrot.lane.b32.xlu0 %v1651, 32
      %v1654 = vpop.permute.xlu0 %1653
      %v1656 = vmul.f32 %v1634, %v1654
      %1658 = vrot.lane.b32.xlu0 %v1656, 64
      %v1659 = vpop.permute.xlu0 %1658
      %1661 = vst.msk [vmem:[#allocation2] sm:$0xf] %vm1013, %v1659
      %1663 = vrot.lane.b32.xlu0 %v1650, 96
      %v1664 = vpop.permute.xlu0 %1663
      %1666 = vst.msk [vmem:[#allocation3] sm:$0xf] %vm1013, %v1664
      %v1667 = vld [vmem:[%s1020] sm:$0xf]
      %v1668 = vld [vmem:[%s1022] sm:$0xf]
      %v1669 = vld [vmem:[%s1024] sm:$0xff]
      %v1670 = vld [vmem:[%s1024 + $0x8] sm:$0xff]
      %v1671 = vld [vmem:[%s1024 + $0x10] sm:$0xff]
      %v1672 = vld [vmem:[%s1024 + $0x18] sm:$0xff]
      %v1673 = vld [vmem:[%s1029] sm:$0xff]
      %v1674 = vld [vmem:[%s1029 + $0x8] sm:$0xff]
      %v1675 = vld [vmem:[%s1029 + $0x10] sm:$0xff]
      %v1676 = vld [vmem:[%s1029 + $0x18] sm:$0xff]
      %v1678 = vsel %vm785, %v1667, 0
      %1680 = vmatpush.msra.mxu0 0.0
      %1681 = vmatpush.msra.mxu0 0.0
      %1682 = vmatpush.msra.mxu0 0.0
      %1683 = vmatpush.msra.mxu0 0.0
      %1684 = vmatpush.msra.mxu0 0.0
      %1685 = vmatpush.msra.mxu0 0.0
      %1686 = vmatpush.msra.mxu0 0.0
      %1687 = vmatpush.msra.mxu0 0.0
      %1688 = vmatpush.msra.mxu0 0.0
      %1689 = vmatpush.msra.mxu0 0.0
      %1690 = vmatpush.msra.mxu0 0.0
      %1691 = vmatpush.msra.mxu0 0.0
      %1692 = vmatpush.msra.mxu0 %v1676
      %1693 = vmatpush.msra.mxu0 %v1675
      %1694 = vmatpush.msra.mxu0 %v1674
      %1695 = vmatpush.msra.mxu0 %v1673
      %1696 = vmatmul.f32.gmra.mxu0 %v1678
      %v1697 = vpop.f32.mrf.mxu0
      %v1698 = vadd.f32 0.0, %v1697
      %1699 = vdwg.mxu0
      %v1700 = vsel %vm785, %v1659, 0
      %1702 = vmatpush.msra.mxu0 0.0
      %1703 = vmatpush.msra.mxu0 0.0
      %1704 = vmatpush.msra.mxu0 0.0
      %1705 = vmatpush.msra.mxu0 0.0
      %1706 = vmatpush.msra.mxu0 0.0
      %1707 = vmatpush.msra.mxu0 0.0
      %1708 = vmatpush.msra.mxu0 0.0
      %1709 = vmatpush.msra.mxu0 0.0
      %1710 = vmatpush.msra.mxu0 0.0
      %1711 = vmatpush.msra.mxu0 0.0
      %1712 = vmatpush.msra.mxu0 0.0
      %1713 = vmatpush.msra.mxu0 0.0
      %1714 = vmatpush.msra.mxu0 %v1672
      %1715 = vmatpush.msra.mxu0 %v1671
      %1716 = vmatpush.msra.mxu0 %v1670
      %1717 = vmatpush.msra.mxu0 %v1669
      %1718 = vmatmul.f32.gmra.mxu0 %v1700
      %v1719 = vpop.f32.mrf.mxu0
      %v1720 = vadd.f32 %v1698, %v1719
      %1721 = vdwg.mxu0
      %v1722 = vld [vmem:[%s1079] sm:$0x1]
      %v1724 = vperm.slane %v1722, 0
      %v1726 = vadd.f32 %v1720, %v1724
      %v1727 = vxor.u32 %v1726, 2147483648
      %v1728 = vmul.f32 %v1727, 1.442695
      %v1729 = vpow.pop %v1728
      %v1730 = vadd.f32 %v1729, 1.0
      %v1731 = vrcp.pop %v1730
      %v1732 = vmul.f32 %v1730, %v1731
      %v1733 = vsub.f32 1.0, %v1732
      %v1734 = vmul.f32 %v1731, %v1733
      %v1735 = vadd.f32 %v1731, %v1734
      %vm1736 = vweird.f32 %v1730
      %vm1737 = vweird.f32 %v1731
      %vm1738 = vmor %vm1736, %vm1737
      %v1739 = vsel %vm1738, %v1731, %v1735
      %v1740 = vand.u32 2147483647, %v1730
      %vm1741 = vcmp.eq.f32.partialorder %v1740, 8.507059e+37
      %v1742 = vand.u32 %v1730, 2147483648
      %v1743 = vor.u32 1.1754944e-38, %v1742
      %v1744 = vsel %vm1741, %v1743, %v1739
      %v1745 = vmul.f32 1.0, %v1744
      %v1746 = vtanh.pop %v1726
      %1748 = vrot.lane.b32.xlu0 %v1668, 32
      %v1749 = vpop.permute.xlu0 %1748
      %v1751 = vmul.f32 %v1745, %v1749
      %1753 = vrot.lane.b32.xlu0 %v1746, 32
      %v1754 = vpop.permute.xlu0 %1753
      %v1756 = vmul.f32 %v1745, %v1754
      %1758 = vrot.lane.b32.xlu0 %v1756, 32
      %v1759 = vpop.permute.xlu0 %1758
      %v1761 = vadd.f32 %v1751, %v1759
      %v1762 = vtanh.pop %v1761
      %1764 = vrot.lane.b32.xlu0 %v1762, 32
      %v1765 = vpop.permute.xlu0 %1764
      %v1767 = vmul.f32 %v1745, %v1765
      %1769 = vrot.lane.b32.xlu0 %v1767, 64
      %v1770 = vpop.permute.xlu0 %1769
      %1772 = vst.msk [vmem:[%s1020] sm:$0xf] %vm1013, %v1770
      %1774 = vrot.lane.b32.xlu0 %v1761, 96
      %v1775 = vpop.permute.xlu0 %1774
      %1777 = vst.msk [vmem:[%s1022] sm:$0xf] %vm1013, %v1775
      %v1779 = vsel %vm785, %v1407, 0
      %v1782 = vsel %vm785, %v1408, 0
      %v1785 = vsel %vm785, %v1409, 0
      %v1788 = vsel %vm785, %v1410, 0
      %1790 = vmatpush.msra.mxu0 0.0
      %1791 = vmatpush.msra.mxu0 0.0
      %1792 = vmatpush.msra.mxu0 0.0
      %1793 = vmatpush.msra.mxu0 0.0
      %1794 = vmatpush.msra.mxu0 0.0
      %1795 = vmatpush.msra.mxu0 0.0
      %1796 = vmatpush.msra.mxu0 0.0
      %1797 = vmatpush.msra.mxu0 0.0
      %1798 = vmatpush.msra.mxu0 0.0
      %1799 = vmatpush.msra.mxu0 0.0
      %1800 = vmatpush.msra.mxu0 0.0
      %1801 = vmatpush.msra.mxu0 0.0
      %1802 = vmatpush.msra.mxu0 %v741
      %1803 = vmatpush.msra.mxu0 %v740
      %1804 = vmatpush.msra.mxu0 %v739
      %1805 = vmatpush.msra.mxu0 %v738
      %1806 = vmatmul.f32.gmra.mxu0 %v1779
      %v1807 = vpop.f32.mrf.mxu0
      %v1808 = vadd.f32 0.0, %v1807
      %1809 = vmatmul.f32.gmra.mxu0 %v1782
      %v1810 = vpop.f32.mrf.mxu0
      %v1811 = vadd.f32 0.0, %v1810
      %1812 = vmatmul.f32.gmra.mxu0 %v1785
      %v1813 = vpop.f32.mrf.mxu0
      %v1814 = vadd.f32 0.0, %v1813
      %1815 = vmatmul.f32.gmra.mxu0 %v1788
      %v1816 = vpop.f32.mrf.mxu0
      %v1817 = vadd.f32 0.0, %v1816
      %1818 = vdwg.mxu0
      %v1819 = vsel %vm785, %v1770, 0
      %1821 = vmatpush.msra.mxu0 0.0
      %1822 = vmatpush.msra.mxu0 0.0
      %1823 = vmatpush.msra.mxu0 0.0
      %1824 = vmatpush.msra.mxu0 0.0
      %1825 = vmatpush.msra.mxu0 0.0
      %1826 = vmatpush.msra.mxu0 0.0
      %1827 = vmatpush.msra.mxu0 0.0
      %1828 = vmatpush.msra.mxu0 0.0
      %1829 = vmatpush.msra.mxu0 0.0
      %1830 = vmatpush.msra.mxu0 0.0
      %1831 = vmatpush.msra.mxu0 0.0
      %1832 = vmatpush.msra.mxu0 0.0
      %1833 = vmatpush.msra.mxu0 %v745
      %1834 = vmatpush.msra.mxu0 %v744
      %1835 = vmatpush.msra.mxu0 %v743
      %1836 = vmatpush.msra.mxu0 %v742
      %1837 = vmatmul.f32.gmra.mxu0 %v1819
      %v1838 = vpop.f32.mrf.mxu0
      %v1839 = vadd.f32 0.0, %v1838
      %1840 = vdwg.mxu0
      %v1842 = vrot.slane %v1839, 1
      %v1843 = vrot.slane %v1839, 2
      %v1844 = vrot.slane %v1839, 3
      %v1845 = vperm.slane %v1839, 0
      %v1846 = vperm.slane %v1842, 0
      %v1847 = vperm.slane %v1843, 0
      %v1848 = vperm.slane %v1844, 0
      %v1853 = vadd.f32 %v1808, %v1845
      %v1854 = vadd.f32 %v1811, %v1846
      %v1855 = vadd.f32 %v1814, %v1847
      %v1856 = vadd.f32 %v1817, %v1848
      %v1857 = vadd.f32 %v1853, %v1216
      %v1858 = vadd.f32 %v1854, %v1216
      %v1859 = vadd.f32 %v1855, %v1216
      %v1860 = vadd.f32 %v1856, %v1216
      %v1861 = vtanh.pop %v1857
      %v1862 = vtanh.pop %v1858
      %v1863 = vtanh.pop %v1859
      %v1864 = vtanh.pop %v1860
      %v1865 = vxor.u32 %v1857, 2147483648
      %v1866 = vxor.u32 %v1858, 2147483648
      %v1867 = vxor.u32 %v1859, 2147483648
      %v1868 = vxor.u32 %v1860, 2147483648
      %v1869 = vmul.f32 %v1865, 1.442695
      %v1870 = vpow.pop %v1869
      %v1871 = vmul.f32 %v1866, 1.442695
      %v1872 = vpow.pop %v1871
      %v1873 = vmul.f32 %v1867, 1.442695
      %v1874 = vpow.pop %v1873
      %v1875 = vmul.f32 %v1868, 1.442695
      %v1876 = vpow.pop %v1875
      %v1877 = vadd.f32 %v1870, 1.0
      %v1878 = vadd.f32 %v1872, 1.0
      %v1879 = vadd.f32 %v1874, 1.0
      %v1880 = vadd.f32 %v1876, 1.0
      %v1881 = vrcp.pop %v1877
      %v1882 = vmul.f32 %v1877, %v1881
      %v1883 = vsub.f32 1.0, %v1882
      %v1884 = vmul.f32 %v1881, %v1883
      %v1885 = vadd.f32 %v1881, %v1884
      %vm1886 = vweird.f32 %v1877
      %vm1887 = vweird.f32 %v1881
      %vm1888 = vmor %vm1886, %vm1887
      %v1889 = vsel %vm1888, %v1881, %v1885
      %v1890 = vand.u32 2147483647, %v1877
      %vm1891 = vcmp.eq.f32.partialorder %v1890, 8.507059e+37
      %v1892 = vand.u32 %v1877, 2147483648
      %v1893 = vor.u32 1.1754944e-38, %v1892
      %v1894 = vsel %vm1891, %v1893, %v1889
      %v1895 = vmul.f32 1.0, %v1894
      %v1896 = vrcp.pop %v1878
      %v1897 = vmul.f32 %v1878, %v1896
      %v1898 = vsub.f32 1.0, %v1897
      %v1899 = vmul.f32 %v1896, %v1898
      %v1900 = vadd.f32 %v1896, %v1899
      %vm1901 = vweird.f32 %v1878
      %vm1902 = vweird.f32 %v1896
      %vm1903 = vmor %vm1901, %vm1902
      %v1904 = vsel %vm1903, %v1896, %v1900
      %v1905 = vand.u32 2147483647, %v1878
      %vm1906 = vcmp.eq.f32.partialorder %v1905, 8.507059e+37
      %v1907 = vand.u32 %v1878, 2147483648
      %v1908 = vor.u32 1.1754944e-38, %v1907
      %v1909 = vsel %vm1906, %v1908, %v1904
      %v1910 = vmul.f32 1.0, %v1909
      %v1911 = vrcp.pop %v1879
      %v1912 = vmul.f32 %v1879, %v1911
      %v1913 = vsub.f32 1.0, %v1912
      %v1914 = vmul.f32 %v1911, %v1913
      %v1915 = vadd.f32 %v1911, %v1914
      %vm1916 = vweird.f32 %v1879
      %vm1917 = vweird.f32 %v1911
      %vm1918 = vmor %vm1916, %vm1917
      %v1919 = vsel %vm1918, %v1911, %v1915
      %v1920 = vand.u32 2147483647, %v1879
      %vm1921 = vcmp.eq.f32.partialorder %v1920, 8.507059e+37
      %v1922 = vand.u32 %v1879, 2147483648
      %v1923 = vor.u32 1.1754944e-38, %v1922
      %v1924 = vsel %vm1921, %v1923, %v1919
      %v1925 = vmul.f32 1.0, %v1924
      %v1926 = vrcp.pop %v1880
      %v1927 = vmul.f32 %v1880, %v1926
      %v1928 = vsub.f32 1.0, %v1927
      %v1929 = vmul.f32 %v1926, %v1928
      %v1930 = vadd.f32 %v1926, %v1929
      %vm1931 = vweird.f32 %v1880
      %vm1932 = vweird.f32 %v1926
      %vm1933 = vmor %vm1931, %vm1932
      %v1934 = vsel %vm1933, %v1926, %v1930
      %v1935 = vand.u32 2147483647, %v1880
      %vm1936 = vcmp.eq.f32.partialorder %v1935, 8.507059e+37
      %v1937 = vand.u32 %v1880, 2147483648
      %v1938 = vor.u32 1.1754944e-38, %v1937
      %v1939 = vsel %vm1936, %v1938, %v1934
      %v1940 = vmul.f32 1.0, %v1939
      %v1941 = vsub.f32 1.0, %v1895
      %v1942 = vsub.f32 1.0, %v1910
      %v1943 = vsub.f32 1.0, %v1925
      %v1944 = vsub.f32 1.0, %v1940
      %1946 = vset.pattern.permute.xlu0 32
      %1947 = vperm.xlu0 %1946, %v1941
      %v1948 = vpop.permute.xlu0 %1947
      %1951 = vset.pattern.permute.xlu0 32
      %1952 = vperm.xlu0 %1951, %v1942
      %v1953 = vpop.permute.xlu0 %1952
      %1956 = vset.pattern.permute.xlu0 32
      %1957 = vperm.xlu0 %1956, %v1943
      %v1958 = vpop.permute.xlu0 %1957
      %1961 = vset.pattern.permute.xlu0 32
      %1962 = vperm.xlu0 %1961, %v1944
      %v1963 = vpop.permute.xlu0 %1962
      %v1965 = vmul.f32 %v1407, %v1948
      %v1966 = vmul.f32 %v1408, %v1953
      %v1967 = vmul.f32 %v1409, %v1958
      %v1968 = vmul.f32 %v1410, %v1963
      %1970 = vset.pattern.permute.xlu0 32
      %1971 = vperm.xlu0 %1970, %v1895
      %v1972 = vpop.permute.xlu0 %1971
      %1975 = vset.pattern.permute.xlu0 32
      %1976 = vperm.xlu0 %1975, %v1910
      %v1977 = vpop.permute.xlu0 %1976
      %1980 = vset.pattern.permute.xlu0 32
      %1981 = vperm.xlu0 %1980, %v1925
      %v1982 = vpop.permute.xlu0 %1981
      %1985 = vset.pattern.permute.xlu0 32
      %1986 = vperm.xlu0 %1985, %v1940
      %v1987 = vpop.permute.xlu0 %1986
      %v1989 = vmul.f32 %v1972, %v1861
      %v1990 = vmul.f32 %v1977, %v1862
      %v1991 = vmul.f32 %v1982, %v1863
      %v1992 = vmul.f32 %v1987, %v1864
      %v1993 = vadd.f32 %v1965, %v1989
      %v1994 = vadd.f32 %v1966, %v1990
      %v1995 = vadd.f32 %v1967, %v1991
      %v1996 = vadd.f32 %v1968, %v1992
      %v1997 = vlaneseq
      %v1998 = vshrl.u32 %v1997, 7
      %v1999 = vadd.s32 %v1998, 9
      %2000 = vset.pattern.permute.xlu0 %v1999
      %2001 = vperm.xlu0 %2000, %v1411
      %v2002 = vpop.permute.xlu0 %2001
      %v2003 = vlaneseq
      %v2004 = vshrl.u32 %v2003, 7
      %v2005 = vadd.s32 %v2004, 9
      %2006 = vset.pattern.permute.xlu0 %v2005
      %2007 = vperm.xlu0 %2006, %v1418
      %v2008 = vpop.permute.xlu0 %2007
      %v2009 = vlaneseq
      %v2010 = vshrl.u32 %v2009, 7
      %v2011 = vadd.s32 %v2010, 9
      %2012 = vset.pattern.permute.xlu0 %v2011
      %2013 = vperm.xlu0 %2012, %v1425
      %v2014 = vpop.permute.xlu0 %2013
      %v2015 = vlaneseq
      %v2016 = vshrl.u32 %v2015, 7
      %v2017 = vadd.s32 %v2016, 9
      %2018 = vset.pattern.permute.xlu0 %v2017
      %2019 = vperm.xlu0 %2018, %v1432
      %v2020 = vpop.permute.xlu0 %2019
      %vm2021 = vcmp.gt.f32.partialorder %v2002, 0.5
      %vm2022 = vcmp.gt.f32.partialorder %v2008, 0.5
      %vm2023 = vcmp.gt.f32.partialorder %v2014, 0.5
      %vm2024 = vcmp.gt.f32.partialorder %v2020, 0.5
      %v2025 = vsel %vm2021, 1, 0
      %v2026 = vsel %vm2022, 1, 0
      %v2027 = vsel %vm2023, 1, 0
      %v2028 = vsel %vm2024, 1, 0
      %vm2029 = vcmp.eq.s32.totalorder %v2025, 1
      %vm2030 = vcmp.eq.s32.totalorder %v2026, 1
      %vm2031 = vcmp.eq.s32.totalorder %v2027, 1
      %vm2032 = vcmp.eq.s32.totalorder %v2028, 1
      %v2033 = vsel %vm2029, 0.0, %v1993
      %v2034 = vsel %vm2030, 0.0, %v1994
      %v2035 = vsel %vm2031, 0.0, %v1995
      %v2036 = vsel %vm2032, 0.0, %v1996
      %2037 = vst.msk [vmem:[#allocation4] sm:$0xff] %vm785, %v2033
      %2038 = vst.msk [vmem:[#allocation4 + $0x8] sm:$0xff] %vm785, %v2034
      %2039 = vst.msk [vmem:[#allocation4 + $0x10] sm:$0xff] %vm785, %v2035
      %2040 = vst.msk [vmem:[#allocation4 + $0x18] sm:$0xff] %vm785, %v2036
      %2041 = vst.msk [vmem:[#allocation5 + $0x4] sm:$0xf] %vm1013, %v1770
      %s2042 = scalar_lea.vmem %s677, 8
      %v2043 = vld [vmem:[%s2042] sm:$0xf]
      %s2044 = scalar_lea.vmem %s686, 8
      %v2045 = vld [vmem:[%s2044] sm:$0xf]
      %v2046 = vld [vmem:[#allocation4] sm:$0xff]
      %v2047 = vld [vmem:[#allocation4 + $0x8] sm:$0xff]
      %v2048 = vld [vmem:[#allocation4 + $0x10] sm:$0xff]
      %v2049 = vld [vmem:[#allocation4 + $0x18] sm:$0xff]
      %v2050 = vperm.slane %v2045, 0
      %v2051 = vlaneseq
      %v2052 = vshrl.u32 %v2051, 7
      %2054 = vset.pattern.permute.xlu0 %v2052
      %2055 = vperm.xlu0 %2054, %v2050
      %v2056 = vpop.permute.xlu0 %2055
      %v2057 = vperm.slane %v2045, 1
      %v2058 = vlaneseq
      %v2059 = vshrl.u32 %v2058, 7
      %2061 = vset.pattern.permute.xlu0 %v2059
      %2062 = vperm.xlu0 %2061, %v2057
      %v2063 = vpop.permute.xlu0 %2062
      %v2064 = vperm.slane %v2045, 2
      %v2065 = vlaneseq
      %v2066 = vshrl.u32 %v2065, 7
      %2068 = vset.pattern.permute.xlu0 %v2066
      %2069 = vperm.xlu0 %2068, %v2064
      %v2070 = vpop.permute.xlu0 %2069
      %v2071 = vperm.slane %v2045, 3
      %v2072 = vlaneseq
      %v2073 = vshrl.u32 %v2072, 7
      %2075 = vset.pattern.permute.xlu0 %v2073
      %2076 = vperm.xlu0 %2075, %v2071
      %v2077 = vpop.permute.xlu0 %2076
      %v2078 = vmul.f32 %v2056, %v2046
      %v2079 = vmul.f32 %v2063, %v2047
      %v2080 = vmul.f32 %v2070, %v2048
      %v2081 = vmul.f32 %v2077, %v2049
      %v2082 = vsel %vm785, %v2078, 0.0
      %v2083 = vrot.slane %v2082, 4
      %v2084 = vadd.f32 %v2082, %v2083
      %v2085 = vrot.slane %v2084, 2
      %v2086 = vadd.f32 %v2084, %v2085
      %v2087 = vrot.slane %v2086, 1
      %v2088 = vadd.f32 %v2086, %v2087
      %v2089 = vsel %vm785, %v2079, 0.0
      %v2090 = vrot.slane %v2089, 4
      %v2091 = vadd.f32 %v2089, %v2090
      %v2092 = vrot.slane %v2091, 2
      %v2093 = vadd.f32 %v2091, %v2092
      %v2094 = vrot.slane %v2093, 1
      %v2095 = vadd.f32 %v2093, %v2094
      %v2096 = vsel %vm785, %v2080, 0.0
      %v2097 = vrot.slane %v2096, 4
      %v2098 = vadd.f32 %v2096, %v2097
      %v2099 = vrot.slane %v2098, 2
      %v2100 = vadd.f32 %v2098, %v2099
      %v2101 = vrot.slane %v2100, 1
      %v2102 = vadd.f32 %v2100, %v2101
      %v2103 = vsel %vm785, %v2081, 0.0
      %v2104 = vrot.slane %v2103, 4
      %v2105 = vadd.f32 %v2103, %v2104
      %v2106 = vrot.slane %v2105, 2
      %v2107 = vadd.f32 %v2105, %v2106
      %v2108 = vrot.slane %v2107, 1
      %v2109 = vadd.f32 %v2107, %v2108
      %v2111 = vsel %vm785, %v2043, 0
      %2113 = vmatpush.msra.mxu0 0.0
      %2114 = vmatpush.msra.mxu0 0.0
      %2115 = vmatpush.msra.mxu0 0.0
      %2116 = vmatpush.msra.mxu0 0.0
      %2117 = vmatpush.msra.mxu0 0.0
      %2118 = vmatpush.msra.mxu0 0.0
      %2119 = vmatpush.msra.mxu0 0.0
      %2120 = vmatpush.msra.mxu0 0.0
      %2121 = vmatpush.msra.mxu0 0.0
      %2122 = vmatpush.msra.mxu0 0.0
      %2123 = vmatpush.msra.mxu0 0.0
      %2124 = vmatpush.msra.mxu0 0.0
      %2125 = vmatpush.msra.mxu0 %v731
      %2126 = vmatpush.msra.mxu0 %v730
      %2127 = vmatpush.msra.mxu0 %v729
      %2128 = vmatpush.msra.mxu0 %v728
      %2129 = vmatmul.f32.gmra.mxu0 %v2111
      %v2130 = vpop.f32.mrf.mxu0
      %v2131 = vadd.f32 0.0, %v2130
      %2132 = vdwg.mxu0
      %v2137 = vsel %vm841, %v2095, %v2088
      %v2138 = vsel %vm843, %v2102, %v2137
      %v2139 = vsel %vm845, %v2109, %v2138
      %v2140 = vsel %vm785, %v2139, 0
      %2142 = vmatpush.msra.mxu0 0.0
      %2143 = vmatpush.msra.mxu0 0.0
      %2144 = vmatpush.msra.mxu0 0.0
      %2145 = vmatpush.msra.mxu0 0.0
      %2146 = vmatpush.msra.mxu0 0.0
      %2147 = vmatpush.msra.mxu0 0.0
      %2148 = vmatpush.msra.mxu0 0.0
      %2149 = vmatpush.msra.mxu0 0.0
      %2150 = vmatpush.msra.mxu0 0.0
      %2151 = vmatpush.msra.mxu0 0.0
      %2152 = vmatpush.msra.mxu0 0.0
      %2153 = vmatpush.msra.mxu0 0.0
      %2154 = vmatpush.msra.mxu0 %v727
      %2155 = vmatpush.msra.mxu0 %v726
      %2156 = vmatpush.msra.mxu0 %v725
      %2157 = vmatpush.msra.mxu0 %v724
      %2158 = vmatmul.f32.gmra.mxu0 %v2140
      %v2159 = vpop.f32.mrf.mxu0
      %v2160 = vadd.f32 %v2131, %v2159
      %2161 = vdwg.mxu0
      %v2162 = vadd.f32 %v2160, %v870
      %v2163 = vmax.f32 %v2162, 0.0
      %v2165 = vsel %vm785, %v2163, 0
      %2167 = vmatpush.msra.mxu0 0.0
      %2168 = vmatpush.msra.mxu0 0.0
      %2169 = vmatpush.msra.mxu0 0.0
      %2170 = vmatpush.msra.mxu0 0.0
      %2171 = vmatpush.msra.mxu0 0.0
      %2172 = vmatpush.msra.mxu0 0.0
      %2173 = vmatpush.msra.mxu0 0.0
      %2174 = vmatpush.msra.mxu0 0.0
      %2175 = vmatpush.msra.mxu0 0.0
      %2176 = vmatpush.msra.mxu0 0.0
      %2177 = vmatpush.msra.mxu0 0.0
      %2178 = vmatpush.msra.mxu0 0.0
      %2179 = vmatpush.msra.mxu0 %v736
      %2180 = vmatpush.msra.mxu0 %v735
      %2181 = vmatpush.msra.mxu0 %v734
      %2182 = vmatpush.msra.mxu0 %v733
      %2183 = vmatmul.f32.gmra.mxu0 %v2165
      %v2184 = vpop.f32.mrf.mxu0
      %v2185 = vadd.f32 %v875, %v2184
      %2186 = vdwg.mxu0
      %vm2187 = vcmp.gt.f32.partialorder %v2045, 0.5
      %v2188 = vsel %vm2187, 1, 0
      %2189 = vset.pattern.permute.xlu0 8
      %2190 = vperm.xlu0 %2189, %v2188
      %v2191 = vpop.permute.xlu0 %2190
      %vm2192 = vcmp.eq.s32.totalorder %v2191, 1
      %v2193 = vsel %vm2192, %v2185, %v2043
      %v2194 = vld [vmem:[#allocation2] sm:$0xf]
      %v2195 = vld [vmem:[#allocation3] sm:$0xf]
      %v2196 = vld [vmem:[%s9] sm:$0xff]
      %v2197 = vld [vmem:[%s9 + $0x8] sm:$0xff]
      %v2198 = vld [vmem:[%s9 + $0x10] sm:$0xff]
      %v2199 = vld [vmem:[%s9 + $0x18] sm:$0xff]
      %v2200 = vld [vmem:[%s10] sm:$0xff]
      %v2201 = vld [vmem:[%s10 + $0x8] sm:$0xff]
      %v2202 = vld [vmem:[%s10 + $0x10] sm:$0xff]
      %v2203 = vld [vmem:[%s10 + $0x18] sm:$0xff]
      %v2205 = vsel %vm785, %v2194, 0
      %2207 = vmatpush.msra.mxu0 0.0
      %2208 = vmatpush.msra.mxu0 0.0
      %2209 = vmatpush.msra.mxu0 0.0
      %2210 = vmatpush.msra.mxu0 0.0
      %2211 = vmatpush.msra.mxu0 0.0
      %2212 = vmatpush.msra.mxu0 0.0
      %2213 = vmatpush.msra.mxu0 0.0
      %2214 = vmatpush.msra.mxu0 0.0
      %2215 = vmatpush.msra.mxu0 0.0
      %2216 = vmatpush.msra.mxu0 0.0
      %2217 = vmatpush.msra.mxu0 0.0
      %2218 = vmatpush.msra.mxu0 0.0
      %2219 = vmatpush.msra.mxu0 %v2203
      %2220 = vmatpush.msra.mxu0 %v2202
      %2221 = vmatpush.msra.mxu0 %v2201
      %2222 = vmatpush.msra.mxu0 %v2200
      %2223 = vmatmul.f32.gmra.mxu0 %v2205
      %v2224 = vpop.f32.mrf.mxu0
      %v2225 = vadd.f32 0.0, %v2224
      %2226 = vdwg.mxu0
      %v2228 = vsel %vm785, %v2193, 0
      %2230 = vmatpush.msra.mxu0 0.0
      %2231 = vmatpush.msra.mxu0 0.0
      %2232 = vmatpush.msra.mxu0 0.0
      %2233 = vmatpush.msra.mxu0 0.0
      %2234 = vmatpush.msra.mxu0 0.0
      %2235 = vmatpush.msra.mxu0 0.0
      %2236 = vmatpush.msra.mxu0 0.0
      %2237 = vmatpush.msra.mxu0 0.0
      %2238 = vmatpush.msra.mxu0 0.0
      %2239 = vmatpush.msra.mxu0 0.0
      %2240 = vmatpush.msra.mxu0 0.0
      %2241 = vmatpush.msra.mxu0 0.0
      %2242 = vmatpush.msra.mxu0 %v2199
      %2243 = vmatpush.msra.mxu0 %v2198
      %2244 = vmatpush.msra.mxu0 %v2197
      %2245 = vmatpush.msra.mxu0 %v2196
      %2246 = vmatmul.f32.gmra.mxu0 %v2228
      %v2247 = vpop.f32.mrf.mxu0
      %v2248 = vadd.f32 %v2225, %v2247
      %2249 = vdwg.mxu0
      %v2250 = vld [vmem:[%s11] sm:$0x1]
      %v2252 = vperm.slane %v2250, 0
      %v2254 = vadd.f32 %v2248, %v2252
      %v2255 = vxor.u32 %v2254, 2147483648
      %v2256 = vmul.f32 %v2255, 1.442695
      %v2257 = vpow.pop %v2256
      %v2258 = vadd.f32 %v2257, 1.0
      %v2259 = vrcp.pop %v2258
      %v2260 = vmul.f32 %v2258, %v2259
      %v2261 = vsub.f32 1.0, %v2260
      %v2262 = vmul.f32 %v2259, %v2261
      %v2263 = vadd.f32 %v2259, %v2262
      %vm2264 = vweird.f32 %v2258
      %vm2265 = vweird.f32 %v2259
      %vm2266 = vmor %vm2264, %vm2265
      %v2267 = vsel %vm2266, %v2259, %v2263
      %v2268 = vand.u32 2147483647, %v2258
      %vm2269 = vcmp.eq.f32.partialorder %v2268, 8.507059e+37
      %v2270 = vand.u32 %v2258, 2147483648
      %v2271 = vor.u32 1.1754944e-38, %v2270
      %v2272 = vsel %vm2269, %v2271, %v2267
      %v2273 = vmul.f32 1.0, %v2272
      %v2274 = vtanh.pop %v2254
      %2276 = vrot.lane.b32.xlu0 %v2195, 32
      %v2277 = vpop.permute.xlu0 %2276
      %v2279 = vmul.f32 %v2273, %v2277
      %2281 = vrot.lane.b32.xlu0 %v2274, 32
      %v2282 = vpop.permute.xlu0 %2281
      %v2284 = vmul.f32 %v2273, %v2282
      %2286 = vrot.lane.b32.xlu0 %v2284, 32
      %v2287 = vpop.permute.xlu0 %2286
      %v2289 = vadd.f32 %v2279, %v2287
      %v2290 = vtanh.pop %v2289
      %2292 = vrot.lane.b32.xlu0 %v2290, 32
      %v2293 = vpop.permute.xlu0 %2292
      %v2295 = vmul.f32 %v2273, %v2293
      %2297 = vrot.lane.b32.xlu0 %v2295, 64
      %v2298 = vpop.permute.xlu0 %2297
      %2300 = vst.msk [vmem:[#allocation2] sm:$0xf] %vm1013, %v2298
      %2302 = vrot.lane.b32.xlu0 %v2289, 96
      %v2303 = vpop.permute.xlu0 %2302
      %2305 = vst.msk [vmem:[#allocation3] sm:$0xf] %vm1013, %v2303
      %v2306 = vld [vmem:[%s1020] sm:$0xf]
      %v2307 = vld [vmem:[%s1022] sm:$0xf]
      %v2308 = vld [vmem:[%s1024] sm:$0xff]
      %v2309 = vld [vmem:[%s1024 + $0x8] sm:$0xff]
      %v2310 = vld [vmem:[%s1024 + $0x10] sm:$0xff]
      %v2311 = vld [vmem:[%s1024 + $0x18] sm:$0xff]
      %v2312 = vld [vmem:[%s1029] sm:$0xff]
      %v2313 = vld [vmem:[%s1029 + $0x8] sm:$0xff]
      %v2314 = vld [vmem:[%s1029 + $0x10] sm:$0xff]
      %v2315 = vld [vmem:[%s1029 + $0x18] sm:$0xff]
      %v2317 = vsel %vm785, %v2306, 0
      %2319 = vmatpush.msra.mxu0 0.0
      %2320 = vmatpush.msra.mxu0 0.0
      %2321 = vmatpush.msra.mxu0 0.0
      %2322 = vmatpush.msra.mxu0 0.0
      %2323 = vmatpush.msra.mxu0 0.0
      %2324 = vmatpush.msra.mxu0 0.0
      %2325 = vmatpush.msra.mxu0 0.0
      %2326 = vmatpush.msra.mxu0 0.0
      %2327 = vmatpush.msra.mxu0 0.0
      %2328 = vmatpush.msra.mxu0 0.0
      %2329 = vmatpush.msra.mxu0 0.0
      %2330 = vmatpush.msra.mxu0 0.0
      %2331 = vmatpush.msra.mxu0 %v2315
      %2332 = vmatpush.msra.mxu0 %v2314
      %2333 = vmatpush.msra.mxu0 %v2313
      %2334 = vmatpush.msra.mxu0 %v2312
      %2335 = vmatmul.f32.gmra.mxu0 %v2317
      %v2336 = vpop.f32.mrf.mxu0
      %v2337 = vadd.f32 0.0, %v2336
      %2338 = vdwg.mxu0
      %v2339 = vsel %vm785, %v2298, 0
      %2341 = vmatpush.msra.mxu0 0.0
      %2342 = vmatpush.msra.mxu0 0.0
      %2343 = vmatpush.msra.mxu0 0.0
      %2344 = vmatpush.msra.mxu0 0.0
      %2345 = vmatpush.msra.mxu0 0.0
      %2346 = vmatpush.msra.mxu0 0.0
      %2347 = vmatpush.msra.mxu0 0.0
      %2348 = vmatpush.msra.mxu0 0.0
      %2349 = vmatpush.msra.mxu0 0.0
      %2350 = vmatpush.msra.mxu0 0.0
      %2351 = vmatpush.msra.mxu0 0.0
      %2352 = vmatpush.msra.mxu0 0.0
      %2353 = vmatpush.msra.mxu0 %v2311
      %2354 = vmatpush.msra.mxu0 %v2310
      %2355 = vmatpush.msra.mxu0 %v2309
      %2356 = vmatpush.msra.mxu0 %v2308
      %2357 = vmatmul.f32.gmra.mxu0 %v2339
      %v2358 = vpop.f32.mrf.mxu0
      %v2359 = vadd.f32 %v2337, %v2358
      %2360 = vdwg.mxu0
      %v2361 = vld [vmem:[%s1079] sm:$0x1]
      %v2363 = vperm.slane %v2361, 0
      %v2365 = vadd.f32 %v2359, %v2363
      %v2366 = vxor.u32 %v2365, 2147483648
      %v2367 = vmul.f32 %v2366, 1.442695
      %v2368 = vpow.pop %v2367
      %v2369 = vadd.f32 %v2368, 1.0
      %v2370 = vrcp.pop %v2369
      %v2371 = vmul.f32 %v2369, %v2370
      %v2372 = vsub.f32 1.0, %v2371
      %v2373 = vmul.f32 %v2370, %v2372
      %v2374 = vadd.f32 %v2370, %v2373
      %vm2375 = vweird.f32 %v2369
      %vm2376 = vweird.f32 %v2370
      %vm2377 = vmor %vm2375, %vm2376
      %v2378 = vsel %vm2377, %v2370, %v2374
      %v2379 = vand.u32 2147483647, %v2369
      %vm2380 = vcmp.eq.f32.partialorder %v2379, 8.507059e+37
      %v2381 = vand.u32 %v2369, 2147483648
      %v2382 = vor.u32 1.1754944e-38, %v2381
      %v2383 = vsel %vm2380, %v2382, %v2378
      %v2384 = vmul.f32 1.0, %v2383
      %v2385 = vtanh.pop %v2365
      %2387 = vrot.lane.b32.xlu0 %v2307, 32
      %v2388 = vpop.permute.xlu0 %2387
      %v2390 = vmul.f32 %v2384, %v2388
      %2392 = vrot.lane.b32.xlu0 %v2385, 32
      %v2393 = vpop.permute.xlu0 %2392
      %v2395 = vmul.f32 %v2384, %v2393
      %2397 = vrot.lane.b32.xlu0 %v2395, 32
      %v2398 = vpop.permute.xlu0 %2397
      %v2400 = vadd.f32 %v2390, %v2398
      %v2401 = vtanh.pop %v2400
      %2403 = vrot.lane.b32.xlu0 %v2401, 32
      %v2404 = vpop.permute.xlu0 %2403
      %v2406 = vmul.f32 %v2384, %v2404
      %2408 = vrot.lane.b32.xlu0 %v2406, 64
      %v2409 = vpop.permute.xlu0 %2408
      %2411 = vst.msk [vmem:[%s1020] sm:$0xf] %vm1013, %v2409
      %2413 = vrot.lane.b32.xlu0 %v2400, 96
      %v2414 = vpop.permute.xlu0 %2413
      %2416 = vst.msk [vmem:[%s1022] sm:$0xf] %vm1013, %v2414
      %v2418 = vsel %vm785, %v2046, 0
      %v2421 = vsel %vm785, %v2047, 0
      %v2424 = vsel %vm785, %v2048, 0
      %v2427 = vsel %vm785, %v2049, 0
      %2429 = vmatpush.msra.mxu0 0.0
      %2430 = vmatpush.msra.mxu0 0.0
      %2431 = vmatpush.msra.mxu0 0.0
      %2432 = vmatpush.msra.mxu0 0.0
      %2433 = vmatpush.msra.mxu0 0.0
      %2434 = vmatpush.msra.mxu0 0.0
      %2435 = vmatpush.msra.mxu0 0.0
      %2436 = vmatpush.msra.mxu0 0.0
      %2437 = vmatpush.msra.mxu0 0.0
      %2438 = vmatpush.msra.mxu0 0.0
      %2439 = vmatpush.msra.mxu0 0.0
      %2440 = vmatpush.msra.mxu0 0.0
      %2441 = vmatpush.msra.mxu0 %v741
      %2442 = vmatpush.msra.mxu0 %v740
      %2443 = vmatpush.msra.mxu0 %v739
      %2444 = vmatpush.msra.mxu0 %v738
      %2445 = vmatmul.f32.gmra.mxu0 %v2418
      %v2446 = vpop.f32.mrf.mxu0
      %v2447 = vadd.f32 0.0, %v2446
      %2448 = vmatmul.f32.gmra.mxu0 %v2421
      %v2449 = vpop.f32.mrf.mxu0
      %v2450 = vadd.f32 0.0, %v2449
      %2451 = vmatmul.f32.gmra.mxu0 %v2424
      %v2452 = vpop.f32.mrf.mxu0
      %v2453 = vadd.f32 0.0, %v2452
      %2454 = vmatmul.f32.gmra.mxu0 %v2427
      %v2455 = vpop.f32.mrf.mxu0
      %v2456 = vadd.f32 0.0, %v2455
      %2457 = vdwg.mxu0
      %v2458 = vsel %vm785, %v2409, 0
      %2460 = vmatpush.msra.mxu0 0.0
      %2461 = vmatpush.msra.mxu0 0.0
      %2462 = vmatpush.msra.mxu0 0.0
      %2463 = vmatpush.msra.mxu0 0.0
      %2464 = vmatpush.msra.mxu0 0.0
      %2465 = vmatpush.msra.mxu0 0.0
      %2466 = vmatpush.msra.mxu0 0.0
      %2467 = vmatpush.msra.mxu0 0.0
      %2468 = vmatpush.msra.mxu0 0.0
      %2469 = vmatpush.msra.mxu0 0.0
      %2470 = vmatpush.msra.mxu0 0.0
      %2471 = vmatpush.msra.mxu0 0.0
      %2472 = vmatpush.msra.mxu0 %v745
      %2473 = vmatpush.msra.mxu0 %v744
      %2474 = vmatpush.msra.mxu0 %v743
      %2475 = vmatpush.msra.mxu0 %v742
      %2476 = vmatmul.f32.gmra.mxu0 %v2458
      %v2477 = vpop.f32.mrf.mxu0
      %v2478 = vadd.f32 0.0, %v2477
      %2479 = vdwg.mxu0
      %v2481 = vrot.slane %v2478, 1
      %v2482 = vrot.slane %v2478, 2
      %v2483 = vrot.slane %v2478, 3
      %v2484 = vperm.slane %v2478, 0
      %v2485 = vperm.slane %v2481, 0
      %v2486 = vperm.slane %v2482, 0
      %v2487 = vperm.slane %v2483, 0
      %v2492 = vadd.f32 %v2447, %v2484
      %v2493 = vadd.f32 %v2450, %v2485
      %v2494 = vadd.f32 %v2453, %v2486
      %v2495 = vadd.f32 %v2456, %v2487
      %v2496 = vadd.f32 %v2492, %v1216
      %v2497 = vadd.f32 %v2493, %v1216
      %v2498 = vadd.f32 %v2494, %v1216
      %v2499 = vadd.f32 %v2495, %v1216
      %v2500 = vtanh.pop %v2496
      %v2501 = vtanh.pop %v2497
      %v2502 = vtanh.pop %v2498
      %v2503 = vtanh.pop %v2499
      %v2504 = vxor.u32 %v2496, 2147483648
      %v2505 = vxor.u32 %v2497, 2147483648
      %v2506 = vxor.u32 %v2498, 2147483648
      %v2507 = vxor.u32 %v2499, 2147483648
      %v2508 = vmul.f32 %v2504, 1.442695
      %v2509 = vpow.pop %v2508
      %v2510 = vmul.f32 %v2505, 1.442695
      %v2511 = vpow.pop %v2510
      %v2512 = vmul.f32 %v2506, 1.442695
      %v2513 = vpow.pop %v2512
      %v2514 = vmul.f32 %v2507, 1.442695
      %v2515 = vpow.pop %v2514
      %v2516 = vadd.f32 %v2509, 1.0
      %v2517 = vadd.f32 %v2511, 1.0
      %v2518 = vadd.f32 %v2513, 1.0
      %v2519 = vadd.f32 %v2515, 1.0
      %v2520 = vrcp.pop %v2516
      %v2521 = vmul.f32 %v2516, %v2520
      %v2522 = vsub.f32 1.0, %v2521
      %v2523 = vmul.f32 %v2520, %v2522
      %v2524 = vadd.f32 %v2520, %v2523
      %vm2525 = vweird.f32 %v2516
      %vm2526 = vweird.f32 %v2520
      %vm2527 = vmor %vm2525, %vm2526
      %v2528 = vsel %vm2527, %v2520, %v2524
      %v2529 = vand.u32 2147483647, %v2516
      %vm2530 = vcmp.eq.f32.partialorder %v2529, 8.507059e+37
      %v2531 = vand.u32 %v2516, 2147483648
      %v2532 = vor.u32 1.1754944e-38, %v2531
      %v2533 = vsel %vm2530, %v2532, %v2528
      %v2534 = vmul.f32 1.0, %v2533
      %v2535 = vrcp.pop %v2517
      %v2536 = vmul.f32 %v2517, %v2535
      %v2537 = vsub.f32 1.0, %v2536
      %v2538 = vmul.f32 %v2535, %v2537
      %v2539 = vadd.f32 %v2535, %v2538
      %vm2540 = vweird.f32 %v2517
      %vm2541 = vweird.f32 %v2535
      %vm2542 = vmor %vm2540, %vm2541
      %v2543 = vsel %vm2542, %v2535, %v2539
      %v2544 = vand.u32 2147483647, %v2517
      %vm2545 = vcmp.eq.f32.partialorder %v2544, 8.507059e+37
      %v2546 = vand.u32 %v2517, 2147483648
      %v2547 = vor.u32 1.1754944e-38, %v2546
      %v2548 = vsel %vm2545, %v2547, %v2543
      %v2549 = vmul.f32 1.0, %v2548
      %v2550 = vrcp.pop %v2518
      %v2551 = vmul.f32 %v2518, %v2550
      %v2552 = vsub.f32 1.0, %v2551
      %v2553 = vmul.f32 %v2550, %v2552
      %v2554 = vadd.f32 %v2550, %v2553
      %vm2555 = vweird.f32 %v2518
      %vm2556 = vweird.f32 %v2550
      %vm2557 = vmor %vm2555, %vm2556
      %v2558 = vsel %vm2557, %v2550, %v2554
      %v2559 = vand.u32 2147483647, %v2518
      %vm2560 = vcmp.eq.f32.partialorder %v2559, 8.507059e+37
      %v2561 = vand.u32 %v2518, 2147483648
      %v2562 = vor.u32 1.1754944e-38, %v2561
      %v2563 = vsel %vm2560, %v2562, %v2558
      %v2564 = vmul.f32 1.0, %v2563
      %v2565 = vrcp.pop %v2519
      %v2566 = vmul.f32 %v2519, %v2565
      %v2567 = vsub.f32 1.0, %v2566
      %v2568 = vmul.f32 %v2565, %v2567
      %v2569 = vadd.f32 %v2565, %v2568
      %vm2570 = vweird.f32 %v2519
      %vm2571 = vweird.f32 %v2565
      %vm2572 = vmor %vm2570, %vm2571
      %v2573 = vsel %vm2572, %v2565, %v2569
      %v2574 = vand.u32 2147483647, %v2519
      %vm2575 = vcmp.eq.f32.partialorder %v2574, 8.507059e+37
      %v2576 = vand.u32 %v2519, 2147483648
      %v2577 = vor.u32 1.1754944e-38, %v2576
      %v2578 = vsel %vm2575, %v2577, %v2573
      %v2579 = vmul.f32 1.0, %v2578
      %v2580 = vsub.f32 1.0, %v2534
      %v2581 = vsub.f32 1.0, %v2549
      %v2582 = vsub.f32 1.0, %v2564
      %v2583 = vsub.f32 1.0, %v2579
      %2585 = vset.pattern.permute.xlu0 32
      %2586 = vperm.xlu0 %2585, %v2580
      %v2587 = vpop.permute.xlu0 %2586
      %2590 = vset.pattern.permute.xlu0 32
      %2591 = vperm.xlu0 %2590, %v2581
      %v2592 = vpop.permute.xlu0 %2591
      %2595 = vset.pattern.permute.xlu0 32
      %2596 = vperm.xlu0 %2595, %v2582
      %v2597 = vpop.permute.xlu0 %2596
      %2600 = vset.pattern.permute.xlu0 32
      %2601 = vperm.xlu0 %2600, %v2583
      %v2602 = vpop.permute.xlu0 %2601
      %v2604 = vmul.f32 %v2046, %v2587
      %v2605 = vmul.f32 %v2047, %v2592
      %v2606 = vmul.f32 %v2048, %v2597
      %v2607 = vmul.f32 %v2049, %v2602
      %2609 = vset.pattern.permute.xlu0 32
      %2610 = vperm.xlu0 %2609, %v2534
      %v2611 = vpop.permute.xlu0 %2610
      %2614 = vset.pattern.permute.xlu0 32
      %2615 = vperm.xlu0 %2614, %v2549
      %v2616 = vpop.permute.xlu0 %2615
      %2619 = vset.pattern.permute.xlu0 32
      %2620 = vperm.xlu0 %2619, %v2564
      %v2621 = vpop.permute.xlu0 %2620
      %2624 = vset.pattern.permute.xlu0 32
      %2625 = vperm.xlu0 %2624, %v2579
      %v2626 = vpop.permute.xlu0 %2625
      %v2628 = vmul.f32 %v2611, %v2500
      %v2629 = vmul.f32 %v2616, %v2501
      %v2630 = vmul.f32 %v2621, %v2502
      %v2631 = vmul.f32 %v2626, %v2503
      %v2632 = vadd.f32 %v2604, %v2628
      %v2633 = vadd.f32 %v2605, %v2629
      %v2634 = vadd.f32 %v2606, %v2630
      %v2635 = vadd.f32 %v2607, %v2631
      %v2636 = vlaneseq
      %v2637 = vshrl.u32 %v2636, 7
      %v2638 = vadd.s32 %v2637, 9
      %2639 = vset.pattern.permute.xlu0 %v2638
      %2640 = vperm.xlu0 %2639, %v2050
      %v2641 = vpop.permute.xlu0 %2640
      %v2642 = vlaneseq
      %v2643 = vshrl.u32 %v2642, 7
      %v2644 = vadd.s32 %v2643, 9
      %2645 = vset.pattern.permute.xlu0 %v2644
      %2646 = vperm.xlu0 %2645, %v2057
      %v2647 = vpop.permute.xlu0 %2646
      %v2648 = vlaneseq
      %v2649 = vshrl.u32 %v2648, 7
      %v2650 = vadd.s32 %v2649, 9
      %2651 = vset.pattern.permute.xlu0 %v2650
      %2652 = vperm.xlu0 %2651, %v2064
      %v2653 = vpop.permute.xlu0 %2652
      %v2654 = vlaneseq
      %v2655 = vshrl.u32 %v2654, 7
      %v2656 = vadd.s32 %v2655, 9
      %2657 = vset.pattern.permute.xlu0 %v2656
      %2658 = vperm.xlu0 %2657, %v2071
      %v2659 = vpop.permute.xlu0 %2658
      %vm2660 = vcmp.gt.f32.partialorder %v2641, 0.5
      %vm2661 = vcmp.gt.f32.partialorder %v2647, 0.5
      %vm2662 = vcmp.gt.f32.partialorder %v2653, 0.5
      %vm2663 = vcmp.gt.f32.partialorder %v2659, 0.5
      %v2664 = vsel %vm2660, 1, 0
      %v2665 = vsel %vm2661, 1, 0
      %v2666 = vsel %vm2662, 1, 0
      %v2667 = vsel %vm2663, 1, 0
      %vm2668 = vcmp.eq.s32.totalorder %v2664, 1
      %vm2669 = vcmp.eq.s32.totalorder %v2665, 1
      %vm2670 = vcmp.eq.s32.totalorder %v2666, 1
      %vm2671 = vcmp.eq.s32.totalorder %v2667, 1
      %v2672 = vsel %vm2668, 0.0, %v2632
      %v2673 = vsel %vm2669, 0.0, %v2633
      %v2674 = vsel %vm2670, 0.0, %v2634
      %v2675 = vsel %vm2671, 0.0, %v2635
      %2676 = vst.msk [vmem:[#allocation4] sm:$0xff] %vm785, %v2672
      %2677 = vst.msk [vmem:[#allocation4 + $0x8] sm:$0xff] %vm785, %v2673
      %2678 = vst.msk [vmem:[#allocation4 + $0x10] sm:$0xff] %vm785, %v2674
      %2679 = vst.msk [vmem:[#allocation4 + $0x18] sm:$0xff] %vm785, %v2675
      %2680 = vst.msk [vmem:[#allocation5 + $0x8] sm:$0xf] %vm1013, %v2409
      %s2681 = scalar_lea.vmem %s677, 12
      %v2682 = vld [vmem:[%s2681] sm:$0xf]
      %s2683 = scalar_lea.vmem %s686, 12
      %v2684 = vld [vmem:[%s2683] sm:$0xf]
      %v2685 = vld [vmem:[#allocation4] sm:$0xff]
      %v2686 = vld [vmem:[#allocation4 + $0x8] sm:$0xff]
      %v2687 = vld [vmem:[#allocation4 + $0x10] sm:$0xff]
      %v2688 = vld [vmem:[#allocation4 + $0x18] sm:$0xff]
      %v2689 = vperm.slane %v2684, 0
      %v2690 = vlaneseq
      %v2691 = vshrl.u32 %v2690, 7
      %2693 = vset.pattern.permute.xlu0 %v2691
      %2694 = vperm.xlu0 %2693, %v2689
      %v2695 = vpop.permute.xlu0 %2694
      %v2696 = vperm.slane %v2684, 1
      %v2697 = vlaneseq
      %v2698 = vshrl.u32 %v2697, 7
      %2700 = vset.pattern.permute.xlu0 %v2698
      %2701 = vperm.xlu0 %2700, %v2696
      %v2702 = vpop.permute.xlu0 %2701
      %v2703 = vperm.slane %v2684, 2
      %v2704 = vlaneseq
      %v2705 = vshrl.u32 %v2704, 7
      %2707 = vset.pattern.permute.xlu0 %v2705
      %2708 = vperm.xlu0 %2707, %v2703
      %v2709 = vpop.permute.xlu0 %2708
      %v2710 = vperm.slane %v2684, 3
      %v2711 = vlaneseq
      %v2712 = vshrl.u32 %v2711, 7
      %2714 = vset.pattern.permute.xlu0 %v2712
      %2715 = vperm.xlu0 %2714, %v2710
      %v2716 = vpop.permute.xlu0 %2715
      %v2717 = vmul.f32 %v2695, %v2685
      %v2718 = vmul.f32 %v2702, %v2686
      %v2719 = vmul.f32 %v2709, %v2687
      %v2720 = vmul.f32 %v2716, %v2688
      %v2721 = vsel %vm785, %v2717, 0.0
      %v2722 = vrot.slane %v2721, 4
      %v2723 = vadd.f32 %v2721, %v2722
      %v2724 = vrot.slane %v2723, 2
      %v2725 = vadd.f32 %v2723, %v2724
      %v2726 = vrot.slane %v2725, 1
      %v2727 = vadd.f32 %v2725, %v2726
      %v2728 = vsel %vm785, %v2718, 0.0
      %v2729 = vrot.slane %v2728, 4
      %v2730 = vadd.f32 %v2728, %v2729
      %v2731 = vrot.slane %v2730, 2
      %v2732 = vadd.f32 %v2730, %v2731
      %v2733 = vrot.slane %v2732, 1
      %v2734 = vadd.f32 %v2732, %v2733
      %v2735 = vsel %vm785, %v2719, 0.0
      %v2736 = vrot.slane %v2735, 4
      %v2737 = vadd.f32 %v2735, %v2736
      %v2738 = vrot.slane %v2737, 2
      %v2739 = vadd.f32 %v2737, %v2738
      %v2740 = vrot.slane %v2739, 1
      %v2741 = vadd.f32 %v2739, %v2740
      %v2742 = vsel %vm785, %v2720, 0.0
      %v2743 = vrot.slane %v2742, 4
      %v2744 = vadd.f32 %v2742, %v2743
      %v2745 = vrot.slane %v2744, 2
      %v2746 = vadd.f32 %v2744, %v2745
      %v2747 = vrot.slane %v2746, 1
      %v2748 = vadd.f32 %v2746, %v2747
      %v2750 = vsel %vm785, %v2682, 0
      %2752 = vmatpush.msra.mxu0 0.0
      %2753 = vmatpush.msra.mxu0 0.0
      %2754 = vmatpush.msra.mxu0 0.0
      %2755 = vmatpush.msra.mxu0 0.0
      %2756 = vmatpush.msra.mxu0 0.0
      %2757 = vmatpush.msra.mxu0 0.0
      %2758 = vmatpush.msra.mxu0 0.0
      %2759 = vmatpush.msra.mxu0 0.0
      %2760 = vmatpush.msra.mxu0 0.0
      %2761 = vmatpush.msra.mxu0 0.0
      %2762 = vmatpush.msra.mxu0 0.0
      %2763 = vmatpush.msra.mxu0 0.0
      %2764 = vmatpush.msra.mxu0 %v731
      %2765 = vmatpush.msra.mxu0 %v730
      %2766 = vmatpush.msra.mxu0 %v729
      %2767 = vmatpush.msra.mxu0 %v728
      %2768 = vmatmul.f32.gmra.mxu0 %v2750
      %v2769 = vpop.f32.mrf.mxu0
      %v2770 = vadd.f32 0.0, %v2769
      %2771 = vdwg.mxu0
      %v2776 = vsel %vm841, %v2734, %v2727
      %v2777 = vsel %vm843, %v2741, %v2776
      %v2778 = vsel %vm845, %v2748, %v2777
      %v2779 = vsel %vm785, %v2778, 0
      %2781 = vmatpush.msra.mxu0 0.0
      %2782 = vmatpush.msra.mxu0 0.0
      %2783 = vmatpush.msra.mxu0 0.0
      %2784 = vmatpush.msra.mxu0 0.0
      %2785 = vmatpush.msra.mxu0 0.0
      %2786 = vmatpush.msra.mxu0 0.0
      %2787 = vmatpush.msra.mxu0 0.0
      %2788 = vmatpush.msra.mxu0 0.0
      %2789 = vmatpush.msra.mxu0 0.0
      %2790 = vmatpush.msra.mxu0 0.0
      %2791 = vmatpush.msra.mxu0 0.0
      %2792 = vmatpush.msra.mxu0 0.0
      %2793 = vmatpush.msra.mxu0 %v727
      %2794 = vmatpush.msra.mxu0 %v726
      %2795 = vmatpush.msra.mxu0 %v725
      %2796 = vmatpush.msra.mxu0 %v724
      %2797 = vmatmul.f32.gmra.mxu0 %v2779
      %v2798 = vpop.f32.mrf.mxu0
      %v2799 = vadd.f32 %v2770, %v2798
      %2800 = vdwg.mxu0
      %v2801 = vadd.f32 %v2799, %v870
      %v2802 = vmax.f32 %v2801, 0.0
      %v2804 = vsel %vm785, %v2802, 0
      %2806 = vmatpush.msra.mxu0 0.0
      %2807 = vmatpush.msra.mxu0 0.0
      %2808 = vmatpush.msra.mxu0 0.0
      %2809 = vmatpush.msra.mxu0 0.0
      %2810 = vmatpush.msra.mxu0 0.0
      %2811 = vmatpush.msra.mxu0 0.0
      %2812 = vmatpush.msra.mxu0 0.0
      %2813 = vmatpush.msra.mxu0 0.0
      %2814 = vmatpush.msra.mxu0 0.0
      %2815 = vmatpush.msra.mxu0 0.0
      %2816 = vmatpush.msra.mxu0 0.0
      %2817 = vmatpush.msra.mxu0 0.0
      %2818 = vmatpush.msra.mxu0 %v736
      %2819 = vmatpush.msra.mxu0 %v735
      %2820 = vmatpush.msra.mxu0 %v734
      %2821 = vmatpush.msra.mxu0 %v733
      %2822 = vmatmul.f32.gmra.mxu0 %v2804
      %v2823 = vpop.f32.mrf.mxu0
      %v2824 = vadd.f32 %v875, %v2823
      %2825 = vdwg.mxu0
      %vm2826 = vcmp.gt.f32.partialorder %v2684, 0.5
      %v2827 = vsel %vm2826, 1, 0
      %2828 = vset.pattern.permute.xlu0 8
      %2829 = vperm.xlu0 %2828, %v2827
      %v2830 = vpop.permute.xlu0 %2829
      %vm2831 = vcmp.eq.s32.totalorder %v2830, 1
      %v2832 = vsel %vm2831, %v2824, %v2682
      %v2833 = vld [vmem:[#allocation2] sm:$0xf]
      %v2834 = vld [vmem:[#allocation3] sm:$0xf]
      %v2835 = vld [vmem:[%s9] sm:$0xff]
      %v2836 = vld [vmem:[%s9 + $0x8] sm:$0xff]
      %v2837 = vld [vmem:[%s9 + $0x10] sm:$0xff]
      %v2838 = vld [vmem:[%s9 + $0x18] sm:$0xff]
      %v2839 = vld [vmem:[%s10] sm:$0xff]
      %v2840 = vld [vmem:[%s10 + $0x8] sm:$0xff]
      %v2841 = vld [vmem:[%s10 + $0x10] sm:$0xff]
      %v2842 = vld [vmem:[%s10 + $0x18] sm:$0xff]
      %v2844 = vsel %vm785, %v2833, 0
      %2846 = vmatpush.msra.mxu0 0.0
      %2847 = vmatpush.msra.mxu0 0.0
      %2848 = vmatpush.msra.mxu0 0.0
      %2849 = vmatpush.msra.mxu0 0.0
      %2850 = vmatpush.msra.mxu0 0.0
      %2851 = vmatpush.msra.mxu0 0.0
      %2852 = vmatpush.msra.mxu0 0.0
      %2853 = vmatpush.msra.mxu0 0.0
      %2854 = vmatpush.msra.mxu0 0.0
      %2855 = vmatpush.msra.mxu0 0.0
      %2856 = vmatpush.msra.mxu0 0.0
      %2857 = vmatpush.msra.mxu0 0.0
      %2858 = vmatpush.msra.mxu0 %v2842
      %2859 = vmatpush.msra.mxu0 %v2841
      %2860 = vmatpush.msra.mxu0 %v2840
      %2861 = vmatpush.msra.mxu0 %v2839
      %2862 = vmatmul.f32.gmra.mxu0 %v2844
      %v2863 = vpop.f32.mrf.mxu0
      %v2864 = vadd.f32 0.0, %v2863
      %2865 = vdwg.mxu0
      %v2867 = vsel %vm785, %v2832, 0
      %2869 = vmatpush.msra.mxu0 0.0
      %2870 = vmatpush.msra.mxu0 0.0
      %2871 = vmatpush.msra.mxu0 0.0
      %2872 = vmatpush.msra.mxu0 0.0
      %2873 = vmatpush.msra.mxu0 0.0
      %2874 = vmatpush.msra.mxu0 0.0
      %2875 = vmatpush.msra.mxu0 0.0
      %2876 = vmatpush.msra.mxu0 0.0
      %2877 = vmatpush.msra.mxu0 0.0
      %2878 = vmatpush.msra.mxu0 0.0
      %2879 = vmatpush.msra.mxu0 0.0
      %2880 = vmatpush.msra.mxu0 0.0
      %2881 = vmatpush.msra.mxu0 %v2838
      %2882 = vmatpush.msra.mxu0 %v2837
      %2883 = vmatpush.msra.mxu0 %v2836
      %2884 = vmatpush.msra.mxu0 %v2835
      %2885 = vmatmul.f32.gmra.mxu0 %v2867
      %v2886 = vpop.f32.mrf.mxu0
      %v2887 = vadd.f32 %v2864, %v2886
      %2888 = vdwg.mxu0
      %v2889 = vld [vmem:[%s11] sm:$0x1]
      %v2891 = vperm.slane %v2889, 0
      %v2893 = vadd.f32 %v2887, %v2891
      %v2894 = vxor.u32 %v2893, 2147483648
      %v2895 = vmul.f32 %v2894, 1.442695
      %v2896 = vpow.pop %v2895
      %v2897 = vadd.f32 %v2896, 1.0
      %v2898 = vrcp.pop %v2897
      %v2899 = vmul.f32 %v2897, %v2898
      %v2900 = vsub.f32 1.0, %v2899
      %v2901 = vmul.f32 %v2898, %v2900
      %v2902 = vadd.f32 %v2898, %v2901
      %vm2903 = vweird.f32 %v2897
      %vm2904 = vweird.f32 %v2898
      %vm2905 = vmor %vm2903, %vm2904
      %v2906 = vsel %vm2905, %v2898, %v2902
      %v2907 = vand.u32 2147483647, %v2897
      %vm2908 = vcmp.eq.f32.partialorder %v2907, 8.507059e+37
      %v2909 = vand.u32 %v2897, 2147483648
      %v2910 = vor.u32 1.1754944e-38, %v2909
      %v2911 = vsel %vm2908, %v2910, %v2906
      %v2912 = vmul.f32 1.0, %v2911
      %v2913 = vtanh.pop %v2893
      %2915 = vrot.lane.b32.xlu0 %v2834, 32
      %v2916 = vpop.permute.xlu0 %2915
      %v2918 = vmul.f32 %v2912, %v2916
      %2920 = vrot.lane.b32.xlu0 %v2913, 32
      %v2921 = vpop.permute.xlu0 %2920
      %v2923 = vmul.f32 %v2912, %v2921
      %2925 = vrot.lane.b32.xlu0 %v2923, 32
      %v2926 = vpop.permute.xlu0 %2925
      %v2928 = vadd.f32 %v2918, %v2926
      %v2929 = vtanh.pop %v2928
      %2931 = vrot.lane.b32.xlu0 %v2929, 32
      %v2932 = vpop.permute.xlu0 %2931
      %v2934 = vmul.f32 %v2912, %v2932
      %2936 = vrot.lane.b32.xlu0 %v2934, 64
      %v2937 = vpop.permute.xlu0 %2936
      %2939 = vst.msk [vmem:[#allocation2] sm:$0xf] %vm1013, %v2937
      %2941 = vrot.lane.b32.xlu0 %v2928, 96
      %v2942 = vpop.permute.xlu0 %2941
      %2944 = vst.msk [vmem:[#allocation3] sm:$0xf] %vm1013, %v2942
      %v2945 = vld [vmem:[%s1020] sm:$0xf]
      %v2946 = vld [vmem:[%s1022] sm:$0xf]
      %v2947 = vld [vmem:[%s1024] sm:$0xff]
      %v2948 = vld [vmem:[%s1024 + $0x8] sm:$0xff]
      %v2949 = vld [vmem:[%s1024 + $0x10] sm:$0xff]
      %v2950 = vld [vmem:[%s1024 + $0x18] sm:$0xff]
      %v2951 = vld [vmem:[%s1029] sm:$0xff]
      %v2952 = vld [vmem:[%s1029 + $0x8] sm:$0xff]
      %v2953 = vld [vmem:[%s1029 + $0x10] sm:$0xff]
      %v2954 = vld [vmem:[%s1029 + $0x18] sm:$0xff]
      %v2956 = vsel %vm785, %v2945, 0
      %2958 = vmatpush.msra.mxu0 0.0
      %2959 = vmatpush.msra.mxu0 0.0
      %2960 = vmatpush.msra.mxu0 0.0
      %2961 = vmatpush.msra.mxu0 0.0
      %2962 = vmatpush.msra.mxu0 0.0
      %2963 = vmatpush.msra.mxu0 0.0
      %2964 = vmatpush.msra.mxu0 0.0
      %2965 = vmatpush.msra.mxu0 0.0
      %2966 = vmatpush.msra.mxu0 0.0
      %2967 = vmatpush.msra.mxu0 0.0
      %2968 = vmatpush.msra.mxu0 0.0
      %2969 = vmatpush.msra.mxu0 0.0
      %2970 = vmatpush.msra.mxu0 %v2954
      %2971 = vmatpush.msra.mxu0 %v2953
      %2972 = vmatpush.msra.mxu0 %v2952
      %2973 = vmatpush.msra.mxu0 %v2951
      %2974 = vmatmul.f32.gmra.mxu0 %v2956
      %v2975 = vpop.f32.mrf.mxu0
      %v2976 = vadd.f32 0.0, %v2975
      %2977 = vdwg.mxu0
      %v2978 = vsel %vm785, %v2937, 0
      %2980 = vmatpush.msra.mxu0 0.0
      %2981 = vmatpush.msra.mxu0 0.0
      %2982 = vmatpush.msra.mxu0 0.0
      %2983 = vmatpush.msra.mxu0 0.0
      %2984 = vmatpush.msra.mxu0 0.0
      %2985 = vmatpush.msra.mxu0 0.0
      %2986 = vmatpush.msra.mxu0 0.0
      %2987 = vmatpush.msra.mxu0 0.0
      %2988 = vmatpush.msra.mxu0 0.0
      %2989 = vmatpush.msra.mxu0 0.0
      %2990 = vmatpush.msra.mxu0 0.0
      %2991 = vmatpush.msra.mxu0 0.0
      %2992 = vmatpush.msra.mxu0 %v2950
      %2993 = vmatpush.msra.mxu0 %v2949
      %2994 = vmatpush.msra.mxu0 %v2948
      %2995 = vmatpush.msra.mxu0 %v2947
      %2996 = vmatmul.f32.gmra.mxu0 %v2978
      %v2997 = vpop.f32.mrf.mxu0
      %v2998 = vadd.f32 %v2976, %v2997
      %2999 = vdwg.mxu0
      %v3000 = vld [vmem:[%s1079] sm:$0x1]
      %v3002 = vperm.slane %v3000, 0
      %v3004 = vadd.f32 %v2998, %v3002
      %v3005 = vxor.u32 %v3004, 2147483648
      %v3006 = vmul.f32 %v3005, 1.442695
      %v3007 = vpow.pop %v3006
      %v3008 = vadd.f32 %v3007, 1.0
      %v3009 = vrcp.pop %v3008
      %v3010 = vmul.f32 %v3008, %v3009
      %v3011 = vsub.f32 1.0, %v3010
      %v3012 = vmul.f32 %v3009, %v3011
      %v3013 = vadd.f32 %v3009, %v3012
      %vm3014 = vweird.f32 %v3008
      %vm3015 = vweird.f32 %v3009
      %vm3016 = vmor %vm3014, %vm3015
      %v3017 = vsel %vm3016, %v3009, %v3013
      %v3018 = vand.u32 2147483647, %v3008
      %vm3019 = vcmp.eq.f32.partialorder %v3018, 8.507059e+37
      %v3020 = vand.u32 %v3008, 2147483648
      %v3021 = vor.u32 1.1754944e-38, %v3020
      %v3022 = vsel %vm3019, %v3021, %v3017
      %v3023 = vmul.f32 1.0, %v3022
      %v3024 = vtanh.pop %v3004
      %3026 = vrot.lane.b32.xlu0 %v2946, 32
      %v3027 = vpop.permute.xlu0 %3026
      %v3029 = vmul.f32 %v3023, %v3027
      %3031 = vrot.lane.b32.xlu0 %v3024, 32
      %v3032 = vpop.permute.xlu0 %3031
      %v3034 = vmul.f32 %v3023, %v3032
      %3036 = vrot.lane.b32.xlu0 %v3034, 32
      %v3037 = vpop.permute.xlu0 %3036
      %v3039 = vadd.f32 %v3029, %v3037
      %v3040 = vtanh.pop %v3039
      %3042 = vrot.lane.b32.xlu0 %v3040, 32
      %v3043 = vpop.permute.xlu0 %3042
      %v3045 = vmul.f32 %v3023, %v3043
      %3047 = vrot.lane.b32.xlu0 %v3045, 64
      %v3048 = vpop.permute.xlu0 %3047
      %3050 = vst.msk [vmem:[%s1020] sm:$0xf] %vm1013, %v3048
      %3052 = vrot.lane.b32.xlu0 %v3039, 96
      %v3053 = vpop.permute.xlu0 %3052
      %3055 = vst.msk [vmem:[%s1022] sm:$0xf] %vm1013, %v3053
      %v3057 = vsel %vm785, %v2685, 0
      %v3060 = vsel %vm785, %v2686, 0
      %v3063 = vsel %vm785, %v2687, 0
      %v3066 = vsel %vm785, %v2688, 0
      %3068 = vmatpush.msra.mxu0 0.0
      %3069 = vmatpush.msra.mxu0 0.0
      %3070 = vmatpush.msra.mxu0 0.0
      %3071 = vmatpush.msra.mxu0 0.0
      %3072 = vmatpush.msra.mxu0 0.0
      %3073 = vmatpush.msra.mxu0 0.0
      %3074 = vmatpush.msra.mxu0 0.0
      %3075 = vmatpush.msra.mxu0 0.0
      %3076 = vmatpush.msra.mxu0 0.0
      %3077 = vmatpush.msra.mxu0 0.0
      %3078 = vmatpush.msra.mxu0 0.0
      %3079 = vmatpush.msra.mxu0 0.0
      %3080 = vmatpush.msra.mxu0 %v741
      %3081 = vmatpush.msra.mxu0 %v740
      %3082 = vmatpush.msra.mxu0 %v739
      %3083 = vmatpush.msra.mxu0 %v738
      %3084 = vmatmul.f32.gmra.mxu0 %v3057
      %v3085 = vpop.f32.mrf.mxu0
      %v3086 = vadd.f32 0.0, %v3085
      %3087 = vmatmul.f32.gmra.mxu0 %v3060
      %v3088 = vpop.f32.mrf.mxu0
      %v3089 = vadd.f32 0.0, %v3088
      %3090 = vmatmul.f32.gmra.mxu0 %v3063
      %v3091 = vpop.f32.mrf.mxu0
      %v3092 = vadd.f32 0.0, %v3091
      %3093 = vmatmul.f32.gmra.mxu0 %v3066
      %v3094 = vpop.f32.mrf.mxu0
      %v3095 = vadd.f32 0.0, %v3094
      %3096 = vdwg.mxu0
      %v3097 = vsel %vm785, %v3048, 0
      %3099 = vmatpush.msra.mxu0 0.0
      %3100 = vmatpush.msra.mxu0 0.0
      %3101 = vmatpush.msra.mxu0 0.0
      %3102 = vmatpush.msra.mxu0 0.0
      %3103 = vmatpush.msra.mxu0 0.0
      %3104 = vmatpush.msra.mxu0 0.0
      %3105 = vmatpush.msra.mxu0 0.0
      %3106 = vmatpush.msra.mxu0 0.0
      %3107 = vmatpush.msra.mxu0 0.0
      %3108 = vmatpush.msra.mxu0 0.0
      %3109 = vmatpush.msra.mxu0 0.0
      %3110 = vmatpush.msra.mxu0 0.0
      %3111 = vmatpush.msra.mxu0 %v745
      %3112 = vmatpush.msra.mxu0 %v744
      %3113 = vmatpush.msra.mxu0 %v743
      %3114 = vmatpush.msra.mxu0 %v742
      %3115 = vmatmul.f32.gmra.mxu0 %v3097
      %v3116 = vpop.f32.mrf.mxu0
      %v3117 = vadd.f32 0.0, %v3116
      %3118 = vdwg.mxu0
      %v3120 = vrot.slane %v3117, 1
      %v3121 = vrot.slane %v3117, 2
      %v3122 = vrot.slane %v3117, 3
      %v3123 = vperm.slane %v3117, 0
      %v3124 = vperm.slane %v3120, 0
      %v3125 = vperm.slane %v3121, 0
      %v3126 = vperm.slane %v3122, 0
      %v3131 = vadd.f32 %v3086, %v3123
      %v3132 = vadd.f32 %v3089, %v3124
      %v3133 = vadd.f32 %v3092, %v3125
      %v3134 = vadd.f32 %v3095, %v3126
      %v3135 = vadd.f32 %v3131, %v1216
      %v3136 = vadd.f32 %v3132, %v1216
      %v3137 = vadd.f32 %v3133, %v1216
      %v3138 = vadd.f32 %v3134, %v1216
      %v3139 = vtanh.pop %v3135
      %v3140 = vtanh.pop %v3136
      %v3141 = vtanh.pop %v3137
      %v3142 = vtanh.pop %v3138
      %v3143 = vxor.u32 %v3135, 2147483648
      %v3144 = vxor.u32 %v3136, 2147483648
      %v3145 = vxor.u32 %v3137, 2147483648
      %v3146 = vxor.u32 %v3138, 2147483648
      %v3147 = vmul.f32 %v3143, 1.442695
      %v3148 = vpow.pop %v3147
      %v3149 = vmul.f32 %v3144, 1.442695
      %v3150 = vpow.pop %v3149
      %v3151 = vmul.f32 %v3145, 1.442695
      %v3152 = vpow.pop %v3151
      %v3153 = vmul.f32 %v3146, 1.442695
      %v3154 = vpow.pop %v3153
      %v3155 = vadd.f32 %v3148, 1.0
      %v3156 = vadd.f32 %v3150, 1.0
      %v3157 = vadd.f32 %v3152, 1.0
      %v3158 = vadd.f32 %v3154, 1.0
      %v3159 = vrcp.pop %v3155
      %v3160 = vmul.f32 %v3155, %v3159
      %v3161 = vsub.f32 1.0, %v3160
      %v3162 = vmul.f32 %v3159, %v3161
      %v3163 = vadd.f32 %v3159, %v3162
      %vm3164 = vweird.f32 %v3155
      %vm3165 = vweird.f32 %v3159
      %vm3166 = vmor %vm3164, %vm3165
      %v3167 = vsel %vm3166, %v3159, %v3163
      %v3168 = vand.u32 2147483647, %v3155
      %vm3169 = vcmp.eq.f32.partialorder %v3168, 8.507059e+37
      %v3170 = vand.u32 %v3155, 2147483648
      %v3171 = vor.u32 1.1754944e-38, %v3170
      %v3172 = vsel %vm3169, %v3171, %v3167
      %v3173 = vmul.f32 1.0, %v3172
      %v3174 = vrcp.pop %v3156
      %v3175 = vmul.f32 %v3156, %v3174
      %v3176 = vsub.f32 1.0, %v3175
      %v3177 = vmul.f32 %v3174, %v3176
      %v3178 = vadd.f32 %v3174, %v3177
      %vm3179 = vweird.f32 %v3156
      %vm3180 = vweird.f32 %v3174
      %vm3181 = vmor %vm3179, %vm3180
      %v3182 = vsel %vm3181, %v3174, %v3178
      %v3183 = vand.u32 2147483647, %v3156
      %vm3184 = vcmp.eq.f32.partialorder %v3183, 8.507059e+37
      %v3185 = vand.u32 %v3156, 2147483648
      %v3186 = vor.u32 1.1754944e-38, %v3185
      %v3187 = vsel %vm3184, %v3186, %v3182
      %v3188 = vmul.f32 1.0, %v3187
      %v3189 = vrcp.pop %v3157
      %v3190 = vmul.f32 %v3157, %v3189
      %v3191 = vsub.f32 1.0, %v3190
      %v3192 = vmul.f32 %v3189, %v3191
      %v3193 = vadd.f32 %v3189, %v3192
      %vm3194 = vweird.f32 %v3157
      %vm3195 = vweird.f32 %v3189
      %vm3196 = vmor %vm3194, %vm3195
      %v3197 = vsel %vm3196, %v3189, %v3193
      %v3198 = vand.u32 2147483647, %v3157
      %vm3199 = vcmp.eq.f32.partialorder %v3198, 8.507059e+37
      %v3200 = vand.u32 %v3157, 2147483648
      %v3201 = vor.u32 1.1754944e-38, %v3200
      %v3202 = vsel %vm3199, %v3201, %v3197
      %v3203 = vmul.f32 1.0, %v3202
      %v3204 = vrcp.pop %v3158
      %v3205 = vmul.f32 %v3158, %v3204
      %v3206 = vsub.f32 1.0, %v3205
      %v3207 = vmul.f32 %v3204, %v3206
      %v3208 = vadd.f32 %v3204, %v3207
      %vm3209 = vweird.f32 %v3158
      %vm3210 = vweird.f32 %v3204
      %vm3211 = vmor %vm3209, %vm3210
      %v3212 = vsel %vm3211, %v3204, %v3208
      %v3213 = vand.u32 2147483647, %v3158
      %vm3214 = vcmp.eq.f32.partialorder %v3213, 8.507059e+37
      %v3215 = vand.u32 %v3158, 2147483648
      %v3216 = vor.u32 1.1754944e-38, %v3215
      %v3217 = vsel %vm3214, %v3216, %v3212
      %v3218 = vmul.f32 1.0, %v3217
      %v3219 = vsub.f32 1.0, %v3173
      %v3220 = vsub.f32 1.0, %v3188
      %v3221 = vsub.f32 1.0, %v3203
      %v3222 = vsub.f32 1.0, %v3218
      %3224 = vset.pattern.permute.xlu0 32
      %3225 = vperm.xlu0 %3224, %v3219
      %v3226 = vpop.permute.xlu0 %3225
      %3229 = vset.pattern.permute.xlu0 32
      %3230 = vperm.xlu0 %3229, %v3220
      %v3231 = vpop.permute.xlu0 %3230
      %3234 = vset.pattern.permute.xlu0 32
      %3235 = vperm.xlu0 %3234, %v3221
      %v3236 = vpop.permute.xlu0 %3235
      %3239 = vset.pattern.permute.xlu0 32
      %3240 = vperm.xlu0 %3239, %v3222
      %v3241 = vpop.permute.xlu0 %3240
      %v3243 = vmul.f32 %v2685, %v3226
      %v3244 = vmul.f32 %v2686, %v3231
      %v3245 = vmul.f32 %v2687, %v3236
      %v3246 = vmul.f32 %v2688, %v3241
      %3248 = vset.pattern.permute.xlu0 32
      %3249 = vperm.xlu0 %3248, %v3173
      %v3250 = vpop.permute.xlu0 %3249
      %3253 = vset.pattern.permute.xlu0 32
      %3254 = vperm.xlu0 %3253, %v3188
      %v3255 = vpop.permute.xlu0 %3254
      %3258 = vset.pattern.permute.xlu0 32
      %3259 = vperm.xlu0 %3258, %v3203
      %v3260 = vpop.permute.xlu0 %3259
      %3263 = vset.pattern.permute.xlu0 32
      %3264 = vperm.xlu0 %3263, %v3218
      %v3265 = vpop.permute.xlu0 %3264
      %v3267 = vmul.f32 %v3250, %v3139
      %v3268 = vmul.f32 %v3255, %v3140
      %v3269 = vmul.f32 %v3260, %v3141
      %v3270 = vmul.f32 %v3265, %v3142
      %v3271 = vadd.f32 %v3243, %v3267
      %v3272 = vadd.f32 %v3244, %v3268
      %v3273 = vadd.f32 %v3245, %v3269
      %v3274 = vadd.f32 %v3246, %v3270
      %v3275 = vlaneseq
      %v3276 = vshrl.u32 %v3275, 7
      %v3277 = vadd.s32 %v3276, 9
      %3278 = vset.pattern.permute.xlu0 %v3277
      %3279 = vperm.xlu0 %3278, %v2689
      %v3280 = vpop.permute.xlu0 %3279
      %v3281 = vlaneseq
      %v3282 = vshrl.u32 %v3281, 7
      %v3283 = vadd.s32 %v3282, 9
      %3284 = vset.pattern.permute.xlu0 %v3283
      %3285 = vperm.xlu0 %3284, %v2696
      %v3286 = vpop.permute.xlu0 %3285
      %v3287 = vlaneseq
      %v3288 = vshrl.u32 %v3287, 7
      %v3289 = vadd.s32 %v3288, 9
      %3290 = vset.pattern.permute.xlu0 %v3289
      %3291 = vperm.xlu0 %3290, %v2703
      %v3292 = vpop.permute.xlu0 %3291
      %v3293 = vlaneseq
      %v3294 = vshrl.u32 %v3293, 7
      %v3295 = vadd.s32 %v3294, 9
      %3296 = vset.pattern.permute.xlu0 %v3295
      %3297 = vperm.xlu0 %3296, %v2710
      %v3298 = vpop.permute.xlu0 %3297
      %vm3299 = vcmp.gt.f32.partialorder %v3280, 0.5
      %vm3300 = vcmp.gt.f32.partialorder %v3286, 0.5
      %vm3301 = vcmp.gt.f32.partialorder %v3292, 0.5
      %vm3302 = vcmp.gt.f32.partialorder %v3298, 0.5
      %v3303 = vsel %vm3299, 1, 0
      %v3304 = vsel %vm3300, 1, 0
      %v3305 = vsel %vm3301, 1, 0
      %v3306 = vsel %vm3302, 1, 0
      %vm3307 = vcmp.eq.s32.totalorder %v3303, 1
      %vm3308 = vcmp.eq.s32.totalorder %v3304, 1
      %vm3309 = vcmp.eq.s32.totalorder %v3305, 1
      %vm3310 = vcmp.eq.s32.totalorder %v3306, 1
      %v3311 = vsel %vm3307, 0.0, %v3271
      %v3312 = vsel %vm3308, 0.0, %v3272
      %v3313 = vsel %vm3309, 0.0, %v3273
      %v3314 = vsel %vm3310, 0.0, %v3274
      %3315 = vst.msk [vmem:[#allocation4] sm:$0xff] %vm785, %v3311
      %3316 = vst.msk [vmem:[#allocation4 + $0x8] sm:$0xff] %vm785, %v3312
      %3317 = vst.msk [vmem:[#allocation4 + $0x10] sm:$0xff] %vm785, %v3313
      %3318 = vst.msk [vmem:[#allocation4 + $0x18] sm:$0xff] %vm785, %v3314
      %3319 = vst.msk [vmem:[#allocation5 + $0xc] sm:$0xf] %vm1013, %v3048
      %s3320 = scalar_lea.vmem %s677, 16
      %v3321 = vld [vmem:[%s3320] sm:$0xf]
      %s3322 = scalar_lea.vmem %s686, 16
      %v3323 = vld [vmem:[%s3322] sm:$0xf]
      %v3324 = vld [vmem:[#allocation4] sm:$0xff]
      %v3325 = vld [vmem:[#allocation4 + $0x8] sm:$0xff]
      %v3326 = vld [vmem:[#allocation4 + $0x10] sm:$0xff]
      %v3327 = vld [vmem:[#allocation4 + $0x18] sm:$0xff]
      %v3328 = vperm.slane %v3323, 0
      %v3329 = vlaneseq
      %v3330 = vshrl.u32 %v3329, 7
      %3332 = vset.pattern.permute.xlu0 %v3330
      %3333 = vperm.xlu0 %3332, %v3328
      %v3334 = vpop.permute.xlu0 %3333
      %v3335 = vperm.slane %v3323, 1
      %v3336 = vlaneseq
      %v3337 = vshrl.u32 %v3336, 7
      %3339 = vset.pattern.permute.xlu0 %v3337
      %3340 = vperm.xlu0 %3339, %v3335
      %v3341 = vpop.permute.xlu0 %3340
      %v3342 = vperm.slane %v3323, 2
      %v3343 = vlaneseq
      %v3344 = vshrl.u32 %v3343, 7
      %3346 = vset.pattern.permute.xlu0 %v3344
      %3347 = vperm.xlu0 %3346, %v3342
      %v3348 = vpop.permute.xlu0 %3347
      %v3349 = vperm.slane %v3323, 3
      %v3350 = vlaneseq
      %v3351 = vshrl.u32 %v3350, 7
      %3353 = vset.pattern.permute.xlu0 %v3351
      %3354 = vperm.xlu0 %3353, %v3349
      %v3355 = vpop.permute.xlu0 %3354
      %v3356 = vmul.f32 %v3334, %v3324
      %v3357 = vmul.f32 %v3341, %v3325
      %v3358 = vmul.f32 %v3348, %v3326
      %v3359 = vmul.f32 %v3355, %v3327
      %v3360 = vsel %vm785, %v3356, 0.0
      %v3361 = vrot.slane %v3360, 4
      %v3362 = vadd.f32 %v3360, %v3361
      %v3363 = vrot.slane %v3362, 2
      %v3364 = vadd.f32 %v3362, %v3363
      %v3365 = vrot.slane %v3364, 1
      %v3366 = vadd.f32 %v3364, %v3365
      %v3367 = vsel %vm785, %v3357, 0.0
      %v3368 = vrot.slane %v3367, 4
      %v3369 = vadd.f32 %v3367, %v3368
      %v3370 = vrot.slane %v3369, 2
      %v3371 = vadd.f32 %v3369, %v3370
      %v3372 = vrot.slane %v3371, 1
      %v3373 = vadd.f32 %v3371, %v3372
      %v3374 = vsel %vm785, %v3358, 0.0
      %v3375 = vrot.slane %v3374, 4
      %v3376 = vadd.f32 %v3374, %v3375
      %v3377 = vrot.slane %v3376, 2
      %v3378 = vadd.f32 %v3376, %v3377
      %v3379 = vrot.slane %v3378, 1
      %v3380 = vadd.f32 %v3378, %v3379
      %v3381 = vsel %vm785, %v3359, 0.0
      %v3382 = vrot.slane %v3381, 4
      %v3383 = vadd.f32 %v3381, %v3382
      %v3384 = vrot.slane %v3383, 2
      %v3385 = vadd.f32 %v3383, %v3384
      %v3386 = vrot.slane %v3385, 1
      %v3387 = vadd.f32 %v3385, %v3386
      %v3389 = vsel %vm785, %v3321, 0
      %3391 = vmatpush.msra.mxu0 0.0
      %3392 = vmatpush.msra.mxu0 0.0
      %3393 = vmatpush.msra.mxu0 0.0
      %3394 = vmatpush.msra.mxu0 0.0
      %3395 = vmatpush.msra.mxu0 0.0
      %3396 = vmatpush.msra.mxu0 0.0
      %3397 = vmatpush.msra.mxu0 0.0
      %3398 = vmatpush.msra.mxu0 0.0
      %3399 = vmatpush.msra.mxu0 0.0
      %3400 = vmatpush.msra.mxu0 0.0
      %3401 = vmatpush.msra.mxu0 0.0
      %3402 = vmatpush.msra.mxu0 0.0
      %3403 = vmatpush.msra.mxu0 %v731
      %3404 = vmatpush.msra.mxu0 %v730
      %3405 = vmatpush.msra.mxu0 %v729
      %3406 = vmatpush.msra.mxu0 %v728
      %3407 = vmatmul.f32.gmra.mxu0 %v3389
      %v3408 = vpop.f32.mrf.mxu0
      %v3409 = vadd.f32 0.0, %v3408
      %3410 = vdwg.mxu0
      %v3415 = vsel %vm841, %v3373, %v3366
      %v3416 = vsel %vm843, %v3380, %v3415
      %v3417 = vsel %vm845, %v3387, %v3416
      %v3418 = vsel %vm785, %v3417, 0
      %3420 = vmatpush.msra.mxu0 0.0
      %3421 = vmatpush.msra.mxu0 0.0
      %3422 = vmatpush.msra.mxu0 0.0
      %3423 = vmatpush.msra.mxu0 0.0
      %3424 = vmatpush.msra.mxu0 0.0
      %3425 = vmatpush.msra.mxu0 0.0
      %3426 = vmatpush.msra.mxu0 0.0
      %3427 = vmatpush.msra.mxu0 0.0
      %3428 = vmatpush.msra.mxu0 0.0
      %3429 = vmatpush.msra.mxu0 0.0
      %3430 = vmatpush.msra.mxu0 0.0
      %3431 = vmatpush.msra.mxu0 0.0
      %3432 = vmatpush.msra.mxu0 %v727
      %3433 = vmatpush.msra.mxu0 %v726
      %3434 = vmatpush.msra.mxu0 %v725
      %3435 = vmatpush.msra.mxu0 %v724
      %3436 = vmatmul.f32.gmra.mxu0 %v3418
      %v3437 = vpop.f32.mrf.mxu0
      %v3438 = vadd.f32 %v3409, %v3437
      %3439 = vdwg.mxu0
      %v3440 = vadd.f32 %v3438, %v870
      %v3441 = vmax.f32 %v3440, 0.0
      %v3443 = vsel %vm785, %v3441, 0
      %3445 = vmatpush.msra.mxu0 0.0
      %3446 = vmatpush.msra.mxu0 0.0
      %3447 = vmatpush.msra.mxu0 0.0
      %3448 = vmatpush.msra.mxu0 0.0
      %3449 = vmatpush.msra.mxu0 0.0
      %3450 = vmatpush.msra.mxu0 0.0
      %3451 = vmatpush.msra.mxu0 0.0
      %3452 = vmatpush.msra.mxu0 0.0
      %3453 = vmatpush.msra.mxu0 0.0
      %3454 = vmatpush.msra.mxu0 0.0
      %3455 = vmatpush.msra.mxu0 0.0
      %3456 = vmatpush.msra.mxu0 0.0
      %3457 = vmatpush.msra.mxu0 %v736
      %3458 = vmatpush.msra.mxu0 %v735
      %3459 = vmatpush.msra.mxu0 %v734
      %3460 = vmatpush.msra.mxu0 %v733
      %3461 = vmatmul.f32.gmra.mxu0 %v3443
      %v3462 = vpop.f32.mrf.mxu0
      %v3463 = vadd.f32 %v875, %v3462
      %3464 = vdwg.mxu0
      %vm3465 = vcmp.gt.f32.partialorder %v3323, 0.5
      %v3466 = vsel %vm3465, 1, 0
      %3467 = vset.pattern.permute.xlu0 8
      %3468 = vperm.xlu0 %3467, %v3466
      %v3469 = vpop.permute.xlu0 %3468
      %vm3470 = vcmp.eq.s32.totalorder %v3469, 1
      %v3471 = vsel %vm3470, %v3463, %v3321
      %v3472 = vld [vmem:[#allocation2] sm:$0xf]
      %v3473 = vld [vmem:[#allocation3] sm:$0xf]
      %v3474 = vld [vmem:[%s9] sm:$0xff]
      %v3475 = vld [vmem:[%s9 + $0x8] sm:$0xff]
      %v3476 = vld [vmem:[%s9 + $0x10] sm:$0xff]
      %v3477 = vld [vmem:[%s9 + $0x18] sm:$0xff]
      %v3478 = vld [vmem:[%s10] sm:$0xff]
      %v3479 = vld [vmem:[%s10 + $0x8] sm:$0xff]
      %v3480 = vld [vmem:[%s10 + $0x10] sm:$0xff]
      %v3481 = vld [vmem:[%s10 + $0x18] sm:$0xff]
      %v3483 = vsel %vm785, %v3472, 0
      %3485 = vmatpush.msra.mxu0 0.0
      %3486 = vmatpush.msra.mxu0 0.0
      %3487 = vmatpush.msra.mxu0 0.0
      %3488 = vmatpush.msra.mxu0 0.0
      %3489 = vmatpush.msra.mxu0 0.0
      %3490 = vmatpush.msra.mxu0 0.0
      %3491 = vmatpush.msra.mxu0 0.0
      %3492 = vmatpush.msra.mxu0 0.0
      %3493 = vmatpush.msra.mxu0 0.0
      %3494 = vmatpush.msra.mxu0 0.0
      %3495 = vmatpush.msra.mxu0 0.0
      %3496 = vmatpush.msra.mxu0 0.0
      %3497 = vmatpush.msra.mxu0 %v3481
      %3498 = vmatpush.msra.mxu0 %v3480
      %3499 = vmatpush.msra.mxu0 %v3479
      %3500 = vmatpush.msra.mxu0 %v3478
      %3501 = vmatmul.f32.gmra.mxu0 %v3483
      %v3502 = vpop.f32.mrf.mxu0
      %v3503 = vadd.f32 0.0, %v3502
      %3504 = vdwg.mxu0
      %v3506 = vsel %vm785, %v3471, 0
      %3508 = vmatpush.msra.mxu0 0.0
      %3509 = vmatpush.msra.mxu0 0.0
      %3510 = vmatpush.msra.mxu0 0.0
      %3511 = vmatpush.msra.mxu0 0.0
      %3512 = vmatpush.msra.mxu0 0.0
      %3513 = vmatpush.msra.mxu0 0.0
      %3514 = vmatpush.msra.mxu0 0.0
      %3515 = vmatpush.msra.mxu0 0.0
      %3516 = vmatpush.msra.mxu0 0.0
      %3517 = vmatpush.msra.mxu0 0.0
      %3518 = vmatpush.msra.mxu0 0.0
      %3519 = vmatpush.msra.mxu0 0.0
      %3520 = vmatpush.msra.mxu0 %v3477
      %3521 = vmatpush.msra.mxu0 %v3476
      %3522 = vmatpush.msra.mxu0 %v3475
      %3523 = vmatpush.msra.mxu0 %v3474
      %3524 = vmatmul.f32.gmra.mxu0 %v3506
      %v3525 = vpop.f32.mrf.mxu0
      %v3526 = vadd.f32 %v3503, %v3525
      %3527 = vdwg.mxu0
      %v3528 = vld [vmem:[%s11] sm:$0x1]
      %v3530 = vperm.slane %v3528, 0
      %v3532 = vadd.f32 %v3526, %v3530
      %v3533 = vxor.u32 %v3532, 2147483648
      %v3534 = vmul.f32 %v3533, 1.442695
      %v3535 = vpow.pop %v3534
      %v3536 = vadd.f32 %v3535, 1.0
      %v3537 = vrcp.pop %v3536
      %v3538 = vmul.f32 %v3536, %v3537
      %v3539 = vsub.f32 1.0, %v3538
      %v3540 = vmul.f32 %v3537, %v3539
      %v3541 = vadd.f32 %v3537, %v3540
      %vm3542 = vweird.f32 %v3536
      %vm3543 = vweird.f32 %v3537
      %vm3544 = vmor %vm3542, %vm3543
      %v3545 = vsel %vm3544, %v3537, %v3541
      %v3546 = vand.u32 2147483647, %v3536
      %vm3547 = vcmp.eq.f32.partialorder %v3546, 8.507059e+37
      %v3548 = vand.u32 %v3536, 2147483648
      %v3549 = vor.u32 1.1754944e-38, %v3548
      %v3550 = vsel %vm3547, %v3549, %v3545
      %v3551 = vmul.f32 1.0, %v3550
      %v3552 = vtanh.pop %v3532
      %3554 = vrot.lane.b32.xlu0 %v3473, 32
      %v3555 = vpop.permute.xlu0 %3554
      %v3557 = vmul.f32 %v3551, %v3555
      %3559 = vrot.lane.b32.xlu0 %v3552, 32
      %v3560 = vpop.permute.xlu0 %3559
      %v3562 = vmul.f32 %v3551, %v3560
      %3564 = vrot.lane.b32.xlu0 %v3562, 32
      %v3565 = vpop.permute.xlu0 %3564
      %v3567 = vadd.f32 %v3557, %v3565
      %v3568 = vtanh.pop %v3567
      %3570 = vrot.lane.b32.xlu0 %v3568, 32
      %v3571 = vpop.permute.xlu0 %3570
      %v3573 = vmul.f32 %v3551, %v3571
      %3575 = vrot.lane.b32.xlu0 %v3573, 64
      %v3576 = vpop.permute.xlu0 %3575
      %3578 = vst.msk [vmem:[#allocation2] sm:$0xf] %vm1013, %v3576
      %3580 = vrot.lane.b32.xlu0 %v3567, 96
      %v3581 = vpop.permute.xlu0 %3580
      %3583 = vst.msk [vmem:[#allocation3] sm:$0xf] %vm1013, %v3581
      %v3584 = vld [vmem:[%s1020] sm:$0xf]
      %v3585 = vld [vmem:[%s1022] sm:$0xf]
      %v3586 = vld [vmem:[%s1024] sm:$0xff]
      %v3587 = vld [vmem:[%s1024 + $0x8] sm:$0xff]
      %v3588 = vld [vmem:[%s1024 + $0x10] sm:$0xff]
      %v3589 = vld [vmem:[%s1024 + $0x18] sm:$0xff]
      %v3590 = vld [vmem:[%s1029] sm:$0xff]
      %v3591 = vld [vmem:[%s1029 + $0x8] sm:$0xff]
      %v3592 = vld [vmem:[%s1029 + $0x10] sm:$0xff]
      %v3593 = vld [vmem:[%s1029 + $0x18] sm:$0xff]
      %v3595 = vsel %vm785, %v3584, 0
      %3597 = vmatpush.msra.mxu0 0.0
      %3598 = vmatpush.msra.mxu0 0.0
      %3599 = vmatpush.msra.mxu0 0.0
      %3600 = vmatpush.msra.mxu0 0.0
      %3601 = vmatpush.msra.mxu0 0.0
      %3602 = vmatpush.msra.mxu0 0.0
      %3603 = vmatpush.msra.mxu0 0.0
      %3604 = vmatpush.msra.mxu0 0.0
      %3605 = vmatpush.msra.mxu0 0.0
      %3606 = vmatpush.msra.mxu0 0.0
      %3607 = vmatpush.msra.mxu0 0.0
      %3608 = vmatpush.msra.mxu0 0.0
      %3609 = vmatpush.msra.mxu0 %v3593
      %3610 = vmatpush.msra.mxu0 %v3592
      %3611 = vmatpush.msra.mxu0 %v3591
      %3612 = vmatpush.msra.mxu0 %v3590
      %3613 = vmatmul.f32.gmra.mxu0 %v3595
      %v3614 = vpop.f32.mrf.mxu0
      %v3615 = vadd.f32 0.0, %v3614
      %3616 = vdwg.mxu0
      %v3617 = vsel %vm785, %v3576, 0
      %3619 = vmatpush.msra.mxu0 0.0
      %3620 = vmatpush.msra.mxu0 0.0
      %3621 = vmatpush.msra.mxu0 0.0
      %3622 = vmatpush.msra.mxu0 0.0
      %3623 = vmatpush.msra.mxu0 0.0
      %3624 = vmatpush.msra.mxu0 0.0
      %3625 = vmatpush.msra.mxu0 0.0
      %3626 = vmatpush.msra.mxu0 0.0
      %3627 = vmatpush.msra.mxu0 0.0
      %3628 = vmatpush.msra.mxu0 0.0
      %3629 = vmatpush.msra.mxu0 0.0
      %3630 = vmatpush.msra.mxu0 0.0
      %3631 = vmatpush.msra.mxu0 %v3589
      %3632 = vmatpush.msra.mxu0 %v3588
      %3633 = vmatpush.msra.mxu0 %v3587
      %3634 = vmatpush.msra.mxu0 %v3586
      %3635 = vmatmul.f32.gmra.mxu0 %v3617
      %v3636 = vpop.f32.mrf.mxu0
      %v3637 = vadd.f32 %v3615, %v3636
      %3638 = vdwg.mxu0
      %v3639 = vld [vmem:[%s1079] sm:$0x1]
      %v3641 = vperm.slane %v3639, 0
      %v3643 = vadd.f32 %v3637, %v3641
      %v3644 = vxor.u32 %v3643, 2147483648
      %v3645 = vmul.f32 %v3644, 1.442695
      %v3646 = vpow.pop %v3645
      %v3647 = vadd.f32 %v3646, 1.0
      %v3648 = vrcp.pop %v3647
      %v3649 = vmul.f32 %v3647, %v3648
      %v3650 = vsub.f32 1.0, %v3649
      %v3651 = vmul.f32 %v3648, %v3650
      %v3652 = vadd.f32 %v3648, %v3651
      %vm3653 = vweird.f32 %v3647
      %vm3654 = vweird.f32 %v3648
      %vm3655 = vmor %vm3653, %vm3654
      %v3656 = vsel %vm3655, %v3648, %v3652
      %v3657 = vand.u32 2147483647, %v3647
      %vm3658 = vcmp.eq.f32.partialorder %v3657, 8.507059e+37
      %v3659 = vand.u32 %v3647, 2147483648
      %v3660 = vor.u32 1.1754944e-38, %v3659
      %v3661 = vsel %vm3658, %v3660, %v3656
      %v3662 = vmul.f32 1.0, %v3661
      %v3663 = vtanh.pop %v3643
      %3665 = vrot.lane.b32.xlu0 %v3585, 32
      %v3666 = vpop.permute.xlu0 %3665
      %v3668 = vmul.f32 %v3662, %v3666
      %3670 = vrot.lane.b32.xlu0 %v3663, 32
      %v3671 = vpop.permute.xlu0 %3670
      %v3673 = vmul.f32 %v3662, %v3671
      %3675 = vrot.lane.b32.xlu0 %v3673, 32
      %v3676 = vpop.permute.xlu0 %3675
      %v3678 = vadd.f32 %v3668, %v3676
      %v3679 = vtanh.pop %v3678
      %3681 = vrot.lane.b32.xlu0 %v3679, 32
      %v3682 = vpop.permute.xlu0 %3681
      %v3684 = vmul.f32 %v3662, %v3682
      %3686 = vrot.lane.b32.xlu0 %v3684, 64
      %v3687 = vpop.permute.xlu0 %3686
      %3689 = vst.msk [vmem:[%s1020] sm:$0xf] %vm1013, %v3687
      %3691 = vrot.lane.b32.xlu0 %v3678, 96
      %v3692 = vpop.permute.xlu0 %3691
      %3694 = vst.msk [vmem:[%s1022] sm:$0xf] %vm1013, %v3692
      %v3696 = vsel %vm785, %v3324, 0
      %v3699 = vsel %vm785, %v3325, 0
      %v3702 = vsel %vm785, %v3326, 0
      %v3705 = vsel %vm785, %v3327, 0
      %3707 = vmatpush.msra.mxu0 0.0
      %3708 = vmatpush.msra.mxu0 0.0
      %3709 = vmatpush.msra.mxu0 0.0
      %3710 = vmatpush.msra.mxu0 0.0
      %3711 = vmatpush.msra.mxu0 0.0
      %3712 = vmatpush.msra.mxu0 0.0
      %3713 = vmatpush.msra.mxu0 0.0
      %3714 = vmatpush.msra.mxu0 0.0
      %3715 = vmatpush.msra.mxu0 0.0
      %3716 = vmatpush.msra.mxu0 0.0
      %3717 = vmatpush.msra.mxu0 0.0
      %3718 = vmatpush.msra.mxu0 0.0
      %3719 = vmatpush.msra.mxu0 %v741
      %3720 = vmatpush.msra.mxu0 %v740
      %3721 = vmatpush.msra.mxu0 %v739
      %3722 = vmatpush.msra.mxu0 %v738
      %3723 = vmatmul.f32.gmra.mxu0 %v3696
      %v3724 = vpop.f32.mrf.mxu0
      %v3725 = vadd.f32 0.0, %v3724
      %3726 = vmatmul.f32.gmra.mxu0 %v3699
      %v3727 = vpop.f32.mrf.mxu0
      %v3728 = vadd.f32 0.0, %v3727
      %3729 = vmatmul.f32.gmra.mxu0 %v3702
      %v3730 = vpop.f32.mrf.mxu0
      %v3731 = vadd.f32 0.0, %v3730
      %3732 = vmatmul.f32.gmra.mxu0 %v3705
      %v3733 = vpop.f32.mrf.mxu0
      %v3734 = vadd.f32 0.0, %v3733
      %3735 = vdwg.mxu0
      %v3736 = vsel %vm785, %v3687, 0
      %3738 = vmatpush.msra.mxu0 0.0
      %3739 = vmatpush.msra.mxu0 0.0
      %3740 = vmatpush.msra.mxu0 0.0
      %3741 = vmatpush.msra.mxu0 0.0
      %3742 = vmatpush.msra.mxu0 0.0
      %3743 = vmatpush.msra.mxu0 0.0
      %3744 = vmatpush.msra.mxu0 0.0
      %3745 = vmatpush.msra.mxu0 0.0
      %3746 = vmatpush.msra.mxu0 0.0
      %3747 = vmatpush.msra.mxu0 0.0
      %3748 = vmatpush.msra.mxu0 0.0
      %3749 = vmatpush.msra.mxu0 0.0
      %3750 = vmatpush.msra.mxu0 %v745
      %3751 = vmatpush.msra.mxu0 %v744
      %3752 = vmatpush.msra.mxu0 %v743
      %3753 = vmatpush.msra.mxu0 %v742
      %3754 = vmatmul.f32.gmra.mxu0 %v3736
      %v3755 = vpop.f32.mrf.mxu0
      %v3756 = vadd.f32 0.0, %v3755
      %3757 = vdwg.mxu0
      %v3759 = vrot.slane %v3756, 1
      %v3760 = vrot.slane %v3756, 2
      %v3761 = vrot.slane %v3756, 3
      %v3762 = vperm.slane %v3756, 0
      %v3763 = vperm.slane %v3759, 0
      %v3764 = vperm.slane %v3760, 0
      %v3765 = vperm.slane %v3761, 0
      %v3770 = vadd.f32 %v3725, %v3762
      %v3771 = vadd.f32 %v3728, %v3763
      %v3772 = vadd.f32 %v3731, %v3764
      %v3773 = vadd.f32 %v3734, %v3765
      %v3774 = vadd.f32 %v3770, %v1216
      %v3775 = vadd.f32 %v3771, %v1216
      %v3776 = vadd.f32 %v3772, %v1216
      %v3777 = vadd.f32 %v3773, %v1216
      %v3778 = vtanh.pop %v3774
      %v3779 = vtanh.pop %v3775
      %v3780 = vtanh.pop %v3776
      %v3781 = vtanh.pop %v3777
      %v3782 = vxor.u32 %v3774, 2147483648
      %v3783 = vxor.u32 %v3775, 2147483648
      %v3784 = vxor.u32 %v3776, 2147483648
      %v3785 = vxor.u32 %v3777, 2147483648
      %v3786 = vmul.f32 %v3782, 1.442695
      %v3787 = vpow.pop %v3786
      %v3788 = vmul.f32 %v3783, 1.442695
      %v3789 = vpow.pop %v3788
      %v3790 = vmul.f32 %v3784, 1.442695
      %v3791 = vpow.pop %v3790
      %v3792 = vmul.f32 %v3785, 1.442695
      %v3793 = vpow.pop %v3792
      %v3794 = vadd.f32 %v3787, 1.0
      %v3795 = vadd.f32 %v3789, 1.0
      %v3796 = vadd.f32 %v3791, 1.0
      %v3797 = vadd.f32 %v3793, 1.0
      %v3798 = vrcp.pop %v3794
      %v3799 = vmul.f32 %v3794, %v3798
      %v3800 = vsub.f32 1.0, %v3799
      %v3801 = vmul.f32 %v3798, %v3800
      %v3802 = vadd.f32 %v3798, %v3801
      %vm3803 = vweird.f32 %v3794
      %vm3804 = vweird.f32 %v3798
      %vm3805 = vmor %vm3803, %vm3804
      %v3806 = vsel %vm3805, %v3798, %v3802
      %v3807 = vand.u32 2147483647, %v3794
      %vm3808 = vcmp.eq.f32.partialorder %v3807, 8.507059e+37
      %v3809 = vand.u32 %v3794, 2147483648
      %v3810 = vor.u32 1.1754944e-38, %v3809
      %v3811 = vsel %vm3808, %v3810, %v3806
      %v3812 = vmul.f32 1.0, %v3811
      %v3813 = vrcp.pop %v3795
      %v3814 = vmul.f32 %v3795, %v3813
      %v3815 = vsub.f32 1.0, %v3814
      %v3816 = vmul.f32 %v3813, %v3815
      %v3817 = vadd.f32 %v3813, %v3816
      %vm3818 = vweird.f32 %v3795
      %vm3819 = vweird.f32 %v3813
      %vm3820 = vmor %vm3818, %vm3819
      %v3821 = vsel %vm3820, %v3813, %v3817
      %v3822 = vand.u32 2147483647, %v3795
      %vm3823 = vcmp.eq.f32.partialorder %v3822, 8.507059e+37
      %v3824 = vand.u32 %v3795, 2147483648
      %v3825 = vor.u32 1.1754944e-38, %v3824
      %v3826 = vsel %vm3823, %v3825, %v3821
      %v3827 = vmul.f32 1.0, %v3826
      %v3828 = vrcp.pop %v3796
      %v3829 = vmul.f32 %v3796, %v3828
      %v3830 = vsub.f32 1.0, %v3829
      %v3831 = vmul.f32 %v3828, %v3830
      %v3832 = vadd.f32 %v3828, %v3831
      %vm3833 = vweird.f32 %v3796
      %vm3834 = vweird.f32 %v3828
      %vm3835 = vmor %vm3833, %vm3834
      %v3836 = vsel %vm3835, %v3828, %v3832
      %v3837 = vand.u32 2147483647, %v3796
      %vm3838 = vcmp.eq.f32.partialorder %v3837, 8.507059e+37
      %v3839 = vand.u32 %v3796, 2147483648
      %v3840 = vor.u32 1.1754944e-38, %v3839
      %v3841 = vsel %vm3838, %v3840, %v3836
      %v3842 = vmul.f32 1.0, %v3841
      %v3843 = vrcp.pop %v3797
      %v3844 = vmul.f32 %v3797, %v3843
      %v3845 = vsub.f32 1.0, %v3844
      %v3846 = vmul.f32 %v3843, %v3845
      %v3847 = vadd.f32 %v3843, %v3846
      %vm3848 = vweird.f32 %v3797
      %vm3849 = vweird.f32 %v3843
      %vm3850 = vmor %vm3848, %vm3849
      %v3851 = vsel %vm3850, %v3843, %v3847
      %v3852 = vand.u32 2147483647, %v3797
      %vm3853 = vcmp.eq.f32.partialorder %v3852, 8.507059e+37
      %v3854 = vand.u32 %v3797, 2147483648
      %v3855 = vor.u32 1.1754944e-38, %v3854
      %v3856 = vsel %vm3853, %v3855, %v3851
      %v3857 = vmul.f32 1.0, %v3856
      %v3858 = vsub.f32 1.0, %v3812
      %v3859 = vsub.f32 1.0, %v3827
      %v3860 = vsub.f32 1.0, %v3842
      %v3861 = vsub.f32 1.0, %v3857
      %3863 = vset.pattern.permute.xlu0 32
      %3864 = vperm.xlu0 %3863, %v3858
      %v3865 = vpop.permute.xlu0 %3864
      %3868 = vset.pattern.permute.xlu0 32
      %3869 = vperm.xlu0 %3868, %v3859
      %v3870 = vpop.permute.xlu0 %3869
      %3873 = vset.pattern.permute.xlu0 32
      %3874 = vperm.xlu0 %3873, %v3860
      %v3875 = vpop.permute.xlu0 %3874
      %3878 = vset.pattern.permute.xlu0 32
      %3879 = vperm.xlu0 %3878, %v3861
      %v3880 = vpop.permute.xlu0 %3879
      %v3882 = vmul.f32 %v3324, %v3865
      %v3883 = vmul.f32 %v3325, %v3870
      %v3884 = vmul.f32 %v3326, %v3875
      %v3885 = vmul.f32 %v3327, %v3880
      %3887 = vset.pattern.permute.xlu0 32
      %3888 = vperm.xlu0 %3887, %v3812
      %v3889 = vpop.permute.xlu0 %3888
      %3892 = vset.pattern.permute.xlu0 32
      %3893 = vperm.xlu0 %3892, %v3827
      %v3894 = vpop.permute.xlu0 %3893
      %3897 = vset.pattern.permute.xlu0 32
      %3898 = vperm.xlu0 %3897, %v3842
      %v3899 = vpop.permute.xlu0 %3898
      %3902 = vset.pattern.permute.xlu0 32
      %3903 = vperm.xlu0 %3902, %v3857
      %v3904 = vpop.permute.xlu0 %3903
      %v3906 = vmul.f32 %v3889, %v3778
      %v3907 = vmul.f32 %v3894, %v3779
      %v3908 = vmul.f32 %v3899, %v3780
      %v3909 = vmul.f32 %v3904, %v3781
      %v3910 = vadd.f32 %v3882, %v3906
      %v3911 = vadd.f32 %v3883, %v3907
      %v3912 = vadd.f32 %v3884, %v3908
      %v3913 = vadd.f32 %v3885, %v3909
      %v3914 = vlaneseq
      %v3915 = vshrl.u32 %v3914, 7
      %v3916 = vadd.s32 %v3915, 9
      %3917 = vset.pattern.permute.xlu0 %v3916
      %3918 = vperm.xlu0 %3917, %v3328
      %v3919 = vpop.permute.xlu0 %3918
      %v3920 = vlaneseq
      %v3921 = vshrl.u32 %v3920, 7
      %v3922 = vadd.s32 %v3921, 9
      %3923 = vset.pattern.permute.xlu0 %v3922
      %3924 = vperm.xlu0 %3923, %v3335
      %v3925 = vpop.permute.xlu0 %3924
      %v3926 = vlaneseq
      %v3927 = vshrl.u32 %v3926, 7
      %v3928 = vadd.s32 %v3927, 9
      %3929 = vset.pattern.permute.xlu0 %v3928
      %3930 = vperm.xlu0 %3929, %v3342
      %v3931 = vpop.permute.xlu0 %3930
      %v3932 = vlaneseq
      %v3933 = vshrl.u32 %v3932, 7
      %v3934 = vadd.s32 %v3933, 9
      %3935 = vset.pattern.permute.xlu0 %v3934
      %3936 = vperm.xlu0 %3935, %v3349
      %v3937 = vpop.permute.xlu0 %3936
      %vm3938 = vcmp.gt.f32.partialorder %v3919, 0.5
      %vm3939 = vcmp.gt.f32.partialorder %v3925, 0.5
      %vm3940 = vcmp.gt.f32.partialorder %v3931, 0.5
      %vm3941 = vcmp.gt.f32.partialorder %v3937, 0.5
      %v3942 = vsel %vm3938, 1, 0
      %v3943 = vsel %vm3939, 1, 0
      %v3944 = vsel %vm3940, 1, 0
      %v3945 = vsel %vm3941, 1, 0
      %vm3946 = vcmp.eq.s32.totalorder %v3942, 1
      %vm3947 = vcmp.eq.s32.totalorder %v3943, 1
      %vm3948 = vcmp.eq.s32.totalorder %v3944, 1
      %vm3949 = vcmp.eq.s32.totalorder %v3945, 1
      %v3950 = vsel %vm3946, 0.0, %v3910
      %v3951 = vsel %vm3947, 0.0, %v3911
      %v3952 = vsel %vm3948, 0.0, %v3912
      %v3953 = vsel %vm3949, 0.0, %v3913
      %3954 = vst.msk [vmem:[#allocation4] sm:$0xff] %vm785, %v3950
      %3955 = vst.msk [vmem:[#allocation4 + $0x8] sm:$0xff] %vm785, %v3951
      %3956 = vst.msk [vmem:[#allocation4 + $0x10] sm:$0xff] %vm785, %v3952
      %3957 = vst.msk [vmem:[#allocation4 + $0x18] sm:$0xff] %vm785, %v3953
      %3958 = vst.msk [vmem:[#allocation5 + $0x10] sm:$0xf] %vm1013, %v3687
      %s3959 = scalar_lea.vmem %s677, 20
      %v3960 = vld [vmem:[%s3959] sm:$0xf]
      %s3961 = scalar_lea.vmem %s686, 20
      %v3962 = vld [vmem:[%s3961] sm:$0xf]
      %v3963 = vld [vmem:[#allocation4] sm:$0xff]
      %v3964 = vld [vmem:[#allocation4 + $0x8] sm:$0xff]
      %v3965 = vld [vmem:[#allocation4 + $0x10] sm:$0xff]
      %v3966 = vld [vmem:[#allocation4 + $0x18] sm:$0xff]
      %v3967 = vperm.slane %v3962, 0
      %v3968 = vlaneseq
      %v3969 = vshrl.u32 %v3968, 7
      %3971 = vset.pattern.permute.xlu0 %v3969
      %3972 = vperm.xlu0 %3971, %v3967
      %v3973 = vpop.permute.xlu0 %3972
      %v3974 = vperm.slane %v3962, 1
      %v3975 = vlaneseq
      %v3976 = vshrl.u32 %v3975, 7
      %3978 = vset.pattern.permute.xlu0 %v3976
      %3979 = vperm.xlu0 %3978, %v3974
      %v3980 = vpop.permute.xlu0 %3979
      %v3981 = vperm.slane %v3962, 2
      %v3982 = vlaneseq
      %v3983 = vshrl.u32 %v3982, 7
      %3985 = vset.pattern.permute.xlu0 %v3983
      %3986 = vperm.xlu0 %3985, %v3981
      %v3987 = vpop.permute.xlu0 %3986
      %v3988 = vperm.slane %v3962, 3
      %v3989 = vlaneseq
      %v3990 = vshrl.u32 %v3989, 7
      %3992 = vset.pattern.permute.xlu0 %v3990
      %3993 = vperm.xlu0 %3992, %v3988
      %v3994 = vpop.permute.xlu0 %3993
      %v3995 = vmul.f32 %v3973, %v3963
      %v3996 = vmul.f32 %v3980, %v3964
      %v3997 = vmul.f32 %v3987, %v3965
      %v3998 = vmul.f32 %v3994, %v3966
      %v3999 = vsel %vm785, %v3995, 0.0
      %v4000 = vrot.slane %v3999, 4
      %v4001 = vadd.f32 %v3999, %v4000
      %v4002 = vrot.slane %v4001, 2
      %v4003 = vadd.f32 %v4001, %v4002
      %v4004 = vrot.slane %v4003, 1
      %v4005 = vadd.f32 %v4003, %v4004
      %v4006 = vsel %vm785, %v3996, 0.0
      %v4007 = vrot.slane %v4006, 4
      %v4008 = vadd.f32 %v4006, %v4007
      %v4009 = vrot.slane %v4008, 2
      %v4010 = vadd.f32 %v4008, %v4009
      %v4011 = vrot.slane %v4010, 1
      %v4012 = vadd.f32 %v4010, %v4011
      %v4013 = vsel %vm785, %v3997, 0.0
      %v4014 = vrot.slane %v4013, 4
      %v4015 = vadd.f32 %v4013, %v4014
      %v4016 = vrot.slane %v4015, 2
      %v4017 = vadd.f32 %v4015, %v4016
      %v4018 = vrot.slane %v4017, 1
      %v4019 = vadd.f32 %v4017, %v4018
      %v4020 = vsel %vm785, %v3998, 0.0
      %v4021 = vrot.slane %v4020, 4
      %v4022 = vadd.f32 %v4020, %v4021
      %v4023 = vrot.slane %v4022, 2
      %v4024 = vadd.f32 %v4022, %v4023
      %v4025 = vrot.slane %v4024, 1
      %v4026 = vadd.f32 %v4024, %v4025
      %v4028 = vsel %vm785, %v3960, 0
      %4030 = vmatpush.msra.mxu0 0.0
      %4031 = vmatpush.msra.mxu0 0.0
      %4032 = vmatpush.msra.mxu0 0.0
      %4033 = vmatpush.msra.mxu0 0.0
      %4034 = vmatpush.msra.mxu0 0.0
      %4035 = vmatpush.msra.mxu0 0.0
      %4036 = vmatpush.msra.mxu0 0.0
      %4037 = vmatpush.msra.mxu0 0.0
      %4038 = vmatpush.msra.mxu0 0.0
      %4039 = vmatpush.msra.mxu0 0.0
      %4040 = vmatpush.msra.mxu0 0.0
      %4041 = vmatpush.msra.mxu0 0.0
      %4042 = vmatpush.msra.mxu0 %v731
      %4043 = vmatpush.msra.mxu0 %v730
      %4044 = vmatpush.msra.mxu0 %v729
      %4045 = vmatpush.msra.mxu0 %v728
      %4046 = vmatmul.f32.gmra.mxu0 %v4028
      %v4047 = vpop.f32.mrf.mxu0
      %v4048 = vadd.f32 0.0, %v4047
      %4049 = vdwg.mxu0
      %v4054 = vsel %vm841, %v4012, %v4005
      %v4055 = vsel %vm843, %v4019, %v4054
      %v4056 = vsel %vm845, %v4026, %v4055
      %v4057 = vsel %vm785, %v4056, 0
      %4059 = vmatpush.msra.mxu0 0.0
      %4060 = vmatpush.msra.mxu0 0.0
      %4061 = vmatpush.msra.mxu0 0.0
      %4062 = vmatpush.msra.mxu0 0.0
      %4063 = vmatpush.msra.mxu0 0.0
      %4064 = vmatpush.msra.mxu0 0.0
      %4065 = vmatpush.msra.mxu0 0.0
      %4066 = vmatpush.msra.mxu0 0.0
      %4067 = vmatpush.msra.mxu0 0.0
      %4068 = vmatpush.msra.mxu0 0.0
      %4069 = vmatpush.msra.mxu0 0.0
      %4070 = vmatpush.msra.mxu0 0.0
      %4071 = vmatpush.msra.mxu0 %v727
      %4072 = vmatpush.msra.mxu0 %v726
      %4073 = vmatpush.msra.mxu0 %v725
      %4074 = vmatpush.msra.mxu0 %v724
      %4075 = vmatmul.f32.gmra.mxu0 %v4057
      %v4076 = vpop.f32.mrf.mxu0
      %v4077 = vadd.f32 %v4048, %v4076
      %4078 = vdwg.mxu0
      %v4079 = vadd.f32 %v4077, %v870
      %v4080 = vmax.f32 %v4079, 0.0
      %v4082 = vsel %vm785, %v4080, 0
      %4084 = vmatpush.msra.mxu0 0.0
      %4085 = vmatpush.msra.mxu0 0.0
      %4086 = vmatpush.msra.mxu0 0.0
      %4087 = vmatpush.msra.mxu0 0.0
      %4088 = vmatpush.msra.mxu0 0.0
      %4089 = vmatpush.msra.mxu0 0.0
      %4090 = vmatpush.msra.mxu0 0.0
      %4091 = vmatpush.msra.mxu0 0.0
      %4092 = vmatpush.msra.mxu0 0.0
      %4093 = vmatpush.msra.mxu0 0.0
      %4094 = vmatpush.msra.mxu0 0.0
      %4095 = vmatpush.msra.mxu0 0.0
      %4096 = vmatpush.msra.mxu0 %v736
      %4097 = vmatpush.msra.mxu0 %v735
      %4098 = vmatpush.msra.mxu0 %v734
      %4099 = vmatpush.msra.mxu0 %v733
      %4100 = vmatmul.f32.gmra.mxu0 %v4082
      %v4101 = vpop.f32.mrf.mxu0
      %v4102 = vadd.f32 %v875, %v4101
      %4103 = vdwg.mxu0
      %vm4104 = vcmp.gt.f32.partialorder %v3962, 0.5
      %v4105 = vsel %vm4104, 1, 0
      %4106 = vset.pattern.permute.xlu0 8
      %4107 = vperm.xlu0 %4106, %v4105
      %v4108 = vpop.permute.xlu0 %4107
      %vm4109 = vcmp.eq.s32.totalorder %v4108, 1
      %v4110 = vsel %vm4109, %v4102, %v3960
      %v4111 = vld [vmem:[#allocation2] sm:$0xf]
      %v4112 = vld [vmem:[#allocation3] sm:$0xf]
      %v4113 = vld [vmem:[%s9] sm:$0xff]
      %v4114 = vld [vmem:[%s9 + $0x8] sm:$0xff]
      %v4115 = vld [vmem:[%s9 + $0x10] sm:$0xff]
      %v4116 = vld [vmem:[%s9 + $0x18] sm:$0xff]
      %v4117 = vld [vmem:[%s10] sm:$0xff]
      %v4118 = vld [vmem:[%s10 + $0x8] sm:$0xff]
      %v4119 = vld [vmem:[%s10 + $0x10] sm:$0xff]
      %v4120 = vld [vmem:[%s10 + $0x18] sm:$0xff]
      %v4122 = vsel %vm785, %v4111, 0
      %4124 = vmatpush.msra.mxu0 0.0
      %4125 = vmatpush.msra.mxu0 0.0
      %4126 = vmatpush.msra.mxu0 0.0
      %4127 = vmatpush.msra.mxu0 0.0
      %4128 = vmatpush.msra.mxu0 0.0
      %4129 = vmatpush.msra.mxu0 0.0
      %4130 = vmatpush.msra.mxu0 0.0
      %4131 = vmatpush.msra.mxu0 0.0
      %4132 = vmatpush.msra.mxu0 0.0
      %4133 = vmatpush.msra.mxu0 0.0
      %4134 = vmatpush.msra.mxu0 0.0
      %4135 = vmatpush.msra.mxu0 0.0
      %4136 = vmatpush.msra.mxu0 %v4120
      %4137 = vmatpush.msra.mxu0 %v4119
      %4138 = vmatpush.msra.mxu0 %v4118
      %4139 = vmatpush.msra.mxu0 %v4117
      %4140 = vmatmul.f32.gmra.mxu0 %v4122
      %v4141 = vpop.f32.mrf.mxu0
      %v4142 = vadd.f32 0.0, %v4141
      %4143 = vdwg.mxu0
      %v4145 = vsel %vm785, %v4110, 0
      %4147 = vmatpush.msra.mxu0 0.0
      %4148 = vmatpush.msra.mxu0 0.0
      %4149 = vmatpush.msra.mxu0 0.0
      %4150 = vmatpush.msra.mxu0 0.0
      %4151 = vmatpush.msra.mxu0 0.0
      %4152 = vmatpush.msra.mxu0 0.0
      %4153 = vmatpush.msra.mxu0 0.0
      %4154 = vmatpush.msra.mxu0 0.0
      %4155 = vmatpush.msra.mxu0 0.0
      %4156 = vmatpush.msra.mxu0 0.0
      %4157 = vmatpush.msra.mxu0 0.0
      %4158 = vmatpush.msra.mxu0 0.0
      %4159 = vmatpush.msra.mxu0 %v4116
      %4160 = vmatpush.msra.mxu0 %v4115
      %4161 = vmatpush.msra.mxu0 %v4114
      %4162 = vmatpush.msra.mxu0 %v4113
      %4163 = vmatmul.f32.gmra.mxu0 %v4145
      %v4164 = vpop.f32.mrf.mxu0
      %v4165 = vadd.f32 %v4142, %v4164
      %4166 = vdwg.mxu0
      %v4167 = vld [vmem:[%s11] sm:$0x1]
      %v4169 = vperm.slane %v4167, 0
      %v4171 = vadd.f32 %v4165, %v4169
      %v4172 = vxor.u32 %v4171, 2147483648
      %v4173 = vmul.f32 %v4172, 1.442695
      %v4174 = vpow.pop %v4173
      %v4175 = vadd.f32 %v4174, 1.0
      %v4176 = vrcp.pop %v4175
      %v4177 = vmul.f32 %v4175, %v4176
      %v4178 = vsub.f32 1.0, %v4177
      %v4179 = vmul.f32 %v4176, %v4178
      %v4180 = vadd.f32 %v4176, %v4179
      %vm4181 = vweird.f32 %v4175
      %vm4182 = vweird.f32 %v4176
      %vm4183 = vmor %vm4181, %vm4182
      %v4184 = vsel %vm4183, %v4176, %v4180
      %v4185 = vand.u32 2147483647, %v4175
      %vm4186 = vcmp.eq.f32.partialorder %v4185, 8.507059e+37
      %v4187 = vand.u32 %v4175, 2147483648
      %v4188 = vor.u32 1.1754944e-38, %v4187
      %v4189 = vsel %vm4186, %v4188, %v4184
      %v4190 = vmul.f32 1.0, %v4189
      %v4191 = vtanh.pop %v4171
      %4193 = vrot.lane.b32.xlu0 %v4112, 32
      %v4194 = vpop.permute.xlu0 %4193
      %v4196 = vmul.f32 %v4190, %v4194
      %4198 = vrot.lane.b32.xlu0 %v4191, 32
      %v4199 = vpop.permute.xlu0 %4198
      %v4201 = vmul.f32 %v4190, %v4199
      %4203 = vrot.lane.b32.xlu0 %v4201, 32
      %v4204 = vpop.permute.xlu0 %4203
      %v4206 = vadd.f32 %v4196, %v4204
      %v4207 = vtanh.pop %v4206
      %4209 = vrot.lane.b32.xlu0 %v4207, 32
      %v4210 = vpop.permute.xlu0 %4209
      %v4212 = vmul.f32 %v4190, %v4210
      %4214 = vrot.lane.b32.xlu0 %v4212, 64
      %v4215 = vpop.permute.xlu0 %4214
      %4217 = vst.msk [vmem:[#allocation2] sm:$0xf] %vm1013, %v4215
      %4219 = vrot.lane.b32.xlu0 %v4206, 96
      %v4220 = vpop.permute.xlu0 %4219
      %4222 = vst.msk [vmem:[#allocation3] sm:$0xf] %vm1013, %v4220
      %v4223 = vld [vmem:[%s1020] sm:$0xf]
      %v4224 = vld [vmem:[%s1022] sm:$0xf]
      %v4225 = vld [vmem:[%s1024] sm:$0xff]
      %v4226 = vld [vmem:[%s1024 + $0x8] sm:$0xff]
      %v4227 = vld [vmem:[%s1024 + $0x10] sm:$0xff]
      %v4228 = vld [vmem:[%s1024 + $0x18] sm:$0xff]
      %v4229 = vld [vmem:[%s1029] sm:$0xff]
      %v4230 = vld [vmem:[%s1029 + $0x8] sm:$0xff]
      %v4231 = vld [vmem:[%s1029 + $0x10] sm:$0xff]
      %v4232 = vld [vmem:[%s1029 + $0x18] sm:$0xff]
      %v4234 = vsel %vm785, %v4223, 0
      %4236 = vmatpush.msra.mxu0 0.0
      %4237 = vmatpush.msra.mxu0 0.0
      %4238 = vmatpush.msra.mxu0 0.0
      %4239 = vmatpush.msra.mxu0 0.0
      %4240 = vmatpush.msra.mxu0 0.0
      %4241 = vmatpush.msra.mxu0 0.0
      %4242 = vmatpush.msra.mxu0 0.0
      %4243 = vmatpush.msra.mxu0 0.0
      %4244 = vmatpush.msra.mxu0 0.0
      %4245 = vmatpush.msra.mxu0 0.0
      %4246 = vmatpush.msra.mxu0 0.0
      %4247 = vmatpush.msra.mxu0 0.0
      %4248 = vmatpush.msra.mxu0 %v4232
      %4249 = vmatpush.msra.mxu0 %v4231
      %4250 = vmatpush.msra.mxu0 %v4230
      %4251 = vmatpush.msra.mxu0 %v4229
      %4252 = vmatmul.f32.gmra.mxu0 %v4234
      %v4253 = vpop.f32.mrf.mxu0
      %v4254 = vadd.f32 0.0, %v4253
      %4255 = vdwg.mxu0
      %v4256 = vsel %vm785, %v4215, 0
      %4258 = vmatpush.msra.mxu0 0.0
      %4259 = vmatpush.msra.mxu0 0.0
      %4260 = vmatpush.msra.mxu0 0.0
      %4261 = vmatpush.msra.mxu0 0.0
      %4262 = vmatpush.msra.mxu0 0.0
      %4263 = vmatpush.msra.mxu0 0.0
      %4264 = vmatpush.msra.mxu0 0.0
      %4265 = vmatpush.msra.mxu0 0.0
      %4266 = vmatpush.msra.mxu0 0.0
      %4267 = vmatpush.msra.mxu0 0.0
      %4268 = vmatpush.msra.mxu0 0.0
      %4269 = vmatpush.msra.mxu0 0.0
      %4270 = vmatpush.msra.mxu0 %v4228
      %4271 = vmatpush.msra.mxu0 %v4227
      %4272 = vmatpush.msra.mxu0 %v4226
      %4273 = vmatpush.msra.mxu0 %v4225
      %4274 = vmatmul.f32.gmra.mxu0 %v4256
      %v4275 = vpop.f32.mrf.mxu0
      %v4276 = vadd.f32 %v4254, %v4275
      %4277 = vdwg.mxu0
      %v4278 = vld [vmem:[%s1079] sm:$0x1]
      %v4280 = vperm.slane %v4278, 0
      %v4282 = vadd.f32 %v4276, %v4280
      %v4283 = vxor.u32 %v4282, 2147483648
      %v4284 = vmul.f32 %v4283, 1.442695
      %v4285 = vpow.pop %v4284
      %v4286 = vadd.f32 %v4285, 1.0
      %v4287 = vrcp.pop %v4286
      %v4288 = vmul.f32 %v4286, %v4287
      %v4289 = vsub.f32 1.0, %v4288
      %v4290 = vmul.f32 %v4287, %v4289
      %v4291 = vadd.f32 %v4287, %v4290
      %vm4292 = vweird.f32 %v4286
      %vm4293 = vweird.f32 %v4287
      %vm4294 = vmor %vm4292, %vm4293
      %v4295 = vsel %vm4294, %v4287, %v4291
      %v4296 = vand.u32 2147483647, %v4286
      %vm4297 = vcmp.eq.f32.partialorder %v4296, 8.507059e+37
      %v4298 = vand.u32 %v4286, 2147483648
      %v4299 = vor.u32 1.1754944e-38, %v4298
      %v4300 = vsel %vm4297, %v4299, %v4295
      %v4301 = vmul.f32 1.0, %v4300
      %v4302 = vtanh.pop %v4282
      %4304 = vrot.lane.b32.xlu0 %v4224, 32
      %v4305 = vpop.permute.xlu0 %4304
      %v4307 = vmul.f32 %v4301, %v4305
      %4309 = vrot.lane.b32.xlu0 %v4302, 32
      %v4310 = vpop.permute.xlu0 %4309
      %v4312 = vmul.f32 %v4301, %v4310
      %4314 = vrot.lane.b32.xlu0 %v4312, 32
      %v4315 = vpop.permute.xlu0 %4314
      %v4317 = vadd.f32 %v4307, %v4315
      %v4318 = vtanh.pop %v4317
      %4320 = vrot.lane.b32.xlu0 %v4318, 32
      %v4321 = vpop.permute.xlu0 %4320
      %v4323 = vmul.f32 %v4301, %v4321
      %4325 = vrot.lane.b32.xlu0 %v4323, 64
      %v4326 = vpop.permute.xlu0 %4325
      %4328 = vst.msk [vmem:[%s1020] sm:$0xf] %vm1013, %v4326
      %4330 = vrot.lane.b32.xlu0 %v4317, 96
      %v4331 = vpop.permute.xlu0 %4330
      %4333 = vst.msk [vmem:[%s1022] sm:$0xf] %vm1013, %v4331
      %v4335 = vsel %vm785, %v3963, 0
      %v4338 = vsel %vm785, %v3964, 0
      %v4341 = vsel %vm785, %v3965, 0
      %v4344 = vsel %vm785, %v3966, 0
      %4346 = vmatpush.msra.mxu0 0.0
      %4347 = vmatpush.msra.mxu0 0.0
      %4348 = vmatpush.msra.mxu0 0.0
      %4349 = vmatpush.msra.mxu0 0.0
      %4350 = vmatpush.msra.mxu0 0.0
      %4351 = vmatpush.msra.mxu0 0.0
      %4352 = vmatpush.msra.mxu0 0.0
      %4353 = vmatpush.msra.mxu0 0.0
      %4354 = vmatpush.msra.mxu0 0.0
      %4355 = vmatpush.msra.mxu0 0.0
      %4356 = vmatpush.msra.mxu0 0.0
      %4357 = vmatpush.msra.mxu0 0.0
      %4358 = vmatpush.msra.mxu0 %v741
      %4359 = vmatpush.msra.mxu0 %v740
      %4360 = vmatpush.msra.mxu0 %v739
      %4361 = vmatpush.msra.mxu0 %v738
      %4362 = vmatmul.f32.gmra.mxu0 %v4335
      %v4363 = vpop.f32.mrf.mxu0
      %v4364 = vadd.f32 0.0, %v4363
      %4365 = vmatmul.f32.gmra.mxu0 %v4338
      %v4366 = vpop.f32.mrf.mxu0
      %v4367 = vadd.f32 0.0, %v4366
      %4368 = vmatmul.f32.gmra.mxu0 %v4341
      %v4369 = vpop.f32.mrf.mxu0
      %v4370 = vadd.f32 0.0, %v4369
      %4371 = vmatmul.f32.gmra.mxu0 %v4344
      %v4372 = vpop.f32.mrf.mxu0
      %v4373 = vadd.f32 0.0, %v4372
      %4374 = vdwg.mxu0
      %v4375 = vsel %vm785, %v4326, 0
      %4377 = vmatpush.msra.mxu0 0.0
      %4378 = vmatpush.msra.mxu0 0.0
      %4379 = vmatpush.msra.mxu0 0.0
      %4380 = vmatpush.msra.mxu0 0.0
      %4381 = vmatpush.msra.mxu0 0.0
      %4382 = vmatpush.msra.mxu0 0.0
      %4383 = vmatpush.msra.mxu0 0.0
      %4384 = vmatpush.msra.mxu0 0.0
      %4385 = vmatpush.msra.mxu0 0.0
      %4386 = vmatpush.msra.mxu0 0.0
      %4387 = vmatpush.msra.mxu0 0.0
      %4388 = vmatpush.msra.mxu0 0.0
      %4389 = vmatpush.msra.mxu0 %v745
      %4390 = vmatpush.msra.mxu0 %v744
      %4391 = vmatpush.msra.mxu0 %v743
      %4392 = vmatpush.msra.mxu0 %v742
      %4393 = vmatmul.f32.gmra.mxu0 %v4375
      %v4394 = vpop.f32.mrf.mxu0
      %v4395 = vadd.f32 0.0, %v4394
      %4396 = vdwg.mxu0
      %v4398 = vrot.slane %v4395, 1
      %v4399 = vrot.slane %v4395, 2
      %v4400 = vrot.slane %v4395, 3
      %v4401 = vperm.slane %v4395, 0
      %v4402 = vperm.slane %v4398, 0
      %v4403 = vperm.slane %v4399, 0
      %v4404 = vperm.slane %v4400, 0
      %v4409 = vadd.f32 %v4364, %v4401
      %v4410 = vadd.f32 %v4367, %v4402
      %v4411 = vadd.f32 %v4370, %v4403
      %v4412 = vadd.f32 %v4373, %v4404
      %v4413 = vadd.f32 %v4409, %v1216
      %v4414 = vadd.f32 %v4410, %v1216
      %v4415 = vadd.f32 %v4411, %v1216
      %v4416 = vadd.f32 %v4412, %v1216
      %v4417 = vtanh.pop %v4413
      %v4418 = vtanh.pop %v4414
      %v4419 = vtanh.pop %v4415
      %v4420 = vtanh.pop %v4416
      %v4421 = vxor.u32 %v4413, 2147483648
      %v4422 = vxor.u32 %v4414, 2147483648
      %v4423 = vxor.u32 %v4415, 2147483648
      %v4424 = vxor.u32 %v4416, 2147483648
      %v4425 = vmul.f32 %v4421, 1.442695
      %v4426 = vpow.pop %v4425
      %v4427 = vmul.f32 %v4422, 1.442695
      %v4428 = vpow.pop %v4427
      %v4429 = vmul.f32 %v4423, 1.442695
      %v4430 = vpow.pop %v4429
      %v4431 = vmul.f32 %v4424, 1.442695
      %v4432 = vpow.pop %v4431
      %v4433 = vadd.f32 %v4426, 1.0
      %v4434 = vadd.f32 %v4428, 1.0
      %v4435 = vadd.f32 %v4430, 1.0
      %v4436 = vadd.f32 %v4432, 1.0
      %v4437 = vrcp.pop %v4433
      %v4438 = vmul.f32 %v4433, %v4437
      %v4439 = vsub.f32 1.0, %v4438
      %v4440 = vmul.f32 %v4437, %v4439
      %v4441 = vadd.f32 %v4437, %v4440
      %vm4442 = vweird.f32 %v4433
      %vm4443 = vweird.f32 %v4437
      %vm4444 = vmor %vm4442, %vm4443
      %v4445 = vsel %vm4444, %v4437, %v4441
      %v4446 = vand.u32 2147483647, %v4433
      %vm4447 = vcmp.eq.f32.partialorder %v4446, 8.507059e+37
      %v4448 = vand.u32 %v4433, 2147483648
      %v4449 = vor.u32 1.1754944e-38, %v4448
      %v4450 = vsel %vm4447, %v4449, %v4445
      %v4451 = vmul.f32 1.0, %v4450
      %v4452 = vrcp.pop %v4434
      %v4453 = vmul.f32 %v4434, %v4452
      %v4454 = vsub.f32 1.0, %v4453
      %v4455 = vmul.f32 %v4452, %v4454
      %v4456 = vadd.f32 %v4452, %v4455
      %vm4457 = vweird.f32 %v4434
      %vm4458 = vweird.f32 %v4452
      %vm4459 = vmor %vm4457, %vm4458
      %v4460 = vsel %vm4459, %v4452, %v4456
      %v4461 = vand.u32 2147483647, %v4434
      %vm4462 = vcmp.eq.f32.partialorder %v4461, 8.507059e+37
      %v4463 = vand.u32 %v4434, 2147483648
      %v4464 = vor.u32 1.1754944e-38, %v4463
      %v4465 = vsel %vm4462, %v4464, %v4460
      %v4466 = vmul.f32 1.0, %v4465
      %v4467 = vrcp.pop %v4435
      %v4468 = vmul.f32 %v4435, %v4467
      %v4469 = vsub.f32 1.0, %v4468
      %v4470 = vmul.f32 %v4467, %v4469
      %v4471 = vadd.f32 %v4467, %v4470
      %vm4472 = vweird.f32 %v4435
      %vm4473 = vweird.f32 %v4467
      %vm4474 = vmor %vm4472, %vm4473
      %v4475 = vsel %vm4474, %v4467, %v4471
      %v4476 = vand.u32 2147483647, %v4435
      %vm4477 = vcmp.eq.f32.partialorder %v4476, 8.507059e+37
      %v4478 = vand.u32 %v4435, 2147483648
      %v4479 = vor.u32 1.1754944e-38, %v4478
      %v4480 = vsel %vm4477, %v4479, %v4475
      %v4481 = vmul.f32 1.0, %v4480
      %v4482 = vrcp.pop %v4436
      %v4483 = vmul.f32 %v4436, %v4482
      %v4484 = vsub.f32 1.0, %v4483
      %v4485 = vmul.f32 %v4482, %v4484
      %v4486 = vadd.f32 %v4482, %v4485
      %vm4487 = vweird.f32 %v4436
      %vm4488 = vweird.f32 %v4482
      %vm4489 = vmor %vm4487, %vm4488
      %v4490 = vsel %vm4489, %v4482, %v4486
      %v4491 = vand.u32 2147483647, %v4436
      %vm4492 = vcmp.eq.f32.partialorder %v4491, 8.507059e+37
      %v4493 = vand.u32 %v4436, 2147483648
      %v4494 = vor.u32 1.1754944e-38, %v4493
      %v4495 = vsel %vm4492, %v4494, %v4490
      %v4496 = vmul.f32 1.0, %v4495
      %v4497 = vsub.f32 1.0, %v4451
      %v4498 = vsub.f32 1.0, %v4466
      %v4499 = vsub.f32 1.0, %v4481
      %v4500 = vsub.f32 1.0, %v4496
      %4502 = vset.pattern.permute.xlu0 32
      %4503 = vperm.xlu0 %4502, %v4497
      %v4504 = vpop.permute.xlu0 %4503
      %4507 = vset.pattern.permute.xlu0 32
      %4508 = vperm.xlu0 %4507, %v4498
      %v4509 = vpop.permute.xlu0 %4508
      %4512 = vset.pattern.permute.xlu0 32
      %4513 = vperm.xlu0 %4512, %v4499
      %v4514 = vpop.permute.xlu0 %4513
      %4517 = vset.pattern.permute.xlu0 32
      %4518 = vperm.xlu0 %4517, %v4500
      %v4519 = vpop.permute.xlu0 %4518
      %v4521 = vmul.f32 %v3963, %v4504
      %v4522 = vmul.f32 %v3964, %v4509
      %v4523 = vmul.f32 %v3965, %v4514
      %v4524 = vmul.f32 %v3966, %v4519
      %4526 = vset.pattern.permute.xlu0 32
      %4527 = vperm.xlu0 %4526, %v4451
      %v4528 = vpop.permute.xlu0 %4527
      %4531 = vset.pattern.permute.xlu0 32
      %4532 = vperm.xlu0 %4531, %v4466
      %v4533 = vpop.permute.xlu0 %4532
      %4536 = vset.pattern.permute.xlu0 32
      %4537 = vperm.xlu0 %4536, %v4481
      %v4538 = vpop.permute.xlu0 %4537
      %4541 = vset.pattern.permute.xlu0 32
      %4542 = vperm.xlu0 %4541, %v4496
      %v4543 = vpop.permute.xlu0 %4542
      %v4545 = vmul.f32 %v4528, %v4417
      %v4546 = vmul.f32 %v4533, %v4418
      %v4547 = vmul.f32 %v4538, %v4419
      %v4548 = vmul.f32 %v4543, %v4420
      %v4549 = vadd.f32 %v4521, %v4545
      %v4550 = vadd.f32 %v4522, %v4546
      %v4551 = vadd.f32 %v4523, %v4547
      %v4552 = vadd.f32 %v4524, %v4548
      %v4553 = vlaneseq
      %v4554 = vshrl.u32 %v4553, 7
      %v4555 = vadd.s32 %v4554, 9
      %4556 = vset.pattern.permute.xlu0 %v4555
      %4557 = vperm.xlu0 %4556, %v3967
      %v4558 = vpop.permute.xlu0 %4557
      %v4559 = vlaneseq
      %v4560 = vshrl.u32 %v4559, 7
      %v4561 = vadd.s32 %v4560, 9
      %4562 = vset.pattern.permute.xlu0 %v4561
      %4563 = vperm.xlu0 %4562, %v3974
      %v4564 = vpop.permute.xlu0 %4563
      %v4565 = vlaneseq
      %v4566 = vshrl.u32 %v4565, 7
      %v4567 = vadd.s32 %v4566, 9
      %4568 = vset.pattern.permute.xlu0 %v4567
      %4569 = vperm.xlu0 %4568, %v3981
      %v4570 = vpop.permute.xlu0 %4569
      %v4571 = vlaneseq
      %v4572 = vshrl.u32 %v4571, 7
      %v4573 = vadd.s32 %v4572, 9
      %4574 = vset.pattern.permute.xlu0 %v4573
      %4575 = vperm.xlu0 %4574, %v3988
      %v4576 = vpop.permute.xlu0 %4575
      %vm4577 = vcmp.gt.f32.partialorder %v4558, 0.5
      %vm4578 = vcmp.gt.f32.partialorder %v4564, 0.5
      %vm4579 = vcmp.gt.f32.partialorder %v4570, 0.5
      %vm4580 = vcmp.gt.f32.partialorder %v4576, 0.5
      %v4581 = vsel %vm4577, 1, 0
      %v4582 = vsel %vm4578, 1, 0
      %v4583 = vsel %vm4579, 1, 0
      %v4584 = vsel %vm4580, 1, 0
      %vm4585 = vcmp.eq.s32.totalorder %v4581, 1
      %vm4586 = vcmp.eq.s32.totalorder %v4582, 1
      %vm4587 = vcmp.eq.s32.totalorder %v4583, 1
      %vm4588 = vcmp.eq.s32.totalorder %v4584, 1
      %v4589 = vsel %vm4585, 0.0, %v4549
      %v4590 = vsel %vm4586, 0.0, %v4550
      %v4591 = vsel %vm4587, 0.0, %v4551
      %v4592 = vsel %vm4588, 0.0, %v4552
      %4593 = vst.msk [vmem:[#allocation4] sm:$0xff] %vm785, %v4589
      %4594 = vst.msk [vmem:[#allocation4 + $0x8] sm:$0xff] %vm785, %v4590
      %4595 = vst.msk [vmem:[#allocation4 + $0x10] sm:$0xff] %vm785, %v4591
      %4596 = vst.msk [vmem:[#allocation4 + $0x18] sm:$0xff] %vm785, %v4592
      %4597 = vst.msk [vmem:[#allocation5 + $0x14] sm:$0xf] %vm1013, %v4326
      %s4598 = scalar_lea.vmem %s677, 24
      %v4599 = vld [vmem:[%s4598] sm:$0xf]
      %s4600 = scalar_lea.vmem %s686, 24
      %v4601 = vld [vmem:[%s4600] sm:$0xf]
      %v4602 = vld [vmem:[#allocation4] sm:$0xff]
      %v4603 = vld [vmem:[#allocation4 + $0x8] sm:$0xff]
      %v4604 = vld [vmem:[#allocation4 + $0x10] sm:$0xff]
      %v4605 = vld [vmem:[#allocation4 + $0x18] sm:$0xff]
      %v4606 = vperm.slane %v4601, 0
      %v4607 = vlaneseq
      %v4608 = vshrl.u32 %v4607, 7
      %4610 = vset.pattern.permute.xlu0 %v4608
      %4611 = vperm.xlu0 %4610, %v4606
      %v4612 = vpop.permute.xlu0 %4611
      %v4613 = vperm.slane %v4601, 1
      %v4614 = vlaneseq
      %v4615 = vshrl.u32 %v4614, 7
      %4617 = vset.pattern.permute.xlu0 %v4615
      %4618 = vperm.xlu0 %4617, %v4613
      %v4619 = vpop.permute.xlu0 %4618
      %v4620 = vperm.slane %v4601, 2
      %v4621 = vlaneseq
      %v4622 = vshrl.u32 %v4621, 7
      %4624 = vset.pattern.permute.xlu0 %v4622
      %4625 = vperm.xlu0 %4624, %v4620
      %v4626 = vpop.permute.xlu0 %4625
      %v4627 = vperm.slane %v4601, 3
      %v4628 = vlaneseq
      %v4629 = vshrl.u32 %v4628, 7
      %4631 = vset.pattern.permute.xlu0 %v4629
      %4632 = vperm.xlu0 %4631, %v4627
      %v4633 = vpop.permute.xlu0 %4632
      %v4634 = vmul.f32 %v4612, %v4602
      %v4635 = vmul.f32 %v4619, %v4603
      %v4636 = vmul.f32 %v4626, %v4604
      %v4637 = vmul.f32 %v4633, %v4605
      %v4638 = vsel %vm785, %v4634, 0.0
      %v4639 = vrot.slane %v4638, 4
      %v4640 = vadd.f32 %v4638, %v4639
      %v4641 = vrot.slane %v4640, 2
      %v4642 = vadd.f32 %v4640, %v4641
      %v4643 = vrot.slane %v4642, 1
      %v4644 = vadd.f32 %v4642, %v4643
      %v4645 = vsel %vm785, %v4635, 0.0
      %v4646 = vrot.slane %v4645, 4
      %v4647 = vadd.f32 %v4645, %v4646
      %v4648 = vrot.slane %v4647, 2
      %v4649 = vadd.f32 %v4647, %v4648
      %v4650 = vrot.slane %v4649, 1
      %v4651 = vadd.f32 %v4649, %v4650
      %v4652 = vsel %vm785, %v4636, 0.0
      %v4653 = vrot.slane %v4652, 4
      %v4654 = vadd.f32 %v4652, %v4653
      %v4655 = vrot.slane %v4654, 2
      %v4656 = vadd.f32 %v4654, %v4655
      %v4657 = vrot.slane %v4656, 1
      %v4658 = vadd.f32 %v4656, %v4657
      %v4659 = vsel %vm785, %v4637, 0.0
      %v4660 = vrot.slane %v4659, 4
      %v4661 = vadd.f32 %v4659, %v4660
      %v4662 = vrot.slane %v4661, 2
      %v4663 = vadd.f32 %v4661, %v4662
      %v4664 = vrot.slane %v4663, 1
      %v4665 = vadd.f32 %v4663, %v4664
      %v4667 = vsel %vm785, %v4599, 0
      %4669 = vmatpush.msra.mxu0 0.0
      %4670 = vmatpush.msra.mxu0 0.0
      %4671 = vmatpush.msra.mxu0 0.0
      %4672 = vmatpush.msra.mxu0 0.0
      %4673 = vmatpush.msra.mxu0 0.0
      %4674 = vmatpush.msra.mxu0 0.0
      %4675 = vmatpush.msra.mxu0 0.0
      %4676 = vmatpush.msra.mxu0 0.0
      %4677 = vmatpush.msra.mxu0 0.0
      %4678 = vmatpush.msra.mxu0 0.0
      %4679 = vmatpush.msra.mxu0 0.0
      %4680 = vmatpush.msra.mxu0 0.0
      %4681 = vmatpush.msra.mxu0 %v731
      %4682 = vmatpush.msra.mxu0 %v730
      %4683 = vmatpush.msra.mxu0 %v729
      %4684 = vmatpush.msra.mxu0 %v728
      %4685 = vmatmul.f32.gmra.mxu0 %v4667
      %v4686 = vpop.f32.mrf.mxu0
      %v4687 = vadd.f32 0.0, %v4686
      %4688 = vdwg.mxu0
      %v4693 = vsel %vm841, %v4651, %v4644
      %v4694 = vsel %vm843, %v4658, %v4693
      %v4695 = vsel %vm845, %v4665, %v4694
      %v4696 = vsel %vm785, %v4695, 0
      %4698 = vmatpush.msra.mxu0 0.0
      %4699 = vmatpush.msra.mxu0 0.0
      %4700 = vmatpush.msra.mxu0 0.0
      %4701 = vmatpush.msra.mxu0 0.0
      %4702 = vmatpush.msra.mxu0 0.0
      %4703 = vmatpush.msra.mxu0 0.0
      %4704 = vmatpush.msra.mxu0 0.0
      %4705 = vmatpush.msra.mxu0 0.0
      %4706 = vmatpush.msra.mxu0 0.0
      %4707 = vmatpush.msra.mxu0 0.0
      %4708 = vmatpush.msra.mxu0 0.0
      %4709 = vmatpush.msra.mxu0 0.0
      %4710 = vmatpush.msra.mxu0 %v727
      %4711 = vmatpush.msra.mxu0 %v726
      %4712 = vmatpush.msra.mxu0 %v725
      %4713 = vmatpush.msra.mxu0 %v724
      %4714 = vmatmul.f32.gmra.mxu0 %v4696
      %v4715 = vpop.f32.mrf.mxu0
      %v4716 = vadd.f32 %v4687, %v4715
      %4717 = vdwg.mxu0
      %v4718 = vadd.f32 %v4716, %v870
      %v4719 = vmax.f32 %v4718, 0.0
      %v4721 = vsel %vm785, %v4719, 0
      %4723 = vmatpush.msra.mxu0 0.0
      %4724 = vmatpush.msra.mxu0 0.0
      %4725 = vmatpush.msra.mxu0 0.0
      %4726 = vmatpush.msra.mxu0 0.0
      %4727 = vmatpush.msra.mxu0 0.0
      %4728 = vmatpush.msra.mxu0 0.0
      %4729 = vmatpush.msra.mxu0 0.0
      %4730 = vmatpush.msra.mxu0 0.0
      %4731 = vmatpush.msra.mxu0 0.0
      %4732 = vmatpush.msra.mxu0 0.0
      %4733 = vmatpush.msra.mxu0 0.0
      %4734 = vmatpush.msra.mxu0 0.0
      %4735 = vmatpush.msra.mxu0 %v736
      %4736 = vmatpush.msra.mxu0 %v735
      %4737 = vmatpush.msra.mxu0 %v734
      %4738 = vmatpush.msra.mxu0 %v733
      %4739 = vmatmul.f32.gmra.mxu0 %v4721
      %v4740 = vpop.f32.mrf.mxu0
      %v4741 = vadd.f32 %v875, %v4740
      %4742 = vdwg.mxu0
      %vm4743 = vcmp.gt.f32.partialorder %v4601, 0.5
      %v4744 = vsel %vm4743, 1, 0
      %4745 = vset.pattern.permute.xlu0 8
      %4746 = vperm.xlu0 %4745, %v4744
      %v4747 = vpop.permute.xlu0 %4746
      %vm4748 = vcmp.eq.s32.totalorder %v4747, 1
      %v4749 = vsel %vm4748, %v4741, %v4599
      %v4750 = vld [vmem:[#allocation2] sm:$0xf]
      %v4751 = vld [vmem:[#allocation3] sm:$0xf]
      %v4752 = vld [vmem:[%s9] sm:$0xff]
      %v4753 = vld [vmem:[%s9 + $0x8] sm:$0xff]
      %v4754 = vld [vmem:[%s9 + $0x10] sm:$0xff]
      %v4755 = vld [vmem:[%s9 + $0x18] sm:$0xff]
      %v4756 = vld [vmem:[%s10] sm:$0xff]
      %v4757 = vld [vmem:[%s10 + $0x8] sm:$0xff]
      %v4758 = vld [vmem:[%s10 + $0x10] sm:$0xff]
      %v4759 = vld [vmem:[%s10 + $0x18] sm:$0xff]
      %v4761 = vsel %vm785, %v4750, 0
      %4763 = vmatpush.msra.mxu0 0.0
      %4764 = vmatpush.msra.mxu0 0.0
      %4765 = vmatpush.msra.mxu0 0.0
      %4766 = vmatpush.msra.mxu0 0.0
      %4767 = vmatpush.msra.mxu0 0.0
      %4768 = vmatpush.msra.mxu0 0.0
      %4769 = vmatpush.msra.mxu0 0.0
      %4770 = vmatpush.msra.mxu0 0.0
      %4771 = vmatpush.msra.mxu0 0.0
      %4772 = vmatpush.msra.mxu0 0.0
      %4773 = vmatpush.msra.mxu0 0.0
      %4774 = vmatpush.msra.mxu0 0.0
      %4775 = vmatpush.msra.mxu0 %v4759
      %4776 = vmatpush.msra.mxu0 %v4758
      %4777 = vmatpush.msra.mxu0 %v4757
      %4778 = vmatpush.msra.mxu0 %v4756
      %4779 = vmatmul.f32.gmra.mxu0 %v4761
      %v4780 = vpop.f32.mrf.mxu0
      %v4781 = vadd.f32 0.0, %v4780
      %4782 = vdwg.mxu0
      %v4784 = vsel %vm785, %v4749, 0
      %4786 = vmatpush.msra.mxu0 0.0
      %4787 = vmatpush.msra.mxu0 0.0
      %4788 = vmatpush.msra.mxu0 0.0
      %4789 = vmatpush.msra.mxu0 0.0
      %4790 = vmatpush.msra.mxu0 0.0
      %4791 = vmatpush.msra.mxu0 0.0
      %4792 = vmatpush.msra.mxu0 0.0
      %4793 = vmatpush.msra.mxu0 0.0
      %4794 = vmatpush.msra.mxu0 0.0
      %4795 = vmatpush.msra.mxu0 0.0
      %4796 = vmatpush.msra.mxu0 0.0
      %4797 = vmatpush.msra.mxu0 0.0
      %4798 = vmatpush.msra.mxu0 %v4755
      %4799 = vmatpush.msra.mxu0 %v4754
      %4800 = vmatpush.msra.mxu0 %v4753
      %4801 = vmatpush.msra.mxu0 %v4752
      %4802 = vmatmul.f32.gmra.mxu0 %v4784
      %v4803 = vpop.f32.mrf.mxu0
      %v4804 = vadd.f32 %v4781, %v4803
      %4805 = vdwg.mxu0
      %v4806 = vld [vmem:[%s11] sm:$0x1]
      %v4808 = vperm.slane %v4806, 0
      %v4810 = vadd.f32 %v4804, %v4808
      %v4811 = vxor.u32 %v4810, 2147483648
      %v4812 = vmul.f32 %v4811, 1.442695
      %v4813 = vpow.pop %v4812
      %v4814 = vadd.f32 %v4813, 1.0
      %v4815 = vrcp.pop %v4814
      %v4816 = vmul.f32 %v4814, %v4815
      %v4817 = vsub.f32 1.0, %v4816
      %v4818 = vmul.f32 %v4815, %v4817
      %v4819 = vadd.f32 %v4815, %v4818
      %vm4820 = vweird.f32 %v4814
      %vm4821 = vweird.f32 %v4815
      %vm4822 = vmor %vm4820, %vm4821
      %v4823 = vsel %vm4822, %v4815, %v4819
      %v4824 = vand.u32 2147483647, %v4814
      %vm4825 = vcmp.eq.f32.partialorder %v4824, 8.507059e+37
      %v4826 = vand.u32 %v4814, 2147483648
      %v4827 = vor.u32 1.1754944e-38, %v4826
      %v4828 = vsel %vm4825, %v4827, %v4823
      %v4829 = vmul.f32 1.0, %v4828
      %v4830 = vtanh.pop %v4810
      %4832 = vrot.lane.b32.xlu0 %v4751, 32
      %v4833 = vpop.permute.xlu0 %4832
      %v4835 = vmul.f32 %v4829, %v4833
      %4837 = vrot.lane.b32.xlu0 %v4830, 32
      %v4838 = vpop.permute.xlu0 %4837
      %v4840 = vmul.f32 %v4829, %v4838
      %4842 = vrot.lane.b32.xlu0 %v4840, 32
      %v4843 = vpop.permute.xlu0 %4842
      %v4845 = vadd.f32 %v4835, %v4843
      %v4846 = vtanh.pop %v4845
      %4848 = vrot.lane.b32.xlu0 %v4846, 32
      %v4849 = vpop.permute.xlu0 %4848
      %v4851 = vmul.f32 %v4829, %v4849
      %4853 = vrot.lane.b32.xlu0 %v4851, 64
      %v4854 = vpop.permute.xlu0 %4853
      %4856 = vst.msk [vmem:[#allocation2] sm:$0xf] %vm1013, %v4854
      %4858 = vrot.lane.b32.xlu0 %v4845, 96
      %v4859 = vpop.permute.xlu0 %4858
      %4861 = vst.msk [vmem:[#allocation3] sm:$0xf] %vm1013, %v4859
      %v4862 = vld [vmem:[%s1020] sm:$0xf]
      %v4863 = vld [vmem:[%s1022] sm:$0xf]
      %v4864 = vld [vmem:[%s1024] sm:$0xff]
      %v4865 = vld [vmem:[%s1024 + $0x8] sm:$0xff]
      %v4866 = vld [vmem:[%s1024 + $0x10] sm:$0xff]
      %v4867 = vld [vmem:[%s1024 + $0x18] sm:$0xff]
      %v4868 = vld [vmem:[%s1029] sm:$0xff]
      %v4869 = vld [vmem:[%s1029 + $0x8] sm:$0xff]
      %v4870 = vld [vmem:[%s1029 + $0x10] sm:$0xff]
      %v4871 = vld [vmem:[%s1029 + $0x18] sm:$0xff]
      %v4873 = vsel %vm785, %v4862, 0
      %4875 = vmatpush.msra.mxu0 0.0
      %4876 = vmatpush.msra.mxu0 0.0
      %4877 = vmatpush.msra.mxu0 0.0
      %4878 = vmatpush.msra.mxu0 0.0
      %4879 = vmatpush.msra.mxu0 0.0
      %4880 = vmatpush.msra.mxu0 0.0
      %4881 = vmatpush.msra.mxu0 0.0
      %4882 = vmatpush.msra.mxu0 0.0
      %4883 = vmatpush.msra.mxu0 0.0
      %4884 = vmatpush.msra.mxu0 0.0
      %4885 = vmatpush.msra.mxu0 0.0
      %4886 = vmatpush.msra.mxu0 0.0
      %4887 = vmatpush.msra.mxu0 %v4871
      %4888 = vmatpush.msra.mxu0 %v4870
      %4889 = vmatpush.msra.mxu0 %v4869
      %4890 = vmatpush.msra.mxu0 %v4868
      %4891 = vmatmul.f32.gmra.mxu0 %v4873
      %v4892 = vpop.f32.mrf.mxu0
      %v4893 = vadd.f32 0.0, %v4892
      %4894 = vdwg.mxu0
      %v4895 = vsel %vm785, %v4854, 0
      %4897 = vmatpush.msra.mxu0 0.0
      %4898 = vmatpush.msra.mxu0 0.0
      %4899 = vmatpush.msra.mxu0 0.0
      %4900 = vmatpush.msra.mxu0 0.0
      %4901 = vmatpush.msra.mxu0 0.0
      %4902 = vmatpush.msra.mxu0 0.0
      %4903 = vmatpush.msra.mxu0 0.0
      %4904 = vmatpush.msra.mxu0 0.0
      %4905 = vmatpush.msra.mxu0 0.0
      %4906 = vmatpush.msra.mxu0 0.0
      %4907 = vmatpush.msra.mxu0 0.0
      %4908 = vmatpush.msra.mxu0 0.0
      %4909 = vmatpush.msra.mxu0 %v4867
      %4910 = vmatpush.msra.mxu0 %v4866
      %4911 = vmatpush.msra.mxu0 %v4865
      %4912 = vmatpush.msra.mxu0 %v4864
      %4913 = vmatmul.f32.gmra.mxu0 %v4895
      %v4914 = vpop.f32.mrf.mxu0
      %v4915 = vadd.f32 %v4893, %v4914
      %4916 = vdwg.mxu0
      %v4917 = vld [vmem:[%s1079] sm:$0x1]
      %v4919 = vperm.slane %v4917, 0
      %v4921 = vadd.f32 %v4915, %v4919
      %v4922 = vxor.u32 %v4921, 2147483648
      %v4923 = vmul.f32 %v4922, 1.442695
      %v4924 = vpow.pop %v4923
      %v4925 = vadd.f32 %v4924, 1.0
      %v4926 = vrcp.pop %v4925
      %v4927 = vmul.f32 %v4925, %v4926
      %v4928 = vsub.f32 1.0, %v4927
      %v4929 = vmul.f32 %v4926, %v4928
      %v4930 = vadd.f32 %v4926, %v4929
      %vm4931 = vweird.f32 %v4925
      %vm4932 = vweird.f32 %v4926
      %vm4933 = vmor %vm4931, %vm4932
      %v4934 = vsel %vm4933, %v4926, %v4930
      %v4935 = vand.u32 2147483647, %v4925
      %vm4936 = vcmp.eq.f32.partialorder %v4935, 8.507059e+37
      %v4937 = vand.u32 %v4925, 2147483648
      %v4938 = vor.u32 1.1754944e-38, %v4937
      %v4939 = vsel %vm4936, %v4938, %v4934
      %v4940 = vmul.f32 1.0, %v4939
      %v4941 = vtanh.pop %v4921
      %4943 = vrot.lane.b32.xlu0 %v4863, 32
      %v4944 = vpop.permute.xlu0 %4943
      %v4946 = vmul.f32 %v4940, %v4944
      %4948 = vrot.lane.b32.xlu0 %v4941, 32
      %v4949 = vpop.permute.xlu0 %4948
      %v4951 = vmul.f32 %v4940, %v4949
      %4953 = vrot.lane.b32.xlu0 %v4951, 32
      %v4954 = vpop.permute.xlu0 %4953
      %v4956 = vadd.f32 %v4946, %v4954
      %v4957 = vtanh.pop %v4956
      %4959 = vrot.lane.b32.xlu0 %v4957, 32
      %v4960 = vpop.permute.xlu0 %4959
      %v4962 = vmul.f32 %v4940, %v4960
      %4964 = vrot.lane.b32.xlu0 %v4962, 64
      %v4965 = vpop.permute.xlu0 %4964
      %4967 = vst.msk [vmem:[%s1020] sm:$0xf] %vm1013, %v4965
      %4969 = vrot.lane.b32.xlu0 %v4956, 96
      %v4970 = vpop.permute.xlu0 %4969
      %4972 = vst.msk [vmem:[%s1022] sm:$0xf] %vm1013, %v4970
      %v4974 = vsel %vm785, %v4602, 0
      %v4977 = vsel %vm785, %v4603, 0
      %v4980 = vsel %vm785, %v4604, 0
      %v4983 = vsel %vm785, %v4605, 0
      %4985 = vmatpush.msra.mxu0 0.0
      %4986 = vmatpush.msra.mxu0 0.0
      %4987 = vmatpush.msra.mxu0 0.0
      %4988 = vmatpush.msra.mxu0 0.0
      %4989 = vmatpush.msra.mxu0 0.0
      %4990 = vmatpush.msra.mxu0 0.0
      %4991 = vmatpush.msra.mxu0 0.0
      %4992 = vmatpush.msra.mxu0 0.0
      %4993 = vmatpush.msra.mxu0 0.0
      %4994 = vmatpush.msra.mxu0 0.0
      %4995 = vmatpush.msra.mxu0 0.0
      %4996 = vmatpush.msra.mxu0 0.0
      %4997 = vmatpush.msra.mxu0 %v741
      %4998 = vmatpush.msra.mxu0 %v740
      %4999 = vmatpush.msra.mxu0 %v739
      %5000 = vmatpush.msra.mxu0 %v738
      %5001 = vmatmul.f32.gmra.mxu0 %v4974
      %v5002 = vpop.f32.mrf.mxu0
      %v5003 = vadd.f32 0.0, %v5002
      %5004 = vmatmul.f32.gmra.mxu0 %v4977
      %v5005 = vpop.f32.mrf.mxu0
      %v5006 = vadd.f32 0.0, %v5005
      %5007 = vmatmul.f32.gmra.mxu0 %v4980
      %v5008 = vpop.f32.mrf.mxu0
      %v5009 = vadd.f32 0.0, %v5008
      %5010 = vmatmul.f32.gmra.mxu0 %v4983
      %v5011 = vpop.f32.mrf.mxu0
      %v5012 = vadd.f32 0.0, %v5011
      %5013 = vdwg.mxu0
      %v5014 = vsel %vm785, %v4965, 0
      %5016 = vmatpush.msra.mxu0 0.0
      %5017 = vmatpush.msra.mxu0 0.0
      %5018 = vmatpush.msra.mxu0 0.0
      %5019 = vmatpush.msra.mxu0 0.0
      %5020 = vmatpush.msra.mxu0 0.0
      %5021 = vmatpush.msra.mxu0 0.0
      %5022 = vmatpush.msra.mxu0 0.0
      %5023 = vmatpush.msra.mxu0 0.0
      %5024 = vmatpush.msra.mxu0 0.0
      %5025 = vmatpush.msra.mxu0 0.0
      %5026 = vmatpush.msra.mxu0 0.0
      %5027 = vmatpush.msra.mxu0 0.0
      %5028 = vmatpush.msra.mxu0 %v745
      %5029 = vmatpush.msra.mxu0 %v744
      %5030 = vmatpush.msra.mxu0 %v743
      %5031 = vmatpush.msra.mxu0 %v742
      %5032 = vmatmul.f32.gmra.mxu0 %v5014
      %v5033 = vpop.f32.mrf.mxu0
      %v5034 = vadd.f32 0.0, %v5033
      %5035 = vdwg.mxu0
      %v5037 = vrot.slane %v5034, 1
      %v5038 = vrot.slane %v5034, 2
      %v5039 = vrot.slane %v5034, 3
      %v5040 = vperm.slane %v5034, 0
      %v5041 = vperm.slane %v5037, 0
      %v5042 = vperm.slane %v5038, 0
      %v5043 = vperm.slane %v5039, 0
      %v5048 = vadd.f32 %v5003, %v5040
      %v5049 = vadd.f32 %v5006, %v5041
      %v5050 = vadd.f32 %v5009, %v5042
      %v5051 = vadd.f32 %v5012, %v5043
      %v5052 = vadd.f32 %v5048, %v1216
      %v5053 = vadd.f32 %v5049, %v1216
      %v5054 = vadd.f32 %v5050, %v1216
      %v5055 = vadd.f32 %v5051, %v1216
      %v5056 = vtanh.pop %v5052
      %v5057 = vtanh.pop %v5053
      %v5058 = vtanh.pop %v5054
      %v5059 = vtanh.pop %v5055
      %v5060 = vxor.u32 %v5052, 2147483648
      %v5061 = vxor.u32 %v5053, 2147483648
      %v5062 = vxor.u32 %v5054, 2147483648
      %v5063 = vxor.u32 %v5055, 2147483648
      %v5064 = vmul.f32 %v5060, 1.442695
      %v5065 = vpow.pop %v5064
      %v5066 = vmul.f32 %v5061, 1.442695
      %v5067 = vpow.pop %v5066
      %v5068 = vmul.f32 %v5062, 1.442695
      %v5069 = vpow.pop %v5068
      %v5070 = vmul.f32 %v5063, 1.442695
      %v5071 = vpow.pop %v5070
      %v5072 = vadd.f32 %v5065, 1.0
      %v5073 = vadd.f32 %v5067, 1.0
      %v5074 = vadd.f32 %v5069, 1.0
      %v5075 = vadd.f32 %v5071, 1.0
      %v5076 = vrcp.pop %v5072
      %v5077 = vmul.f32 %v5072, %v5076
      %v5078 = vsub.f32 1.0, %v5077
      %v5079 = vmul.f32 %v5076, %v5078
      %v5080 = vadd.f32 %v5076, %v5079
      %vm5081 = vweird.f32 %v5072
      %vm5082 = vweird.f32 %v5076
      %vm5083 = vmor %vm5081, %vm5082
      %v5084 = vsel %vm5083, %v5076, %v5080
      %v5085 = vand.u32 2147483647, %v5072
      %vm5086 = vcmp.eq.f32.partialorder %v5085, 8.507059e+37
      %v5087 = vand.u32 %v5072, 2147483648
      %v5088 = vor.u32 1.1754944e-38, %v5087
      %v5089 = vsel %vm5086, %v5088, %v5084
      %v5090 = vmul.f32 1.0, %v5089
      %v5091 = vrcp.pop %v5073
      %v5092 = vmul.f32 %v5073, %v5091
      %v5093 = vsub.f32 1.0, %v5092
      %v5094 = vmul.f32 %v5091, %v5093
      %v5095 = vadd.f32 %v5091, %v5094
      %vm5096 = vweird.f32 %v5073
      %vm5097 = vweird.f32 %v5091
      %vm5098 = vmor %vm5096, %vm5097
      %v5099 = vsel %vm5098, %v5091, %v5095
      %v5100 = vand.u32 2147483647, %v5073
      %vm5101 = vcmp.eq.f32.partialorder %v5100, 8.507059e+37
      %v5102 = vand.u32 %v5073, 2147483648
      %v5103 = vor.u32 1.1754944e-38, %v5102
      %v5104 = vsel %vm5101, %v5103, %v5099
      %v5105 = vmul.f32 1.0, %v5104
      %v5106 = vrcp.pop %v5074
      %v5107 = vmul.f32 %v5074, %v5106
      %v5108 = vsub.f32 1.0, %v5107
      %v5109 = vmul.f32 %v5106, %v5108
      %v5110 = vadd.f32 %v5106, %v5109
      %vm5111 = vweird.f32 %v5074
      %vm5112 = vweird.f32 %v5106
      %vm5113 = vmor %vm5111, %vm5112
      %v5114 = vsel %vm5113, %v5106, %v5110
      %v5115 = vand.u32 2147483647, %v5074
      %vm5116 = vcmp.eq.f32.partialorder %v5115, 8.507059e+37
      %v5117 = vand.u32 %v5074, 2147483648
      %v5118 = vor.u32 1.1754944e-38, %v5117
      %v5119 = vsel %vm5116, %v5118, %v5114
      %v5120 = vmul.f32 1.0, %v5119
      %v5121 = vrcp.pop %v5075
      %v5122 = vmul.f32 %v5075, %v5121
      %v5123 = vsub.f32 1.0, %v5122
      %v5124 = vmul.f32 %v5121, %v5123
      %v5125 = vadd.f32 %v5121, %v5124
      %vm5126 = vweird.f32 %v5075
      %vm5127 = vweird.f32 %v5121
      %vm5128 = vmor %vm5126, %vm5127
      %v5129 = vsel %vm5128, %v5121, %v5125
      %v5130 = vand.u32 2147483647, %v5075
      %vm5131 = vcmp.eq.f32.partialorder %v5130, 8.507059e+37
      %v5132 = vand.u32 %v5075, 2147483648
      %v5133 = vor.u32 1.1754944e-38, %v5132
      %v5134 = vsel %vm5131, %v5133, %v5129
      %v5135 = vmul.f32 1.0, %v5134
      %v5136 = vsub.f32 1.0, %v5090
      %v5137 = vsub.f32 1.0, %v5105
      %v5138 = vsub.f32 1.0, %v5120
      %v5139 = vsub.f32 1.0, %v5135
      %5141 = vset.pattern.permute.xlu0 32
      %5142 = vperm.xlu0 %5141, %v5136
      %v5143 = vpop.permute.xlu0 %5142
      %5146 = vset.pattern.permute.xlu0 32
      %5147 = vperm.xlu0 %5146, %v5137
      %v5148 = vpop.permute.xlu0 %5147
      %5151 = vset.pattern.permute.xlu0 32
      %5152 = vperm.xlu0 %5151, %v5138
      %v5153 = vpop.permute.xlu0 %5152
      %5156 = vset.pattern.permute.xlu0 32
      %5157 = vperm.xlu0 %5156, %v5139
      %v5158 = vpop.permute.xlu0 %5157
      %v5160 = vmul.f32 %v4602, %v5143
      %v5161 = vmul.f32 %v4603, %v5148
      %v5162 = vmul.f32 %v4604, %v5153
      %v5163 = vmul.f32 %v4605, %v5158
      %5165 = vset.pattern.permute.xlu0 32
      %5166 = vperm.xlu0 %5165, %v5090
      %v5167 = vpop.permute.xlu0 %5166
      %5170 = vset.pattern.permute.xlu0 32
      %5171 = vperm.xlu0 %5170, %v5105
      %v5172 = vpop.permute.xlu0 %5171
      %5175 = vset.pattern.permute.xlu0 32
      %5176 = vperm.xlu0 %5175, %v5120
      %v5177 = vpop.permute.xlu0 %5176
      %5180 = vset.pattern.permute.xlu0 32
      %5181 = vperm.xlu0 %5180, %v5135
      %v5182 = vpop.permute.xlu0 %5181
      %v5184 = vmul.f32 %v5167, %v5056
      %v5185 = vmul.f32 %v5172, %v5057
      %v5186 = vmul.f32 %v5177, %v5058
      %v5187 = vmul.f32 %v5182, %v5059
      %v5188 = vadd.f32 %v5160, %v5184
      %v5189 = vadd.f32 %v5161, %v5185
      %v5190 = vadd.f32 %v5162, %v5186
      %v5191 = vadd.f32 %v5163, %v5187
      %v5192 = vlaneseq
      %v5193 = vshrl.u32 %v5192, 7
      %v5194 = vadd.s32 %v5193, 9
      %5195 = vset.pattern.permute.xlu0 %v5194
      %5196 = vperm.xlu0 %5195, %v4606
      %v5197 = vpop.permute.xlu0 %5196
      %v5198 = vlaneseq
      %v5199 = vshrl.u32 %v5198, 7
      %v5200 = vadd.s32 %v5199, 9
      %5201 = vset.pattern.permute.xlu0 %v5200
      %5202 = vperm.xlu0 %5201, %v4613
      %v5203 = vpop.permute.xlu0 %5202
      %v5204 = vlaneseq
      %v5205 = vshrl.u32 %v5204, 7
      %v5206 = vadd.s32 %v5205, 9
      %5207 = vset.pattern.permute.xlu0 %v5206
      %5208 = vperm.xlu0 %5207, %v4620
      %v5209 = vpop.permute.xlu0 %5208
      %v5210 = vlaneseq
      %v5211 = vshrl.u32 %v5210, 7
      %v5212 = vadd.s32 %v5211, 9
      %5213 = vset.pattern.permute.xlu0 %v5212
      %5214 = vperm.xlu0 %5213, %v4627
      %v5215 = vpop.permute.xlu0 %5214
      %vm5216 = vcmp.gt.f32.partialorder %v5197, 0.5
      %vm5217 = vcmp.gt.f32.partialorder %v5203, 0.5
      %vm5218 = vcmp.gt.f32.partialorder %v5209, 0.5
      %vm5219 = vcmp.gt.f32.partialorder %v5215, 0.5
      %v5220 = vsel %vm5216, 1, 0
      %v5221 = vsel %vm5217, 1, 0
      %v5222 = vsel %vm5218, 1, 0
      %v5223 = vsel %vm5219, 1, 0
      %vm5224 = vcmp.eq.s32.totalorder %v5220, 1
      %vm5225 = vcmp.eq.s32.totalorder %v5221, 1
      %vm5226 = vcmp.eq.s32.totalorder %v5222, 1
      %vm5227 = vcmp.eq.s32.totalorder %v5223, 1
      %v5228 = vsel %vm5224, 0.0, %v5188
      %v5229 = vsel %vm5225, 0.0, %v5189
      %v5230 = vsel %vm5226, 0.0, %v5190
      %v5231 = vsel %vm5227, 0.0, %v5191
      %5232 = vst.msk [vmem:[#allocation4] sm:$0xff] %vm785, %v5228
      %5233 = vst.msk [vmem:[#allocation4 + $0x8] sm:$0xff] %vm785, %v5229
      %5234 = vst.msk [vmem:[#allocation4 + $0x10] sm:$0xff] %vm785, %v5230
      %5235 = vst.msk [vmem:[#allocation4 + $0x18] sm:$0xff] %vm785, %v5231
      %5236 = vst.msk [vmem:[#allocation5 + $0x18] sm:$0xf] %vm1013, %v4965
      %s5237 = scalar_lea.vmem %s677, 28
      %v5238 = vld [vmem:[%s5237] sm:$0xf]
      %s5239 = scalar_lea.vmem %s686, 28
      %v5240 = vld [vmem:[%s5239] sm:$0xf]
      %v5241 = vld [vmem:[#allocation4] sm:$0xff]
      %v5242 = vld [vmem:[#allocation4 + $0x8] sm:$0xff]
      %v5243 = vld [vmem:[#allocation4 + $0x10] sm:$0xff]
      %v5244 = vld [vmem:[#allocation4 + $0x18] sm:$0xff]
      %v5245 = vperm.slane %v5240, 0
      %v5246 = vlaneseq
      %v5247 = vshrl.u32 %v5246, 7
      %5249 = vset.pattern.permute.xlu0 %v5247
      %5250 = vperm.xlu0 %5249, %v5245
      %v5251 = vpop.permute.xlu0 %5250
      %v5252 = vperm.slane %v5240, 1
      %v5253 = vlaneseq
      %v5254 = vshrl.u32 %v5253, 7
      %5256 = vset.pattern.permute.xlu0 %v5254
      %5257 = vperm.xlu0 %5256, %v5252
      %v5258 = vpop.permute.xlu0 %5257
      %v5259 = vperm.slane %v5240, 2
      %v5260 = vlaneseq
      %v5261 = vshrl.u32 %v5260, 7
      %5263 = vset.pattern.permute.xlu0 %v5261
      %5264 = vperm.xlu0 %5263, %v5259
      %v5265 = vpop.permute.xlu0 %5264
      %v5266 = vperm.slane %v5240, 3
      %v5267 = vlaneseq
      %v5268 = vshrl.u32 %v5267, 7
      %5270 = vset.pattern.permute.xlu0 %v5268
      %5271 = vperm.xlu0 %5270, %v5266
      %v5272 = vpop.permute.xlu0 %5271
      %v5273 = vmul.f32 %v5251, %v5241
      %v5274 = vmul.f32 %v5258, %v5242
      %v5275 = vmul.f32 %v5265, %v5243
      %v5276 = vmul.f32 %v5272, %v5244
      %v5277 = vsel %vm785, %v5273, 0.0
      %v5278 = vrot.slane %v5277, 4
      %v5279 = vadd.f32 %v5277, %v5278
      %v5280 = vrot.slane %v5279, 2
      %v5281 = vadd.f32 %v5279, %v5280
      %v5282 = vrot.slane %v5281, 1
      %v5283 = vadd.f32 %v5281, %v5282
      %v5284 = vsel %vm785, %v5274, 0.0
      %v5285 = vrot.slane %v5284, 4
      %v5286 = vadd.f32 %v5284, %v5285
      %v5287 = vrot.slane %v5286, 2
      %v5288 = vadd.f32 %v5286, %v5287
      %v5289 = vrot.slane %v5288, 1
      %v5290 = vadd.f32 %v5288, %v5289
      %v5291 = vsel %vm785, %v5275, 0.0
      %v5292 = vrot.slane %v5291, 4
      %v5293 = vadd.f32 %v5291, %v5292
      %v5294 = vrot.slane %v5293, 2
      %v5295 = vadd.f32 %v5293, %v5294
      %v5296 = vrot.slane %v5295, 1
      %v5297 = vadd.f32 %v5295, %v5296
      %v5298 = vsel %vm785, %v5276, 0.0
      %v5299 = vrot.slane %v5298, 4
      %v5300 = vadd.f32 %v5298, %v5299
      %v5301 = vrot.slane %v5300, 2
      %v5302 = vadd.f32 %v5300, %v5301
      %v5303 = vrot.slane %v5302, 1
      %v5304 = vadd.f32 %v5302, %v5303
      %v5306 = vsel %vm785, %v5238, 0
      %5308 = vmatpush.msra.mxu0 0.0
      %5309 = vmatpush.msra.mxu0 0.0
      %5310 = vmatpush.msra.mxu0 0.0
      %5311 = vmatpush.msra.mxu0 0.0
      %5312 = vmatpush.msra.mxu0 0.0
      %5313 = vmatpush.msra.mxu0 0.0
      %5314 = vmatpush.msra.mxu0 0.0
      %5315 = vmatpush.msra.mxu0 0.0
      %5316 = vmatpush.msra.mxu0 0.0
      %5317 = vmatpush.msra.mxu0 0.0
      %5318 = vmatpush.msra.mxu0 0.0
      %5319 = vmatpush.msra.mxu0 0.0
      %5320 = vmatpush.msra.mxu0 %v731
      %5321 = vmatpush.msra.mxu0 %v730
      %5322 = vmatpush.msra.mxu0 %v729
      %5323 = vmatpush.msra.mxu0 %v728
      %5324 = vmatmul.f32.gmra.mxu0 %v5306
      %v5325 = vpop.f32.mrf.mxu0
      %v5326 = vadd.f32 0.0, %v5325
      %5327 = vdwg.mxu0
      %v5332 = vsel %vm841, %v5290, %v5283
      %v5333 = vsel %vm843, %v5297, %v5332
      %v5334 = vsel %vm845, %v5304, %v5333
      %v5335 = vsel %vm785, %v5334, 0
      %5337 = vmatpush.msra.mxu0 0.0
      %5338 = vmatpush.msra.mxu0 0.0
      %5339 = vmatpush.msra.mxu0 0.0
      %5340 = vmatpush.msra.mxu0 0.0
      %5341 = vmatpush.msra.mxu0 0.0
      %5342 = vmatpush.msra.mxu0 0.0
      %5343 = vmatpush.msra.mxu0 0.0
      %5344 = vmatpush.msra.mxu0 0.0
      %5345 = vmatpush.msra.mxu0 0.0
      %5346 = vmatpush.msra.mxu0 0.0
      %5347 = vmatpush.msra.mxu0 0.0
      %5348 = vmatpush.msra.mxu0 0.0
      %5349 = vmatpush.msra.mxu0 %v727
      %5350 = vmatpush.msra.mxu0 %v726
      %5351 = vmatpush.msra.mxu0 %v725
      %5352 = vmatpush.msra.mxu0 %v724
      %5353 = vmatmul.f32.gmra.mxu0 %v5335
      %v5354 = vpop.f32.mrf.mxu0
      %v5355 = vadd.f32 %v5326, %v5354
      %5356 = vdwg.mxu0
      %v5357 = vadd.f32 %v5355, %v870
      %v5358 = vmax.f32 %v5357, 0.0
      %v5360 = vsel %vm785, %v5358, 0
      %5362 = vmatpush.msra.mxu0 0.0
      %5363 = vmatpush.msra.mxu0 0.0
      %5364 = vmatpush.msra.mxu0 0.0
      %5365 = vmatpush.msra.mxu0 0.0
      %5366 = vmatpush.msra.mxu0 0.0
      %5367 = vmatpush.msra.mxu0 0.0
      %5368 = vmatpush.msra.mxu0 0.0
      %5369 = vmatpush.msra.mxu0 0.0
      %5370 = vmatpush.msra.mxu0 0.0
      %5371 = vmatpush.msra.mxu0 0.0
      %5372 = vmatpush.msra.mxu0 0.0
      %5373 = vmatpush.msra.mxu0 0.0
      %5374 = vmatpush.msra.mxu0 %v736
      %5375 = vmatpush.msra.mxu0 %v735
      %5376 = vmatpush.msra.mxu0 %v734
      %5377 = vmatpush.msra.mxu0 %v733
      %5378 = vmatmul.f32.gmra.mxu0 %v5360
      %v5379 = vpop.f32.mrf.mxu0
      %v5380 = vadd.f32 %v875, %v5379
      %5381 = vdwg.mxu0
      %vm5382 = vcmp.gt.f32.partialorder %v5240, 0.5
      %v5383 = vsel %vm5382, 1, 0
      %5384 = vset.pattern.permute.xlu0 8
      %5385 = vperm.xlu0 %5384, %v5383
      %v5386 = vpop.permute.xlu0 %5385
      %vm5387 = vcmp.eq.s32.totalorder %v5386, 1
      %v5388 = vsel %vm5387, %v5380, %v5238
      %v5389 = vld [vmem:[#allocation2] sm:$0xf]
      %v5390 = vld [vmem:[#allocation3] sm:$0xf]
      %v5391 = vld [vmem:[%s9] sm:$0xff]
      %v5392 = vld [vmem:[%s9 + $0x8] sm:$0xff]
      %v5393 = vld [vmem:[%s9 + $0x10] sm:$0xff]
      %v5394 = vld [vmem:[%s9 + $0x18] sm:$0xff]
      %v5395 = vld [vmem:[%s10] sm:$0xff]
      %v5396 = vld [vmem:[%s10 + $0x8] sm:$0xff]
      %v5397 = vld [vmem:[%s10 + $0x10] sm:$0xff]
      %v5398 = vld [vmem:[%s10 + $0x18] sm:$0xff]
      %v5400 = vsel %vm785, %v5389, 0
      %5402 = vmatpush.msra.mxu0 0.0
      %5403 = vmatpush.msra.mxu0 0.0
      %5404 = vmatpush.msra.mxu0 0.0
      %5405 = vmatpush.msra.mxu0 0.0
      %5406 = vmatpush.msra.mxu0 0.0
      %5407 = vmatpush.msra.mxu0 0.0
      %5408 = vmatpush.msra.mxu0 0.0
      %5409 = vmatpush.msra.mxu0 0.0
      %5410 = vmatpush.msra.mxu0 0.0
      %5411 = vmatpush.msra.mxu0 0.0
      %5412 = vmatpush.msra.mxu0 0.0
      %5413 = vmatpush.msra.mxu0 0.0
      %5414 = vmatpush.msra.mxu0 %v5398
      %5415 = vmatpush.msra.mxu0 %v5397
      %5416 = vmatpush.msra.mxu0 %v5396
      %5417 = vmatpush.msra.mxu0 %v5395
      %5418 = vmatmul.f32.gmra.mxu0 %v5400
      %v5419 = vpop.f32.mrf.mxu0
      %v5420 = vadd.f32 0.0, %v5419
      %5421 = vdwg.mxu0
      %v5423 = vsel %vm785, %v5388, 0
      %5425 = vmatpush.msra.mxu0 0.0
      %5426 = vmatpush.msra.mxu0 0.0
      %5427 = vmatpush.msra.mxu0 0.0
      %5428 = vmatpush.msra.mxu0 0.0
      %5429 = vmatpush.msra.mxu0 0.0
      %5430 = vmatpush.msra.mxu0 0.0
      %5431 = vmatpush.msra.mxu0 0.0
      %5432 = vmatpush.msra.mxu0 0.0
      %5433 = vmatpush.msra.mxu0 0.0
      %5434 = vmatpush.msra.mxu0 0.0
      %5435 = vmatpush.msra.mxu0 0.0
      %5436 = vmatpush.msra.mxu0 0.0
      %5437 = vmatpush.msra.mxu0 %v5394
      %5438 = vmatpush.msra.mxu0 %v5393
      %5439 = vmatpush.msra.mxu0 %v5392
      %5440 = vmatpush.msra.mxu0 %v5391
      %5441 = vmatmul.f32.gmra.mxu0 %v5423
      %v5442 = vpop.f32.mrf.mxu0
      %v5443 = vadd.f32 %v5420, %v5442
      %5444 = vdwg.mxu0
      %v5445 = vld [vmem:[%s11] sm:$0x1]
      %v5447 = vperm.slane %v5445, 0
      %v5449 = vadd.f32 %v5443, %v5447
      %v5450 = vxor.u32 %v5449, 2147483648
      %v5451 = vmul.f32 %v5450, 1.442695
      %v5452 = vpow.pop %v5451
      %v5453 = vadd.f32 %v5452, 1.0
      %v5454 = vrcp.pop %v5453
      %v5455 = vmul.f32 %v5453, %v5454
      %v5456 = vsub.f32 1.0, %v5455
      %v5457 = vmul.f32 %v5454, %v5456
      %v5458 = vadd.f32 %v5454, %v5457
      %vm5459 = vweird.f32 %v5453
      %vm5460 = vweird.f32 %v5454
      %vm5461 = vmor %vm5459, %vm5460
      %v5462 = vsel %vm5461, %v5454, %v5458
      %v5463 = vand.u32 2147483647, %v5453
      %vm5464 = vcmp.eq.f32.partialorder %v5463, 8.507059e+37
      %v5465 = vand.u32 %v5453, 2147483648
      %v5466 = vor.u32 1.1754944e-38, %v5465
      %v5467 = vsel %vm5464, %v5466, %v5462
      %v5468 = vmul.f32 1.0, %v5467
      %v5469 = vtanh.pop %v5449
      %5471 = vrot.lane.b32.xlu0 %v5390, 32
      %v5472 = vpop.permute.xlu0 %5471
      %v5474 = vmul.f32 %v5468, %v5472
      %5476 = vrot.lane.b32.xlu0 %v5469, 32
      %v5477 = vpop.permute.xlu0 %5476
      %v5479 = vmul.f32 %v5468, %v5477
      %5481 = vrot.lane.b32.xlu0 %v5479, 32
      %v5482 = vpop.permute.xlu0 %5481
      %v5484 = vadd.f32 %v5474, %v5482
      %v5485 = vtanh.pop %v5484
      %5487 = vrot.lane.b32.xlu0 %v5485, 32
      %v5488 = vpop.permute.xlu0 %5487
      %v5490 = vmul.f32 %v5468, %v5488
      %5492 = vrot.lane.b32.xlu0 %v5490, 64
      %v5493 = vpop.permute.xlu0 %5492
      %5495 = vst.msk [vmem:[#allocation2] sm:$0xf] %vm1013, %v5493
      %5497 = vrot.lane.b32.xlu0 %v5484, 96
      %v5498 = vpop.permute.xlu0 %5497
      %5500 = vst.msk [vmem:[#allocation3] sm:$0xf] %vm1013, %v5498
      %v5501 = vld [vmem:[%s1020] sm:$0xf]
      %v5502 = vld [vmem:[%s1022] sm:$0xf]
      %v5503 = vld [vmem:[%s1024] sm:$0xff]
      %v5504 = vld [vmem:[%s1024 + $0x8] sm:$0xff]
      %v5505 = vld [vmem:[%s1024 + $0x10] sm:$0xff]
      %v5506 = vld [vmem:[%s1024 + $0x18] sm:$0xff]
      %v5507 = vld [vmem:[%s1029] sm:$0xff]
      %v5508 = vld [vmem:[%s1029 + $0x8] sm:$0xff]
      %v5509 = vld [vmem:[%s1029 + $0x10] sm:$0xff]
      %v5510 = vld [vmem:[%s1029 + $0x18] sm:$0xff]
      %v5512 = vsel %vm785, %v5501, 0
      %5514 = vmatpush.msra.mxu0 0.0
      %5515 = vmatpush.msra.mxu0 0.0
      %5516 = vmatpush.msra.mxu0 0.0
      %5517 = vmatpush.msra.mxu0 0.0
      %5518 = vmatpush.msra.mxu0 0.0
      %5519 = vmatpush.msra.mxu0 0.0
      %5520 = vmatpush.msra.mxu0 0.0
      %5521 = vmatpush.msra.mxu0 0.0
      %5522 = vmatpush.msra.mxu0 0.0
      %5523 = vmatpush.msra.mxu0 0.0
      %5524 = vmatpush.msra.mxu0 0.0
      %5525 = vmatpush.msra.mxu0 0.0
      %5526 = vmatpush.msra.mxu0 %v5510
      %5527 = vmatpush.msra.mxu0 %v5509
      %5528 = vmatpush.msra.mxu0 %v5508
      %5529 = vmatpush.msra.mxu0 %v5507
      %5530 = vmatmul.f32.gmra.mxu0 %v5512
      %v5531 = vpop.f32.mrf.mxu0
      %v5532 = vadd.f32 0.0, %v5531
      %5533 = vdwg.mxu0
      %v5534 = vsel %vm785, %v5493, 0
      %5536 = vmatpush.msra.mxu0 0.0
      %5537 = vmatpush.msra.mxu0 0.0
      %5538 = vmatpush.msra.mxu0 0.0
      %5539 = vmatpush.msra.mxu0 0.0
      %5540 = vmatpush.msra.mxu0 0.0
      %5541 = vmatpush.msra.mxu0 0.0
      %5542 = vmatpush.msra.mxu0 0.0
      %5543 = vmatpush.msra.mxu0 0.0
      %5544 = vmatpush.msra.mxu0 0.0
      %5545 = vmatpush.msra.mxu0 0.0
      %5546 = vmatpush.msra.mxu0 0.0
      %5547 = vmatpush.msra.mxu0 0.0
      %5548 = vmatpush.msra.mxu0 %v5506
      %5549 = vmatpush.msra.mxu0 %v5505
      %5550 = vmatpush.msra.mxu0 %v5504
      %5551 = vmatpush.msra.mxu0 %v5503
      %5552 = vmatmul.f32.gmra.mxu0 %v5534
      %v5553 = vpop.f32.mrf.mxu0
      %v5554 = vadd.f32 %v5532, %v5553
      %5555 = vdwg.mxu0
      %v5556 = vld [vmem:[%s1079] sm:$0x1]
      %v5558 = vperm.slane %v5556, 0
      %v5560 = vadd.f32 %v5554, %v5558
      %v5561 = vxor.u32 %v5560, 2147483648
      %v5562 = vmul.f32 %v5561, 1.442695
      %v5563 = vpow.pop %v5562
      %v5564 = vadd.f32 %v5563, 1.0
      %v5565 = vrcp.pop %v5564
      %v5566 = vmul.f32 %v5564, %v5565
      %v5567 = vsub.f32 1.0, %v5566
      %v5568 = vmul.f32 %v5565, %v5567
      %v5569 = vadd.f32 %v5565, %v5568
      %vm5570 = vweird.f32 %v5564
      %vm5571 = vweird.f32 %v5565
      %vm5572 = vmor %vm5570, %vm5571
      %v5573 = vsel %vm5572, %v5565, %v5569
      %v5574 = vand.u32 2147483647, %v5564
      %vm5575 = vcmp.eq.f32.partialorder %v5574, 8.507059e+37
      %v5576 = vand.u32 %v5564, 2147483648
      %v5577 = vor.u32 1.1754944e-38, %v5576
      %v5578 = vsel %vm5575, %v5577, %v5573
      %v5579 = vmul.f32 1.0, %v5578
      %v5580 = vtanh.pop %v5560
      %5582 = vrot.lane.b32.xlu0 %v5502, 32
      %v5583 = vpop.permute.xlu0 %5582
      %v5585 = vmul.f32 %v5579, %v5583
      %5587 = vrot.lane.b32.xlu0 %v5580, 32
      %v5588 = vpop.permute.xlu0 %5587
      %v5590 = vmul.f32 %v5579, %v5588
      %5592 = vrot.lane.b32.xlu0 %v5590, 32
      %v5593 = vpop.permute.xlu0 %5592
      %v5595 = vadd.f32 %v5585, %v5593
      %v5596 = vtanh.pop %v5595
      %5598 = vrot.lane.b32.xlu0 %v5596, 32
      %v5599 = vpop.permute.xlu0 %5598
      %v5601 = vmul.f32 %v5579, %v5599
      %5603 = vrot.lane.b32.xlu0 %v5601, 64
      %v5604 = vpop.permute.xlu0 %5603
      %5606 = vst.msk [vmem:[%s1020] sm:$0xf] %vm1013, %v5604
      %5608 = vrot.lane.b32.xlu0 %v5595, 96
      %v5609 = vpop.permute.xlu0 %5608
      %5611 = vst.msk [vmem:[%s1022] sm:$0xf] %vm1013, %v5609
      %v5613 = vsel %vm785, %v5241, 0
      %v5616 = vsel %vm785, %v5242, 0
      %v5619 = vsel %vm785, %v5243, 0
      %v5622 = vsel %vm785, %v5244, 0
      %5624 = vmatpush.msra.mxu0 0.0
      %5625 = vmatpush.msra.mxu0 0.0
      %5626 = vmatpush.msra.mxu0 0.0
      %5627 = vmatpush.msra.mxu0 0.0
      %5628 = vmatpush.msra.mxu0 0.0
      %5629 = vmatpush.msra.mxu0 0.0
      %5630 = vmatpush.msra.mxu0 0.0
      %5631 = vmatpush.msra.mxu0 0.0
      %5632 = vmatpush.msra.mxu0 0.0
      %5633 = vmatpush.msra.mxu0 0.0
      %5634 = vmatpush.msra.mxu0 0.0
      %5635 = vmatpush.msra.mxu0 0.0
      %5636 = vmatpush.msra.mxu0 %v741
      %5637 = vmatpush.msra.mxu0 %v740
      %5638 = vmatpush.msra.mxu0 %v739
      %5639 = vmatpush.msra.mxu0 %v738
      %5640 = vmatmul.f32.gmra.mxu0 %v5613
      %v5641 = vpop.f32.mrf.mxu0
      %v5642 = vadd.f32 0.0, %v5641
      %5643 = vmatmul.f32.gmra.mxu0 %v5616
      %v5644 = vpop.f32.mrf.mxu0
      %v5645 = vadd.f32 0.0, %v5644
      %5646 = vmatmul.f32.gmra.mxu0 %v5619
      %v5647 = vpop.f32.mrf.mxu0
      %v5648 = vadd.f32 0.0, %v5647
      %5649 = vmatmul.f32.gmra.mxu0 %v5622
      %v5650 = vpop.f32.mrf.mxu0
      %v5651 = vadd.f32 0.0, %v5650
      %5652 = vdwg.mxu0
      %v5653 = vsel %vm785, %v5604, 0
      %5655 = vmatpush.msra.mxu0 0.0
      %5656 = vmatpush.msra.mxu0 0.0
      %5657 = vmatpush.msra.mxu0 0.0
      %5658 = vmatpush.msra.mxu0 0.0
      %5659 = vmatpush.msra.mxu0 0.0
      %5660 = vmatpush.msra.mxu0 0.0
      %5661 = vmatpush.msra.mxu0 0.0
      %5662 = vmatpush.msra.mxu0 0.0
      %5663 = vmatpush.msra.mxu0 0.0
      %5664 = vmatpush.msra.mxu0 0.0
      %5665 = vmatpush.msra.mxu0 0.0
      %5666 = vmatpush.msra.mxu0 0.0
      %5667 = vmatpush.msra.mxu0 %v745
      %5668 = vmatpush.msra.mxu0 %v744
      %5669 = vmatpush.msra.mxu0 %v743
      %5670 = vmatpush.msra.mxu0 %v742
      %5671 = vmatmul.f32.gmra.mxu0 %v5653
      %v5672 = vpop.f32.mrf.mxu0
      %v5673 = vadd.f32 0.0, %v5672
      %5674 = vdwg.mxu0
      %v5676 = vrot.slane %v5673, 1
      %v5677 = vrot.slane %v5673, 2
      %v5678 = vrot.slane %v5673, 3
      %v5679 = vperm.slane %v5673, 0
      %v5680 = vperm.slane %v5676, 0
      %v5681 = vperm.slane %v5677, 0
      %v5682 = vperm.slane %v5678, 0
      %v5687 = vadd.f32 %v5642, %v5679
      %v5688 = vadd.f32 %v5645, %v5680
      %v5689 = vadd.f32 %v5648, %v5681
      %v5690 = vadd.f32 %v5651, %v5682
      %v5691 = vadd.f32 %v5687, %v1216
      %v5692 = vadd.f32 %v5688, %v1216
      %v5693 = vadd.f32 %v5689, %v1216
      %v5694 = vadd.f32 %v5690, %v1216
      %v5695 = vtanh.pop %v5691
      %v5696 = vtanh.pop %v5692
      %v5697 = vtanh.pop %v5693
      %v5698 = vtanh.pop %v5694
      %v5699 = vxor.u32 %v5691, 2147483648
      %v5700 = vxor.u32 %v5692, 2147483648
      %v5701 = vxor.u32 %v5693, 2147483648
      %v5702 = vxor.u32 %v5694, 2147483648
      %v5703 = vmul.f32 %v5699, 1.442695
      %v5704 = vpow.pop %v5703
      %v5705 = vmul.f32 %v5700, 1.442695
      %v5706 = vpow.pop %v5705
      %v5707 = vmul.f32 %v5701, 1.442695
      %v5708 = vpow.pop %v5707
      %v5709 = vmul.f32 %v5702, 1.442695
      %v5710 = vpow.pop %v5709
      %v5711 = vadd.f32 %v5704, 1.0
      %v5712 = vadd.f32 %v5706, 1.0
      %v5713 = vadd.f32 %v5708, 1.0
      %v5714 = vadd.f32 %v5710, 1.0
      %v5715 = vrcp.pop %v5711
      %v5716 = vmul.f32 %v5711, %v5715
      %v5717 = vsub.f32 1.0, %v5716
      %v5718 = vmul.f32 %v5715, %v5717
      %v5719 = vadd.f32 %v5715, %v5718
      %vm5720 = vweird.f32 %v5711
      %vm5721 = vweird.f32 %v5715
      %vm5722 = vmor %vm5720, %vm5721
      %v5723 = vsel %vm5722, %v5715, %v5719
      %v5724 = vand.u32 2147483647, %v5711
      %vm5725 = vcmp.eq.f32.partialorder %v5724, 8.507059e+37
      %v5726 = vand.u32 %v5711, 2147483648
      %v5727 = vor.u32 1.1754944e-38, %v5726
      %v5728 = vsel %vm5725, %v5727, %v5723
      %v5729 = vmul.f32 1.0, %v5728
      %v5730 = vrcp.pop %v5712
      %v5731 = vmul.f32 %v5712, %v5730
      %v5732 = vsub.f32 1.0, %v5731
      %v5733 = vmul.f32 %v5730, %v5732
      %v5734 = vadd.f32 %v5730, %v5733
      %vm5735 = vweird.f32 %v5712
      %vm5736 = vweird.f32 %v5730
      %vm5737 = vmor %vm5735, %vm5736
      %v5738 = vsel %vm5737, %v5730, %v5734
      %v5739 = vand.u32 2147483647, %v5712
      %vm5740 = vcmp.eq.f32.partialorder %v5739, 8.507059e+37
      %v5741 = vand.u32 %v5712, 2147483648
      %v5742 = vor.u32 1.1754944e-38, %v5741
      %v5743 = vsel %vm5740, %v5742, %v5738
      %v5744 = vmul.f32 1.0, %v5743
      %v5745 = vrcp.pop %v5713
      %v5746 = vmul.f32 %v5713, %v5745
      %v5747 = vsub.f32 1.0, %v5746
      %v5748 = vmul.f32 %v5745, %v5747
      %v5749 = vadd.f32 %v5745, %v5748
      %vm5750 = vweird.f32 %v5713
      %vm5751 = vweird.f32 %v5745
      %vm5752 = vmor %vm5750, %vm5751
      %v5753 = vsel %vm5752, %v5745, %v5749
      %v5754 = vand.u32 2147483647, %v5713
      %vm5755 = vcmp.eq.f32.partialorder %v5754, 8.507059e+37
      %v5756 = vand.u32 %v5713, 2147483648
      %v5757 = vor.u32 1.1754944e-38, %v5756
      %v5758 = vsel %vm5755, %v5757, %v5753
      %v5759 = vmul.f32 1.0, %v5758
      %v5760 = vrcp.pop %v5714
      %v5761 = vmul.f32 %v5714, %v5760
      %v5762 = vsub.f32 1.0, %v5761
      %v5763 = vmul.f32 %v5760, %v5762
      %v5764 = vadd.f32 %v5760, %v5763
      %vm5765 = vweird.f32 %v5714
      %vm5766 = vweird.f32 %v5760
      %vm5767 = vmor %vm5765, %vm5766
      %v5768 = vsel %vm5767, %v5760, %v5764
      %v5769 = vand.u32 2147483647, %v5714
      %vm5770 = vcmp.eq.f32.partialorder %v5769, 8.507059e+37
      %v5771 = vand.u32 %v5714, 2147483648
      %v5772 = vor.u32 1.1754944e-38, %v5771
      %v5773 = vsel %vm5770, %v5772, %v5768
      %v5774 = vmul.f32 1.0, %v5773
      %v5775 = vsub.f32 1.0, %v5729
      %v5776 = vsub.f32 1.0, %v5744
      %v5777 = vsub.f32 1.0, %v5759
      %v5778 = vsub.f32 1.0, %v5774
      %5780 = vset.pattern.permute.xlu0 32
      %5781 = vperm.xlu0 %5780, %v5775
      %v5782 = vpop.permute.xlu0 %5781
      %5785 = vset.pattern.permute.xlu0 32
      %5786 = vperm.xlu0 %5785, %v5776
      %v5787 = vpop.permute.xlu0 %5786
      %5790 = vset.pattern.permute.xlu0 32
      %5791 = vperm.xlu0 %5790, %v5777
      %v5792 = vpop.permute.xlu0 %5791
      %5795 = vset.pattern.permute.xlu0 32
      %5796 = vperm.xlu0 %5795, %v5778
      %v5797 = vpop.permute.xlu0 %5796
      %v5799 = vmul.f32 %v5241, %v5782
      %v5800 = vmul.f32 %v5242, %v5787
      %v5801 = vmul.f32 %v5243, %v5792
      %v5802 = vmul.f32 %v5244, %v5797
      %5804 = vset.pattern.permute.xlu0 32
      %5805 = vperm.xlu0 %5804, %v5729
      %v5806 = vpop.permute.xlu0 %5805
      %5809 = vset.pattern.permute.xlu0 32
      %5810 = vperm.xlu0 %5809, %v5744
      %v5811 = vpop.permute.xlu0 %5810
      %5814 = vset.pattern.permute.xlu0 32
      %5815 = vperm.xlu0 %5814, %v5759
      %v5816 = vpop.permute.xlu0 %5815
      %5819 = vset.pattern.permute.xlu0 32
      %5820 = vperm.xlu0 %5819, %v5774
      %v5821 = vpop.permute.xlu0 %5820
      %v5823 = vmul.f32 %v5806, %v5695
      %v5824 = vmul.f32 %v5811, %v5696
      %v5825 = vmul.f32 %v5816, %v5697
      %v5826 = vmul.f32 %v5821, %v5698
      %v5827 = vadd.f32 %v5799, %v5823
      %v5828 = vadd.f32 %v5800, %v5824
      %v5829 = vadd.f32 %v5801, %v5825
      %v5830 = vadd.f32 %v5802, %v5826
      %v5831 = vlaneseq
      %v5832 = vshrl.u32 %v5831, 7
      %v5833 = vadd.s32 %v5832, 9
      %5834 = vset.pattern.permute.xlu0 %v5833
      %5835 = vperm.xlu0 %5834, %v5245
      %v5836 = vpop.permute.xlu0 %5835
      %v5837 = vlaneseq
      %v5838 = vshrl.u32 %v5837, 7
      %v5839 = vadd.s32 %v5838, 9
      %5840 = vset.pattern.permute.xlu0 %v5839
      %5841 = vperm.xlu0 %5840, %v5252
      %v5842 = vpop.permute.xlu0 %5841
      %v5843 = vlaneseq
      %v5844 = vshrl.u32 %v5843, 7
      %v5845 = vadd.s32 %v5844, 9
      %5846 = vset.pattern.permute.xlu0 %v5845
      %5847 = vperm.xlu0 %5846, %v5259
      %v5848 = vpop.permute.xlu0 %5847
      %v5849 = vlaneseq
      %v5850 = vshrl.u32 %v5849, 7
      %v5851 = vadd.s32 %v5850, 9
      %5852 = vset.pattern.permute.xlu0 %v5851
      %5853 = vperm.xlu0 %5852, %v5266
      %v5854 = vpop.permute.xlu0 %5853
      %vm5855 = vcmp.gt.f32.partialorder %v5836, 0.5
      %vm5856 = vcmp.gt.f32.partialorder %v5842, 0.5
      %vm5857 = vcmp.gt.f32.partialorder %v5848, 0.5
      %vm5858 = vcmp.gt.f32.partialorder %v5854, 0.5
      %v5859 = vsel %vm5855, 1, 0
      %v5860 = vsel %vm5856, 1, 0
      %v5861 = vsel %vm5857, 1, 0
      %v5862 = vsel %vm5858, 1, 0
      %vm5863 = vcmp.eq.s32.totalorder %v5859, 1
      %vm5864 = vcmp.eq.s32.totalorder %v5860, 1
      %vm5865 = vcmp.eq.s32.totalorder %v5861, 1
      %vm5866 = vcmp.eq.s32.totalorder %v5862, 1
      %v5867 = vsel %vm5863, 0.0, %v5827
      %v5868 = vsel %vm5864, 0.0, %v5828
      %v5869 = vsel %vm5865, 0.0, %v5829
      %v5870 = vsel %vm5866, 0.0, %v5830
      %5871 = vst.msk [vmem:[#allocation4] sm:$0xff] %vm785, %v5867
      %5872 = vst.msk [vmem:[#allocation4 + $0x8] sm:$0xff] %vm785, %v5868
      %5873 = vst.msk [vmem:[#allocation4 + $0x10] sm:$0xff] %vm785, %v5869
      %5874 = vst.msk [vmem:[#allocation4 + $0x18] sm:$0xff] %vm785, %v5870
      %5875 = vst.msk [vmem:[#allocation5 + $0x1c] sm:$0xf] %vm1013, %v5604
      %v5876 = vld [vmem:[#allocation5] sm:$0xff]
      %v5877 = vld [vmem:[#allocation5 + $0x8] sm:$0xff]
      %v5878 = vld [vmem:[#allocation5 + $0x10] sm:$0xff]
      %v5879 = vld [vmem:[#allocation5 + $0x18] sm:$0xff]
      %v5880 = vld [vmem:[%s15] sm:$0xff]
      %v5881 = vld [vmem:[%s15 + $0x8] sm:$0xff]
      %v5882 = vld [vmem:[%s15 + $0x10] sm:$0xff]
      %v5883 = vld [vmem:[%s15 + $0x18] sm:$0xff]
      %v5884 = vld [vmem:[%s16] sm:$0x1]
      %v5886 = vperm.slane %v5884, 0
      %v5889 = vsel %vm785, %v5876, 0
      %v5892 = vsel %vm785, %v5877, 0
      %v5895 = vsel %vm785, %v5878, 0
      %v5898 = vsel %vm785, %v5879, 0
      %5900 = vmatpush.msra.mxu0 0.0
      %5901 = vmatpush.msra.mxu0 0.0
      %5902 = vmatpush.msra.mxu0 0.0
      %5903 = vmatpush.msra.mxu0 0.0
      %5904 = vmatpush.msra.mxu0 0.0
      %5905 = vmatpush.msra.mxu0 0.0
      %5906 = vmatpush.msra.mxu0 0.0
      %5907 = vmatpush.msra.mxu0 0.0
      %5908 = vmatpush.msra.mxu0 0.0
      %5909 = vmatpush.msra.mxu0 0.0
      %5910 = vmatpush.msra.mxu0 0.0
      %5911 = vmatpush.msra.mxu0 0.0
      %5912 = vmatpush.msra.mxu0 %v5883
      %5913 = vmatpush.msra.mxu0 %v5882
      %5914 = vmatpush.msra.mxu0 %v5881
      %5915 = vmatpush.msra.mxu0 %v5880
      %5916 = vmatmul.f32.gmra.mxu0 %v5889
      %v5917 = vpop.f32.mrf.mxu0
      %v5918 = vadd.f32 %v5886, %v5917
      %5919 = vmatmul.f32.gmra.mxu0 %v5892
      %v5920 = vpop.f32.mrf.mxu0
      %v5921 = vadd.f32 %v5886, %v5920
      %5922 = vmatmul.f32.gmra.mxu0 %v5895
      %v5923 = vpop.f32.mrf.mxu0
      %v5924 = vadd.f32 %v5886, %v5923
      %5925 = vmatmul.f32.gmra.mxu0 %v5898
      %v5926 = vpop.f32.mrf.mxu0
      %v5927 = vadd.f32 %v5886, %v5926
      %5928 = vdwg.mxu0
      %v5929 = vmax.f32 %v5918, 0.0
      %v5930 = vmax.f32 %v5921, 0.0
      %v5931 = vmax.f32 %v5924, 0.0
      %v5932 = vmax.f32 %v5927, 0.0
      %v5933 = vld [vmem:[%s17] sm:$0xff]
      %v5934 = vld [vmem:[%s17 + $0x8] sm:$0xff]
      %v5935 = vld [vmem:[%s17 + $0x10] sm:$0xff]
      %v5936 = vld [vmem:[%s17 + $0x18] sm:$0xff]
      %v5937 = vld [vmem:[%s18] sm:$0x1]
      %v5939 = vperm.slane %v5937, 0
      %v5942 = vsel %vm785, %v5929, 0
      %v5945 = vsel %vm785, %v5930, 0
      %v5948 = vsel %vm785, %v5931, 0
      %v5951 = vsel %vm785, %v5932, 0
      %5953 = vmatpush.msra.mxu0 0.0
      %5954 = vmatpush.msra.mxu0 0.0
      %5955 = vmatpush.msra.mxu0 0.0
      %5956 = vmatpush.msra.mxu0 0.0
      %5957 = vmatpush.msra.mxu0 0.0
      %5958 = vmatpush.msra.mxu0 0.0
      %5959 = vmatpush.msra.mxu0 0.0
      %5960 = vmatpush.msra.mxu0 0.0
      %5961 = vmatpush.msra.mxu0 0.0
      %5962 = vmatpush.msra.mxu0 0.0
      %5963 = vmatpush.msra.mxu0 0.0
      %5964 = vmatpush.msra.mxu0 0.0
      %5965 = vmatpush.msra.mxu0 %v5936
      %5966 = vmatpush.msra.mxu0 %v5935
      %5967 = vmatpush.msra.mxu0 %v5934
      %5968 = vmatpush.msra.mxu0 %v5933
      %5969 = vmatmul.f32.gmra.mxu0 %v5942
      %v5970 = vpop.f32.mrf.mxu0
      %v5971 = vadd.f32 %v5939, %v5970
      %5972 = vmatmul.f32.gmra.mxu0 %v5945
      %v5973 = vpop.f32.mrf.mxu0
      %v5974 = vadd.f32 %v5939, %v5973
      %5975 = vmatmul.f32.gmra.mxu0 %v5948
      %v5976 = vpop.f32.mrf.mxu0
      %v5977 = vadd.f32 %v5939, %v5976
      %5978 = vmatmul.f32.gmra.mxu0 %v5951
      %v5979 = vpop.f32.mrf.mxu0
      %v5980 = vadd.f32 %v5939, %v5979
      %5981 = vdwg.mxu0
      %5982 = vst [vmem:[%s704] sm:$0xff] %v5971
      %5983 = vst [vmem:[%s704 + $0x8] sm:$0xff] %v5974
      %5984 = vst [vmem:[%s704 + $0x10] sm:$0xff] %v5977
      %5985 = vst [vmem:[%s704 + $0x18] sm:$0xff] %v5980
      %s5986 = smul.u32 4, %s35
      %p5987 = scmp.lt.s32.totalorder %s34, 0
      %s5988 = scalar_select %p5987, %s34, 0
      %p5989 = scmp.lt.s32.totalorder %s5986, 7
      %s5990 = scalar_select %p5989, %s5986, 7
      %s5991 = smul.addr %s5988, 8
      %s5992 = sadd.s32 %s5990, %s5991
      %s5993 = smul.addr %s5992, 8
      %s5994 = scalar_lea.vmem %s19, %s5993
      // Predicated region
      $region101: #{scope_lm_forward.1} parent=95 // pred_check
        %p5995 = pneg %p485
      $region102: #{scope_lm_forward.1} parent=95 // pred_check_branch
        %5997 = sbr.rel (%p5995) target = $region104
      $region103: #{scope_lm_forward.1} parent=95 // pred_region
        %s5998 = smul.u32 4, %s35
      $region104: #{scope_lm_forward.1} parent=95 // pred_fallthru
        _
    $region96: #{scope_lm_forward.1} parent=5 // pred_fallthru
      _
    %p5999 = scmp.le.s32.totalorder 2, %s25
    // Predicated region
    $region105: #{scope_lm_forward.1} parent=5 // pred_check
      %p6000 = pneg %p5999
    $region106: #{scope_lm_forward.1} parent=5 // pred_check_branch
      %6002 = sbr.rel (%p6000) target = $region108
    $region107: #{scope_lm_forward.1} parent=5 // pred_region
      %s6003 = ssub.s32 %s25, 2
      // Predicated region
      $region109: #{scope_lm_forward.1} parent=107 // pred_check
        %p6004 = pneg %p491
      $region110: #{scope_lm_forward.1} parent=107 // pred_check_branch
        %6006 = sbr.rel (%p6004) target = $region112
      $region111: #{scope_lm_forward.1} parent=107 // pred_region
        %s6007 = smul.u32 4, %s37
        %p6008 = scmp.lt.s32.totalorder %s36, 0
        %s6009 = scalar_select %p6008, %s36, 0
        %p6010 = scmp.lt.s32.totalorder %s6007, 7
        %s6011 = scalar_select %p6010, %s6007, 7
        %s6012 = smul.addr %s6009, 8
        %s6013 = sadd.s32 %s6011, %s6012
        %s6014 = smul.addr %s6013, 8
        %s6015 = scalar_lea.vmem %s19, %s6014
      $region112: #{scope_lm_forward.1} parent=107 // pred_fallthru
        _
    $region108: #{scope_lm_forward.1} parent=5 // pred_fallthru
      _
  $region6: #{scope_lm_forward.1} parent=0 // loop_footer
    %s29 = sadd.s32 1, %s25
  $region7: #{scope_lm_forward.1} parent=0 // loop_footer_branch
    %24 = sbr.rel target = $region3
  $region8: #{scope_lm_forward.1} parent=0 // loop_exit
    _

</llo_original>
